<compile_context>
chip_gen: v7x
topology: tpu7x:2x2x1
jax: 0.10.0
libtpu: 0.0.40
codegen_flags: <defaults>
</compile_context>

<pallas_src>
import functools
import math

import jax
import jax.numpy as jnp
from jax.experimental import pallas as pl
from jax.experimental.pallas import tpu as pltpu

MXU_DTYPE = jnp.bfloat16   # MXU operand dtype (f32 accumulation). jnp.float32 to bit-match f32 refs.
ACT_DTYPE = jnp.bfloat16   # inter-layer activation storage (halves HBM read/write bytes).
SEQ_TILE = 128             # query/key row tile. TODO(synk): 256 on v6e/v7x fills the 2x256^2 MXU.
_NEG_INF = -1e30           # finite "-inf" for online-softmax init (avoids inf arithmetic).


def _round_up(x, m):
    return ((x + m - 1) // m) * m


@functools.cache
def _device_vmem_bytes():
    """Physical VMEM capacity so vmem_limit_bytes never exceeds the chip (64 MiB on v7x)."""
    try:
        return int(pltpu.get_tpu_info().vmem_capacity_bytes)
    except Exception:
        return 64 * 1024 * 1024        # conservative fallback: v7x per-TensorCore VMEM


@functools.cache
def _single_buffer_supported():
    """Probe whether BlockSpec(pipeline_mode=pl.Buffered(1)) lowers, runs and is correct.
    Weight blocks use constant index_maps (never re-fetched), so single-buffering them
    halves weight VMEM; fall back to default double-buffering if unsupported."""
    try:
        def _probe(w_ref, o_ref):
            o_ref[...] = w_ref[...] + 1.0
        out = pl.pallas_call(
            _probe,
            out_shape=jax.ShapeDtypeStruct((16, 128), jnp.float32),
            grid=(2,),
            in_specs=[pl.BlockSpec((8, 128), lambda i: (0, 0),
                                   pipeline_mode=pl.Buffered(1))],
            out_specs=pl.BlockSpec((8, 128), lambda i: (i, 0)),
        )(jnp.zeros((8, 128), jnp.float32))
        jax.block_until_ready(out)
        return bool(jnp.all(out == 1.0))
    except Exception:
        return False


# ---------------------------------------------------------------------------
# Fused Transformer EncoderLayer kernel.
# Grid = (batch, S_q tiles, S_k tiles); the k axis is the online-softmax reduction.
# TODO(synk): dropout layers are identity (eval/inference mode).
# ---------------------------------------------------------------------------
def encoder_layer_kernel(
    x_q_ref, x_k_ref, mask_ref,
    wq_ref, bq_ref, wkv_ref, bkv_ref, wo_ref, bo_ref,
    g1_ref, be1_ref,
    w1_ref, c1_ref, w2_ref, c2_ref,
    g2_ref, be2_ref,
    out_ref,
    q_sc, m_sc, l_sc, acc_sc,
    *, n_head, hid_dim, eps=1e-5,
):
    ki = pl.program_id(2)
    nk = pl.num_programs(2)
    mx = wq_ref.dtype                    # MXU operand dtype
    tq, h_pad = q_sc.shape
    tk = x_k_ref.shape[1]
    hd = hid_dim // n_head

    # ---- init per (batch, q-tile): project Q once (scale already folded into wq/bq),
    #      reset online-softmax state.  l is initialized to 1 (not 0): real head lanes
    #      get multiplied by alpha=0 on their first update, and padded head lanes keep
    #      l=1 so the final acc * 1/l stays 0 (no 0*inf NaN).
    @pl.when(ki == 0)
    def _():
        xq = x_q_ref[0].astype(mx)
        q = jnp.dot(xq, wq_ref[...], preferred_element_type=jnp.float32) + bq_ref[...]
        q_sc[...] = q.astype(mx)
        m_sc[...] = jnp.full((tq, h_pad), _NEG_INF, jnp.float32)
        l_sc[...] = jnp.ones((tq, h_pad), jnp.float32)
        acc_sc[...] = jnp.zeros((tq, h_pad), jnp.float32)

    # ---- every k-tile: fused K|V projection for this key block, then per-head
    #      online-softmax update.  H stays on the lane axis throughout (no
    #      (S, n_head, head_dim) relayout); the context is accumulated directly into
    #      the (tq, H_pad) scratch, so no lane-axis concatenate is ever materialized.
    xk = x_k_ref[0].astype(mx)
    kv = jnp.dot(xk, wkv_ref[...], preferred_element_type=jnp.float32) + bkv_ref[...]
    kv = kv.astype(mx)                   # (tk, 2*h_pad): [K | V]
    k_all = kv[:, :h_pad]
    v_all = kv[:, h_pad:]
    q_all = q_sc[...]                    # (tq, h_pad) bf16
    mask_add = mask_ref[0]               # (1, tk) additive mask: 0 keep / -1e10 drop

    # TODO(synk): for n_head >= 8 make heads a fori_loop / grid axis to bound vreg live
    # ranges instead of fully unrolling this Python loop.
    for h in range(n_head):
        c0 = h * hd
        hsl = slice(c0, c0 + hd)
        e = jax.lax.dot_general(             # (tq, tk), contract head_dim
            q_all[:, hsl], k_all[:, hsl], (((1,), (1,)), ((), ())),
            preferred_element_type=jnp.float32)
        e = e + mask_add
        m_prev = m_sc[:, c0:c0 + 1]          # (tq, 1)
        l_prev = l_sc[:, c0:c0 + 1]
        m_new = jnp.maximum(m_prev, jnp.max(e, axis=-1, keepdims=True))
        alpha = jnp.exp(m_prev - m_new)
        p = jnp.exp(e - m_new)
        l_new = alpha * l_prev + jnp.sum(p, axis=-1, keepdims=True)
        pv = jnp.dot(p.astype(mx), v_all[:, hsl], preferred_element_type=jnp.float32)
        acc_sc[:, hsl] = acc_sc[:, hsl] * alpha + pv
        m_sc[:, hsl] = jnp.broadcast_to(m_new, (tq, hd))
        l_sc[:, hsl] = jnp.broadcast_to(l_new, (tq, hd))

    # ---- finalize at the last k-tile: normalize, output projection, residual + LN1,
    #      position-wise FFN (tiled over the q rows), residual + LN2, write the tile.
    @pl.when(ki == nk - 1)
    def _():
        inv_h = 1.0 / hid_dim
        x = x_q_ref[0].astype(jnp.float32)
        # per-head normalization is a single vectorized op: l was broadcast per head lane
        ctx = acc_sc[...] * pl.reciprocal(l_sc[...], approx=True)
        attn = jnp.dot(ctx.astype(mx), wo_ref[...],
                       preferred_element_type=jnp.float32) + bo_ref[...]

        y = x + attn
        mu = jnp.sum(y, axis=-1, keepdims=True) * inv_h      # padded lanes are 0
        var = jnp.maximum(jnp.sum(y * y, axis=-1, keepdims=True) * inv_h - mu * mu, 0.0)
        y = (y - mu) * jax.lax.rsqrt(var + eps) * g1_ref[...] + be1_ref[...]

        hmid = jnp.maximum(
            jnp.dot(y.astype(mx), w1_ref[...], preferred_element_type=jnp.float32)
            + c1_ref[...], 0.0)
        f = jnp.dot(hmid.astype(mx), w2_ref[...],
                    preferred_element_type=jnp.float32) + c2_ref[...]

        z = y + f
        mu2 = jnp.sum(z, axis=-1, keepdims=True) * inv_h
        var2 = jnp.maximum(jnp.sum(z * z, axis=-1, keepdims=True) * inv_h - mu2 * mu2, 0.0)
        z = (z - mu2) * jax.lax.rsqrt(var2 + eps) * g2_ref[...] + be2_ref[...]

        out_ref[0] = z.astype(out_ref.dtype)


def encoder_layer_call(x3d, mask_add, plp, *, n_head, hid_dim, tq, tk):
    """x3d: (B, S_pad, H_pad) ACT_DTYPE slab; mask_add: (B, 1, S_pad) f32 additive mask."""
    B, s_pad, h_pad = x3d.shape
    pf_pad = plp["w1"].shape[1]
    n_q, n_k = s_pad // tq, s_pad // tk

    weights = (plp["wq"], plp["bq"], plp["wkv"], plp["bkv"], plp["wo"], plp["bo"],
               plp["g1"], plp["be1"], plp["w1"], plp["c1"], plp["w2"], plp["c2"],
               plp["g2"], plp["be2"])

    use_buffered = _single_buffer_supported()

    def w_spec(a):
        nd = a.ndim
        imap = lambda b, qi, ki, _nd=nd: (0,) * _nd
        if use_buffered:   # constant index_map: never re-fetched -> single buffer
            return pl.BlockSpec(a.shape, imap, pipeline_mode=pl.Buffered(1))
        return pl.BlockSpec(a.shape, imap)

    in_specs = [
        pl.BlockSpec((1, tq, h_pad), lambda b, qi, ki: (b, qi, 0)),  # query rows + residual
        pl.BlockSpec((1, tk, h_pad), lambda b, qi, ki: (b, ki, 0)),  # key/value rows
        pl.BlockSpec((1, 1, tk), lambda b, qi, ki: (b, 0, ki)),      # additive key mask
    ] + [w_spec(a) for a in weights]

    kernel = functools.partial(encoder_layer_kernel, n_head=n_head, hid_dim=hid_dim)

    # VMEM budget: weights (x1 if single-buffered) + double-buffered activation blocks
    # + scratch + kernel intermediates (per-head energy, K|V block, FFN hidden), clamped
    # to the device's physical VMEM (never request more than the chip has — v7x: 64 MiB).
    act_i = jnp.dtype(x3d.dtype).itemsize
    mxu_i = jnp.dtype(MXU_DTYPE).itemsize
    weight_bytes = sum(int(a.size) * a.dtype.itemsize for a in weights)
    weight_bytes *= 1 if use_buffered else 2
    block_bytes = 2 * (tq + tk) * h_pad * act_i + 2 * tk * 4 + 2 * tq * h_pad * act_i
    scratch_bytes = tq * h_pad * (mxu_i + 3 * 4)
    inter_bytes = 4 * (3 * tq * tk + 2 * tk * h_pad + tq * pf_pad + 8 * tq * h_pad)
    vmem_limit = int((weight_bytes + block_bytes + scratch_bytes + inter_bytes) * 1.25)
    vmem_limit = max(vmem_limit, 16 * 1024 * 1024)
    vmem_limit = int(min(vmem_limit, _device_vmem_bytes() - 2 * 1024 * 1024))

    # NOTE: no input_output_aliases — key rows are re-read across q tiles, so in-place
    # update of the activation slab is only safe when n_q == 1; skipped for generality.
    return pl.pallas_call(
        kernel,
        out_shape=jax.ShapeDtypeStruct((B, s_pad, h_pad), x3d.dtype),
        grid=(B, n_q, n_k),
        in_specs=in_specs,
        out_specs=pl.BlockSpec((1, tq, h_pad), lambda b, qi, ki: (b, qi, 0)),
        scratch_shapes=[
            pltpu.VMEM((tq, h_pad), MXU_DTYPE),    # Q (stored in MXU dtype)
            pltpu.VMEM((tq, h_pad), jnp.float32),  # running max  (per-head, lane-broadcast)
            pltpu.VMEM((tq, h_pad), jnp.float32),  # running sum  (per-head, lane-broadcast)
            pltpu.VMEM((tq, h_pad), jnp.float32),  # unnormalized context accumulator
        ],
        compiler_params=pltpu.CompilerParams(
            dimension_semantics=("parallel", "parallel", "arbitrary"),
            vmem_limit_bytes=vmem_limit),
    )(x3d, x3d, mask_add, *weights)


# ---------------------------------------------------------------------------
# Parameter construction (deterministic, synthetic, PyTorch (out,in) layout)
# ---------------------------------------------------------------------------
def _linear(key, d_in, d_out):
    kw, kb = jax.random.split(key)
    w = jax.random.normal(kw, (d_out, d_in), jnp.float32) * 0.02   # (out, in)
    b = jax.random.normal(kb, (d_out,), jnp.float32) * 0.02
    return w, b


def make_layer_params(key, hid_dim, pf_dim):
    ks = jax.random.split(key, 6)
    wq, bq = _linear(ks[0], hid_dim, hid_dim)
    wk, bk = _linear(ks[1], hid_dim, hid_dim)
    wv, bv = _linear(ks[2], hid_dim, hid_dim)
    wo, bo = _linear(ks[3], hid_dim, hid_dim)
    w1, c1 = _linear(ks[4], hid_dim, pf_dim)
    w2, c2 = _linear(ks[5], pf_dim, hid_dim)
    return dict(
        wq=wq, bq=bq, wk=wk, bk=bk, wv=wv, bv=bv, wo=wo, bo=bo,
        g1=jnp.ones((hid_dim,), jnp.float32), be1=jnp.zeros((hid_dim,), jnp.float32),
        w1=w1, c1=c1, w2=w2, c2=c2,
        g2=jnp.ones((hid_dim,), jnp.float32), be2=jnp.zeros((hid_dim,), jnp.float32),
    )


def make_encoder_params(key, in_dim, hid_dim, n_layer, pf_dim, max_length=100):
    ks = jax.random.split(key, n_layer + 2)
    tok_emb = jax.random.normal(ks[0], (in_dim, hid_dim), jnp.float32) * 0.02
    pos_emb = jax.random.normal(ks[1], (max_length, hid_dim), jnp.float32) * 0.02
    layers = [make_layer_params(ks[2 + i], hid_dim, pf_dim) for i in range(n_layer)]
    return dict(tok_emb=tok_emb, pos_emb=pos_emb, layers=layers)


def prepare_layer_params(lp, hid_dim, h_pad, pf_pad, mxu_dtype=MXU_DTYPE):
    """One-time prep: transpose (out,in)->(in,out), zero-pad to lane-dense shapes,
    fold 1/sqrt(hid_dim) into fc_q, fuse fc_k|fc_v, cast MXU weights to bf16."""
    inv_scale = 1.0 / math.sqrt(hid_dim)

    def w_(w, rows, cols, scale=1.0):
        wt = w.T * scale
        wt = jnp.pad(wt, ((0, rows - wt.shape[0]), (0, cols - wt.shape[1])))
        return wt.astype(mxu_dtype)

    def v_(b, cols, scale=1.0):
        return jnp.pad(b * scale, (0, cols - b.shape[0])).reshape(1, cols).astype(jnp.float32)

    wkv = jnp.concatenate([w_(lp["wk"], h_pad, h_pad), w_(lp["wv"], h_pad, h_pad)], axis=1)
    bkv = jnp.concatenate([v_(lp["bk"], h_pad), v_(lp["bv"], h_pad)], axis=1)
    return dict(
        wq=w_(lp["wq"], h_pad, h_pad, inv_scale), bq=v_(lp["bq"], h_pad, inv_scale),
        wkv=wkv, bkv=bkv,
        wo=w_(lp["wo"], h_pad, h_pad), bo=v_(lp["bo"], h_pad),
        g1=v_(lp["g1"], h_pad), be1=v_(lp["be1"], h_pad),
        w1=w_(lp["w1"], h_pad, pf_pad), c1=v_(lp["c1"], pf_pad),
        w2=w_(lp["w2"], pf_pad, h_pad), c2=v_(lp["c2"], h_pad),
        g2=v_(lp["g2"], h_pad), be2=v_(lp["be2"], h_pad),
    )


def encoder_forward(src, src_mask, params, prepared_layers, n_head):
    """src: (B,S) int32 token ids; src_mask: (B,S) int32 (1=keep, 0=pad)."""
    B, S = src.shape
    H = params["tok_emb"].shape[1]
    tq = tk = SEQ_TILE
    s_pad = _round_up(S, SEQ_TILE)       # >=128 keeps every matmul M-dim MXU-friendly
    h_pad = _round_up(H, 128)

    # embedding gather + positional add is glue (plain JAX); dropout = identity
    pos = jnp.arange(S)
    x = params["tok_emb"][src] * math.sqrt(H) + params["pos_emb"][pos][None, :, :]

    # pad once to a lane/sublane-dense (B, S_pad, H_pad) slab; padded lanes = 0.
    x = jnp.pad(x, ((0, 0), (0, s_pad - S), (0, h_pad - H))).astype(ACT_DTYPE)

    # additive attention mask computed once: 0 (keep) / -1e10 (masked or padded key)
    mask_add = (src_mask.astype(jnp.float32) - 1.0) * 1e10
    mask_add = jnp.pad(mask_add, ((0, 0), (0, s_pad - S)), constant_values=-1e10)
    mask_add = mask_add.reshape(B, 1, s_pad)

    # TODO(synk): cross-call prefetch of the next layer's weights (P10) for small-batch v5e.
    for plp in prepared_layers:
        x = encoder_layer_call(x, mask_add, plp, n_head=n_head, hid_dim=H, tq=tq, tk=tk)

    return x[:, :S, :H].astype(jnp.float32)


# ---------------------------------------------------------------------------
if __name__ == "__main__":
    in_dim = 50          # vocab size
    hid_dim = 32
    n_layer = 2
    n_head = 4
    pf_dim = 64
    batch, seq = 2, 8

    key = jax.random.PRNGKey(0)
    kp, ks = jax.random.split(key)
    params = make_encoder_params(kp, in_dim, hid_dim, n_layer, pf_dim)

    h_pad = _round_up(hid_dim, 128)
    pf_pad = _round_up(pf_dim, 128)
    prepared = [prepare_layer_params(lp, hid_dim, h_pad, pf_pad) for lp in params["layers"]]

    src = jax.random.randint(ks, (batch, seq), 0, in_dim, dtype=jnp.int32)
    src_mask = jnp.array(
        [[1, 1, 1, 1, 1, 1, 1, 1],
         [1, 1, 1, 1, 1, 1, 0, 0]], dtype=jnp.int32)

    # warm the cached hardware probes outside the jit trace
    _single_buffer_supported()
    _device_vmem_bytes()

    fwd = jax.jit(encoder_forward, static_argnames=("n_head",))
    out = fwd(src, src_mask, params, prepared, n_head=n_head)
    jax.block_until_ready(out)
    assert out.shape == (batch, seq, hid_dim)
    assert bool(jnp.all(jnp.isfinite(out)))
    print("KERNEL_OK")
</pallas_src>

<mosaic_0001>
module attributes {stable_mosaic.version = 11 : i64} {
  func.func @_probe(%arg0: i32, %arg1: memref<8x128xf32, #tpu.memory_space<vmem>>, %arg2: memref<8x128xf32, #tpu.memory_space<vmem>>) attributes {dimension_semantics = [#tpu.dimension_semantics<arbitrary>], iteration_bounds = array<i64: 2>, scalar_prefetch = 0 : i64, scratch_operands = 0 : i64, tpu.core_type = #tpu.core_type<tc>, window_params = [{pipeline_mode = #tpu.pipeline_mode<synchronous>, transform_indices = @transform_0, window_bounds = array<i64: 8, 128>}, {transform_indices = @transform_1, window_bounds = array<i64: 8, 128>}]} {
    %c0 = arith.constant 0 : index
    %c0_0 = arith.constant 0 : index
    %0 = vector.load %arg1[%c0, %c0_0] : memref<8x128xf32, #tpu.memory_space<vmem>>, vector<8x128xf32>
    %cst = arith.constant 1.000000e+00 : f32
    %1 = vector.broadcast %cst : f32 to vector<8x128xf32>
    %2 = arith.addf %0, %1 : vector<8x128xf32>
    %c0_1 = arith.constant 0 : index
    %c0_2 = arith.constant 0 : index
    %3 = vector.load %arg2[%c0_1, %c0_2] : memref<8x128xf32, #tpu.memory_space<vmem>>, vector<8x128xf32>
    tpu.vector_store %arg2[%c0_1, %c0_2], %2 {strides = array<i32>} : memref<8x128xf32, #tpu.memory_space<vmem>>, vector<8x128xf32>,
    return
  }
  func.func @transform_0(%arg0: i32) -> (i32, i32) {
    %c0_i32 = arith.constant 0 : i32
    %c0_i32_0 = arith.constant 0 : i32
    %c0_i32_1 = arith.constant 0 : i32
    return %c0_i32, %c0_i32_0 : i32, i32
  }
  func.func @transform_1(%arg0: i32) -> (i32, i32) {
    %c0_i32 = arith.constant 0 : i32
    %c0_i32_0 = arith.constant 0 : i32
    return %arg0, %c0_i32 : i32, i32
  }
}

module attributes {stable_mosaic.version = 11 : i64} {
  func.func @encoder_layer_kernel(%arg0: i32, %arg1: i32, %arg2: i32, %arg3: memref<1x128x128xbf16, #tpu.memory_space<vmem>>, %arg4: memref<1x128x128xbf16, #tpu.memory_space<vmem>>, %arg5: memref<1x1x128xf32, #tpu.memory_space<vmem>>, %arg6: memref<128x128xbf16, #tpu.memory_space<vmem>>, %arg7: memref<1x128xf32, #tpu.memory_space<vmem>>, %arg8: memref<128x256xbf16, #tpu.memory_space<vmem>>, %arg9: memref<1x256xf32, #tpu.memory_space<vmem>>, %arg10: memref<128x128xbf16, #tpu.memory_space<vmem>>, %arg11: memref<1x128xf32, #tpu.memory_space<vmem>>, %arg12: memref<1x128xf32, #tpu.memory_space<vmem>>, %arg13: memref<1x128xf32, #tpu.memory_space<vmem>>, %arg14: memref<128x128xbf16, #tpu.memory_space<vmem>>, %arg15: memref<1x128xf32, #tpu.memory_space<vmem>>, %arg16: memref<128x128xbf16, #tpu.memory_space<vmem>>, %arg17: memref<1x128xf32, #tpu.memory_space<vmem>>, %arg18: memref<1x128xf32, #tpu.memory_space<vmem>>, %arg19: memref<1x128xf32, #tpu.memory_space<vmem>>, %arg20: memref<1x128x128xbf16, #tpu.memory_space<vmem>>, %arg21: memref<128x128xbf16, #tpu.memory_space<vmem>>, %arg22: memref<128x128xf32, #tpu.memory_space<vmem>>, %arg23: memref<128x128xf32, #tpu.memory_space<vmem>>, %arg24: memref<128x128xf32, #tpu.memory_space<vmem>>) attributes {dimension_semantics = [#tpu.dimension_semantics<parallel>, #tpu.dimension_semantics<parallel>, #tpu.dimension_semantics<arbitrary>], iteration_bounds = array<i64: 2, 1, 1>, scalar_prefetch = 0 : i64, scratch_operands = 4 : i64, tpu.core_type = #tpu.core_type<tc>, window_params = [{transform_indices = @transform_0, window_bounds = array<i64: 1, 128, 128>}, {transform_indices = @transform_1, window_bounds = array<i64: 1, 128, 128>}, {transform_indices = @transform_2, window_bounds = array<i64: 1, 1, 128>}, {pipeline_mode = #tpu.pipeline_mode<synchronous>, transform_indices = @transform_3, window_bounds = array<i64: 128, 128>}, {pipeline_mode = #tpu.pipeline_mode<synchronous>, transform_indices = @transform_4, window_bounds = array<i64: 1, 128>}, {pipeline_mode = #tpu.pipeline_mode<synchronous>, transform_indices = @transform_5, window_bounds = array<i64: 128, 256>}, {pipeline_mode = #tpu.pipeline_mode<synchronous>, transform_indices = @transform_6, window_bounds = array<i64: 1, 256>}, {pipeline_mode = #tpu.pipeline_mode<synchronous>, transform_indices = @transform_7, window_bounds = array<i64: 128, 128>}, {pipeline_mode = #tpu.pipeline_mode<synchronous>, transform_indices = @transform_8, window_bounds = array<i64: 1, 128>}, {pipeline_mode = #tpu.pipeline_mode<synchronous>, transform_indices = @transform_9, window_bounds = array<i64: 1, 128>}, {pipeline_mode = #tpu.pipeline_mode<synchronous>, transform_indices = @transform_10, window_bounds = array<i64: 1, 128>}, {pipeline_mode = #tpu.pipeline_mode<synchronous>, transform_indices = @transform_11, window_bounds = array<i64: 128, 128>}, {pipeline_mode = #tpu.pipeline_mode<synchronous>, transform_indices = @transform_12, window_bounds = array<i64: 1, 128>}, {pipeline_mode = #tpu.pipeline_mode<synchronous>, transform_indices = @transform_13, window_bounds = array<i64: 128, 128>}, {pipeline_mode = #tpu.pipeline_mode<synchronous>, transform_indices = @transform_14, window_bounds = array<i64: 1, 128>}, {pipeline_mode = #tpu.pipeline_mode<synchronous>, transform_indices = @transform_15, window_bounds = array<i64: 1, 128>}, {pipeline_mode = #tpu.pipeline_mode<synchronous>, transform_indices = @transform_16, window_bounds = array<i64: 1, 128>}, {transform_indices = @transform_17, window_bounds = array<i64: 1, 128, 128>}]} {
    %c0_i32 = arith.constant 0 : i32
    %0 = arith.cmpi eq, %arg2, %c0_i32 : i32
    %1 = arith.extui %0 : i1 to i32
    %c0_i32_0 = arith.constant 0 : i32
    %2 = arith.cmpi ne, %1, %c0_i32_0 : i32
    scf.if %2 {
      %c0_75 = arith.constant 0 : index
      %c0_76 = arith.constant 0 : index
      %c0_77 = arith.constant 0 : index
      %151 = vector.load %arg3[%c0_75, %c0_76, %c0_77] : memref<1x128x128xbf16, #tpu.memory_space<vmem>>, vector<1x128x128xbf16>
      %152 = vector.shape_cast %151 : vector<1x128x128xbf16> to vector<128x128xbf16>
      %c0_78 = arith.constant 0 : index
      %c0_79 = arith.constant 0 : index
      %153 = vector.load %arg6[%c0_78, %c0_79] : memref<128x128xbf16, #tpu.memory_space<vmem>>, vector<128x128xbf16>
      %cst_80 = arith.constant dense<0.000000e+00> : vector<128x128xf32>
      %154 = tpu.matmul %152, %153, %cst_80 {dimension_numbers = #tpu.dot_dimension_numbers<[1], [0], [0], [1], [0, 0, 1, 1], [], []>} : vector<128x128xbf16>, vector<128x128xbf16>, vector<128x128xf32> -> vector<128x128xf32>
      %c0_81 = arith.constant 0 : index
      %c0_82 = arith.constant 0 : index
      %155 = vector.load %arg7[%c0_81, %c0_82] : memref<1x128xf32, #tpu.memory_space<vmem>>, vector<1x128xf32>
      %156 = vector.broadcast %155 : vector<1x128xf32> to vector<128x128xf32>
      %157 = arith.addf %154, %156 : vector<128x128xf32>
      %158 = arith.truncf %157 : vector<128x128xf32> to vector<128x128xbf16>
      %c0_83 = arith.constant 0 : index
      %c0_84 = arith.constant 0 : index
      %159 = vector.load %arg21[%c0_83, %c0_84] : memref<128x128xbf16, #tpu.memory_space<vmem>>, vector<128x128xbf16>
      tpu.vector_store %arg21[%c0_83, %c0_84], %158 {strides = array<i32>} : memref<128x128xbf16, #tpu.memory_space<vmem>>, vector<128x128xbf16>,
      %cst_85 = arith.constant -1.000000e+30 : f32
      %160 = vector.broadcast %cst_85 : f32 to vector<128x128xf32>
      %c0_86 = arith.constant 0 : index
      %c0_87 = arith.constant 0 : index
      %161 = vector.load %arg22[%c0_86, %c0_87] : memref<128x128xf32, #tpu.memory_space<vmem>>, vector<128x128xf32>
      tpu.vector_store %arg22[%c0_86, %c0_87], %160 {strides = array<i32>} : memref<128x128xf32, #tpu.memory_space<vmem>>, vector<128x128xf32>,
      %cst_88 = arith.constant 1.000000e+00 : f32
      %162 = vector.broadcast %cst_88 : f32 to vector<128x128xf32>
      %c0_89 = arith.constant 0 : index
      %c0_90 = arith.constant 0 : index
      %163 = vector.load %arg23[%c0_89, %c0_90] : memref<128x128xf32, #tpu.memory_space<vmem>>, vector<128x128xf32>
      tpu.vector_store %arg23[%c0_89, %c0_90], %162 {strides = array<i32>} : memref<128x128xf32, #tpu.memory_space<vmem>>, vector<128x128xf32>,
      %cst_91 = arith.constant 0.000000e+00 : f32
      %164 = vector.broadcast %cst_91 : f32 to vector<128x128xf32>
      %c0_92 = arith.constant 0 : index
      %c0_93 = arith.constant 0 : index
      %165 = vector.load %arg24[%c0_92, %c0_93] : memref<128x128xf32, #tpu.memory_space<vmem>>, vector<128x128xf32>
      tpu.vector_store %arg24[%c0_92, %c0_93], %164 {strides = array<i32>} : memref<128x128xf32, #tpu.memory_space<vmem>>, vector<128x128xf32>,
    } else {
    }
    %c0 = arith.constant 0 : index
    %c0_1 = arith.constant 0 : index
    %c0_2 = arith.constant 0 : index
    %3 = vector.load %arg4[%c0, %c0_1, %c0_2] : memref<1x128x128xbf16, #tpu.memory_space<vmem>>, vector<1x128x128xbf16>
    %4 = vector.shape_cast %3 : vector<1x128x128xbf16> to vector<128x128xbf16>
    %c0_3 = arith.constant 0 : index
    %c0_4 = arith.constant 0 : index
    %5 = vector.load %arg8[%c0_3, %c0_4] : memref<128x256xbf16, #tpu.memory_space<vmem>>, vector<128x256xbf16>
    %cst = arith.constant dense<0.000000e+00> : vector<128x256xf32>
    %6 = tpu.matmul %4, %5, %cst {dimension_numbers = #tpu.dot_dimension_numbers<[1], [0], [0], [1], [0, 0, 1, 1], [], []>} : vector<128x128xbf16>, vector<128x256xbf16>, vector<128x256xf32> -> vector<128x256xf32>
    %c0_5 = arith.constant 0 : index
    %c0_6 = arith.constant 0 : index
    %7 = vector.load %arg9[%c0_5, %c0_6] : memref<1x256xf32, #tpu.memory_space<vmem>>, vector<1x256xf32>
    %8 = vector.broadcast %7 : vector<1x256xf32> to vector<128x256xf32>
    %9 = arith.addf %6, %8 : vector<128x256xf32>
    %10 = arith.truncf %9 : vector<128x256xf32> to vector<128x256xbf16>
    %11 = vector.extract_strided_slice %10 {offsets = [0, 0], sizes = [128, 128], strides = [1, 1]} : vector<128x256xbf16> to vector<128x128xbf16>
    %12 = vector.extract_strided_slice %10 {offsets = [0, 128], sizes = [128, 128], strides = [1, 1]} : vector<128x256xbf16> to vector<128x128xbf16>
    %c0_7 = arith.constant 0 : index
    %c0_8 = arith.constant 0 : index
    %13 = vector.load %arg21[%c0_7, %c0_8] : memref<128x128xbf16, #tpu.memory_space<vmem>>, vector<128x128xbf16>
    %c0_9 = arith.constant 0 : index
    %c0_10 = arith.constant 0 : index
    %c0_11 = arith.constant 0 : index
    %14 = vector.load %arg5[%c0_9, %c0_10, %c0_11] : memref<1x1x128xf32, #tpu.memory_space<vmem>>, vector<1x1x128xf32>
    %15 = vector.shape_cast %14 : vector<1x1x128xf32> to vector<1x128xf32>
    %16 = vector.extract_strided_slice %13 {offsets = [0, 0], sizes = [128, 8], strides = [1, 1]} : vector<128x128xbf16> to vector<128x8xbf16>
    %17 = vector.extract_strided_slice %11 {offsets = [0, 0], sizes = [128, 8], strides = [1, 1]} : vector<128x128xbf16> to vector<128x8xbf16>
    %cst_12 = arith.constant dense<0.000000e+00> : vector<128x128xf32>
    %18 = tpu.matmul %16, %17, %cst_12 {dimension_numbers = #tpu.dot_dimension_numbers<[1], [1], [0], [0], [0, 0, 1, 0], [], []>} : vector<128x8xbf16>, vector<128x8xbf16>, vector<128x128xf32> -> vector<128x128xf32>
    %19 = vector.broadcast %15 : vector<1x128xf32> to vector<128x128xf32>
    %20 = arith.addf %18, %19 : vector<128x128xf32>
    %c0_13 = arith.constant 0 : index
    %c0_14 = arith.constant 0 : index
    %21 = vector.load %arg22[%c0_13, %c0_14] : memref<128x128xf32, #tpu.memory_space<vmem>>, vector<128x1xf32>
    %c0_15 = arith.constant 0 : index
    %c0_16 = arith.constant 0 : index
    %22 = vector.load %arg23[%c0_15, %c0_16] : memref<128x128xf32, #tpu.memory_space<vmem>>, vector<128x1xf32>
    %cst_17 = arith.constant dense<0xFF800000> : vector<128xf32>
    %23 = vector.multi_reduction <maximumf>, %20, %cst_17 [1] : vector<128x128xf32> to vector<128xf32>
    %24 = vector.shape_cast %23 : vector<128xf32> to vector<128x1xf32>
    %25 = arith.maximumf %21, %24 : vector<128x1xf32>
    %26 = arith.subf %21, %25 : vector<128x1xf32>
    %27 = math.exp %26 : vector<128x1xf32>
    %28 = vector.broadcast %25 : vector<128x1xf32> to vector<128x128xf32>
    %29 = arith.subf %20, %28 : vector<128x128xf32>
    %30 = math.exp %29 : vector<128x128xf32>
    %31 = arith.mulf %27, %22 : vector<128x1xf32>
    %cst_18 = arith.constant dense<0.000000e+00> : vector<128xf32>
    %32 = vector.multi_reduction <add>, %30, %cst_18 [1] : vector<128x128xf32> to vector<128xf32>
    %33 = vector.shape_cast %32 : vector<128xf32> to vector<128x1xf32>
    %34 = arith.addf %31, %33 : vector<128x1xf32>
    %35 = arith.truncf %30 : vector<128x128xf32> to vector<128x128xbf16>
    %36 = vector.extract_strided_slice %12 {offsets = [0, 0], sizes = [128, 8], strides = [1, 1]} : vector<128x128xbf16> to vector<128x8xbf16>
    %cst_19 = arith.constant dense<0.000000e+00> : vector<128x8xf32>
    %37 = tpu.matmul %35, %36, %cst_19 {dimension_numbers = #tpu.dot_dimension_numbers<[1], [0], [0], [1], [0, 0, 1, 1], [], []>} : vector<128x128xbf16>, vector<128x8xbf16>, vector<128x8xf32> -> vector<128x8xf32>
    %c0_20 = arith.constant 0 : index
    %c0_21 = arith.constant 0 : index
    %38 = vector.load %arg24[%c0_20, %c0_21] : memref<128x128xf32, #tpu.memory_space<vmem>>, vector<128x8xf32>
    %39 = vector.broadcast %27 : vector<128x1xf32> to vector<128x8xf32>
    %40 = arith.mulf %38, %39 : vector<128x8xf32>
    %41 = arith.addf %40, %37 : vector<128x8xf32>
    %c0_22 = arith.constant 0 : index
    %c0_23 = arith.constant 0 : index
    %42 = vector.load %arg24[%c0_22, %c0_23] : memref<128x128xf32, #tpu.memory_space<vmem>>, vector<128x8xf32>
    tpu.vector_store %arg24[%c0_22, %c0_23], %41 {strides = array<i32>} : memref<128x128xf32, #tpu.memory_space<vmem>>, vector<128x8xf32>,
    %43 = vector.shape_cast %25 : vector<128x1xf32> to vector<128x1xf32>
    %44 = vector.broadcast %43 : vector<128x1xf32> to vector<128x8xf32>
    %c0_24 = arith.constant 0 : index
    %c0_25 = arith.constant 0 : index
    %45 = vector.load %arg22[%c0_24, %c0_25] : memref<128x128xf32, #tpu.memory_space<vmem>>, vector<128x8xf32>
    tpu.vector_store %arg22[%c0_24, %c0_25], %44 {strides = array<i32>} : memref<128x128xf32, #tpu.memory_space<vmem>>, vector<128x8xf32>,
    %46 = vector.shape_cast %34 : vector<128x1xf32> to vector<128x1xf32>
    %47 = vector.broadcast %46 : vector<128x1xf32> to vector<128x8xf32>
    %c0_26 = arith.constant 0 : index
    %c0_27 = arith.constant 0 : index
    %48 = vector.load %arg23[%c0_26, %c0_27] : memref<128x128xf32, #tpu.memory_space<vmem>>, vector<128x8xf32>
    tpu.vector_store %arg23[%c0_26, %c0_27], %47 {strides = array<i32>} : memref<128x128xf32, #tpu.memory_space<vmem>>, vector<128x8xf32>,
    %49 = vector.extract_strided_slice %13 {offsets = [0, 8], sizes = [128, 8], strides = [1, 1]} : vector<128x128xbf16> to vector<128x8xbf16>
    %50 = vector.extract_strided_slice %11 {offsets = [0, 8], sizes = [128, 8], strides = [1, 1]} : vector<128x128xbf16> to vector<128x8xbf16>
    %cst_28 = arith.constant dense<0.000000e+00> : vector<128x128xf32>
    %51 = tpu.matmul %49, %50, %cst_28 {dimension_numbers = #tpu.dot_dimension_numbers<[1], [1], [0], [0], [0, 0, 1, 0], [], []>} : vector<128x8xbf16>, vector<128x8xbf16>, vector<128x128xf32> -> vector<128x128xf32>
    %52 = vector.broadcast %15 : vector<1x128xf32> to vector<128x128xf32>
    %53 = arith.addf %51, %52 : vector<128x128xf32>
    %c0_29 = arith.constant 0 : index
    %c8 = arith.constant 8 : index
    %54 = vector.load %arg22[%c0_29, %c8] : memref<128x128xf32, #tpu.memory_space<vmem>>, vector<128x1xf32>
    %c0_30 = arith.constant 0 : index
    %c8_31 = arith.constant 8 : index
    %55 = vector.load %arg23[%c0_30, %c8_31] : memref<128x128xf32, #tpu.memory_space<vmem>>, vector<128x1xf32>
    %cst_32 = arith.constant dense<0xFF800000> : vector<128xf32>
    %56 = vector.multi_reduction <maximumf>, %53, %cst_32 [1] : vector<128x128xf32> to vector<128xf32>
    %57 = vector.shape_cast %56 : vector<128xf32> to vector<128x1xf32>
    %58 = arith.maximumf %54, %57 : vector<128x1xf32>
    %59 = arith.subf %54, %58 : vector<128x1xf32>
    %60 = math.exp %59 : vector<128x1xf32>
    %61 = vector.broadcast %58 : vector<128x1xf32> to vector<128x128xf32>
    %62 = arith.subf %53, %61 : vector<128x128xf32>
    %63 = math.exp %62 : vector<128x128xf32>
    %64 = arith.mulf %60, %55 : vector<128x1xf32>
    %cst_33 = arith.constant dense<0.000000e+00> : vector<128xf32>
    %65 = vector.multi_reduction <add>, %63, %cst_33 [1] : vector<128x128xf32> to vector<128xf32>
    %66 = vector.shape_cast %65 : vector<128xf32> to vector<128x1xf32>
    %67 = arith.addf %64, %66 : vector<128x1xf32>
    %68 = arith.truncf %63 : vector<128x128xf32> to vector<128x128xbf16>
    %69 = vector.extract_strided_slice %12 {offsets = [0, 8], sizes = [128, 8], strides = [1, 1]} : vector<128x128xbf16> to vector<128x8xbf16>
    %cst_34 = arith.constant dense<0.000000e+00> : vector<128x8xf32>
    %70 = tpu.matmul %68, %69, %cst_34 {dimension_numbers = #tpu.dot_dimension_numbers<[1], [0], [0], [1], [0, 0, 1, 1], [], []>} : vector<128x128xbf16>, vector<128x8xbf16>, vector<128x8xf32> -> vector<128x8xf32>
    %c0_35 = arith.constant 0 : index
    %c8_36 = arith.constant 8 : index
    %71 = vector.load %arg24[%c0_35, %c8_36] : memref<128x128xf32, #tpu.memory_space<vmem>>, vector<128x8xf32>
    %72 = vector.broadcast %60 : vector<128x1xf32> to vector<128x8xf32>
    %73 = arith.mulf %71, %72 : vector<128x8xf32>
    %74 = arith.addf %73, %70 : vector<128x8xf32>
    %c0_37 = arith.constant 0 : index
    %c8_38 = arith.constant 8 : index
    %75 = vector.load %arg24[%c0_37, %c8_38] : memref<128x128xf32, #tpu.memory_space<vmem>>, vector<128x8xf32>
    tpu.vector_store %arg24[%c0_37, %c8_38], %74 {strides = array<i32>} : memref<128x128xf32, #tpu.memory_space<vmem>>, vector<128x8xf32>,
    %76 = vector.shape_cast %58 : vector<128x1xf32> to vector<128x1xf32>
    %77 = vector.broadcast %76 : vector<128x1xf32> to vector<128x8xf32>
    %c0_39 = arith.constant 0 : index
    %c8_40 = arith.constant 8 : index
    %78 = vector.load %arg22[%c0_39, %c8_40] : memref<128x128xf32, #tpu.memory_space<vmem>>, vector<128x8xf32>
    tpu.vector_store %arg22[%c0_39, %c8_40], %77 {strides = array<i32>} : memref<128x128xf32, #tpu.memory_space<vmem>>, vector<128x8xf32>,
    %79 = vector.shape_cast %67 : vector<128x1xf32> to vector<128x1xf32>
    %80 = vector.broadcast %79 : vector<128x1xf32> to vector<128x8xf32>
    %c0_41 = arith.constant 0 : index
    %c8_42 = arith.constant 8 : index
    %81 = vector.load %arg23[%c0_41, %c8_42] : memref<128x128xf32, #tpu.memory_space<vmem>>, vector<128x8xf32>
    tpu.vector_store %arg23[%c0_41, %c8_42], %80 {strides = array<i32>} : memref<128x128xf32, #tpu.memory_space<vmem>>, vector<128x8xf32>,
    %82 = vector.extract_strided_slice %13 {offsets = [0, 16], sizes = [128, 8], strides = [1, 1]} : vector<128x128xbf16> to vector<128x8xbf16>
    %83 = vector.extract_strided_slice %11 {offsets = [0, 16], sizes = [128, 8], strides = [1, 1]} : vector<128x128xbf16> to vector<128x8xbf16>
    %cst_43 = arith.constant dense<0.000000e+00> : vector<128x128xf32>
    %84 = tpu.matmul %82, %83, %cst_43 {dimension_numbers = #tpu.dot_dimension_numbers<[1], [1], [0], [0], [0, 0, 1, 0], [], []>} : vector<128x8xbf16>, vector<128x8xbf16>, vector<128x128xf32> -> vector<128x128xf32>
    %85 = vector.broadcast %15 : vector<1x128xf32> to vector<128x128xf32>
    %86 = arith.addf %84, %85 : vector<128x128xf32>
    %c0_44 = arith.constant 0 : index
    %c16 = arith.constant 16 : index
    %87 = vector.load %arg22[%c0_44, %c16] : memref<128x128xf32, #tpu.memory_space<vmem>>, vector<128x1xf32>
    %c0_45 = arith.constant 0 : index
    %c16_46 = arith.constant 16 : index
    %88 = vector.load %arg23[%c0_45, %c16_46] : memref<128x128xf32, #tpu.memory_space<vmem>>, vector<128x1xf32>
    %cst_47 = arith.constant dense<0xFF800000> : vector<128xf32>
    %89 = vector.multi_reduction <maximumf>, %86, %cst_47 [1] : vector<128x128xf32> to vector<128xf32>
    %90 = vector.shape_cast %89 : vector<128xf32> to vector<128x1xf32>
    %91 = arith.maximumf %87, %90 : vector<128x1xf32>
    %92 = arith.subf %87, %91 : vector<128x1xf32>
    %93 = math.exp %92 : vector<128x1xf32>
    %94 = vector.broadcast %91 : vector<128x1xf32> to vector<128x128xf32>
    %95 = arith.subf %86, %94 : vector<128x128xf32>
    %96 = math.exp %95 : vector<128x128xf32>
    %97 = arith.mulf %93, %88 : vector<128x1xf32>
    %cst_48 = arith.constant dense<0.000000e+00> : vector<128xf32>
    %98 = vector.multi_reduction <add>, %96, %cst_48 [1] : vector<128x128xf32> to vector<128xf32>
    %99 = vector.shape_cast %98 : vector<128xf32> to vector<128x1xf32>
    %100 = arith.addf %97, %99 : vector<128x1xf32>
    %101 = arith.truncf %96 : vector<128x128xf32> to vector<128x128xbf16>
    %102 = vector.extract_strided_slice %12 {offsets = [0, 16], sizes = [128, 8], strides = [1, 1]} : vector<128x128xbf16> to vector<128x8xbf16>
    %cst_49 = arith.constant dense<0.000000e+00> : vector<128x8xf32>
    %103 = tpu.matmul %101, %102, %cst_49 {dimension_numbers = #tpu.dot_dimension_numbers<[1], [0], [0], [1], [0, 0, 1, 1], [], []>} : vector<128x128xbf16>, vector<128x8xbf16>, vector<128x8xf32> -> vector<128x8xf32>
    %c0_50 = arith.constant 0 : index
    %c16_51 = arith.constant 16 : index
    %104 = vector.load %arg24[%c0_50, %c16_51] : memref<128x128xf32, #tpu.memory_space<vmem>>, vector<128x8xf32>
    %105 = vector.broadcast %93 : vector<128x1xf32> to vector<128x8xf32>
    %106 = arith.mulf %104, %105 : vector<128x8xf32>
    %107 = arith.addf %106, %103 : vector<128x8xf32>
    %c0_52 = arith.constant 0 : index
    %c16_53 = arith.constant 16 : index
    %108 = vector.load %arg24[%c0_52, %c16_53] : memref<128x128xf32, #tpu.memory_space<vmem>>, vector<128x8xf32>
    tpu.vector_store %arg24[%c0_52, %c16_53], %107 {strides = array<i32>} : memref<128x128xf32, #tpu.memory_space<vmem>>, vector<128x8xf32>,
    %109 = vector.shape_cast %91 : vector<128x1xf32> to vector<128x1xf32>
    %110 = vector.broadcast %109 : vector<128x1xf32> to vector<128x8xf32>
    %c0_54 = arith.constant 0 : index
    %c16_55 = arith.constant 16 : index
    %111 = vector.load %arg22[%c0_54, %c16_55] : memref<128x128xf32, #tpu.memory_space<vmem>>, vector<128x8xf32>
    tpu.vector_store %arg22[%c0_54, %c16_55], %110 {strides = array<i32>} : memref<128x128xf32, #tpu.memory_space<vmem>>, vector<128x8xf32>,
    %112 = vector.shape_cast %100 : vector<128x1xf32> to vector<128x1xf32>
    %113 = vector.broadcast %112 : vector<128x1xf32> to vector<128x8xf32>
    %c0_56 = arith.constant 0 : index
    %c16_57 = arith.constant 16 : index
    %114 = vector.load %arg23[%c0_56, %c16_57] : memref<128x128xf32, #tpu.memory_space<vmem>>, vector<128x8xf32>
    tpu.vector_store %arg23[%c0_56, %c16_57], %113 {strides = array<i32>} : memref<128x128xf32, #tpu.memory_space<vmem>>, vector<128x8xf32>,
    %115 = vector.extract_strided_slice %13 {offsets = [0, 24], sizes = [128, 8], strides = [1, 1]} : vector<128x128xbf16> to vector<128x8xbf16>
    %116 = vector.extract_strided_slice %11 {offsets = [0, 24], sizes = [128, 8], strides = [1, 1]} : vector<128x128xbf16> to vector<128x8xbf16>
    %cst_58 = arith.constant dense<0.000000e+00> : vector<128x128xf32>
    %117 = tpu.matmul %115, %116, %cst_58 {dimension_numbers = #tpu.dot_dimension_numbers<[1], [1], [0], [0], [0, 0, 1, 0], [], []>} : vector<128x8xbf16>, vector<128x8xbf16>, vector<128x128xf32> -> vector<128x128xf32>
    %118 = vector.broadcast %15 : vector<1x128xf32> to vector<128x128xf32>
    %119 = arith.addf %117, %118 : vector<128x128xf32>
    %c0_59 = arith.constant 0 : index
    %c24 = arith.constant 24 : index
    %120 = vector.load %arg22[%c0_59, %c24] : memref<128x128xf32, #tpu.memory_space<vmem>>, vector<128x1xf32>
    %c0_60 = arith.constant 0 : index
    %c24_61 = arith.constant 24 : index
    %121 = vector.load %arg23[%c0_60, %c24_61] : memref<128x128xf32, #tpu.memory_space<vmem>>, vector<128x1xf32>
    %cst_62 = arith.constant dense<0xFF800000> : vector<128xf32>
    %122 = vector.multi_reduction <maximumf>, %119, %cst_62 [1] : vector<128x128xf32> to vector<128xf32>
    %123 = vector.shape_cast %122 : vector<128xf32> to vector<128x1xf32>
    %124 = arith.maximumf %120, %123 : vector<128x1xf32>
    %125 = arith.subf %120, %124 : vector<128x1xf32>
    %126 = math.exp %125 : vector<128x1xf32>
    %127 = vector.broadcast %124 : vector<128x1xf32> to vector<128x128xf32>
    %128 = arith.subf %119, %127 : vector<128x128xf32>
    %129 = math.exp %128 : vector<128x128xf32>
    %130 = arith.mulf %126, %121 : vector<128x1xf32>
    %cst_63 = arith.constant dense<0.000000e+00> : vector<128xf32>
    %131 = vector.multi_reduction <add>, %129, %cst_63 [1] : vector<128x128xf32> to vector<128xf32>
    %132 = vector.shape_cast %131 : vector<128xf32> to vector<128x1xf32>
    %133 = arith.addf %130, %132 : vector<128x1xf32>
    %134 = arith.truncf %129 : vector<128x128xf32> to vector<128x128xbf16>
    %135 = vector.extract_strided_slice %12 {offsets = [0, 24], sizes = [128, 8], strides = [1, 1]} : vector<128x128xbf16> to vector<128x8xbf16>
    %cst_64 = arith.constant dense<0.000000e+00> : vector<128x8xf32>
    %136 = tpu.matmul %134, %135, %cst_64 {dimension_numbers = #tpu.dot_dimension_numbers<[1], [0], [0], [1], [0, 0, 1, 1], [], []>} : vector<128x128xbf16>, vector<128x8xbf16>, vector<128x8xf32> -> vector<128x8xf32>
    %c0_65 = arith.constant 0 : index
    %c24_66 = arith.constant 24 : index
    %137 = vector.load %arg24[%c0_65, %c24_66] : memref<128x128xf32, #tpu.memory_space<vmem>>, vector<128x8xf32>
    %138 = vector.broadcast %126 : vector<128x1xf32> to vector<128x8xf32>
    %139 = arith.mulf %137, %138 : vector<128x8xf32>
    %140 = arith.addf %139, %136 : vector<128x8xf32>
    %c0_67 = arith.constant 0 : index
    %c24_68 = arith.constant 24 : index
    %141 = vector.load %arg24[%c0_67, %c24_68] : memref<128x128xf32, #tpu.memory_space<vmem>>, vector<128x8xf32>
    tpu.vector_store %arg24[%c0_67, %c24_68], %140 {strides = array<i32>} : memref<128x128xf32, #tpu.memory_space<vmem>>, vector<128x8xf32>,
    %142 = vector.shape_cast %124 : vector<128x1xf32> to vector<128x1xf32>
    %143 = vector.broadcast %142 : vector<128x1xf32> to vector<128x8xf32>
    %c0_69 = arith.constant 0 : index
    %c24_70 = arith.constant 24 : index
    %144 = vector.load %arg22[%c0_69, %c24_70] : memref<128x128xf32, #tpu.memory_space<vmem>>, vector<128x8xf32>
    tpu.vector_store %arg22[%c0_69, %c24_70], %143 {strides = array<i32>} : memref<128x128xf32, #tpu.memory_space<vmem>>, vector<128x8xf32>,
    %145 = vector.shape_cast %133 : vector<128x1xf32> to vector<128x1xf32>
    %146 = vector.broadcast %145 : vector<128x1xf32> to vector<128x8xf32>
    %c0_71 = arith.constant 0 : index
    %c24_72 = arith.constant 24 : index
    %147 = vector.load %arg23[%c0_71, %c24_72] : memref<128x128xf32, #tpu.memory_space<vmem>>, vector<128x8xf32>
    tpu.vector_store %arg23[%c0_71, %c24_72], %146 {strides = array<i32>} : memref<128x128xf32, #tpu.memory_space<vmem>>, vector<128x8xf32>,
    %c0_i32_73 = arith.constant 0 : i32
    %148 = arith.cmpi eq, %arg2, %c0_i32_73 : i32
    %149 = arith.extui %148 : i1 to i32
    %c0_i32_74 = arith.constant 0 : i32
    %150 = arith.cmpi ne, %149, %c0_i32_74 : i32
    scf.if %150 {
      %c0_75 = arith.constant 0 : index
      %c0_76 = arith.constant 0 : index
      %c0_77 = arith.constant 0 : index
      %151 = vector.load %arg3[%c0_75, %c0_76, %c0_77] : memref<1x128x128xbf16, #tpu.memory_space<vmem>>, vector<1x128x128xbf16>
      %152 = vector.shape_cast %151 : vector<1x128x128xbf16> to vector<128x128xbf16>
      %153 = arith.extf %152 : vector<128x128xbf16> to vector<128x128xf32>
      %c0_78 = arith.constant 0 : index
      %c0_79 = arith.constant 0 : index
      %154 = vector.load %arg24[%c0_78, %c0_79] : memref<128x128xf32, #tpu.memory_space<vmem>>, vector<128x128xf32>
      %c0_80 = arith.constant 0 : index
      %c0_81 = arith.constant 0 : index
      %155 = vector.load %arg23[%c0_80, %c0_81] : memref<128x128xf32, #tpu.memory_space<vmem>>, vector<128x128xf32>
      %156 = tpu.reciprocal %155 {approx = true} : vector<128x128xf32> -> vector<128x128xf32>
      %157 = arith.mulf %154, %156 : vector<128x128xf32>
      %158 = arith.truncf %157 : vector<128x128xf32> to vector<128x128xbf16>
      %c0_82 = arith.constant 0 : index
      %c0_83 = arith.constant 0 : index
      %159 = vector.load %arg10[%c0_82, %c0_83] : memref<128x128xbf16, #tpu.memory_space<vmem>>, vector<128x128xbf16>
      %cst_84 = arith.constant dense<0.000000e+00> : vector<128x128xf32>
      %160 = tpu.matmul %158, %159, %cst_84 {dimension_numbers = #tpu.dot_dimension_numbers<[1], [0], [0], [1], [0, 0, 1, 1], [], []>} : vector<128x128xbf16>, vector<128x128xbf16>, vector<128x128xf32> -> vector<128x128xf32>
      %c0_85 = arith.constant 0 : index
      %c0_86 = arith.constant 0 : index
      %161 = vector.load %arg11[%c0_85, %c0_86] : memref<1x128xf32, #tpu.memory_space<vmem>>, vector<1x128xf32>
      %162 = vector.broadcast %161 : vector<1x128xf32> to vector<128x128xf32>
      %163 = arith.addf %160, %162 : vector<128x128xf32>
      %164 = arith.addf %153, %163 : vector<128x128xf32>
      %cst_87 = arith.constant dense<0.000000e+00> : vector<128xf32>
      %165 = vector.multi_reduction <add>, %164, %cst_87 [1] : vector<128x128xf32> to vector<128xf32>
      %166 = vector.shape_cast %165 : vector<128xf32> to vector<128x1xf32>
      %cst_88 = arith.constant 3.125000e-02 : f32
      %167 = vector.broadcast %cst_88 : f32 to vector<128x1xf32>
      %168 = arith.mulf %166, %167 : vector<128x1xf32>
      %169 = arith.mulf %164, %164 : vector<128x128xf32>
      %cst_89 = arith.constant dense<0.000000e+00> : vector<128xf32>
      %170 = vector.multi_reduction <add>, %169, %cst_89 [1] : vector<128x128xf32> to vector<128xf32>
      %171 = vector.shape_cast %170 : vector<128xf32> to vector<128x1xf32>
      %cst_90 = arith.constant 3.125000e-02 : f32
      %172 = vector.broadcast %cst_90 : f32 to vector<128x1xf32>
      %173 = arith.mulf %171, %172 : vector<128x1xf32>
      %174 = arith.mulf %168, %168 : vector<128x1xf32>
      %175 = arith.subf %173, %174 : vector<128x1xf32>
      %cst_91 = arith.constant 0.000000e+00 : f32
      %176 = vector.broadcast %cst_91 : f32 to vector<128x1xf32>
      %177 = arith.maximumf %175, %176 : vector<128x1xf32>
      %178 = vector.broadcast %168 : vector<128x1xf32> to vector<128x128xf32>
      %179 = arith.subf %164, %178 : vector<128x128xf32>
      %cst_92 = arith.constant 9.99999974E-6 : f32
      %180 = vector.broadcast %cst_92 : f32 to vector<128x1xf32>
      %181 = arith.addf %177, %180 : vector<128x1xf32>
      %182 = math.rsqrt %181 : vector<128x1xf32>
      %183 = vector.broadcast %182 : vector<128x1xf32> to vector<128x128xf32>
      %184 = arith.mulf %179, %183 : vector<128x128xf32>
      %c0_93 = arith.constant 0 : index
      %c0_94 = arith.constant 0 : index
      %185 = vector.load %arg12[%c0_93, %c0_94] : memref<1x128xf32, #tpu.memory_space<vmem>>, vector<1x128xf32>
      %186 = vector.broadcast %185 : vector<1x128xf32> to vector<128x128xf32>
      %187 = arith.mulf %184, %186 : vector<128x128xf32>
      %c0_95 = arith.constant 0 : index
      %c0_96 = arith.constant 0 : index
      %188 = vector.load %arg13[%c0_95, %c0_96] : memref<1x128xf32, #tpu.memory_space<vmem>>, vector<1x128xf32>
      %189 = vector.broadcast %188 : vector<1x128xf32> to vector<128x128xf32>
      %190 = arith.addf %187, %189 : vector<128x128xf32>
      %191 = arith.truncf %190 : vector<128x128xf32> to vector<128x128xbf16>
      %c0_97 = arith.constant 0 : index
      %c0_98 = arith.constant 0 : index
      %192 = vector.load %arg14[%c0_97, %c0_98] : memref<128x128xbf16, #tpu.memory_space<vmem>>, vector<128x128xbf16>
      %cst_99 = arith.constant dense<0.000000e+00> : vector<128x128xf32>
      %193 = tpu.matmul %191, %192, %cst_99 {dimension_numbers = #tpu.dot_dimension_numbers<[1], [0], [0], [1], [0, 0, 1, 1], [], []>} : vector<128x128xbf16>, vector<128x128xbf16>, vector<128x128xf32> -> vector<128x128xf32>
      %c0_100 = arith.constant 0 : index
      %c0_101 = arith.constant 0 : index
      %194 = vector.load %arg15[%c0_100, %c0_101] : memref<1x128xf32, #tpu.memory_space<vmem>>, vector<1x128xf32>
      %195 = vector.broadcast %194 : vector<1x128xf32> to vector<128x128xf32>
      %196 = arith.addf %193, %195 : vector<128x128xf32>
      %cst_102 = arith.constant 0.000000e+00 : f32
      %197 = vector.broadcast %cst_102 : f32 to vector<128x128xf32>
      %198 = arith.maximumf %196, %197 : vector<128x128xf32>
      %199 = arith.truncf %198 : vector<128x128xf32> to vector<128x128xbf16>
      %c0_103 = arith.constant 0 : index
      %c0_104 = arith.constant 0 : index
      %200 = vector.load %arg16[%c0_103, %c0_104] : memref<128x128xbf16, #tpu.memory_space<vmem>>, vector<128x128xbf16>
      %cst_105 = arith.constant dense<0.000000e+00> : vector<128x128xf32>
      %201 = tpu.matmul %199, %200, %cst_105 {dimension_numbers = #tpu.dot_dimension_numbers<[1], [0], [0], [1], [0, 0, 1, 1], [], []>} : vector<128x128xbf16>, vector<128x128xbf16>, vector<128x128xf32> -> vector<128x128xf32>
      %c0_106 = arith.constant 0 : index
      %c0_107 = arith.constant 0 : index
      %202 = vector.load %arg17[%c0_106, %c0_107] : memref<1x128xf32, #tpu.memory_space<vmem>>, vector<1x128xf32>
      %203 = vector.broadcast %202 : vector<1x128xf32> to vector<128x128xf32>
      %204 = arith.addf %201, %203 : vector<128x128xf32>
      %205 = arith.addf %190, %204 : vector<128x128xf32>
      %cst_108 = arith.constant dense<0.000000e+00> : vector<128xf32>
      %206 = vector.multi_reduction <add>, %205, %cst_108 [1] : vector<128x128xf32> to vector<128xf32>
      %207 = vector.shape_cast %206 : vector<128xf32> to vector<128x1xf32>
      %cst_109 = arith.constant 3.125000e-02 : f32
      %208 = vector.broadcast %cst_109 : f32 to vector<128x1xf32>
      %209 = arith.mulf %207, %208 : vector<128x1xf32>
      %210 = arith.mulf %205, %205 : vector<128x128xf32>
      %cst_110 = arith.constant dense<0.000000e+00> : vector<128xf32>
      %211 = vector.multi_reduction <add>, %210, %cst_110 [1] : vector<128x128xf32> to vector<128xf32>
      %212 = vector.shape_cast %211 : vector<128xf32> to vector<128x1xf32>
      %cst_111 = arith.constant 3.125000e-02 : f32
      %213 = vector.broadcast %cst_111 : f32 to vector<128x1xf32>
      %214 = arith.mulf %212, %213 : vector<128x1xf32>
      %215 = arith.mulf %209, %209 : vector<128x1xf32>
      %216 = arith.subf %214, %215 : vector<128x1xf32>
      %cst_112 = arith.constant 0.000000e+00 : f32
      %217 = vector.broadcast %cst_112 : f32 to vector<128x1xf32>
      %218 = arith.maximumf %216, %217 : vector<128x1xf32>
      %219 = vector.broadcast %209 : vector<128x1xf32> to vector<128x128xf32>
      %220 = arith.subf %205, %219 : vector<128x128xf32>
      %cst_113 = arith.constant 9.99999974E-6 : f32
      %221 = vector.broadcast %cst_113 : f32 to vector<128x1xf32>
      %222 = arith.addf %218, %221 : vector<128x1xf32>
      %223 = math.rsqrt %222 : vector<128x1xf32>
      %224 = vector.broadcast %223 : vector<128x1xf32> to vector<128x128xf32>
      %225 = arith.mulf %220, %224 : vector<128x128xf32>
      %c0_114 = arith.constant 0 : index
      %c0_115 = arith.constant 0 : index
      %226 = vector.load %arg18[%c0_114, %c0_115] : memref<1x128xf32, #tpu.memory_space<vmem>>, vector<1x128xf32>
      %227 = vector.broadcast %226 : vector<1x128xf32> to vector<128x128xf32>
      %228 = arith.mulf %225, %227 : vector<128x128xf32>
      %c0_116 = arith.constant 0 : index
      %c0_117 = arith.constant 0 : index
      %229 = vector.load %arg19[%c0_116, %c0_117] : memref<1x128xf32, #tpu.memory_space<vmem>>, vector<1x128xf32>
      %230 = vector.broadcast %229 : vector<1x128xf32> to vector<128x128xf32>
      %231 = arith.addf %228, %230 : vector<128x128xf32>
      %232 = arith.truncf %231 : vector<128x128xf32> to vector<128x128xbf16>
      %c0_118 = arith.constant 0 : index
      %c0_119 = arith.constant 0 : index
      %c0_120 = arith.constant 0 : index
      %233 = vector.load %arg20[%c0_118, %c0_119, %c0_120] : memref<1x128x128xbf16, #tpu.memory_space<vmem>>, vector<1x128x128xbf16>
      %234 = vector.shape_cast %233 : vector<1x128x128xbf16> to vector<128x128xbf16>
      %235 = vector.shape_cast %232 : vector<128x128xbf16> to vector<1x128x128xbf16>
      tpu.vector_store %arg20[%c0_118, %c0_119, %c0_120], %235 {strides = array<i32>} : memref<1x128x128xbf16, #tpu.memory_space<vmem>>, vector<1x128x128xbf16>,
    } else {
    }
    return
  }
  func.func @transform_0(%arg0: i32, %arg1: i32, %arg2: i32) -> (i32, i32, i32) {
    %c0_i32 = arith.constant 0 : i32
    %c0_i32_0 = arith.constant 0 : i32
    return %arg0, %arg1, %c0_i32 : i32, i32, i32
  }
  func.func @transform_1(%arg0: i32, %arg1: i32, %arg2: i32) -> (i32, i32, i32) {
    %c0_i32 = arith.constant 0 : i32
    %c0_i32_0 = arith.constant 0 : i32
    return %arg0, %arg2, %c0_i32 : i32, i32, i32
  }
  func.func @transform_2(%arg0: i32, %arg1: i32, %arg2: i32) -> (i32, i32, i32) {
    %c0_i32 = arith.constant 0 : i32
    %c0_i32_0 = arith.constant 0 : i32
    return %arg0, %c0_i32, %arg2 : i32, i32, i32
  }
  func.func @transform_3(%arg0: i32, %arg1: i32, %arg2: i32) -> (i32, i32) {
    %c0_i32 = arith.constant 0 : i32
    %c0_i32_0 = arith.constant 0 : i32
    %c0_i32_1 = arith.constant 0 : i32
    return %c0_i32, %c0_i32_0 : i32, i32
  }
  func.func @transform_4(%arg0: i32, %arg1: i32, %arg2: i32) -> (i32, i32) {
    %c0_i32 = arith.constant 0 : i32
    %c0_i32_0 = arith.constant 0 : i32
    %c0_i32_1 = arith.constant 0 : i32
    return %c0_i32, %c0_i32_0 : i32, i32
  }
  func.func @transform_5(%arg0: i32, %arg1: i32, %arg2: i32) -> (i32, i32) {
    %c0_i32 = arith.constant 0 : i32
    %c0_i32_0 = arith.constant 0 : i32
    %c0_i32_1 = arith.constant 0 : i32
    return %c0_i32, %c0_i32_0 : i32, i32
  }
  func.func @transform_6(%arg0: i32, %arg1: i32, %arg2: i32) -> (i32, i32) {
    %c0_i32 = arith.constant 0 : i32
    %c0_i32_0 = arith.constant 0 : i32
    %c0_i32_1 = arith.constant 0 : i32
    return %c0_i32, %c0_i32_0 : i32, i32
  }
  func.func @transform_7(%arg0: i32, %arg1: i32, %arg2: i32) -> (i32, i32) {
    %c0_i32 = arith.constant 0 : i32
    %c0_i32_0 = arith.constant 0 : i32
    %c0_i32_1 = arith.constant 0 : i32
    return %c0_i32, %c0_i32_0 : i32, i32
  }
  func.func @transform_8(%arg0: i32, %arg1: i32, %arg2: i32) -> (i32, i32) {
    %c0_i32 = arith.constant 0 : i32
    %c0_i32_0 = arith.constant 0 : i32
    %c0_i32_1 = arith.constant 0 : i32
    return %c0_i32, %c0_i32_0 : i32, i32
  }
  func.func @transform_9(%arg0: i32, %arg1: i32, %arg2: i32) -> (i32, i32) {
    %c0_i32 = arith.constant 0 : i32
    %c0_i32_0 = arith.constant 0 : i32
    %c0_i32_1 = arith.constant 0 : i32
    return %c0_i32, %c0_i32_0 : i32, i32
  }
  func.func @transform_10(%arg0: i32, %arg1: i32, %arg2: i32) -> (i32, i32) {
    %c0_i32 = arith.constant 0 : i32
    %c0_i32_0 = arith.constant 0 : i32
    %c0_i32_1 = arith.constant 0 : i32
    return %c0_i32, %c0_i32_0 : i32, i32
  }
  func.func @transform_11(%arg0: i32, %arg1: i32, %arg2: i32) -> (i32, i32) {
    %c0_i32 = arith.constant 0 : i32
    %c0_i32_0 = arith.constant 0 : i32
    %c0_i32_1 = arith.constant 0 : i32
    return %c0_i32, %c0_i32_0 : i32, i32
  }
  func.func @transform_12(%arg0: i32, %arg1: i32, %arg2: i32) -> (i32, i32) {
    %c0_i32 = arith.constant 0 : i32
    %c0_i32_0 = arith.constant 0 : i32
    %c0_i32_1 = arith.constant 0 : i32
    return %c0_i32, %c0_i32_0 : i32, i32
  }
  func.func @transform_13(%arg0: i32, %arg1: i32, %arg2: i32) -> (i32, i32) {
    %c0_i32 = arith.constant 0 : i32
    %c0_i32_0 = arith.constant 0 : i32
    %c0_i32_1 = arith.constant 0 : i32
    return %c0_i32, %c0_i32_0 : i32, i32
  }
  func.func @transform_14(%arg0: i32, %arg1: i32, %arg2: i32) -> (i32, i32) {
    %c0_i32 = arith.constant 0 : i32
    %c0_i32_0 = arith.constant 0 : i32
    %c0_i32_1 = arith.constant 0 : i32
    return %c0_i32, %c0_i32_0 : i32, i32
  }
  func.func @transform_15(%arg0: i32, %arg1: i32, %arg2: i32) -> (i32, i32) {
    %c0_i32 = arith.constant 0 : i32
    %c0_i32_0 = arith.constant 0 : i32
    %c0_i32_1 = arith.constant 0 : i32
    return %c0_i32, %c0_i32_0 : i32, i32
  }
  func.func @transform_16(%arg0: i32, %arg1: i32, %arg2: i32) -> (i32, i32) {
    %c0_i32 = arith.constant 0 : i32
    %c0_i32_0 = arith.constant 0 : i32
    %c0_i32_1 = arith.constant 0 : i32
    return %c0_i32, %c0_i32_0 : i32, i32
  }
  func.func @transform_17(%arg0: i32, %arg1: i32, %arg2: i32) -> (i32, i32, i32) {
    %c0_i32 = arith.constant 0 : i32
    %c0_i32_0 = arith.constant 0 : i32
    return %arg0, %arg1, %c0_i32 : i32, i32, i32
  }
}

</mosaic_0001>

<llo_original>
// kernel: tpu_custom_call.1
$region0: #{tpu_custom_call.1}
  #allocation0 [shape = 'u32[]', space=smem, size = 0x4, offset = 0x4, fixed_abs, tag = 'smem constant byte address 0x4 - core index']
  #allocation1 [shape = 'u32[144,128]{1,0:T(1,128)}', space=vmem, size = 0x12000, scoped, tag = 'internal scratch']
  %s0 = inlined_call_operand.hbm [shape: f32[8,128], index: 0, kind: input, shape index: {}]
  %s1 = inlined_call_operand.hbm [shape: f32[16,128], index: 1, kind: output, shape index: {}]
  %s2 = sld [smem:[#allocation0]]
  $region41: #{tpu_custom_call.1} parent=0
    _
  %s4 = ssub.s32 1, %s2
  %s5 = scalar_select 0, %s4, %s2
  $region1: #{tpu_custom_call.1} parent=0
    #allocation2 [shape = 'u8[4096]{0}', space=vmem, size = 0x1000, scoped, tag = 'input window, operand 0, single buffered']
    #allocation3 [shape = 's32[2]{0}', space=sflag, size = 0x8, scoped, tag = 'scoped memory for tpu_custom_call.1']
    #allocation4 [shape = 's32[2]{0}', space=sflag, size = 0x8, scoped, tag = 'scoped memory for tpu_custom_call.1']
    #allocation5 [shape = 'u8[8192]{0}', space=vmem, size = 0x2000, scoped, tag = 'output window, operand 0']
    %6 = vsyncpa [#allocation3], 0
    %7 = vsyncpa [#allocation4], 0
    %s8 = scalar_lea.sflag [#allocation4], 1
    %9 = vsyncpa %s8, 0
    loop: start=0, step=1, limit=4
    $region2: #{tpu_custom_call.1} parent=1 // loop_pre_header
      _
    $region3: #{tpu_custom_call.1} parent=1 // loop_header
      %s11 = sphi 0, %s15
      %p12 = scmp.ge.s32.totalorder %s11, 4
      %s19 = sphi 0, %s19
      %s21 = sphi 0, %s19
      %s22 = sphi 0, %s21
      %s36 = sphi 0, %s22
      %s42 = sphi 0, %s44
      %s45 = sphi 0, %s42
      %s46 = sphi 0, %s45
      %s62 = sphi 0, %s46
    $region4: #{tpu_custom_call.1} parent=1 // loop_header_branch
      %14 = sbr.rel (%p12) target = $region8
    $region5: #{tpu_custom_call.1} parent=1 // loop_body
      %s16 = ssub.s32 %s11, 1
      %s17 = ssub.s32 %s11, 2
      %s18 = sadd.s32 %s11, 1
      %s20 = sadd.s32 %s19, 1
      %p23 = scmp.eq.s32.totalorder %s11, 1
      %p24 = scmp.ne.s32.totalorder %s19, %s21
      %p25 = scmp.eq.s32.totalorder %s11, 0
      %p26 = por %p24, %p25
      %p27 = scmp.ne.s32.totalorder %s19, %s21
      %p28 = scmp.eq.s32.totalorder %s16, 1
      %p29 = por %p27, %p28
      %p30 = scmp.ne.s32.totalorder %s21, %s22
      %p31 = scmp.eq.s32.totalorder %s16, 0
      %p32 = por %p30, %p31
      %p33 = scmp.ne.s32.totalorder %s21, %s22
      %p34 = scmp.eq.s32.totalorder %s17, 1
      %p35 = por %p33, %p34
      %p37 = scmp.ne.s32.totalorder %s22, %s36
      %p38 = scmp.eq.s32.totalorder %s17, 0
      %p39 = por %p37, %p38
      %s40 = ssub.s32 %s11, %s18
      %p41 = scmp.eq.s32.totalorder %s40, 0
      %s43 = sadd.s32 %s42, 1
      %s44 = scalar_select %p41, %s42, %s43
      %p47 = pneg %p41
      %p48 = scmp.eq.s32.totalorder %s11, 1
      %p49 = por %p47, %p48
      %p50 = scmp.ne.s32.totalorder %s42, %s45
      %p51 = scmp.eq.s32.totalorder %s11, 0
      %p52 = por %p50, %p51
      %p53 = scmp.ne.s32.totalorder %s42, %s45
      %p54 = scmp.eq.s32.totalorder %s16, 1
      %p55 = por %p53, %p54
      %p56 = scmp.ne.s32.totalorder %s45, %s46
      %p57 = scmp.eq.s32.totalorder %s16, 0
      %p58 = por %p56, %p57
      %p59 = scmp.ne.s32.totalorder %s45, %s46
      %p60 = scmp.eq.s32.totalorder %s17, 1
      %p61 = por %p59, %p60
      %p63 = scmp.ne.s32.totalorder %s46, %s62
      %p64 = scmp.eq.s32.totalorder %s17, 0
      %p65 = por %p63, %p64
      %p66 = scmp.le.s32.totalorder 1, %s11
      %p67 = scmp.lt.s32.totalorder %s11, 3
      %p68 = pnand %p66, %p67
      %p69 = pneg %p68
      // Predicated region
      $region9: #{tpu_custom_call.1} parent=5 // pred_check
        _
      $region10: #{tpu_custom_call.1} parent=5 // pred_check_branch
        %71 = sbr.rel (%p68) target = $region12
      $region11: #{tpu_custom_call.1} parent=5 // pred_region
        %s72 = ssub.s32 %s11, 1
        // Predicated region
        $region13: #{tpu_custom_call.1} parent=11 // pred_check
          %p73 = pneg %p32
        $region14: #{tpu_custom_call.1} parent=11 // pred_check_branch
          %75 = sbr.rel (%p73) target = $region16
        $region15: #{tpu_custom_call.1} parent=11 // pred_region
          %s77 = ssub.s32 128, 128
          %78 = vsyncadd [#allocation3], %s77
          %s80 = sshll.u32 [#allocation2], 4
          %s81 = int_to_ptr.vmem [resolvable:$true] %s80
          %83 = dma.hbm_to_vmem [thread:$0]  %s0, 128, %s81, [#allocation3]
        $region16: #{tpu_custom_call.1} parent=11 // pred_fallthru
          _
      $region12: #{tpu_custom_call.1} parent=5 // pred_fallthru
        _
      %p84 = scmp.lt.s32.totalorder %s11, 2
      // Predicated region
      $region17: #{tpu_custom_call.1} parent=5 // pred_check
        %p85 = pneg %p84
      $region18: #{tpu_custom_call.1} parent=5 // pred_check_branch
        %87 = sbr.rel (%p85) target = $region20
      $region19: #{tpu_custom_call.1} parent=5 // pred_region
        _
      $region20: #{tpu_custom_call.1} parent=5 // pred_fallthru
        _
      %p88 = scmp.le.s32.totalorder 1, %s11
      %p89 = scmp.lt.s32.totalorder %s11, 3
      %p90 = pnand %p88, %p89
      %p91 = pneg %p90
      // Predicated region
      $region21: #{tpu_custom_call.1} parent=5 // pred_check
        _
      $region22: #{tpu_custom_call.1} parent=5 // pred_check_branch
        %93 = sbr.rel (%p90) target = $region24
      $region23: #{tpu_custom_call.1} parent=5 // pred_region
        %s94 = ssub.s32 %s11, 1
        // Predicated region
        $region25: #{tpu_custom_call.1} parent=23 // pred_check
          %p95 = pneg %p32
        $region26: #{tpu_custom_call.1} parent=23 // pred_check_branch
          %97 = sbr.rel (%p95) target = $region28
        $region27: #{tpu_custom_call.1} parent=23 // pred_region
          %98 = dma.done [#allocation3], 128
        $region28: #{tpu_custom_call.1} parent=23 // pred_fallthru
          _
        %p99 = pneg %p32
        %p100 = pneg %p29
        %p101 = pneg %p58
        %p102 = pneg %p55
        %s103 = sand.u32 %s45, 1
        %s104 = scalar_lea.sflag [#allocation4], %s103
        %s105 = sand.u32 %s45, 1
        %s106 = smul.addr %s105, 8
        %s107 = scalar_lea.vmem [#allocation5], %s106
        %v108 = vld [vmem:[#allocation2] sm:$0xff]
        %v109 = vadd.f32 %v108, 1.0
        %110 = vst [vmem:[%s107] sm:$0xff] %v109
        %s111 = sand.u32 %s45, 1
        %s112 = scalar_lea.sflag [#allocation4], %s111
        %s113 = sand.u32 %s45, 1
        %s114 = smul.addr %s113, 8
        %s115 = scalar_lea.vmem [#allocation5], %s114
        // Predicated region
        $region29: #{tpu_custom_call.1} parent=23 // pred_check
          %p116 = pneg %p55
        $region30: #{tpu_custom_call.1} parent=23 // pred_check_branch
          %118 = sbr.rel (%p116) target = $region32
        $region31: #{tpu_custom_call.1} parent=23 // pred_region
          %s120 = ssub.s32 128, 128
          %121 = vsyncadd %s112, %s120
          %s122 = smul.addr %s16, 128
          %s123 = scalar_lea.hbm %s1, %s122
          %s125 = sshll.u32 %s115, 4
          %s126 = int_to_ptr.vmem [resolvable:$true] %s125
          %128 = dma.vmem_to_hbm [thread:$0]  %s126, 128, %s123, %s112
        $region32: #{tpu_custom_call.1} parent=23 // pred_fallthru
          _
      $region24: #{tpu_custom_call.1} parent=5 // pred_fallthru
        _
      %p129 = scmp.le.s32.totalorder 2, %s11
      // Predicated region
      $region33: #{tpu_custom_call.1} parent=5 // pred_check
        %p130 = pneg %p129
      $region34: #{tpu_custom_call.1} parent=5 // pred_check_branch
        %132 = sbr.rel (%p130) target = $region36
      $region35: #{tpu_custom_call.1} parent=5 // pred_region
        %s133 = ssub.s32 %s11, 2
        // Predicated region
        $region37: #{tpu_custom_call.1} parent=35 // pred_check
          %p134 = pneg %p61
        $region38: #{tpu_custom_call.1} parent=35 // pred_check_branch
          %136 = sbr.rel (%p134) target = $region40
        $region39: #{tpu_custom_call.1} parent=35 // pred_region
          %s137 = sand.u32 %s46, 1
          %s138 = scalar_lea.sflag [#allocation4], %s137
          %s139 = sand.u32 %s46, 1
          %s140 = smul.addr %s139, 8
          %s141 = scalar_lea.vmem [#allocation5], %s140
          %142 = dma.done %s138, 128
        $region40: #{tpu_custom_call.1} parent=35 // pred_fallthru
          _
      $region36: #{tpu_custom_call.1} parent=5 // pred_fallthru
        _
    $region6: #{tpu_custom_call.1} parent=1 // loop_footer
      %s15 = sadd.s32 1, %s11
    $region7: #{tpu_custom_call.1} parent=1 // loop_footer_branch
      %10 = sbr.rel target = $region3
    $region8: #{tpu_custom_call.1} parent=1 // loop_exit
      _
    %143 = vsyncpa [#allocation3], 1
    %s144 = scalar_lea.sflag [#allocation3], 1
    %145 = vsyncpa %s144, 1
    %146 = vsyncpa [#allocation4], 1
    %s147 = scalar_lea.sflag [#allocation4], 1
    %148 = vsyncpa %s147, 1

// kernel: encoder_forward.2
$region0: #{encoder_forward.2}
  #allocation0 [shape = 'u32[]', space=smem, size = 0x4, offset = 0x4, fixed_abs, tag = 'smem constant byte address 0x4 - core index']
  #allocation1 [shape = 'u32[144,128]{1,0:T(1,128)}', space=vmem, size = 0x12000, scoped, tag = 'internal scratch']
  #allocation2 [shape = 'bf16[128,128]{1,0:T(16,128)(2,1)}', space=vmem, size = 0x8000, scoped, tag = 'scratch operand']
  #allocation3 [shape = 'f32[128,128]{1,0:T(8,128)}', space=vmem, size = 0x10000, scoped, tag = 'scratch operand']
  #allocation4 [shape = 'f32[128,128]{1,0:T(8,128)}', space=vmem, size = 0x10000, scoped, tag = 'scratch operand']
  #allocation5 [shape = 'f32[128,128]{1,0:T(8,128)}', space=vmem, size = 0x10000, scoped, tag = 'scratch operand']
  %s0 = inlined_call_operand.vmem [shape: bf16[2,128,128], index: 0, kind: input, shape index: {}, may-alias: {0,1}]
  %s1 = inlined_call_operand.vmem [shape: bf16[2,128,128], index: 1, kind: input, shape index: {}, may-alias: {0,1}]
  %s2 = inlined_call_operand.vmem [shape: f32[2,1,128], index: 2, kind: input, shape index: {}]
  %s3 = inlined_call_operand.vmem [shape: bf16[128,128], index: 3, kind: input, shape index: {}]
  %s4 = inlined_call_operand.vmem [shape: f32[1,128], index: 4, kind: input, shape index: {}]
  %s5 = inlined_call_operand.vmem [shape: bf16[128,256], index: 5, kind: input, shape index: {}]
  %s6 = inlined_call_operand.vmem [shape: f32[1,256], index: 6, kind: input, shape index: {}]
  %s7 = inlined_call_operand.vmem [shape: bf16[128,128], index: 7, kind: input, shape index: {}]
  %s8 = inlined_call_operand.vmem [shape: f32[1,128], index: 8, kind: input, shape index: {}]
  %s9 = inlined_call_operand.vmem [shape: f32[1,128], index: 9, kind: input, shape index: {}]
  %s10 = inlined_call_operand.vmem [shape: f32[1,128], index: 10, kind: input, shape index: {}]
  %s11 = inlined_call_operand.vmem [shape: bf16[128,128], index: 11, kind: input, shape index: {}]
  %s12 = inlined_call_operand.vmem [shape: f32[1,128], index: 12, kind: input, shape index: {}]
  %s13 = inlined_call_operand.vmem [shape: bf16[128,128], index: 13, kind: input, shape index: {}]
  %s14 = inlined_call_operand.vmem [shape: f32[1,128], index: 14, kind: input, shape index: {}]
  %s15 = inlined_call_operand.vmem [shape: f32[1,128], index: 15, kind: input, shape index: {}]
  %s16 = inlined_call_operand.vmem [shape: f32[1,128], index: 16, kind: input, shape index: {}]
  %s17 = inlined_call_operand.vmem [shape: bf16[2,128,128], index: 17, kind: output, shape index: {}]
  %s18 = sld [smem:[#allocation0]]
  $region109: #{encoder_forward.2} parent=0
    _
  %s20 = ssub.s32 1, %s18
  %s21 = scalar_select 0, %s20, %s18
  loop: start=0, step=1, limit=4
  $region2: #{encoder_forward.2} parent=0 // loop_pre_header
    _
  $region3: #{encoder_forward.2} parent=0 // loop_header
    %s23 = sphi 0, %s27
    %p24 = scmp.ge.s32.totalorder %s23, 4
    %s30 = sphi 0, %s49
    %s31 = sphi 0, %s45
    %s32 = sphi 0, %s41
    %s33 = sphi 0, %s30
    %s34 = sphi 0, %s31
    %s35 = sphi 0, %s32
    %s36 = sphi 0, %s33
    %s37 = sphi 0, %s34
    %s38 = sphi 0, %s35
    %s54 = sphi 0, %s56
    %s57 = sphi 0, %s54
    %s58 = sphi 0, %s57
    %s74 = sphi 0, %s58
    %s82 = sphi 0, %s84
    %s85 = sphi 0, %s82
    %s86 = sphi 0, %s85
    %s102 = sphi 0, %s86
    %s110 = sphi 0, %s112
    %s113 = sphi 0, %s110
    %s114 = sphi 0, %s113
    %s130 = sphi 0, %s114
    %s134 = sphi 0, %s134
    %s136 = sphi 0, %s134
    %s137 = sphi 0, %s136
    %s151 = sphi 0, %s137
    %s155 = sphi 0, %s155
    %s157 = sphi 0, %s155
    %s158 = sphi 0, %s157
    %s172 = sphi 0, %s158
    %s176 = sphi 0, %s176
    %s178 = sphi 0, %s176
    %s179 = sphi 0, %s178
    %s193 = sphi 0, %s179
    %s197 = sphi 0, %s197
    %s199 = sphi 0, %s197
    %s200 = sphi 0, %s199
    %s214 = sphi 0, %s200
    %s218 = sphi 0, %s218
    %s220 = sphi 0, %s218
    %s221 = sphi 0, %s220
    %s235 = sphi 0, %s221
    %s239 = sphi 0, %s239
    %s241 = sphi 0, %s239
    %s242 = sphi 0, %s241
    %s256 = sphi 0, %s242
    %s260 = sphi 0, %s260
    %s262 = sphi 0, %s260
    %s263 = sphi 0, %s262
    %s277 = sphi 0, %s263
    %s281 = sphi 0, %s281
    %s283 = sphi 0, %s281
    %s284 = sphi 0, %s283
    %s298 = sphi 0, %s284
    %s302 = sphi 0, %s302
    %s304 = sphi 0, %s302
    %s305 = sphi 0, %s304
    %s319 = sphi 0, %s305
    %s323 = sphi 0, %s323
    %s325 = sphi 0, %s323
    %s326 = sphi 0, %s325
    %s340 = sphi 0, %s326
    %s344 = sphi 0, %s344
    %s346 = sphi 0, %s344
    %s347 = sphi 0, %s346
    %s361 = sphi 0, %s347
    %s365 = sphi 0, %s365
    %s367 = sphi 0, %s365
    %s368 = sphi 0, %s367
    %s382 = sphi 0, %s368
    %s386 = sphi 0, %s386
    %s388 = sphi 0, %s386
    %s389 = sphi 0, %s388
    %s403 = sphi 0, %s389
    %s407 = sphi 0, %s407
    %s409 = sphi 0, %s407
    %s410 = sphi 0, %s409
    %s424 = sphi 0, %s410
    %s432 = sphi 0, %s434
    %s435 = sphi 0, %s432
    %s436 = sphi 0, %s435
    %s452 = sphi 0, %s436
  $region4: #{encoder_forward.2} parent=0 // loop_header_branch
    %26 = sbr.rel (%p24) target = $region8
  $region5: #{encoder_forward.2} parent=0 // loop_body
    %s28 = ssub.s32 %s23, 1
    %s29 = ssub.s32 %s23, 2
    %s39 = sadd.s32 1, %s32
    %p40 = scmp.ge.s32.totalorder %s39, 1
    %s41 = scalar_select %p40, 0, %s39
    %s42 = sadd.s32 1, %s31
    %s43 = scalar_select %p40, %s42, %s31
    %p44 = scmp.ge.s32.totalorder %s43, 1
    %s45 = scalar_select %p44, 0, %s43
    %s46 = sadd.s32 1, %s30
    %s47 = scalar_select %p44, %s46, %s30
    %p48 = scmp.ge.s32.totalorder %s47, 2
    %s49 = scalar_select %p48, 0, %s47
    %s50 = ssub.s32 %s30, %s49
    %s51 = ssub.s32 %s31, %s45
    %s52 = sor.u32 %s50, %s51
    %p53 = scmp.eq.s32.totalorder %s52, 0
    %s55 = sadd.s32 %s54, 1
    %s56 = scalar_select %p53, %s54, %s55
    %p59 = pneg %p53
    %p60 = scmp.eq.s32.totalorder %s23, 1
    %p61 = por %p59, %p60
    %p62 = scmp.ne.s32.totalorder %s54, %s57
    %p63 = scmp.eq.s32.totalorder %s23, 0
    %p64 = por %p62, %p63
    %p65 = scmp.ne.s32.totalorder %s54, %s57
    %p66 = scmp.eq.s32.totalorder %s28, 1
    %p67 = por %p65, %p66
    %p68 = scmp.ne.s32.totalorder %s57, %s58
    %p69 = scmp.eq.s32.totalorder %s28, 0
    %p70 = por %p68, %p69
    %p71 = scmp.ne.s32.totalorder %s57, %s58
    %p72 = scmp.eq.s32.totalorder %s29, 1
    %p73 = por %p71, %p72
    %p75 = scmp.ne.s32.totalorder %s58, %s74
    %p76 = scmp.eq.s32.totalorder %s29, 0
    %p77 = por %p75, %p76
    %s78 = ssub.s32 %s30, %s49
    %s79 = ssub.s32 %s32, %s41
    %s80 = sor.u32 %s78, %s79
    %p81 = scmp.eq.s32.totalorder %s80, 0
    %s83 = sadd.s32 %s82, 1
    %s84 = scalar_select %p81, %s82, %s83
    %p87 = pneg %p81
    %p88 = scmp.eq.s32.totalorder %s23, 1
    %p89 = por %p87, %p88
    %p90 = scmp.ne.s32.totalorder %s82, %s85
    %p91 = scmp.eq.s32.totalorder %s23, 0
    %p92 = por %p90, %p91
    %p93 = scmp.ne.s32.totalorder %s82, %s85
    %p94 = scmp.eq.s32.totalorder %s28, 1
    %p95 = por %p93, %p94
    %p96 = scmp.ne.s32.totalorder %s85, %s86
    %p97 = scmp.eq.s32.totalorder %s28, 0
    %p98 = por %p96, %p97
    %p99 = scmp.ne.s32.totalorder %s85, %s86
    %p100 = scmp.eq.s32.totalorder %s29, 1
    %p101 = por %p99, %p100
    %p103 = scmp.ne.s32.totalorder %s86, %s102
    %p104 = scmp.eq.s32.totalorder %s29, 0
    %p105 = por %p103, %p104
    %s106 = ssub.s32 %s30, %s49
    %s107 = ssub.s32 %s32, %s41
    %s108 = sor.u32 %s106, %s107
    %p109 = scmp.eq.s32.totalorder %s108, 0
    %s111 = sadd.s32 %s110, 1
    %s112 = scalar_select %p109, %s110, %s111
    %p115 = pneg %p109
    %p116 = scmp.eq.s32.totalorder %s23, 1
    %p117 = por %p115, %p116
    %p118 = scmp.ne.s32.totalorder %s110, %s113
    %p119 = scmp.eq.s32.totalorder %s23, 0
    %p120 = por %p118, %p119
    %p121 = scmp.ne.s32.totalorder %s110, %s113
    %p122 = scmp.eq.s32.totalorder %s28, 1
    %p123 = por %p121, %p122
    %p124 = scmp.ne.s32.totalorder %s113, %s114
    %p125 = scmp.eq.s32.totalorder %s28, 0
    %p126 = por %p124, %p125
    %p127 = scmp.ne.s32.totalorder %s113, %s114
    %p128 = scmp.eq.s32.totalorder %s29, 1
    %p129 = por %p127, %p128
    %p131 = scmp.ne.s32.totalorder %s114, %s130
    %p132 = scmp.eq.s32.totalorder %s29, 0
    %p133 = por %p131, %p132
    %s135 = sadd.s32 %s134, 1
    %p138 = scmp.eq.s32.totalorder %s23, 1
    %p139 = scmp.ne.s32.totalorder %s134, %s136
    %p140 = scmp.eq.s32.totalorder %s23, 0
    %p141 = por %p139, %p140
    %p142 = scmp.ne.s32.totalorder %s134, %s136
    %p143 = scmp.eq.s32.totalorder %s28, 1
    %p144 = por %p142, %p143
    %p145 = scmp.ne.s32.totalorder %s136, %s137
    %p146 = scmp.eq.s32.totalorder %s28, 0
    %p147 = por %p145, %p146
    %p148 = scmp.ne.s32.totalorder %s136, %s137
    %p149 = scmp.eq.s32.totalorder %s29, 1
    %p150 = por %p148, %p149
    %p152 = scmp.ne.s32.totalorder %s137, %s151
    %p153 = scmp.eq.s32.totalorder %s29, 0
    %p154 = por %p152, %p153
    %s156 = sadd.s32 %s155, 1
    %p159 = scmp.eq.s32.totalorder %s23, 1
    %p160 = scmp.ne.s32.totalorder %s155, %s157
    %p161 = scmp.eq.s32.totalorder %s23, 0
    %p162 = por %p160, %p161
    %p163 = scmp.ne.s32.totalorder %s155, %s157
    %p164 = scmp.eq.s32.totalorder %s28, 1
    %p165 = por %p163, %p164
    %p166 = scmp.ne.s32.totalorder %s157, %s158
    %p167 = scmp.eq.s32.totalorder %s28, 0
    %p168 = por %p166, %p167
    %p169 = scmp.ne.s32.totalorder %s157, %s158
    %p170 = scmp.eq.s32.totalorder %s29, 1
    %p171 = por %p169, %p170
    %p173 = scmp.ne.s32.totalorder %s158, %s172
    %p174 = scmp.eq.s32.totalorder %s29, 0
    %p175 = por %p173, %p174
    %s177 = sadd.s32 %s176, 1
    %p180 = scmp.eq.s32.totalorder %s23, 1
    %p181 = scmp.ne.s32.totalorder %s176, %s178
    %p182 = scmp.eq.s32.totalorder %s23, 0
    %p183 = por %p181, %p182
    %p184 = scmp.ne.s32.totalorder %s176, %s178
    %p185 = scmp.eq.s32.totalorder %s28, 1
    %p186 = por %p184, %p185
    %p187 = scmp.ne.s32.totalorder %s178, %s179
    %p188 = scmp.eq.s32.totalorder %s28, 0
    %p189 = por %p187, %p188
    %p190 = scmp.ne.s32.totalorder %s178, %s179
    %p191 = scmp.eq.s32.totalorder %s29, 1
    %p192 = por %p190, %p191
    %p194 = scmp.ne.s32.totalorder %s179, %s193
    %p195 = scmp.eq.s32.totalorder %s29, 0
    %p196 = por %p194, %p195
    %s198 = sadd.s32 %s197, 1
    %p201 = scmp.eq.s32.totalorder %s23, 1
    %p202 = scmp.ne.s32.totalorder %s197, %s199
    %p203 = scmp.eq.s32.totalorder %s23, 0
    %p204 = por %p202, %p203
    %p205 = scmp.ne.s32.totalorder %s197, %s199
    %p206 = scmp.eq.s32.totalorder %s28, 1
    %p207 = por %p205, %p206
    %p208 = scmp.ne.s32.totalorder %s199, %s200
    %p209 = scmp.eq.s32.totalorder %s28, 0
    %p210 = por %p208, %p209
    %p211 = scmp.ne.s32.totalorder %s199, %s200
    %p212 = scmp.eq.s32.totalorder %s29, 1
    %p213 = por %p211, %p212
    %p215 = scmp.ne.s32.totalorder %s200, %s214
    %p216 = scmp.eq.s32.totalorder %s29, 0
    %p217 = por %p215, %p216
    %s219 = sadd.s32 %s218, 1
    %p222 = scmp.eq.s32.totalorder %s23, 1
    %p223 = scmp.ne.s32.totalorder %s218, %s220
    %p224 = scmp.eq.s32.totalorder %s23, 0
    %p225 = por %p223, %p224
    %p226 = scmp.ne.s32.totalorder %s218, %s220
    %p227 = scmp.eq.s32.totalorder %s28, 1
    %p228 = por %p226, %p227
    %p229 = scmp.ne.s32.totalorder %s220, %s221
    %p230 = scmp.eq.s32.totalorder %s28, 0
    %p231 = por %p229, %p230
    %p232 = scmp.ne.s32.totalorder %s220, %s221
    %p233 = scmp.eq.s32.totalorder %s29, 1
    %p234 = por %p232, %p233
    %p236 = scmp.ne.s32.totalorder %s221, %s235
    %p237 = scmp.eq.s32.totalorder %s29, 0
    %p238 = por %p236, %p237
    %s240 = sadd.s32 %s239, 1
    %p243 = scmp.eq.s32.totalorder %s23, 1
    %p244 = scmp.ne.s32.totalorder %s239, %s241
    %p245 = scmp.eq.s32.totalorder %s23, 0
    %p246 = por %p244, %p245
    %p247 = scmp.ne.s32.totalorder %s239, %s241
    %p248 = scmp.eq.s32.totalorder %s28, 1
    %p249 = por %p247, %p248
    %p250 = scmp.ne.s32.totalorder %s241, %s242
    %p251 = scmp.eq.s32.totalorder %s28, 0
    %p252 = por %p250, %p251
    %p253 = scmp.ne.s32.totalorder %s241, %s242
    %p254 = scmp.eq.s32.totalorder %s29, 1
    %p255 = por %p253, %p254
    %p257 = scmp.ne.s32.totalorder %s242, %s256
    %p258 = scmp.eq.s32.totalorder %s29, 0
    %p259 = por %p257, %p258
    %s261 = sadd.s32 %s260, 1
    %p264 = scmp.eq.s32.totalorder %s23, 1
    %p265 = scmp.ne.s32.totalorder %s260, %s262
    %p266 = scmp.eq.s32.totalorder %s23, 0
    %p267 = por %p265, %p266
    %p268 = scmp.ne.s32.totalorder %s260, %s262
    %p269 = scmp.eq.s32.totalorder %s28, 1
    %p270 = por %p268, %p269
    %p271 = scmp.ne.s32.totalorder %s262, %s263
    %p272 = scmp.eq.s32.totalorder %s28, 0
    %p273 = por %p271, %p272
    %p274 = scmp.ne.s32.totalorder %s262, %s263
    %p275 = scmp.eq.s32.totalorder %s29, 1
    %p276 = por %p274, %p275
    %p278 = scmp.ne.s32.totalorder %s263, %s277
    %p279 = scmp.eq.s32.totalorder %s29, 0
    %p280 = por %p278, %p279
    %s282 = sadd.s32 %s281, 1
    %p285 = scmp.eq.s32.totalorder %s23, 1
    %p286 = scmp.ne.s32.totalorder %s281, %s283
    %p287 = scmp.eq.s32.totalorder %s23, 0
    %p288 = por %p286, %p287
    %p289 = scmp.ne.s32.totalorder %s281, %s283
    %p290 = scmp.eq.s32.totalorder %s28, 1
    %p291 = por %p289, %p290
    %p292 = scmp.ne.s32.totalorder %s283, %s284
    %p293 = scmp.eq.s32.totalorder %s28, 0
    %p294 = por %p292, %p293
    %p295 = scmp.ne.s32.totalorder %s283, %s284
    %p296 = scmp.eq.s32.totalorder %s29, 1
    %p297 = por %p295, %p296
    %p299 = scmp.ne.s32.totalorder %s284, %s298
    %p300 = scmp.eq.s32.totalorder %s29, 0
    %p301 = por %p299, %p300
    %s303 = sadd.s32 %s302, 1
    %p306 = scmp.eq.s32.totalorder %s23, 1
    %p307 = scmp.ne.s32.totalorder %s302, %s304
    %p308 = scmp.eq.s32.totalorder %s23, 0
    %p309 = por %p307, %p308
    %p310 = scmp.ne.s32.totalorder %s302, %s304
    %p311 = scmp.eq.s32.totalorder %s28, 1
    %p312 = por %p310, %p311
    %p313 = scmp.ne.s32.totalorder %s304, %s305
    %p314 = scmp.eq.s32.totalorder %s28, 0
    %p315 = por %p313, %p314
    %p316 = scmp.ne.s32.totalorder %s304, %s305
    %p317 = scmp.eq.s32.totalorder %s29, 1
    %p318 = por %p316, %p317
    %p320 = scmp.ne.s32.totalorder %s305, %s319
    %p321 = scmp.eq.s32.totalorder %s29, 0
    %p322 = por %p320, %p321
    %s324 = sadd.s32 %s323, 1
    %p327 = scmp.eq.s32.totalorder %s23, 1
    %p328 = scmp.ne.s32.totalorder %s323, %s325
    %p329 = scmp.eq.s32.totalorder %s23, 0
    %p330 = por %p328, %p329
    %p331 = scmp.ne.s32.totalorder %s323, %s325
    %p332 = scmp.eq.s32.totalorder %s28, 1
    %p333 = por %p331, %p332
    %p334 = scmp.ne.s32.totalorder %s325, %s326
    %p335 = scmp.eq.s32.totalorder %s28, 0
    %p336 = por %p334, %p335
    %p337 = scmp.ne.s32.totalorder %s325, %s326
    %p338 = scmp.eq.s32.totalorder %s29, 1
    %p339 = por %p337, %p338
    %p341 = scmp.ne.s32.totalorder %s326, %s340
    %p342 = scmp.eq.s32.totalorder %s29, 0
    %p343 = por %p341, %p342
    %s345 = sadd.s32 %s344, 1
    %p348 = scmp.eq.s32.totalorder %s23, 1
    %p349 = scmp.ne.s32.totalorder %s344, %s346
    %p350 = scmp.eq.s32.totalorder %s23, 0
    %p351 = por %p349, %p350
    %p352 = scmp.ne.s32.totalorder %s344, %s346
    %p353 = scmp.eq.s32.totalorder %s28, 1
    %p354 = por %p352, %p353
    %p355 = scmp.ne.s32.totalorder %s346, %s347
    %p356 = scmp.eq.s32.totalorder %s28, 0
    %p357 = por %p355, %p356
    %p358 = scmp.ne.s32.totalorder %s346, %s347
    %p359 = scmp.eq.s32.totalorder %s29, 1
    %p360 = por %p358, %p359
    %p362 = scmp.ne.s32.totalorder %s347, %s361
    %p363 = scmp.eq.s32.totalorder %s29, 0
    %p364 = por %p362, %p363
    %s366 = sadd.s32 %s365, 1
    %p369 = scmp.eq.s32.totalorder %s23, 1
    %p370 = scmp.ne.s32.totalorder %s365, %s367
    %p371 = scmp.eq.s32.totalorder %s23, 0
    %p372 = por %p370, %p371
    %p373 = scmp.ne.s32.totalorder %s365, %s367
    %p374 = scmp.eq.s32.totalorder %s28, 1
    %p375 = por %p373, %p374
    %p376 = scmp.ne.s32.totalorder %s367, %s368
    %p377 = scmp.eq.s32.totalorder %s28, 0
    %p378 = por %p376, %p377
    %p379 = scmp.ne.s32.totalorder %s367, %s368
    %p380 = scmp.eq.s32.totalorder %s29, 1
    %p381 = por %p379, %p380
    %p383 = scmp.ne.s32.totalorder %s368, %s382
    %p384 = scmp.eq.s32.totalorder %s29, 0
    %p385 = por %p383, %p384
    %s387 = sadd.s32 %s386, 1
    %p390 = scmp.eq.s32.totalorder %s23, 1
    %p391 = scmp.ne.s32.totalorder %s386, %s388
    %p392 = scmp.eq.s32.totalorder %s23, 0
    %p393 = por %p391, %p392
    %p394 = scmp.ne.s32.totalorder %s386, %s388
    %p395 = scmp.eq.s32.totalorder %s28, 1
    %p396 = por %p394, %p395
    %p397 = scmp.ne.s32.totalorder %s388, %s389
    %p398 = scmp.eq.s32.totalorder %s28, 0
    %p399 = por %p397, %p398
    %p400 = scmp.ne.s32.totalorder %s388, %s389
    %p401 = scmp.eq.s32.totalorder %s29, 1
    %p402 = por %p400, %p401
    %p404 = scmp.ne.s32.totalorder %s389, %s403
    %p405 = scmp.eq.s32.totalorder %s29, 0
    %p406 = por %p404, %p405
    %s408 = sadd.s32 %s407, 1
    %p411 = scmp.eq.s32.totalorder %s23, 1
    %p412 = scmp.ne.s32.totalorder %s407, %s409
    %p413 = scmp.eq.s32.totalorder %s23, 0
    %p414 = por %p412, %p413
    %p415 = scmp.ne.s32.totalorder %s407, %s409
    %p416 = scmp.eq.s32.totalorder %s28, 1
    %p417 = por %p415, %p416
    %p418 = scmp.ne.s32.totalorder %s409, %s410
    %p419 = scmp.eq.s32.totalorder %s28, 0
    %p420 = por %p418, %p419
    %p421 = scmp.ne.s32.totalorder %s409, %s410
    %p422 = scmp.eq.s32.totalorder %s29, 1
    %p423 = por %p421, %p422
    %p425 = scmp.ne.s32.totalorder %s410, %s424
    %p426 = scmp.eq.s32.totalorder %s29, 0
    %p427 = por %p425, %p426
    %s428 = ssub.s32 %s30, %s49
    %s429 = ssub.s32 %s31, %s45
    %s430 = sor.u32 %s428, %s429
    %p431 = scmp.eq.s32.totalorder %s430, 0
    %s433 = sadd.s32 %s432, 1
    %s434 = scalar_select %p431, %s432, %s433
    %p437 = pneg %p431
    %p438 = scmp.eq.s32.totalorder %s23, 1
    %p439 = por %p437, %p438
    %p440 = scmp.ne.s32.totalorder %s432, %s435
    %p441 = scmp.eq.s32.totalorder %s23, 0
    %p442 = por %p440, %p441
    %p443 = scmp.ne.s32.totalorder %s432, %s435
    %p444 = scmp.eq.s32.totalorder %s28, 1
    %p445 = por %p443, %p444
    %p446 = scmp.ne.s32.totalorder %s435, %s436
    %p447 = scmp.eq.s32.totalorder %s28, 0
    %p448 = por %p446, %p447
    %p449 = scmp.ne.s32.totalorder %s435, %s436
    %p450 = scmp.eq.s32.totalorder %s29, 1
    %p451 = por %p449, %p450
    %p453 = scmp.ne.s32.totalorder %s436, %s452
    %p454 = scmp.eq.s32.totalorder %s29, 0
    %p455 = por %p453, %p454
    %p456 = scmp.le.s32.totalorder 1, %s23
    %p457 = scmp.lt.s32.totalorder %s23, 3
    %p458 = pnand %p456, %p457
    %p459 = pneg %p458
    // Predicated region
    $region9: #{encoder_forward.2} parent=5 // pred_check
      _
    $region10: #{encoder_forward.2} parent=5 // pred_check_branch
      %461 = sbr.rel (%p458) target = $region12
    $region11: #{encoder_forward.2} parent=5 // pred_region
      %s462 = ssub.s32 %s23, 1
      // Predicated region
      $region13: #{encoder_forward.2} parent=11 // pred_check
        %p463 = pneg %p147
      $region14: #{encoder_forward.2} parent=11 // pred_check_branch
        %465 = sbr.rel (%p463) target = $region16
      $region15: #{encoder_forward.2} parent=11 // pred_region
        _
      $region16: #{encoder_forward.2} parent=11 // pred_fallthru
        _
      // Predicated region
      $region17: #{encoder_forward.2} parent=11 // pred_check
        %p466 = pneg %p168
      $region18: #{encoder_forward.2} parent=11 // pred_check_branch
        %468 = sbr.rel (%p466) target = $region20
      $region19: #{encoder_forward.2} parent=11 // pred_region
        _
      $region20: #{encoder_forward.2} parent=11 // pred_fallthru
        _
      // Predicated region
      $region21: #{encoder_forward.2} parent=11 // pred_check
        %p469 = pneg %p189
      $region22: #{encoder_forward.2} parent=11 // pred_check_branch
        %471 = sbr.rel (%p469) target = $region24
      $region23: #{encoder_forward.2} parent=11 // pred_region
        _
      $region24: #{encoder_forward.2} parent=11 // pred_fallthru
        _
      // Predicated region
      $region25: #{encoder_forward.2} parent=11 // pred_check
        %p472 = pneg %p210
      $region26: #{encoder_forward.2} parent=11 // pred_check_branch
        %474 = sbr.rel (%p472) target = $region28
      $region27: #{encoder_forward.2} parent=11 // pred_region
        _
      $region28: #{encoder_forward.2} parent=11 // pred_fallthru
        _
      // Predicated region
      $region29: #{encoder_forward.2} parent=11 // pred_check
        %p475 = pneg %p231
      $region30: #{encoder_forward.2} parent=11 // pred_check_branch
        %477 = sbr.rel (%p475) target = $region32
      $region31: #{encoder_forward.2} parent=11 // pred_region
        _
      $region32: #{encoder_forward.2} parent=11 // pred_fallthru
        _
      // Predicated region
      $region33: #{encoder_forward.2} parent=11 // pred_check
        %p478 = pneg %p252
      $region34: #{encoder_forward.2} parent=11 // pred_check_branch
        %480 = sbr.rel (%p478) target = $region36
      $region35: #{encoder_forward.2} parent=11 // pred_region
        _
      $region36: #{encoder_forward.2} parent=11 // pred_fallthru
        _
      // Predicated region
      $region37: #{encoder_forward.2} parent=11 // pred_check
        %p481 = pneg %p273
      $region38: #{encoder_forward.2} parent=11 // pred_check_branch
        %483 = sbr.rel (%p481) target = $region40
      $region39: #{encoder_forward.2} parent=11 // pred_region
        _
      $region40: #{encoder_forward.2} parent=11 // pred_fallthru
        _
      // Predicated region
      $region41: #{encoder_forward.2} parent=11 // pred_check
        %p484 = pneg %p294
      $region42: #{encoder_forward.2} parent=11 // pred_check_branch
        %486 = sbr.rel (%p484) target = $region44
      $region43: #{encoder_forward.2} parent=11 // pred_region
        _
      $region44: #{encoder_forward.2} parent=11 // pred_fallthru
        _
      // Predicated region
      $region45: #{encoder_forward.2} parent=11 // pred_check
        %p487 = pneg %p315
      $region46: #{encoder_forward.2} parent=11 // pred_check_branch
        %489 = sbr.rel (%p487) target = $region48
      $region47: #{encoder_forward.2} parent=11 // pred_region
        _
      $region48: #{encoder_forward.2} parent=11 // pred_fallthru
        _
      // Predicated region
      $region49: #{encoder_forward.2} parent=11 // pred_check
        %p490 = pneg %p336
      $region50: #{encoder_forward.2} parent=11 // pred_check_branch
        %492 = sbr.rel (%p490) target = $region52
      $region51: #{encoder_forward.2} parent=11 // pred_region
        _
      $region52: #{encoder_forward.2} parent=11 // pred_fallthru
        _
      // Predicated region
      $region53: #{encoder_forward.2} parent=11 // pred_check
        %p493 = pneg %p357
      $region54: #{encoder_forward.2} parent=11 // pred_check_branch
        %495 = sbr.rel (%p493) target = $region56
      $region55: #{encoder_forward.2} parent=11 // pred_region
        _
      $region56: #{encoder_forward.2} parent=11 // pred_fallthru
        _
      // Predicated region
      $region57: #{encoder_forward.2} parent=11 // pred_check
        %p496 = pneg %p378
      $region58: #{encoder_forward.2} parent=11 // pred_check_branch
        %498 = sbr.rel (%p496) target = $region60
      $region59: #{encoder_forward.2} parent=11 // pred_region
        _
      $region60: #{encoder_forward.2} parent=11 // pred_fallthru
        _
      // Predicated region
      $region61: #{encoder_forward.2} parent=11 // pred_check
        %p499 = pneg %p399
      $region62: #{encoder_forward.2} parent=11 // pred_check_branch
        %501 = sbr.rel (%p499) target = $region64
      $region63: #{encoder_forward.2} parent=11 // pred_region
        _
      $region64: #{encoder_forward.2} parent=11 // pred_fallthru
        _
      // Predicated region
      $region65: #{encoder_forward.2} parent=11 // pred_check
        %p502 = pneg %p420
      $region66: #{encoder_forward.2} parent=11 // pred_check_branch
        %504 = sbr.rel (%p502) target = $region68
      $region67: #{encoder_forward.2} parent=11 // pred_region
        _
      $region68: #{encoder_forward.2} parent=11 // pred_fallthru
        _
    $region12: #{encoder_forward.2} parent=5 // pred_fallthru
      _
    %p505 = scmp.lt.s32.totalorder %s23, 2
    // Predicated region
    $region69: #{encoder_forward.2} parent=5 // pred_check
      %p506 = pneg %p505
    $region70: #{encoder_forward.2} parent=5 // pred_check_branch
      %508 = sbr.rel (%p506) target = $region72
    $region71: #{encoder_forward.2} parent=5 // pred_region
      // Predicated region
      $region73: #{encoder_forward.2} parent=71 // pred_check
        %p509 = pneg %p64
      $region74: #{encoder_forward.2} parent=71 // pred_check_branch
        %511 = sbr.rel (%p509) target = $region76
      $region75: #{encoder_forward.2} parent=71 // pred_region
        %s512 = smul.u32 16, %s31
        %p513 = scmp.lt.s32.totalorder %s30, 1
        %s514 = scalar_select %p513, %s30, 1
        %p515 = scmp.lt.s32.totalorder %s512, 15
        %s516 = scalar_select %p515, %s512, 15
        %s517 = smul.addr %s514, 16
        %s518 = sadd.s32 %s516, %s517
        %s519 = smul.addr %s518, 4
        %s520 = scalar_lea.vmem %s0, %s519
        %s521 = smul.u32 16, %s31
      $region76: #{encoder_forward.2} parent=71 // pred_fallthru
        _
      // Predicated region
      $region77: #{encoder_forward.2} parent=71 // pred_check
        %p522 = pneg %p92
      $region78: #{encoder_forward.2} parent=71 // pred_check_branch
        %524 = sbr.rel (%p522) target = $region80
      $region79: #{encoder_forward.2} parent=71 // pred_region
        %s525 = smul.u32 16, %s32
        %p526 = scmp.lt.s32.totalorder %s30, 1
        %s527 = scalar_select %p526, %s30, 1
        %p528 = scmp.lt.s32.totalorder %s525, 15
        %s529 = scalar_select %p528, %s525, 15
        %s530 = smul.addr %s527, 16
        %s531 = sadd.s32 %s529, %s530
        %s532 = smul.addr %s531, 4
        %s533 = scalar_lea.vmem %s1, %s532
        %s534 = smul.u32 16, %s32
      $region80: #{encoder_forward.2} parent=71 // pred_fallthru
        _
      // Predicated region
      $region81: #{encoder_forward.2} parent=71 // pred_check
        %p535 = pneg %p120
      $region82: #{encoder_forward.2} parent=71 // pred_check_branch
        %537 = sbr.rel (%p535) target = $region84
      $region83: #{encoder_forward.2} parent=71 // pred_region
        %p538 = scmp.lt.s32.totalorder %s30, 1
        %s539 = scalar_select %p538, %s30, 1
        %p540 = scmp.lt.s32.totalorder %s32, 0
        %s541 = scalar_select %p540, %s32, 0
        %s542 = sadd.s32 %s541, %s539
        %s543 = scalar_lea.vmem %s2, %s542
      $region84: #{encoder_forward.2} parent=71 // pred_fallthru
        _
    $region72: #{encoder_forward.2} parent=5 // pred_fallthru
      _
    %p544 = scmp.le.s32.totalorder 1, %s23
    %p545 = scmp.lt.s32.totalorder %s23, 3
    %p546 = pnand %p544, %p545
    %p547 = pneg %p546
    // Predicated region
    $region85: #{encoder_forward.2} parent=5 // pred_check
      _
    $region86: #{encoder_forward.2} parent=5 // pred_check_branch
      %549 = sbr.rel (%p546) target = $region88
    $region87: #{encoder_forward.2} parent=5 // pred_region
      %s550 = ssub.s32 %s23, 1
      %s551 = smul.u32 16, %s34
      %p552 = scmp.lt.s32.totalorder %s33, 1
      %s553 = scalar_select %p552, %s33, 1
      %p554 = scmp.lt.s32.totalorder %s551, 15
      %s555 = scalar_select %p554, %s551, 15
      %s556 = smul.addr %s553, 16
      %s557 = sadd.s32 %s555, %s556
      %s558 = smul.addr %s557, 4
      %s559 = scalar_lea.vmem %s0, %s558
      %p560 = pneg %p70
      %p561 = pneg %p67
      %s562 = smul.u32 16, %s35
      %p563 = scmp.lt.s32.totalorder %s33, 1
      %s564 = scalar_select %p563, %s33, 1
      %p565 = scmp.lt.s32.totalorder %s562, 15
      %s566 = scalar_select %p565, %s562, 15
      %s567 = smul.addr %s564, 16
      %s568 = sadd.s32 %s566, %s567
      %s569 = smul.addr %s568, 4
      %s570 = scalar_lea.vmem %s1, %s569
      %p571 = pneg %p98
      %p572 = pneg %p95
      %p573 = scmp.lt.s32.totalorder %s33, 1
      %s574 = scalar_select %p573, %s33, 1
      %p575 = scmp.lt.s32.totalorder %s35, 0
      %s576 = scalar_select %p575, %s35, 0
      %s577 = sadd.s32 %s576, %s574
      %s578 = scalar_lea.vmem %s2, %s577
      %p579 = pneg %p126
      %p580 = pneg %p123
      %p581 = pneg %p147
      %p582 = pneg %p144
      %p583 = pneg %p168
      %p584 = pneg %p165
      %p585 = pneg %p189
      %p586 = pneg %p186
      %p587 = pneg %p210
      %p588 = pneg %p207
      %p589 = pneg %p231
      %p590 = pneg %p228
      %p591 = pneg %p252
      %p592 = pneg %p249
      %p593 = pneg %p273
      %p594 = pneg %p270
      %p595 = pneg %p294
      %p596 = pneg %p291
      %p597 = pneg %p315
      %p598 = pneg %p312
      %p599 = pneg %p336
      %p600 = pneg %p333
      %p601 = pneg %p357
      %p602 = pneg %p354
      %p603 = pneg %p378
      %p604 = pneg %p375
      %p605 = pneg %p399
      %p606 = pneg %p396
      %p607 = pneg %p420
      %p608 = pneg %p417
      %p609 = pneg %p448
      %p610 = pneg %p445
      %s611 = smul.u32 16, %s34
      %p612 = scmp.lt.s32.totalorder %s33, 1
      %s613 = scalar_select %p612, %s33, 1
      %p614 = scmp.lt.s32.totalorder %s611, 15
      %s615 = scalar_select %p614, %s611, 15
      %s616 = smul.addr %s613, 16
      %s617 = sadd.s32 %s615, %s616
      %s618 = smul.addr %s617, 4
      %s619 = scalar_lea.vmem %s17, %s618
      %s620 = smul.u32 16, %s34
      %p621 = scmp.lt.s32.totalorder %s33, 1
      %s622 = scalar_select %p621, %s33, 1
      %p623 = scmp.lt.s32.totalorder %s620, 15
      %s624 = scalar_select %p623, %s620, 15
      %s625 = smul.addr %s622, 16
      %s626 = sadd.s32 %s624, %s625
      %s627 = smul.addr %s626, 4
      %s628 = scalar_lea.vmem %s0, %s627
      %s629 = smul.u32 16, %s34
      %s630 = smul.u32 16, %s35
      %p631 = scmp.lt.s32.totalorder %s33, 1
      %s632 = scalar_select %p631, %s33, 1
      %p633 = scmp.lt.s32.totalorder %s630, 15
      %s634 = scalar_select %p633, %s630, 15
      %s635 = smul.addr %s632, 16
      %s636 = sadd.s32 %s634, %s635
      %s637 = smul.addr %s636, 4
      %s638 = scalar_lea.vmem %s1, %s637
      %s639 = smul.u32 16, %s35
      %p640 = scmp.lt.s32.totalorder %s33, 1
      %s641 = scalar_select %p640, %s33, 1
      %p642 = scmp.lt.s32.totalorder %s35, 0
      %s643 = scalar_select %p642, %s35, 0
      %s644 = sadd.s32 %s643, %s641
      %s645 = scalar_lea.vmem %s2, %s644
      %s646 = smul.u32 16, %s34
      %p647 = scmp.lt.s32.totalorder %s33, 1
      %s648 = scalar_select %p647, %s33, 1
      %p649 = scmp.lt.s32.totalorder %s646, 15
      %s650 = scalar_select %p649, %s646, 15
      %s651 = smul.addr %s648, 16
      %s652 = sadd.s32 %s650, %s651
      %s653 = smul.addr %s652, 4
      %s654 = scalar_lea.vmem %s17, %s653
      %s655 = smul.u32 16, %s34
      %p657 = scmp.eq.s32.totalorder %s35, 0
      // Predicated region
      $region89: #{encoder_forward.2} parent=87 // pred_check
        %p658 = pneg %p657
      $region90: #{encoder_forward.2} parent=87 // pred_check_branch
        %660 = sbr.rel (%p658) target = $region92
      $region91: #{encoder_forward.2} parent=87 // pred_region
        %v661 = vld [vmem:[%s628] sm:$0xf]
        %v662 = vld [vmem:[%s628 + $0x4] sm:$0xf]
        %v663 = vld [vmem:[%s628 + $0x8] sm:$0xf]
        %v664 = vld [vmem:[%s628 + $0xc] sm:$0xf]
        %v665 = vld [vmem:[%s628 + $0x10] sm:$0xf]
        %v666 = vld [vmem:[%s628 + $0x14] sm:$0xf]
        %v667 = vld [vmem:[%s628 + $0x18] sm:$0xf]
        %v668 = vld [vmem:[%s628 + $0x1c] sm:$0xf]
        %v669 = vld [vmem:[%s628 + $0x20] sm:$0xf]
        %v670 = vld [vmem:[%s628 + $0x24] sm:$0xf]
        %v671 = vld [vmem:[%s628 + $0x28] sm:$0xf]
        %v672 = vld [vmem:[%s628 + $0x2c] sm:$0xf]
        %v673 = vld [vmem:[%s628 + $0x30] sm:$0xf]
        %v674 = vld [vmem:[%s628 + $0x34] sm:$0xf]
        %v675 = vld [vmem:[%s628 + $0x38] sm:$0xf]
        %v676 = vld [vmem:[%s628 + $0x3c] sm:$0xf]
        %v677 = vld [vmem:[%s3] sm:$0xf]
        %v678 = vld [vmem:[%s3 + $0x4] sm:$0xf]
        %v679 = vld [vmem:[%s3 + $0x8] sm:$0xf]
        %v680 = vld [vmem:[%s3 + $0xc] sm:$0xf]
        %v681 = vld [vmem:[%s3 + $0x10] sm:$0xf]
        %v682 = vld [vmem:[%s3 + $0x14] sm:$0xf]
        %v683 = vld [vmem:[%s3 + $0x18] sm:$0xf]
        %v684 = vld [vmem:[%s3 + $0x1c] sm:$0xf]
        %v685 = vld [vmem:[%s3 + $0x20] sm:$0xf]
        %v686 = vld [vmem:[%s3 + $0x24] sm:$0xf]
        %v687 = vld [vmem:[%s3 + $0x28] sm:$0xf]
        %v688 = vld [vmem:[%s3 + $0x2c] sm:$0xf]
        %v689 = vld [vmem:[%s3 + $0x30] sm:$0xf]
        %v690 = vld [vmem:[%s3 + $0x34] sm:$0xf]
        %v691 = vld [vmem:[%s3 + $0x38] sm:$0xf]
        %v692 = vld [vmem:[%s3 + $0x3c] sm:$0xf]
        %v693 = vld [vmem:[%s4] sm:$0x1]
        %v695 = vlaneseq
        %v696 = vshrl.u32 %v695, 7
        %v697 = vsub.s32 0, %v696
        %v698 = vrot.slane %v693, %v697
        %v716 = vunpack.c.l.b16 %v661
        %v717 = vunpack.c.l.b16 %v662
        %v718 = vunpack.c.l.b16 %v663
        %v719 = vunpack.c.l.b16 %v664
        %v720 = vunpack.c.l.b16 %v665
        %v721 = vunpack.c.l.b16 %v666
        %v722 = vunpack.c.l.b16 %v667
        %v723 = vunpack.c.l.b16 %v668
        %v724 = vunpack.c.l.b16 %v669
        %v725 = vunpack.c.l.b16 %v670
        %v726 = vunpack.c.l.b16 %v671
        %v727 = vunpack.c.l.b16 %v672
        %v728 = vunpack.c.l.b16 %v673
        %v729 = vunpack.c.l.b16 %v674
        %v730 = vunpack.c.l.b16 %v675
        %v731 = vunpack.c.l.b16 %v676
        %v732 = vpack.c.b16 %v717, %v716
        %v733 = vpack.c.b16 %v719, %v718
        %v734 = vpack.c.b16 %v721, %v720
        %v735 = vpack.c.b16 %v723, %v722
        %v736 = vpack.c.b16 %v725, %v724
        %v737 = vpack.c.b16 %v727, %v726
        %v738 = vpack.c.b16 %v729, %v728
        %v739 = vpack.c.b16 %v731, %v730
        %v764 = vunpack.c.l.b16 %v677
        %v765 = vunpack.c.l.b16 %v678
        %v766 = vunpack.c.l.b16 %v679
        %v767 = vunpack.c.l.b16 %v680
        %v768 = vunpack.c.l.b16 %v681
        %v769 = vunpack.c.l.b16 %v682
        %v770 = vunpack.c.l.b16 %v683
        %v771 = vunpack.c.l.b16 %v684
        %v772 = vunpack.c.l.b16 %v685
        %v773 = vunpack.c.l.b16 %v686
        %v774 = vunpack.c.l.b16 %v687
        %v775 = vunpack.c.l.b16 %v688
        %v776 = vunpack.c.l.b16 %v689
        %v777 = vunpack.c.l.b16 %v690
        %v778 = vunpack.c.l.b16 %v691
        %v779 = vunpack.c.l.b16 %v692
        %v780 = vpack.c.b16 %v765, %v764
        %v781 = vpack.c.b16 %v767, %v766
        %v782 = vpack.c.b16 %v769, %v768
        %v783 = vpack.c.b16 %v771, %v770
        %v784 = vpack.c.b16 %v773, %v772
        %v785 = vpack.c.b16 %v775, %v774
        %v786 = vpack.c.b16 %v777, %v776
        %v787 = vpack.c.b16 %v779, %v778
        %796 = vmatprep.subr.bf16.mxu0 0
        %797 = vmatpush1.bf16.msra.mxu0 %v780
        %798 = vmatprep.subr.bf16.mxu0 0
        %799 = vmatpush1.bf16.msra.mxu0 %v781
        %800 = vmatprep.subr.bf16.mxu0 0
        %801 = vmatpush1.bf16.msra.mxu0 %v782
        %802 = vmatprep.subr.bf16.mxu0 0
        %803 = vmatpush1.bf16.msra.mxu0 %v783
        %804 = vmatprep.subr.bf16.mxu0 0
        %805 = vmatpush1.bf16.msra.mxu0 %v784
        %806 = vmatprep.subr.bf16.mxu0 0
        %807 = vmatpush1.bf16.msra.mxu0 %v785
        %808 = vmatprep.subr.bf16.mxu0 0
        %809 = vmatpush1.bf16.msra.mxu0 %v786
        %810 = vmatprep.subr.bf16.mxu0 0
        %811 = vmatpush1.bf16.msra.mxu0 %v787
        %812 = vmatprep.subr.bf16.mxu0 0
        %813 = vmatpush1.bf16.msra.mxu0 0
        %814 = vmatprep.subr.bf16.mxu0 0
        %815 = vmatpush1.bf16.msra.mxu0 0
        %816 = vmatprep.subr.bf16.mxu0 0
        %817 = vmatpush1.bf16.msra.mxu0 0
        %818 = vmatprep.subr.bf16.mxu0 0
        %819 = vmatpush1.bf16.msra.mxu0 0
        %820 = vmatprep.subr.bf16.mxu0 0
        %821 = vmatpush1.bf16.msra.mxu0 0
        %822 = vmatprep.subr.bf16.mxu0 0
        %823 = vmatpush1.bf16.msra.mxu0 0
        %824 = vmatprep.subr.bf16.mxu0 0
        %825 = vmatpush1.bf16.msra.mxu0 0
        %826 = vmatprep.subr.bf16.mxu0 0
        %827 = vmatpush1.bf16.msra.mxu0 0
        %828 = vmatprep.mubr.bf16.mxu0 0
        %829 = vmatmul.mubr.bf16.gmra.mrb[0].mxu0 %v732
        %v830 = vpop.f32.mrb[0].mxu0
        %v831 = vadd.f32 %v698, %v830
        %v832 = vpop.f32.mrb[0].mxu0
        %v833 = vpop.f32.mrb[0].mxu0
        %v834 = vadd.f32 %v698, %v833
        %v835 = vpop.f32.mrb[0].mxu0
        %836 = vmatprep.mubr.bf16.mxu0 0
        %837 = vmatmul.mubr.bf16.gmra.mrb[0].mxu0 %v733
        %v838 = vpop.f32.mrb[0].mxu0
        %v839 = vadd.f32 %v698, %v838
        %v840 = vpop.f32.mrb[0].mxu0
        %v841 = vpop.f32.mrb[0].mxu0
        %v842 = vadd.f32 %v698, %v841
        %v843 = vpop.f32.mrb[0].mxu0
        %844 = vmatprep.mubr.bf16.mxu0 0
        %845 = vmatmul.mubr.bf16.gmra.mrb[0].mxu0 %v734
        %v846 = vpop.f32.mrb[0].mxu0
        %v847 = vadd.f32 %v698, %v846
        %v848 = vpop.f32.mrb[0].mxu0
        %v849 = vpop.f32.mrb[0].mxu0
        %v850 = vadd.f32 %v698, %v849
        %v851 = vpop.f32.mrb[0].mxu0
        %852 = vmatprep.mubr.bf16.mxu0 0
        %853 = vmatmul.mubr.bf16.gmra.mrb[0].mxu0 %v735
        %v854 = vpop.f32.mrb[0].mxu0
        %v855 = vadd.f32 %v698, %v854
        %v856 = vpop.f32.mrb[0].mxu0
        %v857 = vpop.f32.mrb[0].mxu0
        %v858 = vadd.f32 %v698, %v857
        %v859 = vpop.f32.mrb[0].mxu0
        %860 = vmatprep.mubr.bf16.mxu0 0
        %861 = vmatmul.mubr.bf16.gmra.mrb[0].mxu0 %v736
        %v862 = vpop.f32.mrb[0].mxu0
        %v863 = vadd.f32 %v698, %v862
        %v864 = vpop.f32.mrb[0].mxu0
        %v865 = vpop.f32.mrb[0].mxu0
        %v866 = vadd.f32 %v698, %v865
        %v867 = vpop.f32.mrb[0].mxu0
        %868 = vmatprep.mubr.bf16.mxu0 0
        %869 = vmatmul.mubr.bf16.gmra.mrb[0].mxu0 %v737
        %v870 = vpop.f32.mrb[0].mxu0
        %v871 = vadd.f32 %v698, %v870
        %v872 = vpop.f32.mrb[0].mxu0
        %v873 = vpop.f32.mrb[0].mxu0
        %v874 = vadd.f32 %v698, %v873
        %v875 = vpop.f32.mrb[0].mxu0
        %876 = vmatprep.mubr.bf16.mxu0 0
        %877 = vmatmul.mubr.bf16.gmra.mrb[0].mxu0 %v738
        %v878 = vpop.f32.mrb[0].mxu0
        %v879 = vadd.f32 %v698, %v878
        %v880 = vpop.f32.mrb[0].mxu0
        %v881 = vpop.f32.mrb[0].mxu0
        %v882 = vadd.f32 %v698, %v881
        %v883 = vpop.f32.mrb[0].mxu0
        %884 = vmatprep.mubr.bf16.mxu0 0
        %885 = vmatmul.mubr.bf16.gmra.mrb[0].mxu0 %v739
        %v886 = vpop.f32.mrb[0].mxu0
        %v887 = vadd.f32 %v698, %v886
        %v888 = vpop.f32.mrb[0].mxu0
        %v889 = vpop.f32.mrb[0].mxu0
        %v890 = vadd.f32 %v698, %v889
        %v891 = vpop.f32.mrb[0].mxu0
        %892 = vdwg.mxu0
        %v893 = vpack.c.bf16 %v834, %v831
        %v894 = vpack.c.bf16 %v842, %v839
        %v895 = vpack.c.bf16 %v850, %v847
        %v896 = vpack.c.bf16 %v858, %v855
        %v897 = vpack.c.bf16 %v866, %v863
        %v898 = vpack.c.bf16 %v874, %v871
        %v899 = vpack.c.bf16 %v882, %v879
        %v900 = vpack.c.bf16 %v890, %v887
        %901 = vst [vmem:[#allocation2] sm:$0xff] %v893
        %902 = vst [vmem:[#allocation2 + $0x8] sm:$0xff] %v894
        %903 = vst [vmem:[#allocation2 + $0x10] sm:$0xff] %v895
        %904 = vst [vmem:[#allocation2 + $0x18] sm:$0xff] %v896
        %905 = vst [vmem:[#allocation2 + $0x20] sm:$0xff] %v897
        %906 = vst [vmem:[#allocation2 + $0x28] sm:$0xff] %v898
        %907 = vst [vmem:[#allocation2 + $0x30] sm:$0xff] %v899
        %908 = vst [vmem:[#allocation2 + $0x38] sm:$0xff] %v900
        %909 = vst [vmem:[#allocation3] sm:$0xff] -1e+30
        %910 = vst [vmem:[#allocation3 + $0x8] sm:$0xff] -1e+30
        %911 = vst [vmem:[#allocation3 + $0x10] sm:$0xff] -1e+30
        %912 = vst [vmem:[#allocation3 + $0x18] sm:$0xff] -1e+30
        %913 = vst [vmem:[#allocation3 + $0x20] sm:$0xff] -1e+30
        %914 = vst [vmem:[#allocation3 + $0x28] sm:$0xff] -1e+30
        %915 = vst [vmem:[#allocation3 + $0x30] sm:$0xff] -1e+30
        %916 = vst [vmem:[#allocation3 + $0x38] sm:$0xff] -1e+30
        %917 = vst [vmem:[#allocation3 + $0x40] sm:$0xff] -1e+30
        %918 = vst [vmem:[#allocation3 + $0x48] sm:$0xff] -1e+30
        %919 = vst [vmem:[#allocation3 + $0x50] sm:$0xff] -1e+30
        %920 = vst [vmem:[#allocation3 + $0x58] sm:$0xff] -1e+30
        %921 = vst [vmem:[#allocation3 + $0x60] sm:$0xff] -1e+30
        %922 = vst [vmem:[#allocation3 + $0x68] sm:$0xff] -1e+30
        %923 = vst [vmem:[#allocation3 + $0x70] sm:$0xff] -1e+30
        %924 = vst [vmem:[#allocation3 + $0x78] sm:$0xff] -1e+30
        %925 = vst [vmem:[#allocation4] sm:$0xff] 1.0
        %926 = vst [vmem:[#allocation4 + $0x8] sm:$0xff] 1.0
        %927 = vst [vmem:[#allocation4 + $0x10] sm:$0xff] 1.0
        %928 = vst [vmem:[#allocation4 + $0x18] sm:$0xff] 1.0
        %929 = vst [vmem:[#allocation4 + $0x20] sm:$0xff] 1.0
        %930 = vst [vmem:[#allocation4 + $0x28] sm:$0xff] 1.0
        %931 = vst [vmem:[#allocation4 + $0x30] sm:$0xff] 1.0
        %932 = vst [vmem:[#allocation4 + $0x38] sm:$0xff] 1.0
        %933 = vst [vmem:[#allocation4 + $0x40] sm:$0xff] 1.0
        %934 = vst [vmem:[#allocation4 + $0x48] sm:$0xff] 1.0
        %935 = vst [vmem:[#allocation4 + $0x50] sm:$0xff] 1.0
        %936 = vst [vmem:[#allocation4 + $0x58] sm:$0xff] 1.0
        %937 = vst [vmem:[#allocation4 + $0x60] sm:$0xff] 1.0
        %938 = vst [vmem:[#allocation4 + $0x68] sm:$0xff] 1.0
        %939 = vst [vmem:[#allocation4 + $0x70] sm:$0xff] 1.0
        %940 = vst [vmem:[#allocation4 + $0x78] sm:$0xff] 1.0
        %941 = vst [vmem:[#allocation5] sm:$0xff] 0.0
        %942 = vst [vmem:[#allocation5 + $0x8] sm:$0xff] 0.0
        %943 = vst [vmem:[#allocation5 + $0x10] sm:$0xff] 0.0
        %944 = vst [vmem:[#allocation5 + $0x18] sm:$0xff] 0.0
        %945 = vst [vmem:[#allocation5 + $0x20] sm:$0xff] 0.0
        %946 = vst [vmem:[#allocation5 + $0x28] sm:$0xff] 0.0
        %947 = vst [vmem:[#allocation5 + $0x30] sm:$0xff] 0.0
        %948 = vst [vmem:[#allocation5 + $0x38] sm:$0xff] 0.0
        %949 = vst [vmem:[#allocation5 + $0x40] sm:$0xff] 0.0
        %950 = vst [vmem:[#allocation5 + $0x48] sm:$0xff] 0.0
        %951 = vst [vmem:[#allocation5 + $0x50] sm:$0xff] 0.0
        %952 = vst [vmem:[#allocation5 + $0x58] sm:$0xff] 0.0
        %953 = vst [vmem:[#allocation5 + $0x60] sm:$0xff] 0.0
        %954 = vst [vmem:[#allocation5 + $0x68] sm:$0xff] 0.0
        %955 = vst [vmem:[#allocation5 + $0x70] sm:$0xff] 0.0
        %956 = vst [vmem:[#allocation5 + $0x78] sm:$0xff] 0.0
      $region92: #{encoder_forward.2} parent=87 // pred_fallthru
        _
      %v957 = vld [vmem:[%s638] sm:$0xf]
      %v958 = vld [vmem:[%s638 + $0x4] sm:$0xf]
      %v959 = vld [vmem:[%s638 + $0x8] sm:$0xf]
      %v960 = vld [vmem:[%s638 + $0xc] sm:$0xf]
      %v961 = vld [vmem:[%s638 + $0x10] sm:$0xf]
      %v962 = vld [vmem:[%s638 + $0x14] sm:$0xf]
      %v963 = vld [vmem:[%s638 + $0x18] sm:$0xf]
      %v964 = vld [vmem:[%s638 + $0x1c] sm:$0xf]
      %v965 = vld [vmem:[%s638 + $0x20] sm:$0xf]
      %v966 = vld [vmem:[%s638 + $0x24] sm:$0xf]
      %v967 = vld [vmem:[%s638 + $0x28] sm:$0xf]
      %v968 = vld [vmem:[%s638 + $0x2c] sm:$0xf]
      %v969 = vld [vmem:[%s638 + $0x30] sm:$0xf]
      %v970 = vld [vmem:[%s638 + $0x34] sm:$0xf]
      %v971 = vld [vmem:[%s638 + $0x38] sm:$0xf]
      %v972 = vld [vmem:[%s638 + $0x3c] sm:$0xf]
      %v973 = vld [vmem:[%s5] sm:$0xff]
      %v974 = vld [vmem:[%s5 + $0x8] sm:$0xff]
      %v975 = vld [vmem:[%s5 + $0x10] sm:$0xff]
      %v976 = vld [vmem:[%s5 + $0x18] sm:$0xff]
      %v977 = vld [vmem:[%s5 + $0x20] sm:$0xff]
      %v978 = vld [vmem:[%s5 + $0x28] sm:$0xff]
      %v979 = vld [vmem:[%s5 + $0x30] sm:$0xff]
      %v980 = vld [vmem:[%s5 + $0x38] sm:$0xff]
      %v981 = vld [vmem:[%s5 + $0x40] sm:$0xff]
      %v982 = vld [vmem:[%s5 + $0x48] sm:$0xff]
      %v983 = vld [vmem:[%s5 + $0x50] sm:$0xff]
      %v984 = vld [vmem:[%s5 + $0x58] sm:$0xff]
      %v985 = vld [vmem:[%s5 + $0x60] sm:$0xff]
      %v986 = vld [vmem:[%s5 + $0x68] sm:$0xff]
      %v987 = vld [vmem:[%s5 + $0x70] sm:$0xff]
      %v988 = vld [vmem:[%s5 + $0x78] sm:$0xff]
      %v989 = vld [vmem:[%s6] sm:$0x3]
      %v991 = vlaneseq
      %v992 = vshrl.u32 %v991, 7
      %v993 = vsub.s32 0, %v992
      %v994 = vrot.slane %v989, %v993
      %v995 = vlaneseq
      %v996 = vshrl.u32 %v995, 7
      %v997 = vsub.s32 1, %v996
      %v998 = vrot.slane %v989, %v997
      %v1017 = vunpack.c.l.b16 %v957
      %v1018 = vunpack.c.l.b16 %v958
      %v1019 = vunpack.c.l.b16 %v959
      %v1020 = vunpack.c.l.b16 %v960
      %v1021 = vunpack.c.l.b16 %v961
      %v1022 = vunpack.c.l.b16 %v962
      %v1023 = vunpack.c.l.b16 %v963
      %v1024 = vunpack.c.l.b16 %v964
      %v1025 = vunpack.c.l.b16 %v965
      %v1026 = vunpack.c.l.b16 %v966
      %v1027 = vunpack.c.l.b16 %v967
      %v1028 = vunpack.c.l.b16 %v968
      %v1029 = vunpack.c.l.b16 %v969
      %v1030 = vunpack.c.l.b16 %v970
      %v1031 = vunpack.c.l.b16 %v971
      %v1032 = vunpack.c.l.b16 %v972
      %v1033 = vpack.c.b16 %v1018, %v1017
      %v1034 = vpack.c.b16 %v1020, %v1019
      %v1035 = vpack.c.b16 %v1022, %v1021
      %v1036 = vpack.c.b16 %v1024, %v1023
      %v1037 = vpack.c.b16 %v1026, %v1025
      %v1038 = vpack.c.b16 %v1028, %v1027
      %v1039 = vpack.c.b16 %v1030, %v1029
      %v1040 = vpack.c.b16 %v1032, %v1031
      %v1065 = vunpack.c.l.b16 %v973
      %v1066 = vunpack.c.h.b16 %v973
      %v1067 = vunpack.c.l.b16 %v974
      %v1068 = vunpack.c.h.b16 %v974
      %v1069 = vunpack.c.l.b16 %v975
      %v1070 = vunpack.c.h.b16 %v975
      %v1071 = vunpack.c.l.b16 %v976
      %v1072 = vunpack.c.h.b16 %v976
      %v1073 = vunpack.c.l.b16 %v977
      %v1074 = vunpack.c.h.b16 %v977
      %v1075 = vunpack.c.l.b16 %v978
      %v1076 = vunpack.c.h.b16 %v978
      %v1077 = vunpack.c.l.b16 %v979
      %v1078 = vunpack.c.h.b16 %v979
      %v1079 = vunpack.c.l.b16 %v980
      %v1080 = vunpack.c.h.b16 %v980
      %v1081 = vunpack.c.l.b16 %v981
      %v1082 = vunpack.c.h.b16 %v981
      %v1083 = vunpack.c.l.b16 %v982
      %v1084 = vunpack.c.h.b16 %v982
      %v1085 = vunpack.c.l.b16 %v983
      %v1086 = vunpack.c.h.b16 %v983
      %v1087 = vunpack.c.l.b16 %v984
      %v1088 = vunpack.c.h.b16 %v984
      %v1089 = vunpack.c.l.b16 %v985
      %v1090 = vunpack.c.h.b16 %v985
      %v1091 = vunpack.c.l.b16 %v986
      %v1092 = vunpack.c.h.b16 %v986
      %v1093 = vunpack.c.l.b16 %v987
      %v1094 = vunpack.c.h.b16 %v987
      %v1095 = vunpack.c.l.b16 %v988
      %v1096 = vunpack.c.h.b16 %v988
      %v1097 = vpack.c.b16 %v1067, %v1065
      %v1098 = vpack.c.b16 %v1068, %v1066
      %v1099 = vpack.c.b16 %v1071, %v1069
      %v1100 = vpack.c.b16 %v1072, %v1070
      %v1101 = vpack.c.b16 %v1075, %v1073
      %v1102 = vpack.c.b16 %v1076, %v1074
      %v1103 = vpack.c.b16 %v1079, %v1077
      %v1104 = vpack.c.b16 %v1080, %v1078
      %v1105 = vpack.c.b16 %v1083, %v1081
      %v1106 = vpack.c.b16 %v1084, %v1082
      %v1107 = vpack.c.b16 %v1087, %v1085
      %v1108 = vpack.c.b16 %v1088, %v1086
      %v1109 = vpack.c.b16 %v1091, %v1089
      %v1110 = vpack.c.b16 %v1092, %v1090
      %v1111 = vpack.c.b16 %v1095, %v1093
      %v1112 = vpack.c.b16 %v1096, %v1094
      %1129 = vmatprep.subr.bf16.mxu0 %v1098
      %1130 = vmatpush1.bf16.msra.mxu0 %v1097
      %1131 = vmatprep.subr.bf16.mxu0 %v1100
      %1132 = vmatpush1.bf16.msra.mxu0 %v1099
      %1133 = vmatprep.subr.bf16.mxu0 %v1102
      %1134 = vmatpush1.bf16.msra.mxu0 %v1101
      %1135 = vmatprep.subr.bf16.mxu0 %v1104
      %1136 = vmatpush1.bf16.msra.mxu0 %v1103
      %1137 = vmatprep.subr.bf16.mxu0 %v1106
      %1138 = vmatpush1.bf16.msra.mxu0 %v1105
      %1139 = vmatprep.subr.bf16.mxu0 %v1108
      %1140 = vmatpush1.bf16.msra.mxu0 %v1107
      %1141 = vmatprep.subr.bf16.mxu0 %v1110
      %1142 = vmatpush1.bf16.msra.mxu0 %v1109
      %1143 = vmatprep.subr.bf16.mxu0 %v1112
      %1144 = vmatpush1.bf16.msra.mxu0 %v1111
      %1145 = vmatprep.subr.bf16.mxu0 0
      %1146 = vmatpush1.bf16.msra.mxu0 0
      %1147 = vmatprep.subr.bf16.mxu0 0
      %1148 = vmatpush1.bf16.msra.mxu0 0
      %1149 = vmatprep.subr.bf16.mxu0 0
      %1150 = vmatpush1.bf16.msra.mxu0 0
      %1151 = vmatprep.subr.bf16.mxu0 0
      %1152 = vmatpush1.bf16.msra.mxu0 0
      %1153 = vmatprep.subr.bf16.mxu0 0
      %1154 = vmatpush1.bf16.msra.mxu0 0
      %1155 = vmatprep.subr.bf16.mxu0 0
      %1156 = vmatpush1.bf16.msra.mxu0 0
      %1157 = vmatprep.subr.bf16.mxu0 0
      %1158 = vmatpush1.bf16.msra.mxu0 0
      %1159 = vmatprep.subr.bf16.mxu0 0
      %1160 = vmatpush1.bf16.msra.mxu0 0
      %1161 = vmatprep.mubr.bf16.mxu0 0
      %1162 = vmatmul.mubr.bf16.gmra.mrb[0].mxu0 %v1033
      %v1163 = vpop.f32.mrb[0].mxu0
      %v1164 = vadd.f32 %v994, %v1163
      %v1165 = vpop.f32.mrb[0].mxu0
      %v1166 = vadd.f32 %v998, %v1165
      %v1167 = vpop.f32.mrb[0].mxu0
      %v1168 = vadd.f32 %v994, %v1167
      %v1169 = vpop.f32.mrb[0].mxu0
      %v1170 = vadd.f32 %v998, %v1169
      %1171 = vmatprep.mubr.bf16.mxu0 0
      %1172 = vmatmul.mubr.bf16.gmra.mrb[0].mxu0 %v1034
      %v1173 = vpop.f32.mrb[0].mxu0
      %v1174 = vadd.f32 %v994, %v1173
      %v1175 = vpop.f32.mrb[0].mxu0
      %v1176 = vadd.f32 %v998, %v1175
      %v1177 = vpop.f32.mrb[0].mxu0
      %v1178 = vadd.f32 %v994, %v1177
      %v1179 = vpop.f32.mrb[0].mxu0
      %v1180 = vadd.f32 %v998, %v1179
      %1181 = vmatprep.mubr.bf16.mxu0 0
      %1182 = vmatmul.mubr.bf16.gmra.mrb[0].mxu0 %v1035
      %v1183 = vpop.f32.mrb[0].mxu0
      %v1184 = vadd.f32 %v994, %v1183
      %v1185 = vpop.f32.mrb[0].mxu0
      %v1186 = vadd.f32 %v998, %v1185
      %v1187 = vpop.f32.mrb[0].mxu0
      %v1188 = vadd.f32 %v994, %v1187
      %v1189 = vpop.f32.mrb[0].mxu0
      %v1190 = vadd.f32 %v998, %v1189
      %1191 = vmatprep.mubr.bf16.mxu0 0
      %1192 = vmatmul.mubr.bf16.gmra.mrb[0].mxu0 %v1036
      %v1193 = vpop.f32.mrb[0].mxu0
      %v1194 = vadd.f32 %v994, %v1193
      %v1195 = vpop.f32.mrb[0].mxu0
      %v1196 = vadd.f32 %v998, %v1195
      %v1197 = vpop.f32.mrb[0].mxu0
      %v1198 = vadd.f32 %v994, %v1197
      %v1199 = vpop.f32.mrb[0].mxu0
      %v1200 = vadd.f32 %v998, %v1199
      %1201 = vmatprep.mubr.bf16.mxu0 0
      %1202 = vmatmul.mubr.bf16.gmra.mrb[0].mxu0 %v1037
      %v1203 = vpop.f32.mrb[0].mxu0
      %v1204 = vadd.f32 %v994, %v1203
      %v1205 = vpop.f32.mrb[0].mxu0
      %v1206 = vadd.f32 %v998, %v1205
      %v1207 = vpop.f32.mrb[0].mxu0
      %v1208 = vadd.f32 %v994, %v1207
      %v1209 = vpop.f32.mrb[0].mxu0
      %v1210 = vadd.f32 %v998, %v1209
      %1211 = vmatprep.mubr.bf16.mxu0 0
      %1212 = vmatmul.mubr.bf16.gmra.mrb[0].mxu0 %v1038
      %v1213 = vpop.f32.mrb[0].mxu0
      %v1214 = vadd.f32 %v994, %v1213
      %v1215 = vpop.f32.mrb[0].mxu0
      %v1216 = vadd.f32 %v998, %v1215
      %v1217 = vpop.f32.mrb[0].mxu0
      %v1218 = vadd.f32 %v994, %v1217
      %v1219 = vpop.f32.mrb[0].mxu0
      %v1220 = vadd.f32 %v998, %v1219
      %1221 = vmatprep.mubr.bf16.mxu0 0
      %1222 = vmatmul.mubr.bf16.gmra.mrb[0].mxu0 %v1039
      %v1223 = vpop.f32.mrb[0].mxu0
      %v1224 = vadd.f32 %v994, %v1223
      %v1225 = vpop.f32.mrb[0].mxu0
      %v1226 = vadd.f32 %v998, %v1225
      %v1227 = vpop.f32.mrb[0].mxu0
      %v1228 = vadd.f32 %v994, %v1227
      %v1229 = vpop.f32.mrb[0].mxu0
      %v1230 = vadd.f32 %v998, %v1229
      %1231 = vmatprep.mubr.bf16.mxu0 0
      %1232 = vmatmul.mubr.bf16.gmra.mrb[0].mxu0 %v1040
      %v1233 = vpop.f32.mrb[0].mxu0
      %v1234 = vadd.f32 %v994, %v1233
      %v1235 = vpop.f32.mrb[0].mxu0
      %v1236 = vadd.f32 %v998, %v1235
      %v1237 = vpop.f32.mrb[0].mxu0
      %v1238 = vadd.f32 %v994, %v1237
      %v1239 = vpop.f32.mrb[0].mxu0
      %v1240 = vadd.f32 %v998, %v1239
      %1241 = vdwg.mxu0
      %v1242 = vpack.c.bf16 %v1168, %v1164
      %v1243 = vpack.c.bf16 %v1170, %v1166
      %v1244 = vpack.c.bf16 %v1178, %v1174
      %v1245 = vpack.c.bf16 %v1180, %v1176
      %v1246 = vpack.c.bf16 %v1188, %v1184
      %v1247 = vpack.c.bf16 %v1190, %v1186
      %v1248 = vpack.c.bf16 %v1198, %v1194
      %v1249 = vpack.c.bf16 %v1200, %v1196
      %v1250 = vpack.c.bf16 %v1208, %v1204
      %v1251 = vpack.c.bf16 %v1210, %v1206
      %v1252 = vpack.c.bf16 %v1218, %v1214
      %v1253 = vpack.c.bf16 %v1220, %v1216
      %v1254 = vpack.c.bf16 %v1228, %v1224
      %v1255 = vpack.c.bf16 %v1230, %v1226
      %v1256 = vpack.c.bf16 %v1238, %v1234
      %v1257 = vpack.c.bf16 %v1240, %v1236
      %v1258 = vld [vmem:[#allocation2] sm:$0xff]
      %v1259 = vld [vmem:[#allocation2 + $0x8] sm:$0xff]
      %v1260 = vld [vmem:[#allocation2 + $0x10] sm:$0xff]
      %v1261 = vld [vmem:[#allocation2 + $0x18] sm:$0xff]
      %v1262 = vld [vmem:[#allocation2 + $0x20] sm:$0xff]
      %v1263 = vld [vmem:[#allocation2 + $0x28] sm:$0xff]
      %v1264 = vld [vmem:[#allocation2 + $0x30] sm:$0xff]
      %v1265 = vld [vmem:[#allocation2 + $0x38] sm:$0xff]
      %v1266 = vld [vmem:[%s645] sm:$0x1]
      %v1268 = vlaneseq
      %v1269 = vshrl.u32 %v1268, 7
      %v1270 = vsub.s32 0, %v1269
      %v1271 = vrot.slane %v1266, %v1270
      %vm1273 = vcmask 64512
      %v1275 = vsel %vm1273, %v1258, 0
      %v1278 = vsel %vm1273, %v1259, 0
      %v1281 = vsel %vm1273, %v1260, 0
      %v1284 = vsel %vm1273, %v1261, 0
      %v1287 = vsel %vm1273, %v1262, 0
      %v1290 = vsel %vm1273, %v1263, 0
      %v1293 = vsel %vm1273, %v1264, 0
      %v1296 = vsel %vm1273, %v1265, 0
      %v1299 = vsel %vm1273, %v1242, 0
      %v1302 = vsel %vm1273, %v1244, 0
      %v1305 = vsel %vm1273, %v1246, 0
      %v1308 = vsel %vm1273, %v1248, 0
      %v1311 = vsel %vm1273, %v1250, 0
      %v1314 = vsel %vm1273, %v1252, 0
      %v1317 = vsel %vm1273, %v1254, 0
      %v1320 = vsel %vm1273, %v1256, 0
      %1322 = vmatprep.subr.bf16.mxu0 0
      %1323 = vmatpush1.bf16.xpose.msra.mxu0 %v1299
      %1324 = vmatprep.subr.bf16.mxu0 0
      %1325 = vmatpush1.bf16.xpose.msra.mxu0 %v1302
      %1326 = vmatprep.subr.bf16.mxu0 0
      %1327 = vmatpush1.bf16.xpose.msra.mxu0 %v1305
      %1328 = vmatprep.subr.bf16.mxu0 0
      %1329 = vmatpush1.bf16.xpose.msra.mxu0 %v1308
      %1330 = vmatprep.subr.bf16.mxu0 0
      %1331 = vmatpush1.bf16.xpose.msra.mxu0 %v1311
      %1332 = vmatprep.subr.bf16.mxu0 0
      %1333 = vmatpush1.bf16.xpose.msra.mxu0 %v1314
      %1334 = vmatprep.subr.bf16.mxu0 0
      %1335 = vmatpush1.bf16.xpose.msra.mxu0 %v1317
      %1336 = vmatprep.subr.bf16.mxu0 0
      %1337 = vmatpush1.bf16.xpose.msra.mxu0 %v1320
      %1338 = vmatprep.subr.bf16.mxu0 0
      %1339 = vmatpush1.bf16.xpose.msra.mxu0 0
      %1340 = vmatprep.subr.bf16.mxu0 0
      %1341 = vmatpush1.bf16.xpose.msra.mxu0 0
      %1342 = vmatprep.subr.bf16.mxu0 0
      %1343 = vmatpush1.bf16.xpose.msra.mxu0 0
      %1344 = vmatprep.subr.bf16.mxu0 0
      %1345 = vmatpush1.bf16.xpose.msra.mxu0 0
      %1346 = vmatprep.subr.bf16.mxu0 0
      %1347 = vmatpush1.bf16.xpose.msra.mxu0 0
      %1348 = vmatprep.subr.bf16.mxu0 0
      %1349 = vmatpush1.bf16.xpose.msra.mxu0 0
      %1350 = vmatprep.subr.bf16.mxu0 0
      %1351 = vmatpush1.bf16.xpose.msra.mxu0 0
      %1352 = vmatprep.subr.bf16.mxu0 0
      %1353 = vmatpush1.bf16.xpose.msra.mxu0 0
      %1354 = vmatprep.mubr.bf16.mxu0 0
      %1355 = vmatmul.mubr.bf16.gmra.mrb[0].mxu0 %v1275
      %v1356 = vpop.f32.mrb[0].mxu0
      %v1357 = vadd.f32 %v1271, %v1356
      %v1358 = vpop.f32.mrb[0].mxu0
      %v1359 = vpop.f32.mrb[0].mxu0
      %v1360 = vadd.f32 %v1271, %v1359
      %v1361 = vpop.f32.mrb[0].mxu0
      %1362 = vmatprep.mubr.bf16.mxu0 0
      %1363 = vmatmul.mubr.bf16.gmra.mrb[0].mxu0 %v1278
      %v1364 = vpop.f32.mrb[0].mxu0
      %v1365 = vadd.f32 %v1271, %v1364
      %v1366 = vpop.f32.mrb[0].mxu0
      %v1367 = vpop.f32.mrb[0].mxu0
      %v1368 = vadd.f32 %v1271, %v1367
      %v1369 = vpop.f32.mrb[0].mxu0
      %1370 = vmatprep.mubr.bf16.mxu0 0
      %1371 = vmatmul.mubr.bf16.gmra.mrb[0].mxu0 %v1281
      %v1372 = vpop.f32.mrb[0].mxu0
      %v1373 = vadd.f32 %v1271, %v1372
      %v1374 = vpop.f32.mrb[0].mxu0
      %v1375 = vpop.f32.mrb[0].mxu0
      %v1376 = vadd.f32 %v1271, %v1375
      %v1377 = vpop.f32.mrb[0].mxu0
      %1378 = vmatprep.mubr.bf16.mxu0 0
      %1379 = vmatmul.mubr.bf16.gmra.mrb[0].mxu0 %v1284
      %v1380 = vpop.f32.mrb[0].mxu0
      %v1381 = vadd.f32 %v1271, %v1380
      %v1382 = vpop.f32.mrb[0].mxu0
      %v1383 = vpop.f32.mrb[0].mxu0
      %v1384 = vadd.f32 %v1271, %v1383
      %v1385 = vpop.f32.mrb[0].mxu0
      %1386 = vmatprep.mubr.bf16.mxu0 0
      %1387 = vmatmul.mubr.bf16.gmra.mrb[0].mxu0 %v1287
      %v1388 = vpop.f32.mrb[0].mxu0
      %v1389 = vadd.f32 %v1271, %v1388
      %v1390 = vpop.f32.mrb[0].mxu0
      %v1391 = vpop.f32.mrb[0].mxu0
      %v1392 = vadd.f32 %v1271, %v1391
      %v1393 = vpop.f32.mrb[0].mxu0
      %1394 = vmatprep.mubr.bf16.mxu0 0
      %1395 = vmatmul.mubr.bf16.gmra.mrb[0].mxu0 %v1290
      %v1396 = vpop.f32.mrb[0].mxu0
      %v1397 = vadd.f32 %v1271, %v1396
      %v1398 = vpop.f32.mrb[0].mxu0
      %v1399 = vpop.f32.mrb[0].mxu0
      %v1400 = vadd.f32 %v1271, %v1399
      %v1401 = vpop.f32.mrb[0].mxu0
      %1402 = vmatprep.mubr.bf16.mxu0 0
      %1403 = vmatmul.mubr.bf16.gmra.mrb[0].mxu0 %v1293
      %v1404 = vpop.f32.mrb[0].mxu0
      %v1405 = vadd.f32 %v1271, %v1404
      %v1406 = vpop.f32.mrb[0].mxu0
      %v1407 = vpop.f32.mrb[0].mxu0
      %v1408 = vadd.f32 %v1271, %v1407
      %v1409 = vpop.f32.mrb[0].mxu0
      %1410 = vmatprep.mubr.bf16.mxu0 0
      %1411 = vmatmul.mubr.bf16.gmra.mrb[0].mxu0 %v1296
      %v1412 = vpop.f32.mrb[0].mxu0
      %v1413 = vadd.f32 %v1271, %v1412
      %v1414 = vpop.f32.mrb[0].mxu0
      %v1415 = vpop.f32.mrb[0].mxu0
      %v1416 = vadd.f32 %v1271, %v1415
      %v1417 = vpop.f32.mrb[0].mxu0
      %1418 = vdwg.mxu0
      %v1419 = vld [vmem:[#allocation3] sm:$0xff]
      %v1420 = vld [vmem:[#allocation3 + $0x8] sm:$0xff]
      %v1421 = vld [vmem:[#allocation3 + $0x10] sm:$0xff]
      %v1422 = vld [vmem:[#allocation3 + $0x18] sm:$0xff]
      %v1423 = vld [vmem:[#allocation3 + $0x20] sm:$0xff]
      %v1424 = vld [vmem:[#allocation3 + $0x28] sm:$0xff]
      %v1425 = vld [vmem:[#allocation3 + $0x30] sm:$0xff]
      %v1426 = vld [vmem:[#allocation3 + $0x38] sm:$0xff]
      %v1427 = vld [vmem:[#allocation3 + $0x40] sm:$0xff]
      %v1428 = vld [vmem:[#allocation3 + $0x48] sm:$0xff]
      %v1429 = vld [vmem:[#allocation3 + $0x50] sm:$0xff]
      %v1430 = vld [vmem:[#allocation3 + $0x58] sm:$0xff]
      %v1431 = vld [vmem:[#allocation3 + $0x60] sm:$0xff]
      %v1432 = vld [vmem:[#allocation3 + $0x68] sm:$0xff]
      %v1433 = vld [vmem:[#allocation3 + $0x70] sm:$0xff]
      %v1434 = vld [vmem:[#allocation3 + $0x78] sm:$0xff]
      %v1435 = vld [vmem:[#allocation4] sm:$0xff]
      %v1436 = vld [vmem:[#allocation4 + $0x8] sm:$0xff]
      %v1437 = vld [vmem:[#allocation4 + $0x10] sm:$0xff]
      %v1438 = vld [vmem:[#allocation4 + $0x18] sm:$0xff]
      %v1439 = vld [vmem:[#allocation4 + $0x20] sm:$0xff]
      %v1440 = vld [vmem:[#allocation4 + $0x28] sm:$0xff]
      %v1441 = vld [vmem:[#allocation4 + $0x30] sm:$0xff]
      %v1442 = vld [vmem:[#allocation4 + $0x38] sm:$0xff]
      %v1443 = vld [vmem:[#allocation4 + $0x40] sm:$0xff]
      %v1444 = vld [vmem:[#allocation4 + $0x48] sm:$0xff]
      %v1445 = vld [vmem:[#allocation4 + $0x50] sm:$0xff]
      %v1446 = vld [vmem:[#allocation4 + $0x58] sm:$0xff]
      %v1447 = vld [vmem:[#allocation4 + $0x60] sm:$0xff]
      %v1448 = vld [vmem:[#allocation4 + $0x68] sm:$0xff]
      %v1449 = vld [vmem:[#allocation4 + $0x70] sm:$0xff]
      %v1450 = vld [vmem:[#allocation4 + $0x78] sm:$0xff]
      %1451 = vmax.xlane.f32.xlu0 %v1357
      %v1452 = vpop.xlane.xlu0 %1451
      %1453 = vmax.xlane.f32.xlu0 %v1360
      %v1454 = vpop.xlane.xlu0 %1453
      %1455 = vmax.xlane.f32.xlu0 %v1365
      %v1456 = vpop.xlane.xlu0 %1455
      %1457 = vmax.xlane.f32.xlu0 %v1368
      %v1458 = vpop.xlane.xlu0 %1457
      %1459 = vmax.xlane.f32.xlu0 %v1373
      %v1460 = vpop.xlane.xlu0 %1459
      %1461 = vmax.xlane.f32.xlu0 %v1376
      %v1462 = vpop.xlane.xlu0 %1461
      %1463 = vmax.xlane.f32.xlu0 %v1381
      %v1464 = vpop.xlane.xlu0 %1463
      %1465 = vmax.xlane.f32.xlu0 %v1384
      %v1466 = vpop.xlane.xlu0 %1465
      %1467 = vmax.xlane.f32.xlu0 %v1389
      %v1468 = vpop.xlane.xlu0 %1467
      %1469 = vmax.xlane.f32.xlu0 %v1392
      %v1470 = vpop.xlane.xlu0 %1469
      %1471 = vmax.xlane.f32.xlu0 %v1397
      %v1472 = vpop.xlane.xlu0 %1471
      %1473 = vmax.xlane.f32.xlu0 %v1400
      %v1474 = vpop.xlane.xlu0 %1473
      %1475 = vmax.xlane.f32.xlu0 %v1405
      %v1476 = vpop.xlane.xlu0 %1475
      %1477 = vmax.xlane.f32.xlu0 %v1408
      %v1478 = vpop.xlane.xlu0 %1477
      %1479 = vmax.xlane.f32.xlu0 %v1413
      %v1480 = vpop.xlane.xlu0 %1479
      %1481 = vmax.xlane.f32.xlu0 %v1416
      %v1482 = vpop.xlane.xlu0 %1481
      %v1483 = vmax.f32 %v1419, %v1452
      %v1484 = vmax.f32 %v1420, %v1454
      %v1485 = vmax.f32 %v1421, %v1456
      %v1486 = vmax.f32 %v1422, %v1458
      %v1487 = vmax.f32 %v1423, %v1460
      %v1488 = vmax.f32 %v1424, %v1462
      %v1489 = vmax.f32 %v1425, %v1464
      %v1490 = vmax.f32 %v1426, %v1466
      %v1491 = vmax.f32 %v1427, %v1468
      %v1492 = vmax.f32 %v1428, %v1470
      %v1493 = vmax.f32 %v1429, %v1472
      %v1494 = vmax.f32 %v1430, %v1474
      %v1495 = vmax.f32 %v1431, %v1476
      %v1496 = vmax.f32 %v1432, %v1478
      %v1497 = vmax.f32 %v1433, %v1480
      %v1498 = vmax.f32 %v1434, %v1482
      %v1499 = vsub.f32 %v1419, %v1483
      %v1500 = vsub.f32 %v1420, %v1484
      %v1501 = vsub.f32 %v1421, %v1485
      %v1502 = vsub.f32 %v1422, %v1486
      %v1503 = vsub.f32 %v1423, %v1487
      %v1504 = vsub.f32 %v1424, %v1488
      %v1505 = vsub.f32 %v1425, %v1489
      %v1506 = vsub.f32 %v1426, %v1490
      %v1507 = vsub.f32 %v1427, %v1491
      %v1508 = vsub.f32 %v1428, %v1492
      %v1509 = vsub.f32 %v1429, %v1493
      %v1510 = vsub.f32 %v1430, %v1494
      %v1511 = vsub.f32 %v1431, %v1495
      %v1512 = vsub.f32 %v1432, %v1496
      %v1513 = vsub.f32 %v1433, %v1497
      %v1514 = vsub.f32 %v1434, %v1498
      %v1515 = vmul.f32 %v1499, 1.442695
      %v1516 = vpow.pop %v1515
      %v1517 = vmul.f32 %v1500, 1.442695
      %v1518 = vpow.pop %v1517
      %v1519 = vmul.f32 %v1501, 1.442695
      %v1520 = vpow.pop %v1519
      %v1521 = vmul.f32 %v1502, 1.442695
      %v1522 = vpow.pop %v1521
      %v1523 = vmul.f32 %v1503, 1.442695
      %v1524 = vpow.pop %v1523
      %v1525 = vmul.f32 %v1504, 1.442695
      %v1526 = vpow.pop %v1525
      %v1527 = vmul.f32 %v1505, 1.442695
      %v1528 = vpow.pop %v1527
      %v1529 = vmul.f32 %v1506, 1.442695
      %v1530 = vpow.pop %v1529
      %v1531 = vmul.f32 %v1507, 1.442695
      %v1532 = vpow.pop %v1531
      %v1533 = vmul.f32 %v1508, 1.442695
      %v1534 = vpow.pop %v1533
      %v1535 = vmul.f32 %v1509, 1.442695
      %v1536 = vpow.pop %v1535
      %v1537 = vmul.f32 %v1510, 1.442695
      %v1538 = vpow.pop %v1537
      %v1539 = vmul.f32 %v1511, 1.442695
      %v1540 = vpow.pop %v1539
      %v1541 = vmul.f32 %v1512, 1.442695
      %v1542 = vpow.pop %v1541
      %v1543 = vmul.f32 %v1513, 1.442695
      %v1544 = vpow.pop %v1543
      %v1545 = vmul.f32 %v1514, 1.442695
      %v1546 = vpow.pop %v1545
      %1548 = vset.pattern.permute.xlu0 0
      %1549 = vperm.xlu0 %1548, %v1483
      %v1550 = vpop.permute.xlu0 %1549
      %1553 = vset.pattern.permute.xlu0 0
      %1554 = vperm.xlu0 %1553, %v1484
      %v1555 = vpop.permute.xlu0 %1554
      %1558 = vset.pattern.permute.xlu0 0
      %1559 = vperm.xlu0 %1558, %v1485
      %v1560 = vpop.permute.xlu0 %1559
      %1563 = vset.pattern.permute.xlu0 0
      %1564 = vperm.xlu0 %1563, %v1486
      %v1565 = vpop.permute.xlu0 %1564
      %1568 = vset.pattern.permute.xlu0 0
      %1569 = vperm.xlu0 %1568, %v1487
      %v1570 = vpop.permute.xlu0 %1569
      %1573 = vset.pattern.permute.xlu0 0
      %1574 = vperm.xlu0 %1573, %v1488
      %v1575 = vpop.permute.xlu0 %1574
      %1578 = vset.pattern.permute.xlu0 0
      %1579 = vperm.xlu0 %1578, %v1489
      %v1580 = vpop.permute.xlu0 %1579
      %1583 = vset.pattern.permute.xlu0 0
      %1584 = vperm.xlu0 %1583, %v1490
      %v1585 = vpop.permute.xlu0 %1584
      %1588 = vset.pattern.permute.xlu0 0
      %1589 = vperm.xlu0 %1588, %v1491
      %v1590 = vpop.permute.xlu0 %1589
      %1593 = vset.pattern.permute.xlu0 0
      %1594 = vperm.xlu0 %1593, %v1492
      %v1595 = vpop.permute.xlu0 %1594
      %1598 = vset.pattern.permute.xlu0 0
      %1599 = vperm.xlu0 %1598, %v1493
      %v1600 = vpop.permute.xlu0 %1599
      %1603 = vset.pattern.permute.xlu0 0
      %1604 = vperm.xlu0 %1603, %v1494
      %v1605 = vpop.permute.xlu0 %1604
      %1608 = vset.pattern.permute.xlu0 0
      %1609 = vperm.xlu0 %1608, %v1495
      %v1610 = vpop.permute.xlu0 %1609
      %1613 = vset.pattern.permute.xlu0 0
      %1614 = vperm.xlu0 %1613, %v1496
      %v1615 = vpop.permute.xlu0 %1614
      %1618 = vset.pattern.permute.xlu0 0
      %1619 = vperm.xlu0 %1618, %v1497
      %v1620 = vpop.permute.xlu0 %1619
      %1623 = vset.pattern.permute.xlu0 0
      %1624 = vperm.xlu0 %1623, %v1498
      %v1625 = vpop.permute.xlu0 %1624
      %v1627 = vsub.f32 %v1357, %v1550
      %v1628 = vsub.f32 %v1360, %v1555
      %v1629 = vsub.f32 %v1365, %v1560
      %v1630 = vsub.f32 %v1368, %v1565
      %v1631 = vsub.f32 %v1373, %v1570
      %v1632 = vsub.f32 %v1376, %v1575
      %v1633 = vsub.f32 %v1381, %v1580
      %v1634 = vsub.f32 %v1384, %v1585
      %v1635 = vsub.f32 %v1389, %v1590
      %v1636 = vsub.f32 %v1392, %v1595
      %v1637 = vsub.f32 %v1397, %v1600
      %v1638 = vsub.f32 %v1400, %v1605
      %v1639 = vsub.f32 %v1405, %v1610
      %v1640 = vsub.f32 %v1408, %v1615
      %v1641 = vsub.f32 %v1413, %v1620
      %v1642 = vsub.f32 %v1416, %v1625
      %v1643 = vmul.f32 %v1627, 1.442695
      %v1644 = vpow.pop %v1643
      %v1645 = vmul.f32 %v1628, 1.442695
      %v1646 = vpow.pop %v1645
      %v1647 = vmul.f32 %v1629, 1.442695
      %v1648 = vpow.pop %v1647
      %v1649 = vmul.f32 %v1630, 1.442695
      %v1650 = vpow.pop %v1649
      %v1651 = vmul.f32 %v1631, 1.442695
      %v1652 = vpow.pop %v1651
      %v1653 = vmul.f32 %v1632, 1.442695
      %v1654 = vpow.pop %v1653
      %v1655 = vmul.f32 %v1633, 1.442695
      %v1656 = vpow.pop %v1655
      %v1657 = vmul.f32 %v1634, 1.442695
      %v1658 = vpow.pop %v1657
      %v1659 = vmul.f32 %v1635, 1.442695
      %v1660 = vpow.pop %v1659
      %v1661 = vmul.f32 %v1636, 1.442695
      %v1662 = vpow.pop %v1661
      %v1663 = vmul.f32 %v1637, 1.442695
      %v1664 = vpow.pop %v1663
      %v1665 = vmul.f32 %v1638, 1.442695
      %v1666 = vpow.pop %v1665
      %v1667 = vmul.f32 %v1639, 1.442695
      %v1668 = vpow.pop %v1667
      %v1669 = vmul.f32 %v1640, 1.442695
      %v1670 = vpow.pop %v1669
      %v1671 = vmul.f32 %v1641, 1.442695
      %v1672 = vpow.pop %v1671
      %v1673 = vmul.f32 %v1642, 1.442695
      %v1674 = vpow.pop %v1673
      %v1675 = vmul.f32 %v1516, %v1435
      %v1676 = vmul.f32 %v1518, %v1436
      %v1677 = vmul.f32 %v1520, %v1437
      %v1678 = vmul.f32 %v1522, %v1438
      %v1679 = vmul.f32 %v1524, %v1439
      %v1680 = vmul.f32 %v1526, %v1440
      %v1681 = vmul.f32 %v1528, %v1441
      %v1682 = vmul.f32 %v1530, %v1442
      %v1683 = vmul.f32 %v1532, %v1443
      %v1684 = vmul.f32 %v1534, %v1444
      %v1685 = vmul.f32 %v1536, %v1445
      %v1686 = vmul.f32 %v1538, %v1446
      %v1687 = vmul.f32 %v1540, %v1447
      %v1688 = vmul.f32 %v1542, %v1448
      %v1689 = vmul.f32 %v1544, %v1449
      %v1690 = vmul.f32 %v1546, %v1450
      %1691 = vadd.xlane.f32.xlu0 %v1644
      %v1692 = vpop.xlane.xlu0 %1691
      %1693 = vadd.xlane.f32.xlu0 %v1646
      %v1694 = vpop.xlane.xlu0 %1693
      %1695 = vadd.xlane.f32.xlu0 %v1648
      %v1696 = vpop.xlane.xlu0 %1695
      %1697 = vadd.xlane.f32.xlu0 %v1650
      %v1698 = vpop.xlane.xlu0 %1697
      %1699 = vadd.xlane.f32.xlu0 %v1652
      %v1700 = vpop.xlane.xlu0 %1699
      %1701 = vadd.xlane.f32.xlu0 %v1654
      %v1702 = vpop.xlane.xlu0 %1701
      %1703 = vadd.xlane.f32.xlu0 %v1656
      %v1704 = vpop.xlane.xlu0 %1703
      %1705 = vadd.xlane.f32.xlu0 %v1658
      %v1706 = vpop.xlane.xlu0 %1705
      %1707 = vadd.xlane.f32.xlu0 %v1660
      %v1708 = vpop.xlane.xlu0 %1707
      %1709 = vadd.xlane.f32.xlu0 %v1662
      %v1710 = vpop.xlane.xlu0 %1709
      %1711 = vadd.xlane.f32.xlu0 %v1664
      %v1712 = vpop.xlane.xlu0 %1711
      %1713 = vadd.xlane.f32.xlu0 %v1666
      %v1714 = vpop.xlane.xlu0 %1713
      %1715 = vadd.xlane.f32.xlu0 %v1668
      %v1716 = vpop.xlane.xlu0 %1715
      %1717 = vadd.xlane.f32.xlu0 %v1670
      %v1718 = vpop.xlane.xlu0 %1717
      %1719 = vadd.xlane.f32.xlu0 %v1672
      %v1720 = vpop.xlane.xlu0 %1719
      %1721 = vadd.xlane.f32.xlu0 %v1674
      %v1722 = vpop.xlane.xlu0 %1721
      %v1723 = vadd.f32 %v1675, %v1692
      %v1724 = vadd.f32 %v1676, %v1694
      %v1725 = vadd.f32 %v1677, %v1696
      %v1726 = vadd.f32 %v1678, %v1698
      %v1727 = vadd.f32 %v1679, %v1700
      %v1728 = vadd.f32 %v1680, %v1702
      %v1729 = vadd.f32 %v1681, %v1704
      %v1730 = vadd.f32 %v1682, %v1706
      %v1731 = vadd.f32 %v1683, %v1708
      %v1732 = vadd.f32 %v1684, %v1710
      %v1733 = vadd.f32 %v1685, %v1712
      %v1734 = vadd.f32 %v1686, %v1714
      %v1735 = vadd.f32 %v1687, %v1716
      %v1736 = vadd.f32 %v1688, %v1718
      %v1737 = vadd.f32 %v1689, %v1720
      %v1738 = vadd.f32 %v1690, %v1722
      %v1739 = vpack.c.bf16 %v1646, %v1644
      %v1740 = vpack.c.bf16 %v1650, %v1648
      %v1741 = vpack.c.bf16 %v1654, %v1652
      %v1742 = vpack.c.bf16 %v1658, %v1656
      %v1743 = vpack.c.bf16 %v1662, %v1660
      %v1744 = vpack.c.bf16 %v1666, %v1664
      %v1745 = vpack.c.bf16 %v1670, %v1668
      %v1746 = vpack.c.bf16 %v1674, %v1672
      %1747 = vmatprep.subr.bf16.mxu0 0
      %1748 = vmatpush1.bf16.msra.mxu0 %v1243
      %1749 = vmatprep.subr.bf16.mxu0 0
      %1750 = vmatpush1.bf16.msra.mxu0 %v1245
      %1751 = vmatprep.subr.bf16.mxu0 0
      %1752 = vmatpush1.bf16.msra.mxu0 %v1247
      %1753 = vmatprep.subr.bf16.mxu0 0
      %1754 = vmatpush1.bf16.msra.mxu0 %v1249
      %1755 = vmatprep.subr.bf16.mxu0 0
      %1756 = vmatpush1.bf16.msra.mxu0 %v1251
      %1757 = vmatprep.subr.bf16.mxu0 0
      %1758 = vmatpush1.bf16.msra.mxu0 %v1253
      %1759 = vmatprep.subr.bf16.mxu0 0
      %1760 = vmatpush1.bf16.msra.mxu0 %v1255
      %1761 = vmatprep.subr.bf16.mxu0 0
      %1762 = vmatpush1.bf16.msra.mxu0 %v1257
      %1763 = vmatprep.subr.bf16.mxu0 0
      %1764 = vmatpush1.bf16.msra.mxu0 0
      %1765 = vmatprep.subr.bf16.mxu0 0
      %1766 = vmatpush1.bf16.msra.mxu0 0
      %1767 = vmatprep.subr.bf16.mxu0 0
      %1768 = vmatpush1.bf16.msra.mxu0 0
      %1769 = vmatprep.subr.bf16.mxu0 0
      %1770 = vmatpush1.bf16.msra.mxu0 0
      %1771 = vmatprep.subr.bf16.mxu0 0
      %1772 = vmatpush1.bf16.msra.mxu0 0
      %1773 = vmatprep.subr.bf16.mxu0 0
      %1774 = vmatpush1.bf16.msra.mxu0 0
      %1775 = vmatprep.subr.bf16.mxu0 0
      %1776 = vmatpush1.bf16.msra.mxu0 0
      %1777 = vmatprep.subr.bf16.mxu0 0
      %1778 = vmatpush1.bf16.msra.mxu0 0
      %1779 = vmatprep.mubr.bf16.mxu0 0
      %1780 = vmatmul.mubr.bf16.gmra.mrb[0].mxu0 %v1739
      %v1781 = vpop.f32.mrb[0].mxu0
      %v1782 = vadd.f32 0.0, %v1781
      %v1783 = vpop.f32.mrb[0].mxu0
      %v1784 = vpop.f32.mrb[0].mxu0
      %v1785 = vadd.f32 0.0, %v1784
      %v1786 = vpop.f32.mrb[0].mxu0
      %1787 = vmatprep.mubr.bf16.mxu0 0
      %1788 = vmatmul.mubr.bf16.gmra.mrb[0].mxu0 %v1740
      %v1789 = vpop.f32.mrb[0].mxu0
      %v1790 = vadd.f32 0.0, %v1789
      %v1791 = vpop.f32.mrb[0].mxu0
      %v1792 = vpop.f32.mrb[0].mxu0
      %v1793 = vadd.f32 0.0, %v1792
      %v1794 = vpop.f32.mrb[0].mxu0
      %1795 = vmatprep.mubr.bf16.mxu0 0
      %1796 = vmatmul.mubr.bf16.gmra.mrb[0].mxu0 %v1741
      %v1797 = vpop.f32.mrb[0].mxu0
      %v1798 = vadd.f32 0.0, %v1797
      %v1799 = vpop.f32.mrb[0].mxu0
      %v1800 = vpop.f32.mrb[0].mxu0
      %v1801 = vadd.f32 0.0, %v1800
      %v1802 = vpop.f32.mrb[0].mxu0
      %1803 = vmatprep.mubr.bf16.mxu0 0
      %1804 = vmatmul.mubr.bf16.gmra.mrb[0].mxu0 %v1742
      %v1805 = vpop.f32.mrb[0].mxu0
      %v1806 = vadd.f32 0.0, %v1805
      %v1807 = vpop.f32.mrb[0].mxu0
      %v1808 = vpop.f32.mrb[0].mxu0
      %v1809 = vadd.f32 0.0, %v1808
      %v1810 = vpop.f32.mrb[0].mxu0
      %1811 = vmatprep.mubr.bf16.mxu0 0
      %1812 = vmatmul.mubr.bf16.gmra.mrb[0].mxu0 %v1743
      %v1813 = vpop.f32.mrb[0].mxu0
      %v1814 = vadd.f32 0.0, %v1813
      %v1815 = vpop.f32.mrb[0].mxu0
      %v1816 = vpop.f32.mrb[0].mxu0
      %v1817 = vadd.f32 0.0, %v1816
      %v1818 = vpop.f32.mrb[0].mxu0
      %1819 = vmatprep.mubr.bf16.mxu0 0
      %1820 = vmatmul.mubr.bf16.gmra.mrb[0].mxu0 %v1744
      %v1821 = vpop.f32.mrb[0].mxu0
      %v1822 = vadd.f32 0.0, %v1821
      %v1823 = vpop.f32.mrb[0].mxu0
      %v1824 = vpop.f32.mrb[0].mxu0
      %v1825 = vadd.f32 0.0, %v1824
      %v1826 = vpop.f32.mrb[0].mxu0
      %1827 = vmatprep.mubr.bf16.mxu0 0
      %1828 = vmatmul.mubr.bf16.gmra.mrb[0].mxu0 %v1745
      %v1829 = vpop.f32.mrb[0].mxu0
      %v1830 = vadd.f32 0.0, %v1829
      %v1831 = vpop.f32.mrb[0].mxu0
      %v1832 = vpop.f32.mrb[0].mxu0
      %v1833 = vadd.f32 0.0, %v1832
      %v1834 = vpop.f32.mrb[0].mxu0
      %1835 = vmatprep.mubr.bf16.mxu0 0
      %1836 = vmatmul.mubr.bf16.gmra.mrb[0].mxu0 %v1746
      %v1837 = vpop.f32.mrb[0].mxu0
      %v1838 = vadd.f32 0.0, %v1837
      %v1839 = vpop.f32.mrb[0].mxu0
      %v1840 = vpop.f32.mrb[0].mxu0
      %v1841 = vadd.f32 0.0, %v1840
      %v1842 = vpop.f32.mrb[0].mxu0
      %1843 = vdwg.mxu0
      %v1844 = vld [vmem:[#allocation5] sm:$0xff]
      %v1845 = vld [vmem:[#allocation5 + $0x8] sm:$0xff]
      %v1846 = vld [vmem:[#allocation5 + $0x10] sm:$0xff]
      %v1847 = vld [vmem:[#allocation5 + $0x18] sm:$0xff]
      %v1848 = vld [vmem:[#allocation5 + $0x20] sm:$0xff]
      %v1849 = vld [vmem:[#allocation5 + $0x28] sm:$0xff]
      %v1850 = vld [vmem:[#allocation5 + $0x30] sm:$0xff]
      %v1851 = vld [vmem:[#allocation5 + $0x38] sm:$0xff]
      %v1852 = vld [vmem:[#allocation5 + $0x40] sm:$0xff]
      %v1853 = vld [vmem:[#allocation5 + $0x48] sm:$0xff]
      %v1854 = vld [vmem:[#allocation5 + $0x50] sm:$0xff]
      %v1855 = vld [vmem:[#allocation5 + $0x58] sm:$0xff]
      %v1856 = vld [vmem:[#allocation5 + $0x60] sm:$0xff]
      %v1857 = vld [vmem:[#allocation5 + $0x68] sm:$0xff]
      %v1858 = vld [vmem:[#allocation5 + $0x70] sm:$0xff]
      %v1859 = vld [vmem:[#allocation5 + $0x78] sm:$0xff]
      %1861 = vset.pattern.permute.xlu0 0
      %1862 = vperm.xlu0 %1861, %v1516
      %v1863 = vpop.permute.xlu0 %1862
      %1866 = vset.pattern.permute.xlu0 0
      %1867 = vperm.xlu0 %1866, %v1518
      %v1868 = vpop.permute.xlu0 %1867
      %1871 = vset.pattern.permute.xlu0 0
      %1872 = vperm.xlu0 %1871, %v1520
      %v1873 = vpop.permute.xlu0 %1872
      %1876 = vset.pattern.permute.xlu0 0
      %1877 = vperm.xlu0 %1876, %v1522
      %v1878 = vpop.permute.xlu0 %1877
      %1881 = vset.pattern.permute.xlu0 0
      %1882 = vperm.xlu0 %1881, %v1524
      %v1883 = vpop.permute.xlu0 %1882
      %1886 = vset.pattern.permute.xlu0 0
      %1887 = vperm.xlu0 %1886, %v1526
      %v1888 = vpop.permute.xlu0 %1887
      %1891 = vset.pattern.permute.xlu0 0
      %1892 = vperm.xlu0 %1891, %v1528
      %v1893 = vpop.permute.xlu0 %1892
      %1896 = vset.pattern.permute.xlu0 0
      %1897 = vperm.xlu0 %1896, %v1530
      %v1898 = vpop.permute.xlu0 %1897
      %1901 = vset.pattern.permute.xlu0 0
      %1902 = vperm.xlu0 %1901, %v1532
      %v1903 = vpop.permute.xlu0 %1902
      %1906 = vset.pattern.permute.xlu0 0
      %1907 = vperm.xlu0 %1906, %v1534
      %v1908 = vpop.permute.xlu0 %1907
      %1911 = vset.pattern.permute.xlu0 0
      %1912 = vperm.xlu0 %1911, %v1536
      %v1913 = vpop.permute.xlu0 %1912
      %1916 = vset.pattern.permute.xlu0 0
      %1917 = vperm.xlu0 %1916, %v1538
      %v1918 = vpop.permute.xlu0 %1917
      %1921 = vset.pattern.permute.xlu0 0
      %1922 = vperm.xlu0 %1921, %v1540
      %v1923 = vpop.permute.xlu0 %1922
      %1926 = vset.pattern.permute.xlu0 0
      %1927 = vperm.xlu0 %1926, %v1542
      %v1928 = vpop.permute.xlu0 %1927
      %1931 = vset.pattern.permute.xlu0 0
      %1932 = vperm.xlu0 %1931, %v1544
      %v1933 = vpop.permute.xlu0 %1932
      %1936 = vset.pattern.permute.xlu0 0
      %1937 = vperm.xlu0 %1936, %v1546
      %v1938 = vpop.permute.xlu0 %1937
      %v1940 = vmul.f32 %v1844, %v1863
      %v1941 = vmul.f32 %v1845, %v1868
      %v1942 = vmul.f32 %v1846, %v1873
      %v1943 = vmul.f32 %v1847, %v1878
      %v1944 = vmul.f32 %v1848, %v1883
      %v1945 = vmul.f32 %v1849, %v1888
      %v1946 = vmul.f32 %v1850, %v1893
      %v1947 = vmul.f32 %v1851, %v1898
      %v1948 = vmul.f32 %v1852, %v1903
      %v1949 = vmul.f32 %v1853, %v1908
      %v1950 = vmul.f32 %v1854, %v1913
      %v1951 = vmul.f32 %v1855, %v1918
      %v1952 = vmul.f32 %v1856, %v1923
      %v1953 = vmul.f32 %v1857, %v1928
      %v1954 = vmul.f32 %v1858, %v1933
      %v1955 = vmul.f32 %v1859, %v1938
      %v1956 = vadd.f32 %v1940, %v1782
      %v1957 = vadd.f32 %v1941, %v1785
      %v1958 = vadd.f32 %v1942, %v1790
      %v1959 = vadd.f32 %v1943, %v1793
      %v1960 = vadd.f32 %v1944, %v1798
      %v1961 = vadd.f32 %v1945, %v1801
      %v1962 = vadd.f32 %v1946, %v1806
      %v1963 = vadd.f32 %v1947, %v1809
      %v1964 = vadd.f32 %v1948, %v1814
      %v1965 = vadd.f32 %v1949, %v1817
      %v1966 = vadd.f32 %v1950, %v1822
      %v1967 = vadd.f32 %v1951, %v1825
      %v1968 = vadd.f32 %v1952, %v1830
      %v1969 = vadd.f32 %v1953, %v1833
      %v1970 = vadd.f32 %v1954, %v1838
      %v1971 = vadd.f32 %v1955, %v1841
      %1972 = vst.msk [vmem:[#allocation5] sm:$0xff] %vm1273, %v1956
      %1973 = vst.msk [vmem:[#allocation5 + $0x8] sm:$0xff] %vm1273, %v1957
      %1974 = vst.msk [vmem:[#allocation5 + $0x10] sm:$0xff] %vm1273, %v1958
      %1975 = vst.msk [vmem:[#allocation5 + $0x18] sm:$0xff] %vm1273, %v1959
      %1976 = vst.msk [vmem:[#allocation5 + $0x20] sm:$0xff] %vm1273, %v1960
      %1977 = vst.msk [vmem:[#allocation5 + $0x28] sm:$0xff] %vm1273, %v1961
      %1978 = vst.msk [vmem:[#allocation5 + $0x30] sm:$0xff] %vm1273, %v1962
      %1979 = vst.msk [vmem:[#allocation5 + $0x38] sm:$0xff] %vm1273, %v1963
      %1980 = vst.msk [vmem:[#allocation5 + $0x40] sm:$0xff] %vm1273, %v1964
      %1981 = vst.msk [vmem:[#allocation5 + $0x48] sm:$0xff] %vm1273, %v1965
      %1982 = vst.msk [vmem:[#allocation5 + $0x50] sm:$0xff] %vm1273, %v1966
      %1983 = vst.msk [vmem:[#allocation5 + $0x58] sm:$0xff] %vm1273, %v1967
      %1984 = vst.msk [vmem:[#allocation5 + $0x60] sm:$0xff] %vm1273, %v1968
      %1985 = vst.msk [vmem:[#allocation5 + $0x68] sm:$0xff] %vm1273, %v1969
      %1986 = vst.msk [vmem:[#allocation5 + $0x70] sm:$0xff] %vm1273, %v1970
      %1987 = vst.msk [vmem:[#allocation5 + $0x78] sm:$0xff] %vm1273, %v1971
      %1988 = vst.msk [vmem:[#allocation3] sm:$0xff] %vm1273, %v1550
      %1989 = vst.msk [vmem:[#allocation3 + $0x8] sm:$0xff] %vm1273, %v1555
      %1990 = vst.msk [vmem:[#allocation3 + $0x10] sm:$0xff] %vm1273, %v1560
      %1991 = vst.msk [vmem:[#allocation3 + $0x18] sm:$0xff] %vm1273, %v1565
      %1992 = vst.msk [vmem:[#allocation3 + $0x20] sm:$0xff] %vm1273, %v1570
      %1993 = vst.msk [vmem:[#allocation3 + $0x28] sm:$0xff] %vm1273, %v1575
      %1994 = vst.msk [vmem:[#allocation3 + $0x30] sm:$0xff] %vm1273, %v1580
      %1995 = vst.msk [vmem:[#allocation3 + $0x38] sm:$0xff] %vm1273, %v1585
      %1996 = vst.msk [vmem:[#allocation3 + $0x40] sm:$0xff] %vm1273, %v1590
      %1997 = vst.msk [vmem:[#allocation3 + $0x48] sm:$0xff] %vm1273, %v1595
      %1998 = vst.msk [vmem:[#allocation3 + $0x50] sm:$0xff] %vm1273, %v1600
      %1999 = vst.msk [vmem:[#allocation3 + $0x58] sm:$0xff] %vm1273, %v1605
      %2000 = vst.msk [vmem:[#allocation3 + $0x60] sm:$0xff] %vm1273, %v1610
      %2001 = vst.msk [vmem:[#allocation3 + $0x68] sm:$0xff] %vm1273, %v1615
      %2002 = vst.msk [vmem:[#allocation3 + $0x70] sm:$0xff] %vm1273, %v1620
      %2003 = vst.msk [vmem:[#allocation3 + $0x78] sm:$0xff] %vm1273, %v1625
      %2005 = vset.pattern.permute.xlu0 0
      %2006 = vperm.xlu0 %2005, %v1723
      %v2007 = vpop.permute.xlu0 %2006
      %2010 = vset.pattern.permute.xlu0 0
      %2011 = vperm.xlu0 %2010, %v1724
      %v2012 = vpop.permute.xlu0 %2011
      %2015 = vset.pattern.permute.xlu0 0
      %2016 = vperm.xlu0 %2015, %v1725
      %v2017 = vpop.permute.xlu0 %2016
      %2020 = vset.pattern.permute.xlu0 0
      %2021 = vperm.xlu0 %2020, %v1726
      %v2022 = vpop.permute.xlu0 %2021
      %2025 = vset.pattern.permute.xlu0 0
      %2026 = vperm.xlu0 %2025, %v1727
      %v2027 = vpop.permute.xlu0 %2026
      %2030 = vset.pattern.permute.xlu0 0
      %2031 = vperm.xlu0 %2030, %v1728
      %v2032 = vpop.permute.xlu0 %2031
      %2035 = vset.pattern.permute.xlu0 0
      %2036 = vperm.xlu0 %2035, %v1729
      %v2037 = vpop.permute.xlu0 %2036
      %2040 = vset.pattern.permute.xlu0 0
      %2041 = vperm.xlu0 %2040, %v1730
      %v2042 = vpop.permute.xlu0 %2041
      %2045 = vset.pattern.permute.xlu0 0
      %2046 = vperm.xlu0 %2045, %v1731
      %v2047 = vpop.permute.xlu0 %2046
      %2050 = vset.pattern.permute.xlu0 0
      %2051 = vperm.xlu0 %2050, %v1732
      %v2052 = vpop.permute.xlu0 %2051
      %2055 = vset.pattern.permute.xlu0 0
      %2056 = vperm.xlu0 %2055, %v1733
      %v2057 = vpop.permute.xlu0 %2056
      %2060 = vset.pattern.permute.xlu0 0
      %2061 = vperm.xlu0 %2060, %v1734
      %v2062 = vpop.permute.xlu0 %2061
      %2065 = vset.pattern.permute.xlu0 0
      %2066 = vperm.xlu0 %2065, %v1735
      %v2067 = vpop.permute.xlu0 %2066
      %2070 = vset.pattern.permute.xlu0 0
      %2071 = vperm.xlu0 %2070, %v1736
      %v2072 = vpop.permute.xlu0 %2071
      %2075 = vset.pattern.permute.xlu0 0
      %2076 = vperm.xlu0 %2075, %v1737
      %v2077 = vpop.permute.xlu0 %2076
      %2080 = vset.pattern.permute.xlu0 0
      %2081 = vperm.xlu0 %2080, %v1738
      %v2082 = vpop.permute.xlu0 %2081
      %2084 = vst.msk [vmem:[#allocation4] sm:$0xff] %vm1273, %v2007
      %2085 = vst.msk [vmem:[#allocation4 + $0x8] sm:$0xff] %vm1273, %v2012
      %2086 = vst.msk [vmem:[#allocation4 + $0x10] sm:$0xff] %vm1273, %v2017
      %2087 = vst.msk [vmem:[#allocation4 + $0x18] sm:$0xff] %vm1273, %v2022
      %2088 = vst.msk [vmem:[#allocation4 + $0x20] sm:$0xff] %vm1273, %v2027
      %2089 = vst.msk [vmem:[#allocation4 + $0x28] sm:$0xff] %vm1273, %v2032
      %2090 = vst.msk [vmem:[#allocation4 + $0x30] sm:$0xff] %vm1273, %v2037
      %2091 = vst.msk [vmem:[#allocation4 + $0x38] sm:$0xff] %vm1273, %v2042
      %2092 = vst.msk [vmem:[#allocation4 + $0x40] sm:$0xff] %vm1273, %v2047
      %2093 = vst.msk [vmem:[#allocation4 + $0x48] sm:$0xff] %vm1273, %v2052
      %2094 = vst.msk [vmem:[#allocation4 + $0x50] sm:$0xff] %vm1273, %v2057
      %2095 = vst.msk [vmem:[#allocation4 + $0x58] sm:$0xff] %vm1273, %v2062
      %2096 = vst.msk [vmem:[#allocation4 + $0x60] sm:$0xff] %vm1273, %v2067
      %2097 = vst.msk [vmem:[#allocation4 + $0x68] sm:$0xff] %vm1273, %v2072
      %2098 = vst.msk [vmem:[#allocation4 + $0x70] sm:$0xff] %vm1273, %v2077
      %2099 = vst.msk [vmem:[#allocation4 + $0x78] sm:$0xff] %vm1273, %v2082
      %2108 = vrot.lane.b32.xlu0 %v1258, 120
      %v2109 = vpop.permute.xlu0 %2108
      %2110 = vrot.lane.b32.xlu0 %v1259, 120
      %v2111 = vpop.permute.xlu0 %2110
      %2112 = vrot.lane.b32.xlu0 %v1260, 120
      %v2113 = vpop.permute.xlu0 %2112
      %2114 = vrot.lane.b32.xlu0 %v1261, 120
      %v2115 = vpop.permute.xlu0 %2114
      %2116 = vrot.lane.b32.xlu0 %v1262, 120
      %v2117 = vpop.permute.xlu0 %2116
      %2118 = vrot.lane.b32.xlu0 %v1263, 120
      %v2119 = vpop.permute.xlu0 %2118
      %2120 = vrot.lane.b32.xlu0 %v1264, 120
      %v2121 = vpop.permute.xlu0 %2120
      %2122 = vrot.lane.b32.xlu0 %v1265, 120
      %v2123 = vpop.permute.xlu0 %2122
      %2132 = vrot.lane.b32.xlu0 %v1242, 120
      %v2133 = vpop.permute.xlu0 %2132
      %2134 = vrot.lane.b32.xlu0 %v1244, 120
      %v2135 = vpop.permute.xlu0 %2134
      %2136 = vrot.lane.b32.xlu0 %v1246, 120
      %v2137 = vpop.permute.xlu0 %2136
      %2138 = vrot.lane.b32.xlu0 %v1248, 120
      %v2139 = vpop.permute.xlu0 %2138
      %2140 = vrot.lane.b32.xlu0 %v1250, 120
      %v2141 = vpop.permute.xlu0 %2140
      %2142 = vrot.lane.b32.xlu0 %v1252, 120
      %v2143 = vpop.permute.xlu0 %2142
      %2144 = vrot.lane.b32.xlu0 %v1254, 120
      %v2145 = vpop.permute.xlu0 %2144
      %2146 = vrot.lane.b32.xlu0 %v1256, 120
      %v2147 = vpop.permute.xlu0 %2146
      %v2149 = vsel %vm1273, %v2109, 0
      %v2152 = vsel %vm1273, %v2111, 0
      %v2155 = vsel %vm1273, %v2113, 0
      %v2158 = vsel %vm1273, %v2115, 0
      %v2161 = vsel %vm1273, %v2117, 0
      %v2164 = vsel %vm1273, %v2119, 0
      %v2167 = vsel %vm1273, %v2121, 0
      %v2170 = vsel %vm1273, %v2123, 0
      %v2173 = vsel %vm1273, %v2133, 0
      %v2176 = vsel %vm1273, %v2135, 0
      %v2179 = vsel %vm1273, %v2137, 0
      %v2182 = vsel %vm1273, %v2139, 0
      %v2185 = vsel %vm1273, %v2141, 0
      %v2188 = vsel %vm1273, %v2143, 0
      %v2191 = vsel %vm1273, %v2145, 0
      %v2194 = vsel %vm1273, %v2147, 0
      %2196 = vmatprep.subr.bf16.mxu0 0
      %2197 = vmatpush1.bf16.xpose.msra.mxu0 %v2173
      %2198 = vmatprep.subr.bf16.mxu0 0
      %2199 = vmatpush1.bf16.xpose.msra.mxu0 %v2176
      %2200 = vmatprep.subr.bf16.mxu0 0
      %2201 = vmatpush1.bf16.xpose.msra.mxu0 %v2179
      %2202 = vmatprep.subr.bf16.mxu0 0
      %2203 = vmatpush1.bf16.xpose.msra.mxu0 %v2182
      %2204 = vmatprep.subr.bf16.mxu0 0
      %2205 = vmatpush1.bf16.xpose.msra.mxu0 %v2185
      %2206 = vmatprep.subr.bf16.mxu0 0
      %2207 = vmatpush1.bf16.xpose.msra.mxu0 %v2188
      %2208 = vmatprep.subr.bf16.mxu0 0
      %2209 = vmatpush1.bf16.xpose.msra.mxu0 %v2191
      %2210 = vmatprep.subr.bf16.mxu0 0
      %2211 = vmatpush1.bf16.xpose.msra.mxu0 %v2194
      %2212 = vmatprep.subr.bf16.mxu0 0
      %2213 = vmatpush1.bf16.xpose.msra.mxu0 0
      %2214 = vmatprep.subr.bf16.mxu0 0
      %2215 = vmatpush1.bf16.xpose.msra.mxu0 0
      %2216 = vmatprep.subr.bf16.mxu0 0
      %2217 = vmatpush1.bf16.xpose.msra.mxu0 0
      %2218 = vmatprep.subr.bf16.mxu0 0
      %2219 = vmatpush1.bf16.xpose.msra.mxu0 0
      %2220 = vmatprep.subr.bf16.mxu0 0
      %2221 = vmatpush1.bf16.xpose.msra.mxu0 0
      %2222 = vmatprep.subr.bf16.mxu0 0
      %2223 = vmatpush1.bf16.xpose.msra.mxu0 0
      %2224 = vmatprep.subr.bf16.mxu0 0
      %2225 = vmatpush1.bf16.xpose.msra.mxu0 0
      %2226 = vmatprep.subr.bf16.mxu0 0
      %2227 = vmatpush1.bf16.xpose.msra.mxu0 0
      %2228 = vmatprep.mubr.bf16.mxu0 0
      %2229 = vmatmul.mubr.bf16.gmra.mrb[0].mxu0 %v2149
      %v2230 = vpop.f32.mrb[0].mxu0
      %v2231 = vadd.f32 %v1271, %v2230
      %v2232 = vpop.f32.mrb[0].mxu0
      %v2233 = vpop.f32.mrb[0].mxu0
      %v2234 = vadd.f32 %v1271, %v2233
      %v2235 = vpop.f32.mrb[0].mxu0
      %2236 = vmatprep.mubr.bf16.mxu0 0
      %2237 = vmatmul.mubr.bf16.gmra.mrb[0].mxu0 %v2152
      %v2238 = vpop.f32.mrb[0].mxu0
      %v2239 = vadd.f32 %v1271, %v2238
      %v2240 = vpop.f32.mrb[0].mxu0
      %v2241 = vpop.f32.mrb[0].mxu0
      %v2242 = vadd.f32 %v1271, %v2241
      %v2243 = vpop.f32.mrb[0].mxu0
      %2244 = vmatprep.mubr.bf16.mxu0 0
      %2245 = vmatmul.mubr.bf16.gmra.mrb[0].mxu0 %v2155
      %v2246 = vpop.f32.mrb[0].mxu0
      %v2247 = vadd.f32 %v1271, %v2246
      %v2248 = vpop.f32.mrb[0].mxu0
      %v2249 = vpop.f32.mrb[0].mxu0
      %v2250 = vadd.f32 %v1271, %v2249
      %v2251 = vpop.f32.mrb[0].mxu0
      %2252 = vmatprep.mubr.bf16.mxu0 0
      %2253 = vmatmul.mubr.bf16.gmra.mrb[0].mxu0 %v2158
      %v2254 = vpop.f32.mrb[0].mxu0
      %v2255 = vadd.f32 %v1271, %v2254
      %v2256 = vpop.f32.mrb[0].mxu0
      %v2257 = vpop.f32.mrb[0].mxu0
      %v2258 = vadd.f32 %v1271, %v2257
      %v2259 = vpop.f32.mrb[0].mxu0
      %2260 = vmatprep.mubr.bf16.mxu0 0
      %2261 = vmatmul.mubr.bf16.gmra.mrb[0].mxu0 %v2161
      %v2262 = vpop.f32.mrb[0].mxu0
      %v2263 = vadd.f32 %v1271, %v2262
      %v2264 = vpop.f32.mrb[0].mxu0
      %v2265 = vpop.f32.mrb[0].mxu0
      %v2266 = vadd.f32 %v1271, %v2265
      %v2267 = vpop.f32.mrb[0].mxu0
      %2268 = vmatprep.mubr.bf16.mxu0 0
      %2269 = vmatmul.mubr.bf16.gmra.mrb[0].mxu0 %v2164
      %v2270 = vpop.f32.mrb[0].mxu0
      %v2271 = vadd.f32 %v1271, %v2270
      %v2272 = vpop.f32.mrb[0].mxu0
      %v2273 = vpop.f32.mrb[0].mxu0
      %v2274 = vadd.f32 %v1271, %v2273
      %v2275 = vpop.f32.mrb[0].mxu0
      %2276 = vmatprep.mubr.bf16.mxu0 0
      %2277 = vmatmul.mubr.bf16.gmra.mrb[0].mxu0 %v2167
      %v2278 = vpop.f32.mrb[0].mxu0
      %v2279 = vadd.f32 %v1271, %v2278
      %v2280 = vpop.f32.mrb[0].mxu0
      %v2281 = vpop.f32.mrb[0].mxu0
      %v2282 = vadd.f32 %v1271, %v2281
      %v2283 = vpop.f32.mrb[0].mxu0
      %2284 = vmatprep.mubr.bf16.mxu0 0
      %2285 = vmatmul.mubr.bf16.gmra.mrb[0].mxu0 %v2170
      %v2286 = vpop.f32.mrb[0].mxu0
      %v2287 = vadd.f32 %v1271, %v2286
      %v2288 = vpop.f32.mrb[0].mxu0
      %v2289 = vpop.f32.mrb[0].mxu0
      %v2290 = vadd.f32 %v1271, %v2289
      %v2291 = vpop.f32.mrb[0].mxu0
      %2292 = vdwg.mxu0
      %v2293 = vld [vmem:[#allocation3] sm:$0xff]
      %v2294 = vld [vmem:[#allocation3 + $0x8] sm:$0xff]
      %v2295 = vld [vmem:[#allocation3 + $0x10] sm:$0xff]
      %v2296 = vld [vmem:[#allocation3 + $0x18] sm:$0xff]
      %v2297 = vld [vmem:[#allocation3 + $0x20] sm:$0xff]
      %v2298 = vld [vmem:[#allocation3 + $0x28] sm:$0xff]
      %v2299 = vld [vmem:[#allocation3 + $0x30] sm:$0xff]
      %v2300 = vld [vmem:[#allocation3 + $0x38] sm:$0xff]
      %v2301 = vld [vmem:[#allocation3 + $0x40] sm:$0xff]
      %v2302 = vld [vmem:[#allocation3 + $0x48] sm:$0xff]
      %v2303 = vld [vmem:[#allocation3 + $0x50] sm:$0xff]
      %v2304 = vld [vmem:[#allocation3 + $0x58] sm:$0xff]
      %v2305 = vld [vmem:[#allocation3 + $0x60] sm:$0xff]
      %v2306 = vld [vmem:[#allocation3 + $0x68] sm:$0xff]
      %v2307 = vld [vmem:[#allocation3 + $0x70] sm:$0xff]
      %v2308 = vld [vmem:[#allocation3 + $0x78] sm:$0xff]
      %v2309 = vld [vmem:[#allocation4] sm:$0xff]
      %v2310 = vld [vmem:[#allocation4 + $0x8] sm:$0xff]
      %v2311 = vld [vmem:[#allocation4 + $0x10] sm:$0xff]
      %v2312 = vld [vmem:[#allocation4 + $0x18] sm:$0xff]
      %v2313 = vld [vmem:[#allocation4 + $0x20] sm:$0xff]
      %v2314 = vld [vmem:[#allocation4 + $0x28] sm:$0xff]
      %v2315 = vld [vmem:[#allocation4 + $0x30] sm:$0xff]
      %v2316 = vld [vmem:[#allocation4 + $0x38] sm:$0xff]
      %v2317 = vld [vmem:[#allocation4 + $0x40] sm:$0xff]
      %v2318 = vld [vmem:[#allocation4 + $0x48] sm:$0xff]
      %v2319 = vld [vmem:[#allocation4 + $0x50] sm:$0xff]
      %v2320 = vld [vmem:[#allocation4 + $0x58] sm:$0xff]
      %v2321 = vld [vmem:[#allocation4 + $0x60] sm:$0xff]
      %v2322 = vld [vmem:[#allocation4 + $0x68] sm:$0xff]
      %v2323 = vld [vmem:[#allocation4 + $0x70] sm:$0xff]
      %v2324 = vld [vmem:[#allocation4 + $0x78] sm:$0xff]
      %2325 = vmax.xlane.f32.xlu0 %v2231
      %v2326 = vpop.xlane.xlu0 %2325
      %2327 = vmax.xlane.f32.xlu0 %v2234
      %v2328 = vpop.xlane.xlu0 %2327
      %2329 = vmax.xlane.f32.xlu0 %v2239
      %v2330 = vpop.xlane.xlu0 %2329
      %2331 = vmax.xlane.f32.xlu0 %v2242
      %v2332 = vpop.xlane.xlu0 %2331
      %2333 = vmax.xlane.f32.xlu0 %v2247
      %v2334 = vpop.xlane.xlu0 %2333
      %2335 = vmax.xlane.f32.xlu0 %v2250
      %v2336 = vpop.xlane.xlu0 %2335
      %2337 = vmax.xlane.f32.xlu0 %v2255
      %v2338 = vpop.xlane.xlu0 %2337
      %2339 = vmax.xlane.f32.xlu0 %v2258
      %v2340 = vpop.xlane.xlu0 %2339
      %2341 = vmax.xlane.f32.xlu0 %v2263
      %v2342 = vpop.xlane.xlu0 %2341
      %2343 = vmax.xlane.f32.xlu0 %v2266
      %v2344 = vpop.xlane.xlu0 %2343
      %2345 = vmax.xlane.f32.xlu0 %v2271
      %v2346 = vpop.xlane.xlu0 %2345
      %2347 = vmax.xlane.f32.xlu0 %v2274
      %v2348 = vpop.xlane.xlu0 %2347
      %2349 = vmax.xlane.f32.xlu0 %v2279
      %v2350 = vpop.xlane.xlu0 %2349
      %2351 = vmax.xlane.f32.xlu0 %v2282
      %v2352 = vpop.xlane.xlu0 %2351
      %2353 = vmax.xlane.f32.xlu0 %v2287
      %v2354 = vpop.xlane.xlu0 %2353
      %2355 = vmax.xlane.f32.xlu0 %v2290
      %v2356 = vpop.xlane.xlu0 %2355
      %v2357 = vmax.f32 %v2293, %v2326
      %v2358 = vmax.f32 %v2294, %v2328
      %v2359 = vmax.f32 %v2295, %v2330
      %v2360 = vmax.f32 %v2296, %v2332
      %v2361 = vmax.f32 %v2297, %v2334
      %v2362 = vmax.f32 %v2298, %v2336
      %v2363 = vmax.f32 %v2299, %v2338
      %v2364 = vmax.f32 %v2300, %v2340
      %v2365 = vmax.f32 %v2301, %v2342
      %v2366 = vmax.f32 %v2302, %v2344
      %v2367 = vmax.f32 %v2303, %v2346
      %v2368 = vmax.f32 %v2304, %v2348
      %v2369 = vmax.f32 %v2305, %v2350
      %v2370 = vmax.f32 %v2306, %v2352
      %v2371 = vmax.f32 %v2307, %v2354
      %v2372 = vmax.f32 %v2308, %v2356
      %v2373 = vsub.f32 %v2293, %v2357
      %v2374 = vsub.f32 %v2294, %v2358
      %v2375 = vsub.f32 %v2295, %v2359
      %v2376 = vsub.f32 %v2296, %v2360
      %v2377 = vsub.f32 %v2297, %v2361
      %v2378 = vsub.f32 %v2298, %v2362
      %v2379 = vsub.f32 %v2299, %v2363
      %v2380 = vsub.f32 %v2300, %v2364
      %v2381 = vsub.f32 %v2301, %v2365
      %v2382 = vsub.f32 %v2302, %v2366
      %v2383 = vsub.f32 %v2303, %v2367
      %v2384 = vsub.f32 %v2304, %v2368
      %v2385 = vsub.f32 %v2305, %v2369
      %v2386 = vsub.f32 %v2306, %v2370
      %v2387 = vsub.f32 %v2307, %v2371
      %v2388 = vsub.f32 %v2308, %v2372
      %v2389 = vmul.f32 %v2373, 1.442695
      %v2390 = vpow.pop %v2389
      %v2391 = vmul.f32 %v2374, 1.442695
      %v2392 = vpow.pop %v2391
      %v2393 = vmul.f32 %v2375, 1.442695
      %v2394 = vpow.pop %v2393
      %v2395 = vmul.f32 %v2376, 1.442695
      %v2396 = vpow.pop %v2395
      %v2397 = vmul.f32 %v2377, 1.442695
      %v2398 = vpow.pop %v2397
      %v2399 = vmul.f32 %v2378, 1.442695
      %v2400 = vpow.pop %v2399
      %v2401 = vmul.f32 %v2379, 1.442695
      %v2402 = vpow.pop %v2401
      %v2403 = vmul.f32 %v2380, 1.442695
      %v2404 = vpow.pop %v2403
      %v2405 = vmul.f32 %v2381, 1.442695
      %v2406 = vpow.pop %v2405
      %v2407 = vmul.f32 %v2382, 1.442695
      %v2408 = vpow.pop %v2407
      %v2409 = vmul.f32 %v2383, 1.442695
      %v2410 = vpow.pop %v2409
      %v2411 = vmul.f32 %v2384, 1.442695
      %v2412 = vpow.pop %v2411
      %v2413 = vmul.f32 %v2385, 1.442695
      %v2414 = vpow.pop %v2413
      %v2415 = vmul.f32 %v2386, 1.442695
      %v2416 = vpow.pop %v2415
      %v2417 = vmul.f32 %v2387, 1.442695
      %v2418 = vpow.pop %v2417
      %v2419 = vmul.f32 %v2388, 1.442695
      %v2420 = vpow.pop %v2419
      %2422 = vset.pattern.permute.xlu0 8
      %2423 = vperm.xlu0 %2422, %v2357
      %v2424 = vpop.permute.xlu0 %2423
      %2427 = vset.pattern.permute.xlu0 8
      %2428 = vperm.xlu0 %2427, %v2358
      %v2429 = vpop.permute.xlu0 %2428
      %2432 = vset.pattern.permute.xlu0 8
      %2433 = vperm.xlu0 %2432, %v2359
      %v2434 = vpop.permute.xlu0 %2433
      %2437 = vset.pattern.permute.xlu0 8
      %2438 = vperm.xlu0 %2437, %v2360
      %v2439 = vpop.permute.xlu0 %2438
      %2442 = vset.pattern.permute.xlu0 8
      %2443 = vperm.xlu0 %2442, %v2361
      %v2444 = vpop.permute.xlu0 %2443
      %2447 = vset.pattern.permute.xlu0 8
      %2448 = vperm.xlu0 %2447, %v2362
      %v2449 = vpop.permute.xlu0 %2448
      %2452 = vset.pattern.permute.xlu0 8
      %2453 = vperm.xlu0 %2452, %v2363
      %v2454 = vpop.permute.xlu0 %2453
      %2457 = vset.pattern.permute.xlu0 8
      %2458 = vperm.xlu0 %2457, %v2364
      %v2459 = vpop.permute.xlu0 %2458
      %2462 = vset.pattern.permute.xlu0 8
      %2463 = vperm.xlu0 %2462, %v2365
      %v2464 = vpop.permute.xlu0 %2463
      %2467 = vset.pattern.permute.xlu0 8
      %2468 = vperm.xlu0 %2467, %v2366
      %v2469 = vpop.permute.xlu0 %2468
      %2472 = vset.pattern.permute.xlu0 8
      %2473 = vperm.xlu0 %2472, %v2367
      %v2474 = vpop.permute.xlu0 %2473
      %2477 = vset.pattern.permute.xlu0 8
      %2478 = vperm.xlu0 %2477, %v2368
      %v2479 = vpop.permute.xlu0 %2478
      %2482 = vset.pattern.permute.xlu0 8
      %2483 = vperm.xlu0 %2482, %v2369
      %v2484 = vpop.permute.xlu0 %2483
      %2487 = vset.pattern.permute.xlu0 8
      %2488 = vperm.xlu0 %2487, %v2370
      %v2489 = vpop.permute.xlu0 %2488
      %2492 = vset.pattern.permute.xlu0 8
      %2493 = vperm.xlu0 %2492, %v2371
      %v2494 = vpop.permute.xlu0 %2493
      %2497 = vset.pattern.permute.xlu0 8
      %2498 = vperm.xlu0 %2497, %v2372
      %v2499 = vpop.permute.xlu0 %2498
      %v2501 = vsub.f32 %v2231, %v2424
      %v2502 = vsub.f32 %v2234, %v2429
      %v2503 = vsub.f32 %v2239, %v2434
      %v2504 = vsub.f32 %v2242, %v2439
      %v2505 = vsub.f32 %v2247, %v2444
      %v2506 = vsub.f32 %v2250, %v2449
      %v2507 = vsub.f32 %v2255, %v2454
      %v2508 = vsub.f32 %v2258, %v2459
      %v2509 = vsub.f32 %v2263, %v2464
      %v2510 = vsub.f32 %v2266, %v2469
      %v2511 = vsub.f32 %v2271, %v2474
      %v2512 = vsub.f32 %v2274, %v2479
      %v2513 = vsub.f32 %v2279, %v2484
      %v2514 = vsub.f32 %v2282, %v2489
      %v2515 = vsub.f32 %v2287, %v2494
      %v2516 = vsub.f32 %v2290, %v2499
      %v2517 = vmul.f32 %v2501, 1.442695
      %v2518 = vpow.pop %v2517
      %v2519 = vmul.f32 %v2502, 1.442695
      %v2520 = vpow.pop %v2519
      %v2521 = vmul.f32 %v2503, 1.442695
      %v2522 = vpow.pop %v2521
      %v2523 = vmul.f32 %v2504, 1.442695
      %v2524 = vpow.pop %v2523
      %v2525 = vmul.f32 %v2505, 1.442695
      %v2526 = vpow.pop %v2525
      %v2527 = vmul.f32 %v2506, 1.442695
      %v2528 = vpow.pop %v2527
      %v2529 = vmul.f32 %v2507, 1.442695
      %v2530 = vpow.pop %v2529
      %v2531 = vmul.f32 %v2508, 1.442695
      %v2532 = vpow.pop %v2531
      %v2533 = vmul.f32 %v2509, 1.442695
      %v2534 = vpow.pop %v2533
      %v2535 = vmul.f32 %v2510, 1.442695
      %v2536 = vpow.pop %v2535
      %v2537 = vmul.f32 %v2511, 1.442695
      %v2538 = vpow.pop %v2537
      %v2539 = vmul.f32 %v2512, 1.442695
      %v2540 = vpow.pop %v2539
      %v2541 = vmul.f32 %v2513, 1.442695
      %v2542 = vpow.pop %v2541
      %v2543 = vmul.f32 %v2514, 1.442695
      %v2544 = vpow.pop %v2543
      %v2545 = vmul.f32 %v2515, 1.442695
      %v2546 = vpow.pop %v2545
      %v2547 = vmul.f32 %v2516, 1.442695
      %v2548 = vpow.pop %v2547
      %v2549 = vmul.f32 %v2390, %v2309
      %v2550 = vmul.f32 %v2392, %v2310
      %v2551 = vmul.f32 %v2394, %v2311
      %v2552 = vmul.f32 %v2396, %v2312
      %v2553 = vmul.f32 %v2398, %v2313
      %v2554 = vmul.f32 %v2400, %v2314
      %v2555 = vmul.f32 %v2402, %v2315
      %v2556 = vmul.f32 %v2404, %v2316
      %v2557 = vmul.f32 %v2406, %v2317
      %v2558 = vmul.f32 %v2408, %v2318
      %v2559 = vmul.f32 %v2410, %v2319
      %v2560 = vmul.f32 %v2412, %v2320
      %v2561 = vmul.f32 %v2414, %v2321
      %v2562 = vmul.f32 %v2416, %v2322
      %v2563 = vmul.f32 %v2418, %v2323
      %v2564 = vmul.f32 %v2420, %v2324
      %2565 = vadd.xlane.f32.xlu0 %v2518
      %v2566 = vpop.xlane.xlu0 %2565
      %2567 = vadd.xlane.f32.xlu0 %v2520
      %v2568 = vpop.xlane.xlu0 %2567
      %2569 = vadd.xlane.f32.xlu0 %v2522
      %v2570 = vpop.xlane.xlu0 %2569
      %2571 = vadd.xlane.f32.xlu0 %v2524
      %v2572 = vpop.xlane.xlu0 %2571
      %2573 = vadd.xlane.f32.xlu0 %v2526
      %v2574 = vpop.xlane.xlu0 %2573
      %2575 = vadd.xlane.f32.xlu0 %v2528
      %v2576 = vpop.xlane.xlu0 %2575
      %2577 = vadd.xlane.f32.xlu0 %v2530
      %v2578 = vpop.xlane.xlu0 %2577
      %2579 = vadd.xlane.f32.xlu0 %v2532
      %v2580 = vpop.xlane.xlu0 %2579
      %2581 = vadd.xlane.f32.xlu0 %v2534
      %v2582 = vpop.xlane.xlu0 %2581
      %2583 = vadd.xlane.f32.xlu0 %v2536
      %v2584 = vpop.xlane.xlu0 %2583
      %2585 = vadd.xlane.f32.xlu0 %v2538
      %v2586 = vpop.xlane.xlu0 %2585
      %2587 = vadd.xlane.f32.xlu0 %v2540
      %v2588 = vpop.xlane.xlu0 %2587
      %2589 = vadd.xlane.f32.xlu0 %v2542
      %v2590 = vpop.xlane.xlu0 %2589
      %2591 = vadd.xlane.f32.xlu0 %v2544
      %v2592 = vpop.xlane.xlu0 %2591
      %2593 = vadd.xlane.f32.xlu0 %v2546
      %v2594 = vpop.xlane.xlu0 %2593
      %2595 = vadd.xlane.f32.xlu0 %v2548
      %v2596 = vpop.xlane.xlu0 %2595
      %v2597 = vadd.f32 %v2549, %v2566
      %v2598 = vadd.f32 %v2550, %v2568
      %v2599 = vadd.f32 %v2551, %v2570
      %v2600 = vadd.f32 %v2552, %v2572
      %v2601 = vadd.f32 %v2553, %v2574
      %v2602 = vadd.f32 %v2554, %v2576
      %v2603 = vadd.f32 %v2555, %v2578
      %v2604 = vadd.f32 %v2556, %v2580
      %v2605 = vadd.f32 %v2557, %v2582
      %v2606 = vadd.f32 %v2558, %v2584
      %v2607 = vadd.f32 %v2559, %v2586
      %v2608 = vadd.f32 %v2560, %v2588
      %v2609 = vadd.f32 %v2561, %v2590
      %v2610 = vadd.f32 %v2562, %v2592
      %v2611 = vadd.f32 %v2563, %v2594
      %v2612 = vadd.f32 %v2564, %v2596
      %v2613 = vpack.c.bf16 %v2520, %v2518
      %v2614 = vpack.c.bf16 %v2524, %v2522
      %v2615 = vpack.c.bf16 %v2528, %v2526
      %v2616 = vpack.c.bf16 %v2532, %v2530
      %v2617 = vpack.c.bf16 %v2536, %v2534
      %v2618 = vpack.c.bf16 %v2540, %v2538
      %v2619 = vpack.c.bf16 %v2544, %v2542
      %v2620 = vpack.c.bf16 %v2548, %v2546
      %2629 = vrot.lane.b32.xlu0 %v1243, 120
      %v2630 = vpop.permute.xlu0 %2629
      %2631 = vrot.lane.b32.xlu0 %v1245, 120
      %v2632 = vpop.permute.xlu0 %2631
      %2633 = vrot.lane.b32.xlu0 %v1247, 120
      %v2634 = vpop.permute.xlu0 %2633
      %2635 = vrot.lane.b32.xlu0 %v1249, 120
      %v2636 = vpop.permute.xlu0 %2635
      %2637 = vrot.lane.b32.xlu0 %v1251, 120
      %v2638 = vpop.permute.xlu0 %2637
      %2639 = vrot.lane.b32.xlu0 %v1253, 120
      %v2640 = vpop.permute.xlu0 %2639
      %2641 = vrot.lane.b32.xlu0 %v1255, 120
      %v2642 = vpop.permute.xlu0 %2641
      %2643 = vrot.lane.b32.xlu0 %v1257, 120
      %v2644 = vpop.permute.xlu0 %2643
      %2653 = vmatprep.subr.bf16.mxu0 0
      %2654 = vmatpush1.bf16.msra.mxu0 %v2630
      %2655 = vmatprep.subr.bf16.mxu0 0
      %2656 = vmatpush1.bf16.msra.mxu0 %v2632
      %2657 = vmatprep.subr.bf16.mxu0 0
      %2658 = vmatpush1.bf16.msra.mxu0 %v2634
      %2659 = vmatprep.subr.bf16.mxu0 0
      %2660 = vmatpush1.bf16.msra.mxu0 %v2636
      %2661 = vmatprep.subr.bf16.mxu0 0
      %2662 = vmatpush1.bf16.msra.mxu0 %v2638
      %2663 = vmatprep.subr.bf16.mxu0 0
      %2664 = vmatpush1.bf16.msra.mxu0 %v2640
      %2665 = vmatprep.subr.bf16.mxu0 0
      %2666 = vmatpush1.bf16.msra.mxu0 %v2642
      %2667 = vmatprep.subr.bf16.mxu0 0
      %2668 = vmatpush1.bf16.msra.mxu0 %v2644
      %2669 = vmatprep.subr.bf16.mxu0 0
      %2670 = vmatpush1.bf16.msra.mxu0 0
      %2671 = vmatprep.subr.bf16.mxu0 0
      %2672 = vmatpush1.bf16.msra.mxu0 0
      %2673 = vmatprep.subr.bf16.mxu0 0
      %2674 = vmatpush1.bf16.msra.mxu0 0
      %2675 = vmatprep.subr.bf16.mxu0 0
      %2676 = vmatpush1.bf16.msra.mxu0 0
      %2677 = vmatprep.subr.bf16.mxu0 0
      %2678 = vmatpush1.bf16.msra.mxu0 0
      %2679 = vmatprep.subr.bf16.mxu0 0
      %2680 = vmatpush1.bf16.msra.mxu0 0
      %2681 = vmatprep.subr.bf16.mxu0 0
      %2682 = vmatpush1.bf16.msra.mxu0 0
      %2683 = vmatprep.subr.bf16.mxu0 0
      %2684 = vmatpush1.bf16.msra.mxu0 0
      %2685 = vmatprep.mubr.bf16.mxu0 0
      %2686 = vmatmul.mubr.bf16.gmra.mrb[0].mxu0 %v2613
      %v2687 = vpop.f32.mrb[0].mxu0
      %v2688 = vadd.f32 0.0, %v2687
      %v2689 = vpop.f32.mrb[0].mxu0
      %v2690 = vpop.f32.mrb[0].mxu0
      %v2691 = vadd.f32 0.0, %v2690
      %v2692 = vpop.f32.mrb[0].mxu0
      %2693 = vmatprep.mubr.bf16.mxu0 0
      %2694 = vmatmul.mubr.bf16.gmra.mrb[0].mxu0 %v2614
      %v2695 = vpop.f32.mrb[0].mxu0
      %v2696 = vadd.f32 0.0, %v2695
      %v2697 = vpop.f32.mrb[0].mxu0
      %v2698 = vpop.f32.mrb[0].mxu0
      %v2699 = vadd.f32 0.0, %v2698
      %v2700 = vpop.f32.mrb[0].mxu0
      %2701 = vmatprep.mubr.bf16.mxu0 0
      %2702 = vmatmul.mubr.bf16.gmra.mrb[0].mxu0 %v2615
      %v2703 = vpop.f32.mrb[0].mxu0
      %v2704 = vadd.f32 0.0, %v2703
      %v2705 = vpop.f32.mrb[0].mxu0
      %v2706 = vpop.f32.mrb[0].mxu0
      %v2707 = vadd.f32 0.0, %v2706
      %v2708 = vpop.f32.mrb[0].mxu0
      %2709 = vmatprep.mubr.bf16.mxu0 0
      %2710 = vmatmul.mubr.bf16.gmra.mrb[0].mxu0 %v2616
      %v2711 = vpop.f32.mrb[0].mxu0
      %v2712 = vadd.f32 0.0, %v2711
      %v2713 = vpop.f32.mrb[0].mxu0
      %v2714 = vpop.f32.mrb[0].mxu0
      %v2715 = vadd.f32 0.0, %v2714
      %v2716 = vpop.f32.mrb[0].mxu0
      %2717 = vmatprep.mubr.bf16.mxu0 0
      %2718 = vmatmul.mubr.bf16.gmra.mrb[0].mxu0 %v2617
      %v2719 = vpop.f32.mrb[0].mxu0
      %v2720 = vadd.f32 0.0, %v2719
      %v2721 = vpop.f32.mrb[0].mxu0
      %v2722 = vpop.f32.mrb[0].mxu0
      %v2723 = vadd.f32 0.0, %v2722
      %v2724 = vpop.f32.mrb[0].mxu0
      %2725 = vmatprep.mubr.bf16.mxu0 0
      %2726 = vmatmul.mubr.bf16.gmra.mrb[0].mxu0 %v2618
      %v2727 = vpop.f32.mrb[0].mxu0
      %v2728 = vadd.f32 0.0, %v2727
      %v2729 = vpop.f32.mrb[0].mxu0
      %v2730 = vpop.f32.mrb[0].mxu0
      %v2731 = vadd.f32 0.0, %v2730
      %v2732 = vpop.f32.mrb[0].mxu0
      %2733 = vmatprep.mubr.bf16.mxu0 0
      %2734 = vmatmul.mubr.bf16.gmra.mrb[0].mxu0 %v2619
      %v2735 = vpop.f32.mrb[0].mxu0
      %v2736 = vadd.f32 0.0, %v2735
      %v2737 = vpop.f32.mrb[0].mxu0
      %v2738 = vpop.f32.mrb[0].mxu0
      %v2739 = vadd.f32 0.0, %v2738
      %v2740 = vpop.f32.mrb[0].mxu0
      %2741 = vmatprep.mubr.bf16.mxu0 0
      %2742 = vmatmul.mubr.bf16.gmra.mrb[0].mxu0 %v2620
      %v2743 = vpop.f32.mrb[0].mxu0
      %v2744 = vadd.f32 0.0, %v2743
      %v2745 = vpop.f32.mrb[0].mxu0
      %v2746 = vpop.f32.mrb[0].mxu0
      %v2747 = vadd.f32 0.0, %v2746
      %v2748 = vpop.f32.mrb[0].mxu0
      %2749 = vdwg.mxu0
      %v2750 = vld [vmem:[#allocation5] sm:$0xff]
      %v2751 = vld [vmem:[#allocation5 + $0x8] sm:$0xff]
      %v2752 = vld [vmem:[#allocation5 + $0x10] sm:$0xff]
      %v2753 = vld [vmem:[#allocation5 + $0x18] sm:$0xff]
      %v2754 = vld [vmem:[#allocation5 + $0x20] sm:$0xff]
      %v2755 = vld [vmem:[#allocation5 + $0x28] sm:$0xff]
      %v2756 = vld [vmem:[#allocation5 + $0x30] sm:$0xff]
      %v2757 = vld [vmem:[#allocation5 + $0x38] sm:$0xff]
      %v2758 = vld [vmem:[#allocation5 + $0x40] sm:$0xff]
      %v2759 = vld [vmem:[#allocation5 + $0x48] sm:$0xff]
      %v2760 = vld [vmem:[#allocation5 + $0x50] sm:$0xff]
      %v2761 = vld [vmem:[#allocation5 + $0x58] sm:$0xff]
      %v2762 = vld [vmem:[#allocation5 + $0x60] sm:$0xff]
      %v2763 = vld [vmem:[#allocation5 + $0x68] sm:$0xff]
      %v2764 = vld [vmem:[#allocation5 + $0x70] sm:$0xff]
      %v2765 = vld [vmem:[#allocation5 + $0x78] sm:$0xff]
      %2767 = vset.pattern.permute.xlu0 8
      %2768 = vperm.xlu0 %2767, %v2390
      %v2769 = vpop.permute.xlu0 %2768
      %2772 = vset.pattern.permute.xlu0 8
      %2773 = vperm.xlu0 %2772, %v2392
      %v2774 = vpop.permute.xlu0 %2773
      %2777 = vset.pattern.permute.xlu0 8
      %2778 = vperm.xlu0 %2777, %v2394
      %v2779 = vpop.permute.xlu0 %2778
      %2782 = vset.pattern.permute.xlu0 8
      %2783 = vperm.xlu0 %2782, %v2396
      %v2784 = vpop.permute.xlu0 %2783
      %2787 = vset.pattern.permute.xlu0 8
      %2788 = vperm.xlu0 %2787, %v2398
      %v2789 = vpop.permute.xlu0 %2788
      %2792 = vset.pattern.permute.xlu0 8
      %2793 = vperm.xlu0 %2792, %v2400
      %v2794 = vpop.permute.xlu0 %2793
      %2797 = vset.pattern.permute.xlu0 8
      %2798 = vperm.xlu0 %2797, %v2402
      %v2799 = vpop.permute.xlu0 %2798
      %2802 = vset.pattern.permute.xlu0 8
      %2803 = vperm.xlu0 %2802, %v2404
      %v2804 = vpop.permute.xlu0 %2803
      %2807 = vset.pattern.permute.xlu0 8
      %2808 = vperm.xlu0 %2807, %v2406
      %v2809 = vpop.permute.xlu0 %2808
      %2812 = vset.pattern.permute.xlu0 8
      %2813 = vperm.xlu0 %2812, %v2408
      %v2814 = vpop.permute.xlu0 %2813
      %2817 = vset.pattern.permute.xlu0 8
      %2818 = vperm.xlu0 %2817, %v2410
      %v2819 = vpop.permute.xlu0 %2818
      %2822 = vset.pattern.permute.xlu0 8
      %2823 = vperm.xlu0 %2822, %v2412
      %v2824 = vpop.permute.xlu0 %2823
      %2827 = vset.pattern.permute.xlu0 8
      %2828 = vperm.xlu0 %2827, %v2414
      %v2829 = vpop.permute.xlu0 %2828
      %2832 = vset.pattern.permute.xlu0 8
      %2833 = vperm.xlu0 %2832, %v2416
      %v2834 = vpop.permute.xlu0 %2833
      %2837 = vset.pattern.permute.xlu0 8
      %2838 = vperm.xlu0 %2837, %v2418
      %v2839 = vpop.permute.xlu0 %2838
      %2842 = vset.pattern.permute.xlu0 8
      %2843 = vperm.xlu0 %2842, %v2420
      %v2844 = vpop.permute.xlu0 %2843
      %v2846 = vmul.f32 %v2750, %v2769
      %v2847 = vmul.f32 %v2751, %v2774
      %v2848 = vmul.f32 %v2752, %v2779
      %v2849 = vmul.f32 %v2753, %v2784
      %v2850 = vmul.f32 %v2754, %v2789
      %v2851 = vmul.f32 %v2755, %v2794
      %v2852 = vmul.f32 %v2756, %v2799
      %v2853 = vmul.f32 %v2757, %v2804
      %v2854 = vmul.f32 %v2758, %v2809
      %v2855 = vmul.f32 %v2759, %v2814
      %v2856 = vmul.f32 %v2760, %v2819
      %v2857 = vmul.f32 %v2761, %v2824
      %v2858 = vmul.f32 %v2762, %v2829
      %v2859 = vmul.f32 %v2763, %v2834
      %v2860 = vmul.f32 %v2764, %v2839
      %v2861 = vmul.f32 %v2765, %v2844
      %2878 = vrot.lane.b32.xlu0 %v2688, 8
      %v2879 = vpop.permute.xlu0 %2878
      %2880 = vrot.lane.b32.xlu0 %v2691, 8
      %v2881 = vpop.permute.xlu0 %2880
      %2882 = vrot.lane.b32.xlu0 %v2696, 8
      %v2883 = vpop.permute.xlu0 %2882
      %2884 = vrot.lane.b32.xlu0 %v2699, 8
      %v2885 = vpop.permute.xlu0 %2884
      %2886 = vrot.lane.b32.xlu0 %v2704, 8
      %v2887 = vpop.permute.xlu0 %2886
      %2888 = vrot.lane.b32.xlu0 %v2707, 8
      %v2889 = vpop.permute.xlu0 %2888
      %2890 = vrot.lane.b32.xlu0 %v2712, 8
      %v2891 = vpop.permute.xlu0 %2890
      %2892 = vrot.lane.b32.xlu0 %v2715, 8
      %v2893 = vpop.permute.xlu0 %2892
      %2894 = vrot.lane.b32.xlu0 %v2720, 8
      %v2895 = vpop.permute.xlu0 %2894
      %2896 = vrot.lane.b32.xlu0 %v2723, 8
      %v2897 = vpop.permute.xlu0 %2896
      %2898 = vrot.lane.b32.xlu0 %v2728, 8
      %v2899 = vpop.permute.xlu0 %2898
      %2900 = vrot.lane.b32.xlu0 %v2731, 8
      %v2901 = vpop.permute.xlu0 %2900
      %2902 = vrot.lane.b32.xlu0 %v2736, 8
      %v2903 = vpop.permute.xlu0 %2902
      %2904 = vrot.lane.b32.xlu0 %v2739, 8
      %v2905 = vpop.permute.xlu0 %2904
      %2906 = vrot.lane.b32.xlu0 %v2744, 8
      %v2907 = vpop.permute.xlu0 %2906
      %2908 = vrot.lane.b32.xlu0 %v2747, 8
      %v2909 = vpop.permute.xlu0 %2908
      %v2926 = vadd.f32 %v2846, %v2879
      %v2927 = vadd.f32 %v2847, %v2881
      %v2928 = vadd.f32 %v2848, %v2883
      %v2929 = vadd.f32 %v2849, %v2885
      %v2930 = vadd.f32 %v2850, %v2887
      %v2931 = vadd.f32 %v2851, %v2889
      %v2932 = vadd.f32 %v2852, %v2891
      %v2933 = vadd.f32 %v2853, %v2893
      %v2934 = vadd.f32 %v2854, %v2895
      %v2935 = vadd.f32 %v2855, %v2897
      %v2936 = vadd.f32 %v2856, %v2899
      %v2937 = vadd.f32 %v2857, %v2901
      %v2938 = vadd.f32 %v2858, %v2903
      %v2939 = vadd.f32 %v2859, %v2905
      %v2940 = vadd.f32 %v2860, %v2907
      %v2941 = vadd.f32 %v2861, %v2909
      %vm2942 = vcmask 130112
      %2943 = vst.msk [vmem:[#allocation5] sm:$0xff] %vm2942, %v2926
      %2944 = vst.msk [vmem:[#allocation5 + $0x8] sm:$0xff] %vm2942, %v2927
      %2945 = vst.msk [vmem:[#allocation5 + $0x10] sm:$0xff] %vm2942, %v2928
      %2946 = vst.msk [vmem:[#allocation5 + $0x18] sm:$0xff] %vm2942, %v2929
      %2947 = vst.msk [vmem:[#allocation5 + $0x20] sm:$0xff] %vm2942, %v2930
      %2948 = vst.msk [vmem:[#allocation5 + $0x28] sm:$0xff] %vm2942, %v2931
      %2949 = vst.msk [vmem:[#allocation5 + $0x30] sm:$0xff] %vm2942, %v2932
      %2950 = vst.msk [vmem:[#allocation5 + $0x38] sm:$0xff] %vm2942, %v2933
      %2951 = vst.msk [vmem:[#allocation5 + $0x40] sm:$0xff] %vm2942, %v2934
      %2952 = vst.msk [vmem:[#allocation5 + $0x48] sm:$0xff] %vm2942, %v2935
      %2953 = vst.msk [vmem:[#allocation5 + $0x50] sm:$0xff] %vm2942, %v2936
      %2954 = vst.msk [vmem:[#allocation5 + $0x58] sm:$0xff] %vm2942, %v2937
      %2955 = vst.msk [vmem:[#allocation5 + $0x60] sm:$0xff] %vm2942, %v2938
      %2956 = vst.msk [vmem:[#allocation5 + $0x68] sm:$0xff] %vm2942, %v2939
      %2957 = vst.msk [vmem:[#allocation5 + $0x70] sm:$0xff] %vm2942, %v2940
      %2958 = vst.msk [vmem:[#allocation5 + $0x78] sm:$0xff] %vm2942, %v2941
      %2959 = vst.msk [vmem:[#allocation3] sm:$0xff] %vm2942, %v2424
      %2960 = vst.msk [vmem:[#allocation3 + $0x8] sm:$0xff] %vm2942, %v2429
      %2961 = vst.msk [vmem:[#allocation3 + $0x10] sm:$0xff] %vm2942, %v2434
      %2962 = vst.msk [vmem:[#allocation3 + $0x18] sm:$0xff] %vm2942, %v2439
      %2963 = vst.msk [vmem:[#allocation3 + $0x20] sm:$0xff] %vm2942, %v2444
      %2964 = vst.msk [vmem:[#allocation3 + $0x28] sm:$0xff] %vm2942, %v2449
      %2965 = vst.msk [vmem:[#allocation3 + $0x30] sm:$0xff] %vm2942, %v2454
      %2966 = vst.msk [vmem:[#allocation3 + $0x38] sm:$0xff] %vm2942, %v2459
      %2967 = vst.msk [vmem:[#allocation3 + $0x40] sm:$0xff] %vm2942, %v2464
      %2968 = vst.msk [vmem:[#allocation3 + $0x48] sm:$0xff] %vm2942, %v2469
      %2969 = vst.msk [vmem:[#allocation3 + $0x50] sm:$0xff] %vm2942, %v2474
      %2970 = vst.msk [vmem:[#allocation3 + $0x58] sm:$0xff] %vm2942, %v2479
      %2971 = vst.msk [vmem:[#allocation3 + $0x60] sm:$0xff] %vm2942, %v2484
      %2972 = vst.msk [vmem:[#allocation3 + $0x68] sm:$0xff] %vm2942, %v2489
      %2973 = vst.msk [vmem:[#allocation3 + $0x70] sm:$0xff] %vm2942, %v2494
      %2974 = vst.msk [vmem:[#allocation3 + $0x78] sm:$0xff] %vm2942, %v2499
      %2976 = vset.pattern.permute.xlu0 8
      %2977 = vperm.xlu0 %2976, %v2597
      %v2978 = vpop.permute.xlu0 %2977
      %2981 = vset.pattern.permute.xlu0 8
      %2982 = vperm.xlu0 %2981, %v2598
      %v2983 = vpop.permute.xlu0 %2982
      %2986 = vset.pattern.permute.xlu0 8
      %2987 = vperm.xlu0 %2986, %v2599
      %v2988 = vpop.permute.xlu0 %2987
      %2991 = vset.pattern.permute.xlu0 8
      %2992 = vperm.xlu0 %2991, %v2600
      %v2993 = vpop.permute.xlu0 %2992
      %2996 = vset.pattern.permute.xlu0 8
      %2997 = vperm.xlu0 %2996, %v2601
      %v2998 = vpop.permute.xlu0 %2997
      %3001 = vset.pattern.permute.xlu0 8
      %3002 = vperm.xlu0 %3001, %v2602
      %v3003 = vpop.permute.xlu0 %3002
      %3006 = vset.pattern.permute.xlu0 8
      %3007 = vperm.xlu0 %3006, %v2603
      %v3008 = vpop.permute.xlu0 %3007
      %3011 = vset.pattern.permute.xlu0 8
      %3012 = vperm.xlu0 %3011, %v2604
      %v3013 = vpop.permute.xlu0 %3012
      %3016 = vset.pattern.permute.xlu0 8
      %3017 = vperm.xlu0 %3016, %v2605
      %v3018 = vpop.permute.xlu0 %3017
      %3021 = vset.pattern.permute.xlu0 8
      %3022 = vperm.xlu0 %3021, %v2606
      %v3023 = vpop.permute.xlu0 %3022
      %3026 = vset.pattern.permute.xlu0 8
      %3027 = vperm.xlu0 %3026, %v2607
      %v3028 = vpop.permute.xlu0 %3027
      %3031 = vset.pattern.permute.xlu0 8
      %3032 = vperm.xlu0 %3031, %v2608
      %v3033 = vpop.permute.xlu0 %3032
      %3036 = vset.pattern.permute.xlu0 8
      %3037 = vperm.xlu0 %3036, %v2609
      %v3038 = vpop.permute.xlu0 %3037
      %3041 = vset.pattern.permute.xlu0 8
      %3042 = vperm.xlu0 %3041, %v2610
      %v3043 = vpop.permute.xlu0 %3042
      %3046 = vset.pattern.permute.xlu0 8
      %3047 = vperm.xlu0 %3046, %v2611
      %v3048 = vpop.permute.xlu0 %3047
      %3051 = vset.pattern.permute.xlu0 8
      %3052 = vperm.xlu0 %3051, %v2612
      %v3053 = vpop.permute.xlu0 %3052
      %3055 = vst.msk [vmem:[#allocation4] sm:$0xff] %vm2942, %v2978
      %3056 = vst.msk [vmem:[#allocation4 + $0x8] sm:$0xff] %vm2942, %v2983
      %3057 = vst.msk [vmem:[#allocation4 + $0x10] sm:$0xff] %vm2942, %v2988
      %3058 = vst.msk [vmem:[#allocation4 + $0x18] sm:$0xff] %vm2942, %v2993
      %3059 = vst.msk [vmem:[#allocation4 + $0x20] sm:$0xff] %vm2942, %v2998
      %3060 = vst.msk [vmem:[#allocation4 + $0x28] sm:$0xff] %vm2942, %v3003
      %3061 = vst.msk [vmem:[#allocation4 + $0x30] sm:$0xff] %vm2942, %v3008
      %3062 = vst.msk [vmem:[#allocation4 + $0x38] sm:$0xff] %vm2942, %v3013
      %3063 = vst.msk [vmem:[#allocation4 + $0x40] sm:$0xff] %vm2942, %v3018
      %3064 = vst.msk [vmem:[#allocation4 + $0x48] sm:$0xff] %vm2942, %v3023
      %3065 = vst.msk [vmem:[#allocation4 + $0x50] sm:$0xff] %vm2942, %v3028
      %3066 = vst.msk [vmem:[#allocation4 + $0x58] sm:$0xff] %vm2942, %v3033
      %3067 = vst.msk [vmem:[#allocation4 + $0x60] sm:$0xff] %vm2942, %v3038
      %3068 = vst.msk [vmem:[#allocation4 + $0x68] sm:$0xff] %vm2942, %v3043
      %3069 = vst.msk [vmem:[#allocation4 + $0x70] sm:$0xff] %vm2942, %v3048
      %3070 = vst.msk [vmem:[#allocation4 + $0x78] sm:$0xff] %vm2942, %v3053
      %3071 = vrot.lane.b32.xlu0 %v1258, 112
      %v3072 = vpop.permute.xlu0 %3071
      %3073 = vrot.lane.b32.xlu0 %v1259, 112
      %v3074 = vpop.permute.xlu0 %3073
      %3075 = vrot.lane.b32.xlu0 %v1260, 112
      %v3076 = vpop.permute.xlu0 %3075
      %3077 = vrot.lane.b32.xlu0 %v1261, 112
      %v3078 = vpop.permute.xlu0 %3077
      %3079 = vrot.lane.b32.xlu0 %v1262, 112
      %v3080 = vpop.permute.xlu0 %3079
      %3081 = vrot.lane.b32.xlu0 %v1263, 112
      %v3082 = vpop.permute.xlu0 %3081
      %3083 = vrot.lane.b32.xlu0 %v1264, 112
      %v3084 = vpop.permute.xlu0 %3083
      %3085 = vrot.lane.b32.xlu0 %v1265, 112
      %v3086 = vpop.permute.xlu0 %3085
      %3087 = vrot.lane.b32.xlu0 %v1242, 112
      %v3088 = vpop.permute.xlu0 %3087
      %3089 = vrot.lane.b32.xlu0 %v1244, 112
      %v3090 = vpop.permute.xlu0 %3089
      %3091 = vrot.lane.b32.xlu0 %v1246, 112
      %v3092 = vpop.permute.xlu0 %3091
      %3093 = vrot.lane.b32.xlu0 %v1248, 112
      %v3094 = vpop.permute.xlu0 %3093
      %3095 = vrot.lane.b32.xlu0 %v1250, 112
      %v3096 = vpop.permute.xlu0 %3095
      %3097 = vrot.lane.b32.xlu0 %v1252, 112
      %v3098 = vpop.permute.xlu0 %3097
      %3099 = vrot.lane.b32.xlu0 %v1254, 112
      %v3100 = vpop.permute.xlu0 %3099
      %3101 = vrot.lane.b32.xlu0 %v1256, 112
      %v3102 = vpop.permute.xlu0 %3101
      %v3104 = vsel %vm1273, %v3072, 0
      %v3107 = vsel %vm1273, %v3074, 0
      %v3110 = vsel %vm1273, %v3076, 0
      %v3113 = vsel %vm1273, %v3078, 0
      %v3116 = vsel %vm1273, %v3080, 0
      %v3119 = vsel %vm1273, %v3082, 0
      %v3122 = vsel %vm1273, %v3084, 0
      %v3125 = vsel %vm1273, %v3086, 0
      %v3128 = vsel %vm1273, %v3088, 0
      %v3131 = vsel %vm1273, %v3090, 0
      %v3134 = vsel %vm1273, %v3092, 0
      %v3137 = vsel %vm1273, %v3094, 0
      %v3140 = vsel %vm1273, %v3096, 0
      %v3143 = vsel %vm1273, %v3098, 0
      %v3146 = vsel %vm1273, %v3100, 0
      %v3149 = vsel %vm1273, %v3102, 0
      %3151 = vmatprep.subr.bf16.mxu0 0
      %3152 = vmatpush1.bf16.xpose.msra.mxu0 %v3128
      %3153 = vmatprep.subr.bf16.mxu0 0
      %3154 = vmatpush1.bf16.xpose.msra.mxu0 %v3131
      %3155 = vmatprep.subr.bf16.mxu0 0
      %3156 = vmatpush1.bf16.xpose.msra.mxu0 %v3134
      %3157 = vmatprep.subr.bf16.mxu0 0
      %3158 = vmatpush1.bf16.xpose.msra.mxu0 %v3137
      %3159 = vmatprep.subr.bf16.mxu0 0
      %3160 = vmatpush1.bf16.xpose.msra.mxu0 %v3140
      %3161 = vmatprep.subr.bf16.mxu0 0
      %3162 = vmatpush1.bf16.xpose.msra.mxu0 %v3143
      %3163 = vmatprep.subr.bf16.mxu0 0
      %3164 = vmatpush1.bf16.xpose.msra.mxu0 %v3146
      %3165 = vmatprep.subr.bf16.mxu0 0
      %3166 = vmatpush1.bf16.xpose.msra.mxu0 %v3149
      %3167 = vmatprep.subr.bf16.mxu0 0
      %3168 = vmatpush1.bf16.xpose.msra.mxu0 0
      %3169 = vmatprep.subr.bf16.mxu0 0
      %3170 = vmatpush1.bf16.xpose.msra.mxu0 0
      %3171 = vmatprep.subr.bf16.mxu0 0
      %3172 = vmatpush1.bf16.xpose.msra.mxu0 0
      %3173 = vmatprep.subr.bf16.mxu0 0
      %3174 = vmatpush1.bf16.xpose.msra.mxu0 0
      %3175 = vmatprep.subr.bf16.mxu0 0
      %3176 = vmatpush1.bf16.xpose.msra.mxu0 0
      %3177 = vmatprep.subr.bf16.mxu0 0
      %3178 = vmatpush1.bf16.xpose.msra.mxu0 0
      %3179 = vmatprep.subr.bf16.mxu0 0
      %3180 = vmatpush1.bf16.xpose.msra.mxu0 0
      %3181 = vmatprep.subr.bf16.mxu0 0
      %3182 = vmatpush1.bf16.xpose.msra.mxu0 0
      %3183 = vmatprep.mubr.bf16.mxu0 0
      %3184 = vmatmul.mubr.bf16.gmra.mrb[0].mxu0 %v3104
      %v3185 = vpop.f32.mrb[0].mxu0
      %v3186 = vadd.f32 %v1271, %v3185
      %v3187 = vpop.f32.mrb[0].mxu0
      %v3188 = vpop.f32.mrb[0].mxu0
      %v3189 = vadd.f32 %v1271, %v3188
      %v3190 = vpop.f32.mrb[0].mxu0
      %3191 = vmatprep.mubr.bf16.mxu0 0
      %3192 = vmatmul.mubr.bf16.gmra.mrb[0].mxu0 %v3107
      %v3193 = vpop.f32.mrb[0].mxu0
      %v3194 = vadd.f32 %v1271, %v3193
      %v3195 = vpop.f32.mrb[0].mxu0
      %v3196 = vpop.f32.mrb[0].mxu0
      %v3197 = vadd.f32 %v1271, %v3196
      %v3198 = vpop.f32.mrb[0].mxu0
      %3199 = vmatprep.mubr.bf16.mxu0 0
      %3200 = vmatmul.mubr.bf16.gmra.mrb[0].mxu0 %v3110
      %v3201 = vpop.f32.mrb[0].mxu0
      %v3202 = vadd.f32 %v1271, %v3201
      %v3203 = vpop.f32.mrb[0].mxu0
      %v3204 = vpop.f32.mrb[0].mxu0
      %v3205 = vadd.f32 %v1271, %v3204
      %v3206 = vpop.f32.mrb[0].mxu0
      %3207 = vmatprep.mubr.bf16.mxu0 0
      %3208 = vmatmul.mubr.bf16.gmra.mrb[0].mxu0 %v3113
      %v3209 = vpop.f32.mrb[0].mxu0
      %v3210 = vadd.f32 %v1271, %v3209
      %v3211 = vpop.f32.mrb[0].mxu0
      %v3212 = vpop.f32.mrb[0].mxu0
      %v3213 = vadd.f32 %v1271, %v3212
      %v3214 = vpop.f32.mrb[0].mxu0
      %3215 = vmatprep.mubr.bf16.mxu0 0
      %3216 = vmatmul.mubr.bf16.gmra.mrb[0].mxu0 %v3116
      %v3217 = vpop.f32.mrb[0].mxu0
      %v3218 = vadd.f32 %v1271, %v3217
      %v3219 = vpop.f32.mrb[0].mxu0
      %v3220 = vpop.f32.mrb[0].mxu0
      %v3221 = vadd.f32 %v1271, %v3220
      %v3222 = vpop.f32.mrb[0].mxu0
      %3223 = vmatprep.mubr.bf16.mxu0 0
      %3224 = vmatmul.mubr.bf16.gmra.mrb[0].mxu0 %v3119
      %v3225 = vpop.f32.mrb[0].mxu0
      %v3226 = vadd.f32 %v1271, %v3225
      %v3227 = vpop.f32.mrb[0].mxu0
      %v3228 = vpop.f32.mrb[0].mxu0
      %v3229 = vadd.f32 %v1271, %v3228
      %v3230 = vpop.f32.mrb[0].mxu0
      %3231 = vmatprep.mubr.bf16.mxu0 0
      %3232 = vmatmul.mubr.bf16.gmra.mrb[0].mxu0 %v3122
      %v3233 = vpop.f32.mrb[0].mxu0
      %v3234 = vadd.f32 %v1271, %v3233
      %v3235 = vpop.f32.mrb[0].mxu0
      %v3236 = vpop.f32.mrb[0].mxu0
      %v3237 = vadd.f32 %v1271, %v3236
      %v3238 = vpop.f32.mrb[0].mxu0
      %3239 = vmatprep.mubr.bf16.mxu0 0
      %3240 = vmatmul.mubr.bf16.gmra.mrb[0].mxu0 %v3125
      %v3241 = vpop.f32.mrb[0].mxu0
      %v3242 = vadd.f32 %v1271, %v3241
      %v3243 = vpop.f32.mrb[0].mxu0
      %v3244 = vpop.f32.mrb[0].mxu0
      %v3245 = vadd.f32 %v1271, %v3244
      %v3246 = vpop.f32.mrb[0].mxu0
      %3247 = vdwg.mxu0
      %v3248 = vld [vmem:[#allocation3] sm:$0xff]
      %v3249 = vld [vmem:[#allocation3 + $0x8] sm:$0xff]
      %v3250 = vld [vmem:[#allocation3 + $0x10] sm:$0xff]
      %v3251 = vld [vmem:[#allocation3 + $0x18] sm:$0xff]
      %v3252 = vld [vmem:[#allocation3 + $0x20] sm:$0xff]
      %v3253 = vld [vmem:[#allocation3 + $0x28] sm:$0xff]
      %v3254 = vld [vmem:[#allocation3 + $0x30] sm:$0xff]
      %v3255 = vld [vmem:[#allocation3 + $0x38] sm:$0xff]
      %v3256 = vld [vmem:[#allocation3 + $0x40] sm:$0xff]
      %v3257 = vld [vmem:[#allocation3 + $0x48] sm:$0xff]
      %v3258 = vld [vmem:[#allocation3 + $0x50] sm:$0xff]
      %v3259 = vld [vmem:[#allocation3 + $0x58] sm:$0xff]
      %v3260 = vld [vmem:[#allocation3 + $0x60] sm:$0xff]
      %v3261 = vld [vmem:[#allocation3 + $0x68] sm:$0xff]
      %v3262 = vld [vmem:[#allocation3 + $0x70] sm:$0xff]
      %v3263 = vld [vmem:[#allocation3 + $0x78] sm:$0xff]
      %v3264 = vld [vmem:[#allocation4] sm:$0xff]
      %v3265 = vld [vmem:[#allocation4 + $0x8] sm:$0xff]
      %v3266 = vld [vmem:[#allocation4 + $0x10] sm:$0xff]
      %v3267 = vld [vmem:[#allocation4 + $0x18] sm:$0xff]
      %v3268 = vld [vmem:[#allocation4 + $0x20] sm:$0xff]
      %v3269 = vld [vmem:[#allocation4 + $0x28] sm:$0xff]
      %v3270 = vld [vmem:[#allocation4 + $0x30] sm:$0xff]
      %v3271 = vld [vmem:[#allocation4 + $0x38] sm:$0xff]
      %v3272 = vld [vmem:[#allocation4 + $0x40] sm:$0xff]
      %v3273 = vld [vmem:[#allocation4 + $0x48] sm:$0xff]
      %v3274 = vld [vmem:[#allocation4 + $0x50] sm:$0xff]
      %v3275 = vld [vmem:[#allocation4 + $0x58] sm:$0xff]
      %v3276 = vld [vmem:[#allocation4 + $0x60] sm:$0xff]
      %v3277 = vld [vmem:[#allocation4 + $0x68] sm:$0xff]
      %v3278 = vld [vmem:[#allocation4 + $0x70] sm:$0xff]
      %v3279 = vld [vmem:[#allocation4 + $0x78] sm:$0xff]
      %3280 = vmax.xlane.f32.xlu0 %v3186
      %v3281 = vpop.xlane.xlu0 %3280
      %3282 = vmax.xlane.f32.xlu0 %v3189
      %v3283 = vpop.xlane.xlu0 %3282
      %3284 = vmax.xlane.f32.xlu0 %v3194
      %v3285 = vpop.xlane.xlu0 %3284
      %3286 = vmax.xlane.f32.xlu0 %v3197
      %v3287 = vpop.xlane.xlu0 %3286
      %3288 = vmax.xlane.f32.xlu0 %v3202
      %v3289 = vpop.xlane.xlu0 %3288
      %3290 = vmax.xlane.f32.xlu0 %v3205
      %v3291 = vpop.xlane.xlu0 %3290
      %3292 = vmax.xlane.f32.xlu0 %v3210
      %v3293 = vpop.xlane.xlu0 %3292
      %3294 = vmax.xlane.f32.xlu0 %v3213
      %v3295 = vpop.xlane.xlu0 %3294
      %3296 = vmax.xlane.f32.xlu0 %v3218
      %v3297 = vpop.xlane.xlu0 %3296
      %3298 = vmax.xlane.f32.xlu0 %v3221
      %v3299 = vpop.xlane.xlu0 %3298
      %3300 = vmax.xlane.f32.xlu0 %v3226
      %v3301 = vpop.xlane.xlu0 %3300
      %3302 = vmax.xlane.f32.xlu0 %v3229
      %v3303 = vpop.xlane.xlu0 %3302
      %3304 = vmax.xlane.f32.xlu0 %v3234
      %v3305 = vpop.xlane.xlu0 %3304
      %3306 = vmax.xlane.f32.xlu0 %v3237
      %v3307 = vpop.xlane.xlu0 %3306
      %3308 = vmax.xlane.f32.xlu0 %v3242
      %v3309 = vpop.xlane.xlu0 %3308
      %3310 = vmax.xlane.f32.xlu0 %v3245
      %v3311 = vpop.xlane.xlu0 %3310
      %v3312 = vmax.f32 %v3248, %v3281
      %v3313 = vmax.f32 %v3249, %v3283
      %v3314 = vmax.f32 %v3250, %v3285
      %v3315 = vmax.f32 %v3251, %v3287
      %v3316 = vmax.f32 %v3252, %v3289
      %v3317 = vmax.f32 %v3253, %v3291
      %v3318 = vmax.f32 %v3254, %v3293
      %v3319 = vmax.f32 %v3255, %v3295
      %v3320 = vmax.f32 %v3256, %v3297
      %v3321 = vmax.f32 %v3257, %v3299
      %v3322 = vmax.f32 %v3258, %v3301
      %v3323 = vmax.f32 %v3259, %v3303
      %v3324 = vmax.f32 %v3260, %v3305
      %v3325 = vmax.f32 %v3261, %v3307
      %v3326 = vmax.f32 %v3262, %v3309
      %v3327 = vmax.f32 %v3263, %v3311
      %v3328 = vsub.f32 %v3248, %v3312
      %v3329 = vsub.f32 %v3249, %v3313
      %v3330 = vsub.f32 %v3250, %v3314
      %v3331 = vsub.f32 %v3251, %v3315
      %v3332 = vsub.f32 %v3252, %v3316
      %v3333 = vsub.f32 %v3253, %v3317
      %v3334 = vsub.f32 %v3254, %v3318
      %v3335 = vsub.f32 %v3255, %v3319
      %v3336 = vsub.f32 %v3256, %v3320
      %v3337 = vsub.f32 %v3257, %v3321
      %v3338 = vsub.f32 %v3258, %v3322
      %v3339 = vsub.f32 %v3259, %v3323
      %v3340 = vsub.f32 %v3260, %v3324
      %v3341 = vsub.f32 %v3261, %v3325
      %v3342 = vsub.f32 %v3262, %v3326
      %v3343 = vsub.f32 %v3263, %v3327
      %v3344 = vmul.f32 %v3328, 1.442695
      %v3345 = vpow.pop %v3344
      %v3346 = vmul.f32 %v3329, 1.442695
      %v3347 = vpow.pop %v3346
      %v3348 = vmul.f32 %v3330, 1.442695
      %v3349 = vpow.pop %v3348
      %v3350 = vmul.f32 %v3331, 1.442695
      %v3351 = vpow.pop %v3350
      %v3352 = vmul.f32 %v3332, 1.442695
      %v3353 = vpow.pop %v3352
      %v3354 = vmul.f32 %v3333, 1.442695
      %v3355 = vpow.pop %v3354
      %v3356 = vmul.f32 %v3334, 1.442695
      %v3357 = vpow.pop %v3356
      %v3358 = vmul.f32 %v3335, 1.442695
      %v3359 = vpow.pop %v3358
      %v3360 = vmul.f32 %v3336, 1.442695
      %v3361 = vpow.pop %v3360
      %v3362 = vmul.f32 %v3337, 1.442695
      %v3363 = vpow.pop %v3362
      %v3364 = vmul.f32 %v3338, 1.442695
      %v3365 = vpow.pop %v3364
      %v3366 = vmul.f32 %v3339, 1.442695
      %v3367 = vpow.pop %v3366
      %v3368 = vmul.f32 %v3340, 1.442695
      %v3369 = vpow.pop %v3368
      %v3370 = vmul.f32 %v3341, 1.442695
      %v3371 = vpow.pop %v3370
      %v3372 = vmul.f32 %v3342, 1.442695
      %v3373 = vpow.pop %v3372
      %v3374 = vmul.f32 %v3343, 1.442695
      %v3375 = vpow.pop %v3374
      %3377 = vset.pattern.permute.xlu0 16
      %3378 = vperm.xlu0 %3377, %v3312
      %v3379 = vpop.permute.xlu0 %3378
      %3382 = vset.pattern.permute.xlu0 16
      %3383 = vperm.xlu0 %3382, %v3313
      %v3384 = vpop.permute.xlu0 %3383
      %3387 = vset.pattern.permute.xlu0 16
      %3388 = vperm.xlu0 %3387, %v3314
      %v3389 = vpop.permute.xlu0 %3388
      %3392 = vset.pattern.permute.xlu0 16
      %3393 = vperm.xlu0 %3392, %v3315
      %v3394 = vpop.permute.xlu0 %3393
      %3397 = vset.pattern.permute.xlu0 16
      %3398 = vperm.xlu0 %3397, %v3316
      %v3399 = vpop.permute.xlu0 %3398
      %3402 = vset.pattern.permute.xlu0 16
      %3403 = vperm.xlu0 %3402, %v3317
      %v3404 = vpop.permute.xlu0 %3403
      %3407 = vset.pattern.permute.xlu0 16
      %3408 = vperm.xlu0 %3407, %v3318
      %v3409 = vpop.permute.xlu0 %3408
      %3412 = vset.pattern.permute.xlu0 16
      %3413 = vperm.xlu0 %3412, %v3319
      %v3414 = vpop.permute.xlu0 %3413
      %3417 = vset.pattern.permute.xlu0 16
      %3418 = vperm.xlu0 %3417, %v3320
      %v3419 = vpop.permute.xlu0 %3418
      %3422 = vset.pattern.permute.xlu0 16
      %3423 = vperm.xlu0 %3422, %v3321
      %v3424 = vpop.permute.xlu0 %3423
      %3427 = vset.pattern.permute.xlu0 16
      %3428 = vperm.xlu0 %3427, %v3322
      %v3429 = vpop.permute.xlu0 %3428
      %3432 = vset.pattern.permute.xlu0 16
      %3433 = vperm.xlu0 %3432, %v3323
      %v3434 = vpop.permute.xlu0 %3433
      %3437 = vset.pattern.permute.xlu0 16
      %3438 = vperm.xlu0 %3437, %v3324
      %v3439 = vpop.permute.xlu0 %3438
      %3442 = vset.pattern.permute.xlu0 16
      %3443 = vperm.xlu0 %3442, %v3325
      %v3444 = vpop.permute.xlu0 %3443
      %3447 = vset.pattern.permute.xlu0 16
      %3448 = vperm.xlu0 %3447, %v3326
      %v3449 = vpop.permute.xlu0 %3448
      %3452 = vset.pattern.permute.xlu0 16
      %3453 = vperm.xlu0 %3452, %v3327
      %v3454 = vpop.permute.xlu0 %3453
      %v3456 = vsub.f32 %v3186, %v3379
      %v3457 = vsub.f32 %v3189, %v3384
      %v3458 = vsub.f32 %v3194, %v3389
      %v3459 = vsub.f32 %v3197, %v3394
      %v3460 = vsub.f32 %v3202, %v3399
      %v3461 = vsub.f32 %v3205, %v3404
      %v3462 = vsub.f32 %v3210, %v3409
      %v3463 = vsub.f32 %v3213, %v3414
      %v3464 = vsub.f32 %v3218, %v3419
      %v3465 = vsub.f32 %v3221, %v3424
      %v3466 = vsub.f32 %v3226, %v3429
      %v3467 = vsub.f32 %v3229, %v3434
      %v3468 = vsub.f32 %v3234, %v3439
      %v3469 = vsub.f32 %v3237, %v3444
      %v3470 = vsub.f32 %v3242, %v3449
      %v3471 = vsub.f32 %v3245, %v3454
      %v3472 = vmul.f32 %v3456, 1.442695
      %v3473 = vpow.pop %v3472
      %v3474 = vmul.f32 %v3457, 1.442695
      %v3475 = vpow.pop %v3474
      %v3476 = vmul.f32 %v3458, 1.442695
      %v3477 = vpow.pop %v3476
      %v3478 = vmul.f32 %v3459, 1.442695
      %v3479 = vpow.pop %v3478
      %v3480 = vmul.f32 %v3460, 1.442695
      %v3481 = vpow.pop %v3480
      %v3482 = vmul.f32 %v3461, 1.442695
      %v3483 = vpow.pop %v3482
      %v3484 = vmul.f32 %v3462, 1.442695
      %v3485 = vpow.pop %v3484
      %v3486 = vmul.f32 %v3463, 1.442695
      %v3487 = vpow.pop %v3486
      %v3488 = vmul.f32 %v3464, 1.442695
      %v3489 = vpow.pop %v3488
      %v3490 = vmul.f32 %v3465, 1.442695
      %v3491 = vpow.pop %v3490
      %v3492 = vmul.f32 %v3466, 1.442695
      %v3493 = vpow.pop %v3492
      %v3494 = vmul.f32 %v3467, 1.442695
      %v3495 = vpow.pop %v3494
      %v3496 = vmul.f32 %v3468, 1.442695
      %v3497 = vpow.pop %v3496
      %v3498 = vmul.f32 %v3469, 1.442695
      %v3499 = vpow.pop %v3498
      %v3500 = vmul.f32 %v3470, 1.442695
      %v3501 = vpow.pop %v3500
      %v3502 = vmul.f32 %v3471, 1.442695
      %v3503 = vpow.pop %v3502
      %v3504 = vmul.f32 %v3345, %v3264
      %v3505 = vmul.f32 %v3347, %v3265
      %v3506 = vmul.f32 %v3349, %v3266
      %v3507 = vmul.f32 %v3351, %v3267
      %v3508 = vmul.f32 %v3353, %v3268
      %v3509 = vmul.f32 %v3355, %v3269
      %v3510 = vmul.f32 %v3357, %v3270
      %v3511 = vmul.f32 %v3359, %v3271
      %v3512 = vmul.f32 %v3361, %v3272
      %v3513 = vmul.f32 %v3363, %v3273
      %v3514 = vmul.f32 %v3365, %v3274
      %v3515 = vmul.f32 %v3367, %v3275
      %v3516 = vmul.f32 %v3369, %v3276
      %v3517 = vmul.f32 %v3371, %v3277
      %v3518 = vmul.f32 %v3373, %v3278
      %v3519 = vmul.f32 %v3375, %v3279
      %3520 = vadd.xlane.f32.xlu0 %v3473
      %v3521 = vpop.xlane.xlu0 %3520
      %3522 = vadd.xlane.f32.xlu0 %v3475
      %v3523 = vpop.xlane.xlu0 %3522
      %3524 = vadd.xlane.f32.xlu0 %v3477
      %v3525 = vpop.xlane.xlu0 %3524
      %3526 = vadd.xlane.f32.xlu0 %v3479
      %v3527 = vpop.xlane.xlu0 %3526
      %3528 = vadd.xlane.f32.xlu0 %v3481
      %v3529 = vpop.xlane.xlu0 %3528
      %3530 = vadd.xlane.f32.xlu0 %v3483
      %v3531 = vpop.xlane.xlu0 %3530
      %3532 = vadd.xlane.f32.xlu0 %v3485
      %v3533 = vpop.xlane.xlu0 %3532
      %3534 = vadd.xlane.f32.xlu0 %v3487
      %v3535 = vpop.xlane.xlu0 %3534
      %3536 = vadd.xlane.f32.xlu0 %v3489
      %v3537 = vpop.xlane.xlu0 %3536
      %3538 = vadd.xlane.f32.xlu0 %v3491
      %v3539 = vpop.xlane.xlu0 %3538
      %3540 = vadd.xlane.f32.xlu0 %v3493
      %v3541 = vpop.xlane.xlu0 %3540
      %3542 = vadd.xlane.f32.xlu0 %v3495
      %v3543 = vpop.xlane.xlu0 %3542
      %3544 = vadd.xlane.f32.xlu0 %v3497
      %v3545 = vpop.xlane.xlu0 %3544
      %3546 = vadd.xlane.f32.xlu0 %v3499
      %v3547 = vpop.xlane.xlu0 %3546
      %3548 = vadd.xlane.f32.xlu0 %v3501
      %v3549 = vpop.xlane.xlu0 %3548
      %3550 = vadd.xlane.f32.xlu0 %v3503
      %v3551 = vpop.xlane.xlu0 %3550
      %v3552 = vadd.f32 %v3504, %v3521
      %v3553 = vadd.f32 %v3505, %v3523
      %v3554 = vadd.f32 %v3506, %v3525
      %v3555 = vadd.f32 %v3507, %v3527
      %v3556 = vadd.f32 %v3508, %v3529
      %v3557 = vadd.f32 %v3509, %v3531
      %v3558 = vadd.f32 %v3510, %v3533
      %v3559 = vadd.f32 %v3511, %v3535
      %v3560 = vadd.f32 %v3512, %v3537
      %v3561 = vadd.f32 %v3513, %v3539
      %v3562 = vadd.f32 %v3514, %v3541
      %v3563 = vadd.f32 %v3515, %v3543
      %v3564 = vadd.f32 %v3516, %v3545
      %v3565 = vadd.f32 %v3517, %v3547
      %v3566 = vadd.f32 %v3518, %v3549
      %v3567 = vadd.f32 %v3519, %v3551
      %v3568 = vpack.c.bf16 %v3475, %v3473
      %v3569 = vpack.c.bf16 %v3479, %v3477
      %v3570 = vpack.c.bf16 %v3483, %v3481
      %v3571 = vpack.c.bf16 %v3487, %v3485
      %v3572 = vpack.c.bf16 %v3491, %v3489
      %v3573 = vpack.c.bf16 %v3495, %v3493
      %v3574 = vpack.c.bf16 %v3499, %v3497
      %v3575 = vpack.c.bf16 %v3503, %v3501
      %3576 = vrot.lane.b32.xlu0 %v1243, 112
      %v3577 = vpop.permute.xlu0 %3576
      %3578 = vrot.lane.b32.xlu0 %v1245, 112
      %v3579 = vpop.permute.xlu0 %3578
      %3580 = vrot.lane.b32.xlu0 %v1247, 112
      %v3581 = vpop.permute.xlu0 %3580
      %3582 = vrot.lane.b32.xlu0 %v1249, 112
      %v3583 = vpop.permute.xlu0 %3582
      %3584 = vrot.lane.b32.xlu0 %v1251, 112
      %v3585 = vpop.permute.xlu0 %3584
      %3586 = vrot.lane.b32.xlu0 %v1253, 112
      %v3587 = vpop.permute.xlu0 %3586
      %3588 = vrot.lane.b32.xlu0 %v1255, 112
      %v3589 = vpop.permute.xlu0 %3588
      %3590 = vrot.lane.b32.xlu0 %v1257, 112
      %v3591 = vpop.permute.xlu0 %3590
      %3600 = vmatprep.subr.bf16.mxu0 0
      %3601 = vmatpush1.bf16.msra.mxu0 %v3577
      %3602 = vmatprep.subr.bf16.mxu0 0
      %3603 = vmatpush1.bf16.msra.mxu0 %v3579
      %3604 = vmatprep.subr.bf16.mxu0 0
      %3605 = vmatpush1.bf16.msra.mxu0 %v3581
      %3606 = vmatprep.subr.bf16.mxu0 0
      %3607 = vmatpush1.bf16.msra.mxu0 %v3583
      %3608 = vmatprep.subr.bf16.mxu0 0
      %3609 = vmatpush1.bf16.msra.mxu0 %v3585
      %3610 = vmatprep.subr.bf16.mxu0 0
      %3611 = vmatpush1.bf16.msra.mxu0 %v3587
      %3612 = vmatprep.subr.bf16.mxu0 0
      %3613 = vmatpush1.bf16.msra.mxu0 %v3589
      %3614 = vmatprep.subr.bf16.mxu0 0
      %3615 = vmatpush1.bf16.msra.mxu0 %v3591
      %3616 = vmatprep.subr.bf16.mxu0 0
      %3617 = vmatpush1.bf16.msra.mxu0 0
      %3618 = vmatprep.subr.bf16.mxu0 0
      %3619 = vmatpush1.bf16.msra.mxu0 0
      %3620 = vmatprep.subr.bf16.mxu0 0
      %3621 = vmatpush1.bf16.msra.mxu0 0
      %3622 = vmatprep.subr.bf16.mxu0 0
      %3623 = vmatpush1.bf16.msra.mxu0 0
      %3624 = vmatprep.subr.bf16.mxu0 0
      %3625 = vmatpush1.bf16.msra.mxu0 0
      %3626 = vmatprep.subr.bf16.mxu0 0
      %3627 = vmatpush1.bf16.msra.mxu0 0
      %3628 = vmatprep.subr.bf16.mxu0 0
      %3629 = vmatpush1.bf16.msra.mxu0 0
      %3630 = vmatprep.subr.bf16.mxu0 0
      %3631 = vmatpush1.bf16.msra.mxu0 0
      %3632 = vmatprep.mubr.bf16.mxu0 0
      %3633 = vmatmul.mubr.bf16.gmra.mrb[0].mxu0 %v3568
      %v3634 = vpop.f32.mrb[0].mxu0
      %v3635 = vadd.f32 0.0, %v3634
      %v3636 = vpop.f32.mrb[0].mxu0
      %v3637 = vpop.f32.mrb[0].mxu0
      %v3638 = vadd.f32 0.0, %v3637
      %v3639 = vpop.f32.mrb[0].mxu0
      %3640 = vmatprep.mubr.bf16.mxu0 0
      %3641 = vmatmul.mubr.bf16.gmra.mrb[0].mxu0 %v3569
      %v3642 = vpop.f32.mrb[0].mxu0
      %v3643 = vadd.f32 0.0, %v3642
      %v3644 = vpop.f32.mrb[0].mxu0
      %v3645 = vpop.f32.mrb[0].mxu0
      %v3646 = vadd.f32 0.0, %v3645
      %v3647 = vpop.f32.mrb[0].mxu0
      %3648 = vmatprep.mubr.bf16.mxu0 0
      %3649 = vmatmul.mubr.bf16.gmra.mrb[0].mxu0 %v3570
      %v3650 = vpop.f32.mrb[0].mxu0
      %v3651 = vadd.f32 0.0, %v3650
      %v3652 = vpop.f32.mrb[0].mxu0
      %v3653 = vpop.f32.mrb[0].mxu0
      %v3654 = vadd.f32 0.0, %v3653
      %v3655 = vpop.f32.mrb[0].mxu0
      %3656 = vmatprep.mubr.bf16.mxu0 0
      %3657 = vmatmul.mubr.bf16.gmra.mrb[0].mxu0 %v3571
      %v3658 = vpop.f32.mrb[0].mxu0
      %v3659 = vadd.f32 0.0, %v3658
      %v3660 = vpop.f32.mrb[0].mxu0
      %v3661 = vpop.f32.mrb[0].mxu0
      %v3662 = vadd.f32 0.0, %v3661
      %v3663 = vpop.f32.mrb[0].mxu0
      %3664 = vmatprep.mubr.bf16.mxu0 0
      %3665 = vmatmul.mubr.bf16.gmra.mrb[0].mxu0 %v3572
      %v3666 = vpop.f32.mrb[0].mxu0
      %v3667 = vadd.f32 0.0, %v3666
      %v3668 = vpop.f32.mrb[0].mxu0
      %v3669 = vpop.f32.mrb[0].mxu0
      %v3670 = vadd.f32 0.0, %v3669
      %v3671 = vpop.f32.mrb[0].mxu0
      %3672 = vmatprep.mubr.bf16.mxu0 0
      %3673 = vmatmul.mubr.bf16.gmra.mrb[0].mxu0 %v3573
      %v3674 = vpop.f32.mrb[0].mxu0
      %v3675 = vadd.f32 0.0, %v3674
      %v3676 = vpop.f32.mrb[0].mxu0
      %v3677 = vpop.f32.mrb[0].mxu0
      %v3678 = vadd.f32 0.0, %v3677
      %v3679 = vpop.f32.mrb[0].mxu0
      %3680 = vmatprep.mubr.bf16.mxu0 0
      %3681 = vmatmul.mubr.bf16.gmra.mrb[0].mxu0 %v3574
      %v3682 = vpop.f32.mrb[0].mxu0
      %v3683 = vadd.f32 0.0, %v3682
      %v3684 = vpop.f32.mrb[0].mxu0
      %v3685 = vpop.f32.mrb[0].mxu0
      %v3686 = vadd.f32 0.0, %v3685
      %v3687 = vpop.f32.mrb[0].mxu0
      %3688 = vmatprep.mubr.bf16.mxu0 0
      %3689 = vmatmul.mubr.bf16.gmra.mrb[0].mxu0 %v3575
      %v3690 = vpop.f32.mrb[0].mxu0
      %v3691 = vadd.f32 0.0, %v3690
      %v3692 = vpop.f32.mrb[0].mxu0
      %v3693 = vpop.f32.mrb[0].mxu0
      %v3694 = vadd.f32 0.0, %v3693
      %v3695 = vpop.f32.mrb[0].mxu0
      %3696 = vdwg.mxu0
      %v3697 = vld [vmem:[#allocation5] sm:$0xff]
      %v3698 = vld [vmem:[#allocation5 + $0x8] sm:$0xff]
      %v3699 = vld [vmem:[#allocation5 + $0x10] sm:$0xff]
      %v3700 = vld [vmem:[#allocation5 + $0x18] sm:$0xff]
      %v3701 = vld [vmem:[#allocation5 + $0x20] sm:$0xff]
      %v3702 = vld [vmem:[#allocation5 + $0x28] sm:$0xff]
      %v3703 = vld [vmem:[#allocation5 + $0x30] sm:$0xff]
      %v3704 = vld [vmem:[#allocation5 + $0x38] sm:$0xff]
      %v3705 = vld [vmem:[#allocation5 + $0x40] sm:$0xff]
      %v3706 = vld [vmem:[#allocation5 + $0x48] sm:$0xff]
      %v3707 = vld [vmem:[#allocation5 + $0x50] sm:$0xff]
      %v3708 = vld [vmem:[#allocation5 + $0x58] sm:$0xff]
      %v3709 = vld [vmem:[#allocation5 + $0x60] sm:$0xff]
      %v3710 = vld [vmem:[#allocation5 + $0x68] sm:$0xff]
      %v3711 = vld [vmem:[#allocation5 + $0x70] sm:$0xff]
      %v3712 = vld [vmem:[#allocation5 + $0x78] sm:$0xff]
      %3714 = vset.pattern.permute.xlu0 16
      %3715 = vperm.xlu0 %3714, %v3345
      %v3716 = vpop.permute.xlu0 %3715
      %3719 = vset.pattern.permute.xlu0 16
      %3720 = vperm.xlu0 %3719, %v3347
      %v3721 = vpop.permute.xlu0 %3720
      %3724 = vset.pattern.permute.xlu0 16
      %3725 = vperm.xlu0 %3724, %v3349
      %v3726 = vpop.permute.xlu0 %3725
      %3729 = vset.pattern.permute.xlu0 16
      %3730 = vperm.xlu0 %3729, %v3351
      %v3731 = vpop.permute.xlu0 %3730
      %3734 = vset.pattern.permute.xlu0 16
      %3735 = vperm.xlu0 %3734, %v3353
      %v3736 = vpop.permute.xlu0 %3735
      %3739 = vset.pattern.permute.xlu0 16
      %3740 = vperm.xlu0 %3739, %v3355
      %v3741 = vpop.permute.xlu0 %3740
      %3744 = vset.pattern.permute.xlu0 16
      %3745 = vperm.xlu0 %3744, %v3357
      %v3746 = vpop.permute.xlu0 %3745
      %3749 = vset.pattern.permute.xlu0 16
      %3750 = vperm.xlu0 %3749, %v3359
      %v3751 = vpop.permute.xlu0 %3750
      %3754 = vset.pattern.permute.xlu0 16
      %3755 = vperm.xlu0 %3754, %v3361
      %v3756 = vpop.permute.xlu0 %3755
      %3759 = vset.pattern.permute.xlu0 16
      %3760 = vperm.xlu0 %3759, %v3363
      %v3761 = vpop.permute.xlu0 %3760
      %3764 = vset.pattern.permute.xlu0 16
      %3765 = vperm.xlu0 %3764, %v3365
      %v3766 = vpop.permute.xlu0 %3765
      %3769 = vset.pattern.permute.xlu0 16
      %3770 = vperm.xlu0 %3769, %v3367
      %v3771 = vpop.permute.xlu0 %3770
      %3774 = vset.pattern.permute.xlu0 16
      %3775 = vperm.xlu0 %3774, %v3369
      %v3776 = vpop.permute.xlu0 %3775
      %3779 = vset.pattern.permute.xlu0 16
      %3780 = vperm.xlu0 %3779, %v3371
      %v3781 = vpop.permute.xlu0 %3780
      %3784 = vset.pattern.permute.xlu0 16
      %3785 = vperm.xlu0 %3784, %v3373
      %v3786 = vpop.permute.xlu0 %3785
      %3789 = vset.pattern.permute.xlu0 16
      %3790 = vperm.xlu0 %3789, %v3375
      %v3791 = vpop.permute.xlu0 %3790
      %v3793 = vmul.f32 %v3697, %v3716
      %v3794 = vmul.f32 %v3698, %v3721
      %v3795 = vmul.f32 %v3699, %v3726
      %v3796 = vmul.f32 %v3700, %v3731
      %v3797 = vmul.f32 %v3701, %v3736
      %v3798 = vmul.f32 %v3702, %v3741
      %v3799 = vmul.f32 %v3703, %v3746
      %v3800 = vmul.f32 %v3704, %v3751
      %v3801 = vmul.f32 %v3705, %v3756
      %v3802 = vmul.f32 %v3706, %v3761
      %v3803 = vmul.f32 %v3707, %v3766
      %v3804 = vmul.f32 %v3708, %v3771
      %v3805 = vmul.f32 %v3709, %v3776
      %v3806 = vmul.f32 %v3710, %v3781
      %v3807 = vmul.f32 %v3711, %v3786
      %v3808 = vmul.f32 %v3712, %v3791
      %3825 = vrot.lane.b32.xlu0 %v3635, 16
      %v3826 = vpop.permute.xlu0 %3825
      %3827 = vrot.lane.b32.xlu0 %v3638, 16
      %v3828 = vpop.permute.xlu0 %3827
      %3829 = vrot.lane.b32.xlu0 %v3643, 16
      %v3830 = vpop.permute.xlu0 %3829
      %3831 = vrot.lane.b32.xlu0 %v3646, 16
      %v3832 = vpop.permute.xlu0 %3831
      %3833 = vrot.lane.b32.xlu0 %v3651, 16
      %v3834 = vpop.permute.xlu0 %3833
      %3835 = vrot.lane.b32.xlu0 %v3654, 16
      %v3836 = vpop.permute.xlu0 %3835
      %3837 = vrot.lane.b32.xlu0 %v3659, 16
      %v3838 = vpop.permute.xlu0 %3837
      %3839 = vrot.lane.b32.xlu0 %v3662, 16
      %v3840 = vpop.permute.xlu0 %3839
      %3841 = vrot.lane.b32.xlu0 %v3667, 16
      %v3842 = vpop.permute.xlu0 %3841
      %3843 = vrot.lane.b32.xlu0 %v3670, 16
      %v3844 = vpop.permute.xlu0 %3843
      %3845 = vrot.lane.b32.xlu0 %v3675, 16
      %v3846 = vpop.permute.xlu0 %3845
      %3847 = vrot.lane.b32.xlu0 %v3678, 16
      %v3848 = vpop.permute.xlu0 %3847
      %3849 = vrot.lane.b32.xlu0 %v3683, 16
      %v3850 = vpop.permute.xlu0 %3849
      %3851 = vrot.lane.b32.xlu0 %v3686, 16
      %v3852 = vpop.permute.xlu0 %3851
      %3853 = vrot.lane.b32.xlu0 %v3691, 16
      %v3854 = vpop.permute.xlu0 %3853
      %3855 = vrot.lane.b32.xlu0 %v3694, 16
      %v3856 = vpop.permute.xlu0 %3855
      %v3873 = vadd.f32 %v3793, %v3826
      %v3874 = vadd.f32 %v3794, %v3828
      %v3875 = vadd.f32 %v3795, %v3830
      %v3876 = vadd.f32 %v3796, %v3832
      %v3877 = vadd.f32 %v3797, %v3834
      %v3878 = vadd.f32 %v3798, %v3836
      %v3879 = vadd.f32 %v3799, %v3838
      %v3880 = vadd.f32 %v3800, %v3840
      %v3881 = vadd.f32 %v3801, %v3842
      %v3882 = vadd.f32 %v3802, %v3844
      %v3883 = vadd.f32 %v3803, %v3846
      %v3884 = vadd.f32 %v3804, %v3848
      %v3885 = vadd.f32 %v3805, %v3850
      %v3886 = vadd.f32 %v3806, %v3852
      %v3887 = vadd.f32 %v3807, %v3854
      %v3888 = vadd.f32 %v3808, %v3856
      %vm3889 = vcmask 195712
      %3890 = vst.msk [vmem:[#allocation5] sm:$0xff] %vm3889, %v3873
      %3891 = vst.msk [vmem:[#allocation5 + $0x8] sm:$0xff] %vm3889, %v3874
      %3892 = vst.msk [vmem:[#allocation5 + $0x10] sm:$0xff] %vm3889, %v3875
      %3893 = vst.msk [vmem:[#allocation5 + $0x18] sm:$0xff] %vm3889, %v3876
      %3894 = vst.msk [vmem:[#allocation5 + $0x20] sm:$0xff] %vm3889, %v3877
      %3895 = vst.msk [vmem:[#allocation5 + $0x28] sm:$0xff] %vm3889, %v3878
      %3896 = vst.msk [vmem:[#allocation5 + $0x30] sm:$0xff] %vm3889, %v3879
      %3897 = vst.msk [vmem:[#allocation5 + $0x38] sm:$0xff] %vm3889, %v3880
      %3898 = vst.msk [vmem:[#allocation5 + $0x40] sm:$0xff] %vm3889, %v3881
      %3899 = vst.msk [vmem:[#allocation5 + $0x48] sm:$0xff] %vm3889, %v3882
      %3900 = vst.msk [vmem:[#allocation5 + $0x50] sm:$0xff] %vm3889, %v3883
      %3901 = vst.msk [vmem:[#allocation5 + $0x58] sm:$0xff] %vm3889, %v3884
      %3902 = vst.msk [vmem:[#allocation5 + $0x60] sm:$0xff] %vm3889, %v3885
      %3903 = vst.msk [vmem:[#allocation5 + $0x68] sm:$0xff] %vm3889, %v3886
      %3904 = vst.msk [vmem:[#allocation5 + $0x70] sm:$0xff] %vm3889, %v3887
      %3905 = vst.msk [vmem:[#allocation5 + $0x78] sm:$0xff] %vm3889, %v3888
      %3906 = vst.msk [vmem:[#allocation3] sm:$0xff] %vm3889, %v3379
      %3907 = vst.msk [vmem:[#allocation3 + $0x8] sm:$0xff] %vm3889, %v3384
      %3908 = vst.msk [vmem:[#allocation3 + $0x10] sm:$0xff] %vm3889, %v3389
      %3909 = vst.msk [vmem:[#allocation3 + $0x18] sm:$0xff] %vm3889, %v3394
      %3910 = vst.msk [vmem:[#allocation3 + $0x20] sm:$0xff] %vm3889, %v3399
      %3911 = vst.msk [vmem:[#allocation3 + $0x28] sm:$0xff] %vm3889, %v3404
      %3912 = vst.msk [vmem:[#allocation3 + $0x30] sm:$0xff] %vm3889, %v3409
      %3913 = vst.msk [vmem:[#allocation3 + $0x38] sm:$0xff] %vm3889, %v3414
      %3914 = vst.msk [vmem:[#allocation3 + $0x40] sm:$0xff] %vm3889, %v3419
      %3915 = vst.msk [vmem:[#allocation3 + $0x48] sm:$0xff] %vm3889, %v3424
      %3916 = vst.msk [vmem:[#allocation3 + $0x50] sm:$0xff] %vm3889, %v3429
      %3917 = vst.msk [vmem:[#allocation3 + $0x58] sm:$0xff] %vm3889, %v3434
      %3918 = vst.msk [vmem:[#allocation3 + $0x60] sm:$0xff] %vm3889, %v3439
      %3919 = vst.msk [vmem:[#allocation3 + $0x68] sm:$0xff] %vm3889, %v3444
      %3920 = vst.msk [vmem:[#allocation3 + $0x70] sm:$0xff] %vm3889, %v3449
      %3921 = vst.msk [vmem:[#allocation3 + $0x78] sm:$0xff] %vm3889, %v3454
      %3923 = vset.pattern.permute.xlu0 16
      %3924 = vperm.xlu0 %3923, %v3552
      %v3925 = vpop.permute.xlu0 %3924
      %3928 = vset.pattern.permute.xlu0 16
      %3929 = vperm.xlu0 %3928, %v3553
      %v3930 = vpop.permute.xlu0 %3929
      %3933 = vset.pattern.permute.xlu0 16
      %3934 = vperm.xlu0 %3933, %v3554
      %v3935 = vpop.permute.xlu0 %3934
      %3938 = vset.pattern.permute.xlu0 16
      %3939 = vperm.xlu0 %3938, %v3555
      %v3940 = vpop.permute.xlu0 %3939
      %3943 = vset.pattern.permute.xlu0 16
      %3944 = vperm.xlu0 %3943, %v3556
      %v3945 = vpop.permute.xlu0 %3944
      %3948 = vset.pattern.permute.xlu0 16
      %3949 = vperm.xlu0 %3948, %v3557
      %v3950 = vpop.permute.xlu0 %3949
      %3953 = vset.pattern.permute.xlu0 16
      %3954 = vperm.xlu0 %3953, %v3558
      %v3955 = vpop.permute.xlu0 %3954
      %3958 = vset.pattern.permute.xlu0 16
      %3959 = vperm.xlu0 %3958, %v3559
      %v3960 = vpop.permute.xlu0 %3959
      %3963 = vset.pattern.permute.xlu0 16
      %3964 = vperm.xlu0 %3963, %v3560
      %v3965 = vpop.permute.xlu0 %3964
      %3968 = vset.pattern.permute.xlu0 16
      %3969 = vperm.xlu0 %3968, %v3561
      %v3970 = vpop.permute.xlu0 %3969
      %3973 = vset.pattern.permute.xlu0 16
      %3974 = vperm.xlu0 %3973, %v3562
      %v3975 = vpop.permute.xlu0 %3974
      %3978 = vset.pattern.permute.xlu0 16
      %3979 = vperm.xlu0 %3978, %v3563
      %v3980 = vpop.permute.xlu0 %3979
      %3983 = vset.pattern.permute.xlu0 16
      %3984 = vperm.xlu0 %3983, %v3564
      %v3985 = vpop.permute.xlu0 %3984
      %3988 = vset.pattern.permute.xlu0 16
      %3989 = vperm.xlu0 %3988, %v3565
      %v3990 = vpop.permute.xlu0 %3989
      %3993 = vset.pattern.permute.xlu0 16
      %3994 = vperm.xlu0 %3993, %v3566
      %v3995 = vpop.permute.xlu0 %3994
      %3998 = vset.pattern.permute.xlu0 16
      %3999 = vperm.xlu0 %3998, %v3567
      %v4000 = vpop.permute.xlu0 %3999
      %4002 = vst.msk [vmem:[#allocation4] sm:$0xff] %vm3889, %v3925
      %4003 = vst.msk [vmem:[#allocation4 + $0x8] sm:$0xff] %vm3889, %v3930
      %4004 = vst.msk [vmem:[#allocation4 + $0x10] sm:$0xff] %vm3889, %v3935
      %4005 = vst.msk [vmem:[#allocation4 + $0x18] sm:$0xff] %vm3889, %v3940
      %4006 = vst.msk [vmem:[#allocation4 + $0x20] sm:$0xff] %vm3889, %v3945
      %4007 = vst.msk [vmem:[#allocation4 + $0x28] sm:$0xff] %vm3889, %v3950
      %4008 = vst.msk [vmem:[#allocation4 + $0x30] sm:$0xff] %vm3889, %v3955
      %4009 = vst.msk [vmem:[#allocation4 + $0x38] sm:$0xff] %vm3889, %v3960
      %4010 = vst.msk [vmem:[#allocation4 + $0x40] sm:$0xff] %vm3889, %v3965
      %4011 = vst.msk [vmem:[#allocation4 + $0x48] sm:$0xff] %vm3889, %v3970
      %4012 = vst.msk [vmem:[#allocation4 + $0x50] sm:$0xff] %vm3889, %v3975
      %4013 = vst.msk [vmem:[#allocation4 + $0x58] sm:$0xff] %vm3889, %v3980
      %4014 = vst.msk [vmem:[#allocation4 + $0x60] sm:$0xff] %vm3889, %v3985
      %4015 = vst.msk [vmem:[#allocation4 + $0x68] sm:$0xff] %vm3889, %v3990
      %4016 = vst.msk [vmem:[#allocation4 + $0x70] sm:$0xff] %vm3889, %v3995
      %4017 = vst.msk [vmem:[#allocation4 + $0x78] sm:$0xff] %vm3889, %v4000
      %4018 = vrot.lane.b32.xlu0 %v1258, 104
      %v4019 = vpop.permute.xlu0 %4018
      %4020 = vrot.lane.b32.xlu0 %v1259, 104
      %v4021 = vpop.permute.xlu0 %4020
      %4022 = vrot.lane.b32.xlu0 %v1260, 104
      %v4023 = vpop.permute.xlu0 %4022
      %4024 = vrot.lane.b32.xlu0 %v1261, 104
      %v4025 = vpop.permute.xlu0 %4024
      %4026 = vrot.lane.b32.xlu0 %v1262, 104
      %v4027 = vpop.permute.xlu0 %4026
      %4028 = vrot.lane.b32.xlu0 %v1263, 104
      %v4029 = vpop.permute.xlu0 %4028
      %4030 = vrot.lane.b32.xlu0 %v1264, 104
      %v4031 = vpop.permute.xlu0 %4030
      %4032 = vrot.lane.b32.xlu0 %v1265, 104
      %v4033 = vpop.permute.xlu0 %4032
      %4034 = vrot.lane.b32.xlu0 %v1242, 104
      %v4035 = vpop.permute.xlu0 %4034
      %4036 = vrot.lane.b32.xlu0 %v1244, 104
      %v4037 = vpop.permute.xlu0 %4036
      %4038 = vrot.lane.b32.xlu0 %v1246, 104
      %v4039 = vpop.permute.xlu0 %4038
      %4040 = vrot.lane.b32.xlu0 %v1248, 104
      %v4041 = vpop.permute.xlu0 %4040
      %4042 = vrot.lane.b32.xlu0 %v1250, 104
      %v4043 = vpop.permute.xlu0 %4042
      %4044 = vrot.lane.b32.xlu0 %v1252, 104
      %v4045 = vpop.permute.xlu0 %4044
      %4046 = vrot.lane.b32.xlu0 %v1254, 104
      %v4047 = vpop.permute.xlu0 %4046
      %4048 = vrot.lane.b32.xlu0 %v1256, 104
      %v4049 = vpop.permute.xlu0 %4048
      %v4051 = vsel %vm1273, %v4019, 0
      %v4054 = vsel %vm1273, %v4021, 0
      %v4057 = vsel %vm1273, %v4023, 0
      %v4060 = vsel %vm1273, %v4025, 0
      %v4063 = vsel %vm1273, %v4027, 0
      %v4066 = vsel %vm1273, %v4029, 0
      %v4069 = vsel %vm1273, %v4031, 0
      %v4072 = vsel %vm1273, %v4033, 0
      %v4075 = vsel %vm1273, %v4035, 0
      %v4078 = vsel %vm1273, %v4037, 0
      %v4081 = vsel %vm1273, %v4039, 0
      %v4084 = vsel %vm1273, %v4041, 0
      %v4087 = vsel %vm1273, %v4043, 0
      %v4090 = vsel %vm1273, %v4045, 0
      %v4093 = vsel %vm1273, %v4047, 0
      %v4096 = vsel %vm1273, %v4049, 0
      %4098 = vmatprep.subr.bf16.mxu0 0
      %4099 = vmatpush1.bf16.xpose.msra.mxu0 %v4075
      %4100 = vmatprep.subr.bf16.mxu0 0
      %4101 = vmatpush1.bf16.xpose.msra.mxu0 %v4078
      %4102 = vmatprep.subr.bf16.mxu0 0
      %4103 = vmatpush1.bf16.xpose.msra.mxu0 %v4081
      %4104 = vmatprep.subr.bf16.mxu0 0
      %4105 = vmatpush1.bf16.xpose.msra.mxu0 %v4084
      %4106 = vmatprep.subr.bf16.mxu0 0
      %4107 = vmatpush1.bf16.xpose.msra.mxu0 %v4087
      %4108 = vmatprep.subr.bf16.mxu0 0
      %4109 = vmatpush1.bf16.xpose.msra.mxu0 %v4090
      %4110 = vmatprep.subr.bf16.mxu0 0
      %4111 = vmatpush1.bf16.xpose.msra.mxu0 %v4093
      %4112 = vmatprep.subr.bf16.mxu0 0
      %4113 = vmatpush1.bf16.xpose.msra.mxu0 %v4096
      %4114 = vmatprep.subr.bf16.mxu0 0
      %4115 = vmatpush1.bf16.xpose.msra.mxu0 0
      %4116 = vmatprep.subr.bf16.mxu0 0
      %4117 = vmatpush1.bf16.xpose.msra.mxu0 0
      %4118 = vmatprep.subr.bf16.mxu0 0
      %4119 = vmatpush1.bf16.xpose.msra.mxu0 0
      %4120 = vmatprep.subr.bf16.mxu0 0
      %4121 = vmatpush1.bf16.xpose.msra.mxu0 0
      %4122 = vmatprep.subr.bf16.mxu0 0
      %4123 = vmatpush1.bf16.xpose.msra.mxu0 0
      %4124 = vmatprep.subr.bf16.mxu0 0
      %4125 = vmatpush1.bf16.xpose.msra.mxu0 0
      %4126 = vmatprep.subr.bf16.mxu0 0
      %4127 = vmatpush1.bf16.xpose.msra.mxu0 0
      %4128 = vmatprep.subr.bf16.mxu0 0
      %4129 = vmatpush1.bf16.xpose.msra.mxu0 0
      %4130 = vmatprep.mubr.bf16.mxu0 0
      %4131 = vmatmul.mubr.bf16.gmra.mrb[0].mxu0 %v4051
      %v4132 = vpop.f32.mrb[0].mxu0
      %v4133 = vadd.f32 %v1271, %v4132
      %v4134 = vpop.f32.mrb[0].mxu0
      %v4135 = vpop.f32.mrb[0].mxu0
      %v4136 = vadd.f32 %v1271, %v4135
      %v4137 = vpop.f32.mrb[0].mxu0
      %4138 = vmatprep.mubr.bf16.mxu0 0
      %4139 = vmatmul.mubr.bf16.gmra.mrb[0].mxu0 %v4054
      %v4140 = vpop.f32.mrb[0].mxu0
      %v4141 = vadd.f32 %v1271, %v4140
      %v4142 = vpop.f32.mrb[0].mxu0
      %v4143 = vpop.f32.mrb[0].mxu0
      %v4144 = vadd.f32 %v1271, %v4143
      %v4145 = vpop.f32.mrb[0].mxu0
      %4146 = vmatprep.mubr.bf16.mxu0 0
      %4147 = vmatmul.mubr.bf16.gmra.mrb[0].mxu0 %v4057
      %v4148 = vpop.f32.mrb[0].mxu0
      %v4149 = vadd.f32 %v1271, %v4148
      %v4150 = vpop.f32.mrb[0].mxu0
      %v4151 = vpop.f32.mrb[0].mxu0
      %v4152 = vadd.f32 %v1271, %v4151
      %v4153 = vpop.f32.mrb[0].mxu0
      %4154 = vmatprep.mubr.bf16.mxu0 0
      %4155 = vmatmul.mubr.bf16.gmra.mrb[0].mxu0 %v4060
      %v4156 = vpop.f32.mrb[0].mxu0
      %v4157 = vadd.f32 %v1271, %v4156
      %v4158 = vpop.f32.mrb[0].mxu0
      %v4159 = vpop.f32.mrb[0].mxu0
      %v4160 = vadd.f32 %v1271, %v4159
      %v4161 = vpop.f32.mrb[0].mxu0
      %4162 = vmatprep.mubr.bf16.mxu0 0
      %4163 = vmatmul.mubr.bf16.gmra.mrb[0].mxu0 %v4063
      %v4164 = vpop.f32.mrb[0].mxu0
      %v4165 = vadd.f32 %v1271, %v4164
      %v4166 = vpop.f32.mrb[0].mxu0
      %v4167 = vpop.f32.mrb[0].mxu0
      %v4168 = vadd.f32 %v1271, %v4167
      %v4169 = vpop.f32.mrb[0].mxu0
      %4170 = vmatprep.mubr.bf16.mxu0 0
      %4171 = vmatmul.mubr.bf16.gmra.mrb[0].mxu0 %v4066
      %v4172 = vpop.f32.mrb[0].mxu0
      %v4173 = vadd.f32 %v1271, %v4172
      %v4174 = vpop.f32.mrb[0].mxu0
      %v4175 = vpop.f32.mrb[0].mxu0
      %v4176 = vadd.f32 %v1271, %v4175
      %v4177 = vpop.f32.mrb[0].mxu0
      %4178 = vmatprep.mubr.bf16.mxu0 0
      %4179 = vmatmul.mubr.bf16.gmra.mrb[0].mxu0 %v4069
      %v4180 = vpop.f32.mrb[0].mxu0
      %v4181 = vadd.f32 %v1271, %v4180
      %v4182 = vpop.f32.mrb[0].mxu0
      %v4183 = vpop.f32.mrb[0].mxu0
      %v4184 = vadd.f32 %v1271, %v4183
      %v4185 = vpop.f32.mrb[0].mxu0
      %4186 = vmatprep.mubr.bf16.mxu0 0
      %4187 = vmatmul.mubr.bf16.gmra.mrb[0].mxu0 %v4072
      %v4188 = vpop.f32.mrb[0].mxu0
      %v4189 = vadd.f32 %v1271, %v4188
      %v4190 = vpop.f32.mrb[0].mxu0
      %v4191 = vpop.f32.mrb[0].mxu0
      %v4192 = vadd.f32 %v1271, %v4191
      %v4193 = vpop.f32.mrb[0].mxu0
      %4194 = vdwg.mxu0
      %v4195 = vld [vmem:[#allocation3] sm:$0xff]
      %v4196 = vld [vmem:[#allocation3 + $0x8] sm:$0xff]
      %v4197 = vld [vmem:[#allocation3 + $0x10] sm:$0xff]
      %v4198 = vld [vmem:[#allocation3 + $0x18] sm:$0xff]
      %v4199 = vld [vmem:[#allocation3 + $0x20] sm:$0xff]
      %v4200 = vld [vmem:[#allocation3 + $0x28] sm:$0xff]
      %v4201 = vld [vmem:[#allocation3 + $0x30] sm:$0xff]
      %v4202 = vld [vmem:[#allocation3 + $0x38] sm:$0xff]
      %v4203 = vld [vmem:[#allocation3 + $0x40] sm:$0xff]
      %v4204 = vld [vmem:[#allocation3 + $0x48] sm:$0xff]
      %v4205 = vld [vmem:[#allocation3 + $0x50] sm:$0xff]
      %v4206 = vld [vmem:[#allocation3 + $0x58] sm:$0xff]
      %v4207 = vld [vmem:[#allocation3 + $0x60] sm:$0xff]
      %v4208 = vld [vmem:[#allocation3 + $0x68] sm:$0xff]
      %v4209 = vld [vmem:[#allocation3 + $0x70] sm:$0xff]
      %v4210 = vld [vmem:[#allocation3 + $0x78] sm:$0xff]
      %v4211 = vld [vmem:[#allocation4] sm:$0xff]
      %v4212 = vld [vmem:[#allocation4 + $0x8] sm:$0xff]
      %v4213 = vld [vmem:[#allocation4 + $0x10] sm:$0xff]
      %v4214 = vld [vmem:[#allocation4 + $0x18] sm:$0xff]
      %v4215 = vld [vmem:[#allocation4 + $0x20] sm:$0xff]
      %v4216 = vld [vmem:[#allocation4 + $0x28] sm:$0xff]
      %v4217 = vld [vmem:[#allocation4 + $0x30] sm:$0xff]
      %v4218 = vld [vmem:[#allocation4 + $0x38] sm:$0xff]
      %v4219 = vld [vmem:[#allocation4 + $0x40] sm:$0xff]
      %v4220 = vld [vmem:[#allocation4 + $0x48] sm:$0xff]
      %v4221 = vld [vmem:[#allocation4 + $0x50] sm:$0xff]
      %v4222 = vld [vmem:[#allocation4 + $0x58] sm:$0xff]
      %v4223 = vld [vmem:[#allocation4 + $0x60] sm:$0xff]
      %v4224 = vld [vmem:[#allocation4 + $0x68] sm:$0xff]
      %v4225 = vld [vmem:[#allocation4 + $0x70] sm:$0xff]
      %v4226 = vld [vmem:[#allocation4 + $0x78] sm:$0xff]
      %4227 = vmax.xlane.f32.xlu0 %v4133
      %v4228 = vpop.xlane.xlu0 %4227
      %4229 = vmax.xlane.f32.xlu0 %v4136
      %v4230 = vpop.xlane.xlu0 %4229
      %4231 = vmax.xlane.f32.xlu0 %v4141
      %v4232 = vpop.xlane.xlu0 %4231
      %4233 = vmax.xlane.f32.xlu0 %v4144
      %v4234 = vpop.xlane.xlu0 %4233
      %4235 = vmax.xlane.f32.xlu0 %v4149
      %v4236 = vpop.xlane.xlu0 %4235
      %4237 = vmax.xlane.f32.xlu0 %v4152
      %v4238 = vpop.xlane.xlu0 %4237
      %4239 = vmax.xlane.f32.xlu0 %v4157
      %v4240 = vpop.xlane.xlu0 %4239
      %4241 = vmax.xlane.f32.xlu0 %v4160
      %v4242 = vpop.xlane.xlu0 %4241
      %4243 = vmax.xlane.f32.xlu0 %v4165
      %v4244 = vpop.xlane.xlu0 %4243
      %4245 = vmax.xlane.f32.xlu0 %v4168
      %v4246 = vpop.xlane.xlu0 %4245
      %4247 = vmax.xlane.f32.xlu0 %v4173
      %v4248 = vpop.xlane.xlu0 %4247
      %4249 = vmax.xlane.f32.xlu0 %v4176
      %v4250 = vpop.xlane.xlu0 %4249
      %4251 = vmax.xlane.f32.xlu0 %v4181
      %v4252 = vpop.xlane.xlu0 %4251
      %4253 = vmax.xlane.f32.xlu0 %v4184
      %v4254 = vpop.xlane.xlu0 %4253
      %4255 = vmax.xlane.f32.xlu0 %v4189
      %v4256 = vpop.xlane.xlu0 %4255
      %4257 = vmax.xlane.f32.xlu0 %v4192
      %v4258 = vpop.xlane.xlu0 %4257
      %v4259 = vmax.f32 %v4195, %v4228
      %v4260 = vmax.f32 %v4196, %v4230
      %v4261 = vmax.f32 %v4197, %v4232
      %v4262 = vmax.f32 %v4198, %v4234
      %v4263 = vmax.f32 %v4199, %v4236
      %v4264 = vmax.f32 %v4200, %v4238
      %v4265 = vmax.f32 %v4201, %v4240
      %v4266 = vmax.f32 %v4202, %v4242
      %v4267 = vmax.f32 %v4203, %v4244
      %v4268 = vmax.f32 %v4204, %v4246
      %v4269 = vmax.f32 %v4205, %v4248
      %v4270 = vmax.f32 %v4206, %v4250
      %v4271 = vmax.f32 %v4207, %v4252
      %v4272 = vmax.f32 %v4208, %v4254
      %v4273 = vmax.f32 %v4209, %v4256
      %v4274 = vmax.f32 %v4210, %v4258
      %v4275 = vsub.f32 %v4195, %v4259
      %v4276 = vsub.f32 %v4196, %v4260
      %v4277 = vsub.f32 %v4197, %v4261
      %v4278 = vsub.f32 %v4198, %v4262
      %v4279 = vsub.f32 %v4199, %v4263
      %v4280 = vsub.f32 %v4200, %v4264
      %v4281 = vsub.f32 %v4201, %v4265
      %v4282 = vsub.f32 %v4202, %v4266
      %v4283 = vsub.f32 %v4203, %v4267
      %v4284 = vsub.f32 %v4204, %v4268
      %v4285 = vsub.f32 %v4205, %v4269
      %v4286 = vsub.f32 %v4206, %v4270
      %v4287 = vsub.f32 %v4207, %v4271
      %v4288 = vsub.f32 %v4208, %v4272
      %v4289 = vsub.f32 %v4209, %v4273
      %v4290 = vsub.f32 %v4210, %v4274
      %v4291 = vmul.f32 %v4275, 1.442695
      %v4292 = vpow.pop %v4291
      %v4293 = vmul.f32 %v4276, 1.442695
      %v4294 = vpow.pop %v4293
      %v4295 = vmul.f32 %v4277, 1.442695
      %v4296 = vpow.pop %v4295
      %v4297 = vmul.f32 %v4278, 1.442695
      %v4298 = vpow.pop %v4297
      %v4299 = vmul.f32 %v4279, 1.442695
      %v4300 = vpow.pop %v4299
      %v4301 = vmul.f32 %v4280, 1.442695
      %v4302 = vpow.pop %v4301
      %v4303 = vmul.f32 %v4281, 1.442695
      %v4304 = vpow.pop %v4303
      %v4305 = vmul.f32 %v4282, 1.442695
      %v4306 = vpow.pop %v4305
      %v4307 = vmul.f32 %v4283, 1.442695
      %v4308 = vpow.pop %v4307
      %v4309 = vmul.f32 %v4284, 1.442695
      %v4310 = vpow.pop %v4309
      %v4311 = vmul.f32 %v4285, 1.442695
      %v4312 = vpow.pop %v4311
      %v4313 = vmul.f32 %v4286, 1.442695
      %v4314 = vpow.pop %v4313
      %v4315 = vmul.f32 %v4287, 1.442695
      %v4316 = vpow.pop %v4315
      %v4317 = vmul.f32 %v4288, 1.442695
      %v4318 = vpow.pop %v4317
      %v4319 = vmul.f32 %v4289, 1.442695
      %v4320 = vpow.pop %v4319
      %v4321 = vmul.f32 %v4290, 1.442695
      %v4322 = vpow.pop %v4321
      %4324 = vset.pattern.permute.xlu0 24
      %4325 = vperm.xlu0 %4324, %v4259
      %v4326 = vpop.permute.xlu0 %4325
      %4329 = vset.pattern.permute.xlu0 24
      %4330 = vperm.xlu0 %4329, %v4260
      %v4331 = vpop.permute.xlu0 %4330
      %4334 = vset.pattern.permute.xlu0 24
      %4335 = vperm.xlu0 %4334, %v4261
      %v4336 = vpop.permute.xlu0 %4335
      %4339 = vset.pattern.permute.xlu0 24
      %4340 = vperm.xlu0 %4339, %v4262
      %v4341 = vpop.permute.xlu0 %4340
      %4344 = vset.pattern.permute.xlu0 24
      %4345 = vperm.xlu0 %4344, %v4263
      %v4346 = vpop.permute.xlu0 %4345
      %4349 = vset.pattern.permute.xlu0 24
      %4350 = vperm.xlu0 %4349, %v4264
      %v4351 = vpop.permute.xlu0 %4350
      %4354 = vset.pattern.permute.xlu0 24
      %4355 = vperm.xlu0 %4354, %v4265
      %v4356 = vpop.permute.xlu0 %4355
      %4359 = vset.pattern.permute.xlu0 24
      %4360 = vperm.xlu0 %4359, %v4266
      %v4361 = vpop.permute.xlu0 %4360
      %4364 = vset.pattern.permute.xlu0 24
      %4365 = vperm.xlu0 %4364, %v4267
      %v4366 = vpop.permute.xlu0 %4365
      %4369 = vset.pattern.permute.xlu0 24
      %4370 = vperm.xlu0 %4369, %v4268
      %v4371 = vpop.permute.xlu0 %4370
      %4374 = vset.pattern.permute.xlu0 24
      %4375 = vperm.xlu0 %4374, %v4269
      %v4376 = vpop.permute.xlu0 %4375
      %4379 = vset.pattern.permute.xlu0 24
      %4380 = vperm.xlu0 %4379, %v4270
      %v4381 = vpop.permute.xlu0 %4380
      %4384 = vset.pattern.permute.xlu0 24
      %4385 = vperm.xlu0 %4384, %v4271
      %v4386 = vpop.permute.xlu0 %4385
      %4389 = vset.pattern.permute.xlu0 24
      %4390 = vperm.xlu0 %4389, %v4272
      %v4391 = vpop.permute.xlu0 %4390
      %4394 = vset.pattern.permute.xlu0 24
      %4395 = vperm.xlu0 %4394, %v4273
      %v4396 = vpop.permute.xlu0 %4395
      %4399 = vset.pattern.permute.xlu0 24
      %4400 = vperm.xlu0 %4399, %v4274
      %v4401 = vpop.permute.xlu0 %4400
      %v4403 = vsub.f32 %v4133, %v4326
      %v4404 = vsub.f32 %v4136, %v4331
      %v4405 = vsub.f32 %v4141, %v4336
      %v4406 = vsub.f32 %v4144, %v4341
      %v4407 = vsub.f32 %v4149, %v4346
      %v4408 = vsub.f32 %v4152, %v4351
      %v4409 = vsub.f32 %v4157, %v4356
      %v4410 = vsub.f32 %v4160, %v4361
      %v4411 = vsub.f32 %v4165, %v4366
      %v4412 = vsub.f32 %v4168, %v4371
      %v4413 = vsub.f32 %v4173, %v4376
      %v4414 = vsub.f32 %v4176, %v4381
      %v4415 = vsub.f32 %v4181, %v4386
      %v4416 = vsub.f32 %v4184, %v4391
      %v4417 = vsub.f32 %v4189, %v4396
      %v4418 = vsub.f32 %v4192, %v4401
      %v4419 = vmul.f32 %v4403, 1.442695
      %v4420 = vpow.pop %v4419
      %v4421 = vmul.f32 %v4404, 1.442695
      %v4422 = vpow.pop %v4421
      %v4423 = vmul.f32 %v4405, 1.442695
      %v4424 = vpow.pop %v4423
      %v4425 = vmul.f32 %v4406, 1.442695
      %v4426 = vpow.pop %v4425
      %v4427 = vmul.f32 %v4407, 1.442695
      %v4428 = vpow.pop %v4427
      %v4429 = vmul.f32 %v4408, 1.442695
      %v4430 = vpow.pop %v4429
      %v4431 = vmul.f32 %v4409, 1.442695
      %v4432 = vpow.pop %v4431
      %v4433 = vmul.f32 %v4410, 1.442695
      %v4434 = vpow.pop %v4433
      %v4435 = vmul.f32 %v4411, 1.442695
      %v4436 = vpow.pop %v4435
      %v4437 = vmul.f32 %v4412, 1.442695
      %v4438 = vpow.pop %v4437
      %v4439 = vmul.f32 %v4413, 1.442695
      %v4440 = vpow.pop %v4439
      %v4441 = vmul.f32 %v4414, 1.442695
      %v4442 = vpow.pop %v4441
      %v4443 = vmul.f32 %v4415, 1.442695
      %v4444 = vpow.pop %v4443
      %v4445 = vmul.f32 %v4416, 1.442695
      %v4446 = vpow.pop %v4445
      %v4447 = vmul.f32 %v4417, 1.442695
      %v4448 = vpow.pop %v4447
      %v4449 = vmul.f32 %v4418, 1.442695
      %v4450 = vpow.pop %v4449
      %v4451 = vmul.f32 %v4292, %v4211
      %v4452 = vmul.f32 %v4294, %v4212
      %v4453 = vmul.f32 %v4296, %v4213
      %v4454 = vmul.f32 %v4298, %v4214
      %v4455 = vmul.f32 %v4300, %v4215
      %v4456 = vmul.f32 %v4302, %v4216
      %v4457 = vmul.f32 %v4304, %v4217
      %v4458 = vmul.f32 %v4306, %v4218
      %v4459 = vmul.f32 %v4308, %v4219
      %v4460 = vmul.f32 %v4310, %v4220
      %v4461 = vmul.f32 %v4312, %v4221
      %v4462 = vmul.f32 %v4314, %v4222
      %v4463 = vmul.f32 %v4316, %v4223
      %v4464 = vmul.f32 %v4318, %v4224
      %v4465 = vmul.f32 %v4320, %v4225
      %v4466 = vmul.f32 %v4322, %v4226
      %4467 = vadd.xlane.f32.xlu0 %v4420
      %v4468 = vpop.xlane.xlu0 %4467
      %4469 = vadd.xlane.f32.xlu0 %v4422
      %v4470 = vpop.xlane.xlu0 %4469
      %4471 = vadd.xlane.f32.xlu0 %v4424
      %v4472 = vpop.xlane.xlu0 %4471
      %4473 = vadd.xlane.f32.xlu0 %v4426
      %v4474 = vpop.xlane.xlu0 %4473
      %4475 = vadd.xlane.f32.xlu0 %v4428
      %v4476 = vpop.xlane.xlu0 %4475
      %4477 = vadd.xlane.f32.xlu0 %v4430
      %v4478 = vpop.xlane.xlu0 %4477
      %4479 = vadd.xlane.f32.xlu0 %v4432
      %v4480 = vpop.xlane.xlu0 %4479
      %4481 = vadd.xlane.f32.xlu0 %v4434
      %v4482 = vpop.xlane.xlu0 %4481
      %4483 = vadd.xlane.f32.xlu0 %v4436
      %v4484 = vpop.xlane.xlu0 %4483
      %4485 = vadd.xlane.f32.xlu0 %v4438
      %v4486 = vpop.xlane.xlu0 %4485
      %4487 = vadd.xlane.f32.xlu0 %v4440
      %v4488 = vpop.xlane.xlu0 %4487
      %4489 = vadd.xlane.f32.xlu0 %v4442
      %v4490 = vpop.xlane.xlu0 %4489
      %4491 = vadd.xlane.f32.xlu0 %v4444
      %v4492 = vpop.xlane.xlu0 %4491
      %4493 = vadd.xlane.f32.xlu0 %v4446
      %v4494 = vpop.xlane.xlu0 %4493
      %4495 = vadd.xlane.f32.xlu0 %v4448
      %v4496 = vpop.xlane.xlu0 %4495
      %4497 = vadd.xlane.f32.xlu0 %v4450
      %v4498 = vpop.xlane.xlu0 %4497
      %v4499 = vadd.f32 %v4451, %v4468
      %v4500 = vadd.f32 %v4452, %v4470
      %v4501 = vadd.f32 %v4453, %v4472
      %v4502 = vadd.f32 %v4454, %v4474
      %v4503 = vadd.f32 %v4455, %v4476
      %v4504 = vadd.f32 %v4456, %v4478
      %v4505 = vadd.f32 %v4457, %v4480
      %v4506 = vadd.f32 %v4458, %v4482
      %v4507 = vadd.f32 %v4459, %v4484
      %v4508 = vadd.f32 %v4460, %v4486
      %v4509 = vadd.f32 %v4461, %v4488
      %v4510 = vadd.f32 %v4462, %v4490
      %v4511 = vadd.f32 %v4463, %v4492
      %v4512 = vadd.f32 %v4464, %v4494
      %v4513 = vadd.f32 %v4465, %v4496
      %v4514 = vadd.f32 %v4466, %v4498
      %v4515 = vpack.c.bf16 %v4422, %v4420
      %v4516 = vpack.c.bf16 %v4426, %v4424
      %v4517 = vpack.c.bf16 %v4430, %v4428
      %v4518 = vpack.c.bf16 %v4434, %v4432
      %v4519 = vpack.c.bf16 %v4438, %v4436
      %v4520 = vpack.c.bf16 %v4442, %v4440
      %v4521 = vpack.c.bf16 %v4446, %v4444
      %v4522 = vpack.c.bf16 %v4450, %v4448
      %4523 = vrot.lane.b32.xlu0 %v1243, 104
      %v4524 = vpop.permute.xlu0 %4523
      %4525 = vrot.lane.b32.xlu0 %v1245, 104
      %v4526 = vpop.permute.xlu0 %4525
      %4527 = vrot.lane.b32.xlu0 %v1247, 104
      %v4528 = vpop.permute.xlu0 %4527
      %4529 = vrot.lane.b32.xlu0 %v1249, 104
      %v4530 = vpop.permute.xlu0 %4529
      %4531 = vrot.lane.b32.xlu0 %v1251, 104
      %v4532 = vpop.permute.xlu0 %4531
      %4533 = vrot.lane.b32.xlu0 %v1253, 104
      %v4534 = vpop.permute.xlu0 %4533
      %4535 = vrot.lane.b32.xlu0 %v1255, 104
      %v4536 = vpop.permute.xlu0 %4535
      %4537 = vrot.lane.b32.xlu0 %v1257, 104
      %v4538 = vpop.permute.xlu0 %4537
      %4547 = vmatprep.subr.bf16.mxu0 0
      %4548 = vmatpush1.bf16.msra.mxu0 %v4524
      %4549 = vmatprep.subr.bf16.mxu0 0
      %4550 = vmatpush1.bf16.msra.mxu0 %v4526
      %4551 = vmatprep.subr.bf16.mxu0 0
      %4552 = vmatpush1.bf16.msra.mxu0 %v4528
      %4553 = vmatprep.subr.bf16.mxu0 0
      %4554 = vmatpush1.bf16.msra.mxu0 %v4530
      %4555 = vmatprep.subr.bf16.mxu0 0
      %4556 = vmatpush1.bf16.msra.mxu0 %v4532
      %4557 = vmatprep.subr.bf16.mxu0 0
      %4558 = vmatpush1.bf16.msra.mxu0 %v4534
      %4559 = vmatprep.subr.bf16.mxu0 0
      %4560 = vmatpush1.bf16.msra.mxu0 %v4536
      %4561 = vmatprep.subr.bf16.mxu0 0
      %4562 = vmatpush1.bf16.msra.mxu0 %v4538
      %4563 = vmatprep.subr.bf16.mxu0 0
      %4564 = vmatpush1.bf16.msra.mxu0 0
      %4565 = vmatprep.subr.bf16.mxu0 0
      %4566 = vmatpush1.bf16.msra.mxu0 0
      %4567 = vmatprep.subr.bf16.mxu0 0
      %4568 = vmatpush1.bf16.msra.mxu0 0
      %4569 = vmatprep.subr.bf16.mxu0 0
      %4570 = vmatpush1.bf16.msra.mxu0 0
      %4571 = vmatprep.subr.bf16.mxu0 0
      %4572 = vmatpush1.bf16.msra.mxu0 0
      %4573 = vmatprep.subr.bf16.mxu0 0
      %4574 = vmatpush1.bf16.msra.mxu0 0
      %4575 = vmatprep.subr.bf16.mxu0 0
      %4576 = vmatpush1.bf16.msra.mxu0 0
      %4577 = vmatprep.subr.bf16.mxu0 0
      %4578 = vmatpush1.bf16.msra.mxu0 0
      %4579 = vmatprep.mubr.bf16.mxu0 0
      %4580 = vmatmul.mubr.bf16.gmra.mrb[0].mxu0 %v4515
      %v4581 = vpop.f32.mrb[0].mxu0
      %v4582 = vadd.f32 0.0, %v4581
      %v4583 = vpop.f32.mrb[0].mxu0
      %v4584 = vpop.f32.mrb[0].mxu0
      %v4585 = vadd.f32 0.0, %v4584
      %v4586 = vpop.f32.mrb[0].mxu0
      %4587 = vmatprep.mubr.bf16.mxu0 0
      %4588 = vmatmul.mubr.bf16.gmra.mrb[0].mxu0 %v4516
      %v4589 = vpop.f32.mrb[0].mxu0
      %v4590 = vadd.f32 0.0, %v4589
      %v4591 = vpop.f32.mrb[0].mxu0
      %v4592 = vpop.f32.mrb[0].mxu0
      %v4593 = vadd.f32 0.0, %v4592
      %v4594 = vpop.f32.mrb[0].mxu0
      %4595 = vmatprep.mubr.bf16.mxu0 0
      %4596 = vmatmul.mubr.bf16.gmra.mrb[0].mxu0 %v4517
      %v4597 = vpop.f32.mrb[0].mxu0
      %v4598 = vadd.f32 0.0, %v4597
      %v4599 = vpop.f32.mrb[0].mxu0
      %v4600 = vpop.f32.mrb[0].mxu0
      %v4601 = vadd.f32 0.0, %v4600
      %v4602 = vpop.f32.mrb[0].mxu0
      %4603 = vmatprep.mubr.bf16.mxu0 0
      %4604 = vmatmul.mubr.bf16.gmra.mrb[0].mxu0 %v4518
      %v4605 = vpop.f32.mrb[0].mxu0
      %v4606 = vadd.f32 0.0, %v4605
      %v4607 = vpop.f32.mrb[0].mxu0
      %v4608 = vpop.f32.mrb[0].mxu0
      %v4609 = vadd.f32 0.0, %v4608
      %v4610 = vpop.f32.mrb[0].mxu0
      %4611 = vmatprep.mubr.bf16.mxu0 0
      %4612 = vmatmul.mubr.bf16.gmra.mrb[0].mxu0 %v4519
      %v4613 = vpop.f32.mrb[0].mxu0
      %v4614 = vadd.f32 0.0, %v4613
      %v4615 = vpop.f32.mrb[0].mxu0
      %v4616 = vpop.f32.mrb[0].mxu0
      %v4617 = vadd.f32 0.0, %v4616
      %v4618 = vpop.f32.mrb[0].mxu0
      %4619 = vmatprep.mubr.bf16.mxu0 0
      %4620 = vmatmul.mubr.bf16.gmra.mrb[0].mxu0 %v4520
      %v4621 = vpop.f32.mrb[0].mxu0
      %v4622 = vadd.f32 0.0, %v4621
      %v4623 = vpop.f32.mrb[0].mxu0
      %v4624 = vpop.f32.mrb[0].mxu0
      %v4625 = vadd.f32 0.0, %v4624
      %v4626 = vpop.f32.mrb[0].mxu0
      %4627 = vmatprep.mubr.bf16.mxu0 0
      %4628 = vmatmul.mubr.bf16.gmra.mrb[0].mxu0 %v4521
      %v4629 = vpop.f32.mrb[0].mxu0
      %v4630 = vadd.f32 0.0, %v4629
      %v4631 = vpop.f32.mrb[0].mxu0
      %v4632 = vpop.f32.mrb[0].mxu0
      %v4633 = vadd.f32 0.0, %v4632
      %v4634 = vpop.f32.mrb[0].mxu0
      %4635 = vmatprep.mubr.bf16.mxu0 0
      %4636 = vmatmul.mubr.bf16.gmra.mrb[0].mxu0 %v4522
      %v4637 = vpop.f32.mrb[0].mxu0
      %v4638 = vadd.f32 0.0, %v4637
      %v4639 = vpop.f32.mrb[0].mxu0
      %v4640 = vpop.f32.mrb[0].mxu0
      %v4641 = vadd.f32 0.0, %v4640
      %v4642 = vpop.f32.mrb[0].mxu0
      %4643 = vdwg.mxu0
      %v4644 = vld [vmem:[#allocation5] sm:$0xff]
      %v4645 = vld [vmem:[#allocation5 + $0x8] sm:$0xff]
      %v4646 = vld [vmem:[#allocation5 + $0x10] sm:$0xff]
      %v4647 = vld [vmem:[#allocation5 + $0x18] sm:$0xff]
      %v4648 = vld [vmem:[#allocation5 + $0x20] sm:$0xff]
      %v4649 = vld [vmem:[#allocation5 + $0x28] sm:$0xff]
      %v4650 = vld [vmem:[#allocation5 + $0x30] sm:$0xff]
      %v4651 = vld [vmem:[#allocation5 + $0x38] sm:$0xff]
      %v4652 = vld [vmem:[#allocation5 + $0x40] sm:$0xff]
      %v4653 = vld [vmem:[#allocation5 + $0x48] sm:$0xff]
      %v4654 = vld [vmem:[#allocation5 + $0x50] sm:$0xff]
      %v4655 = vld [vmem:[#allocation5 + $0x58] sm:$0xff]
      %v4656 = vld [vmem:[#allocation5 + $0x60] sm:$0xff]
      %v4657 = vld [vmem:[#allocation5 + $0x68] sm:$0xff]
      %v4658 = vld [vmem:[#allocation5 + $0x70] sm:$0xff]
      %v4659 = vld [vmem:[#allocation5 + $0x78] sm:$0xff]
      %4661 = vset.pattern.permute.xlu0 24
      %4662 = vperm.xlu0 %4661, %v4292
      %v4663 = vpop.permute.xlu0 %4662
      %4666 = vset.pattern.permute.xlu0 24
      %4667 = vperm.xlu0 %4666, %v4294
      %v4668 = vpop.permute.xlu0 %4667
      %4671 = vset.pattern.permute.xlu0 24
      %4672 = vperm.xlu0 %4671, %v4296
      %v4673 = vpop.permute.xlu0 %4672
      %4676 = vset.pattern.permute.xlu0 24
      %4677 = vperm.xlu0 %4676, %v4298
      %v4678 = vpop.permute.xlu0 %4677
      %4681 = vset.pattern.permute.xlu0 24
      %4682 = vperm.xlu0 %4681, %v4300
      %v4683 = vpop.permute.xlu0 %4682
      %4686 = vset.pattern.permute.xlu0 24
      %4687 = vperm.xlu0 %4686, %v4302
      %v4688 = vpop.permute.xlu0 %4687
      %4691 = vset.pattern.permute.xlu0 24
      %4692 = vperm.xlu0 %4691, %v4304
      %v4693 = vpop.permute.xlu0 %4692
      %4696 = vset.pattern.permute.xlu0 24
      %4697 = vperm.xlu0 %4696, %v4306
      %v4698 = vpop.permute.xlu0 %4697
      %4701 = vset.pattern.permute.xlu0 24
      %4702 = vperm.xlu0 %4701, %v4308
      %v4703 = vpop.permute.xlu0 %4702
      %4706 = vset.pattern.permute.xlu0 24
      %4707 = vperm.xlu0 %4706, %v4310
      %v4708 = vpop.permute.xlu0 %4707
      %4711 = vset.pattern.permute.xlu0 24
      %4712 = vperm.xlu0 %4711, %v4312
      %v4713 = vpop.permute.xlu0 %4712
      %4716 = vset.pattern.permute.xlu0 24
      %4717 = vperm.xlu0 %4716, %v4314
      %v4718 = vpop.permute.xlu0 %4717
      %4721 = vset.pattern.permute.xlu0 24
      %4722 = vperm.xlu0 %4721, %v4316
      %v4723 = vpop.permute.xlu0 %4722
      %4726 = vset.pattern.permute.xlu0 24
      %4727 = vperm.xlu0 %4726, %v4318
      %v4728 = vpop.permute.xlu0 %4727
      %4731 = vset.pattern.permute.xlu0 24
      %4732 = vperm.xlu0 %4731, %v4320
      %v4733 = vpop.permute.xlu0 %4732
      %4736 = vset.pattern.permute.xlu0 24
      %4737 = vperm.xlu0 %4736, %v4322
      %v4738 = vpop.permute.xlu0 %4737
      %v4740 = vmul.f32 %v4644, %v4663
      %v4741 = vmul.f32 %v4645, %v4668
      %v4742 = vmul.f32 %v4646, %v4673
      %v4743 = vmul.f32 %v4647, %v4678
      %v4744 = vmul.f32 %v4648, %v4683
      %v4745 = vmul.f32 %v4649, %v4688
      %v4746 = vmul.f32 %v4650, %v4693
      %v4747 = vmul.f32 %v4651, %v4698
      %v4748 = vmul.f32 %v4652, %v4703
      %v4749 = vmul.f32 %v4653, %v4708
      %v4750 = vmul.f32 %v4654, %v4713
      %v4751 = vmul.f32 %v4655, %v4718
      %v4752 = vmul.f32 %v4656, %v4723
      %v4753 = vmul.f32 %v4657, %v4728
      %v4754 = vmul.f32 %v4658, %v4733
      %v4755 = vmul.f32 %v4659, %v4738
      %4772 = vrot.lane.b32.xlu0 %v4582, 24
      %v4773 = vpop.permute.xlu0 %4772
      %4774 = vrot.lane.b32.xlu0 %v4585, 24
      %v4775 = vpop.permute.xlu0 %4774
      %4776 = vrot.lane.b32.xlu0 %v4590, 24
      %v4777 = vpop.permute.xlu0 %4776
      %4778 = vrot.lane.b32.xlu0 %v4593, 24
      %v4779 = vpop.permute.xlu0 %4778
      %4780 = vrot.lane.b32.xlu0 %v4598, 24
      %v4781 = vpop.permute.xlu0 %4780
      %4782 = vrot.lane.b32.xlu0 %v4601, 24
      %v4783 = vpop.permute.xlu0 %4782
      %4784 = vrot.lane.b32.xlu0 %v4606, 24
      %v4785 = vpop.permute.xlu0 %4784
      %4786 = vrot.lane.b32.xlu0 %v4609, 24
      %v4787 = vpop.permute.xlu0 %4786
      %4788 = vrot.lane.b32.xlu0 %v4614, 24
      %v4789 = vpop.permute.xlu0 %4788
      %4790 = vrot.lane.b32.xlu0 %v4617, 24
      %v4791 = vpop.permute.xlu0 %4790
      %4792 = vrot.lane.b32.xlu0 %v4622, 24
      %v4793 = vpop.permute.xlu0 %4792
      %4794 = vrot.lane.b32.xlu0 %v4625, 24
      %v4795 = vpop.permute.xlu0 %4794
      %4796 = vrot.lane.b32.xlu0 %v4630, 24
      %v4797 = vpop.permute.xlu0 %4796
      %4798 = vrot.lane.b32.xlu0 %v4633, 24
      %v4799 = vpop.permute.xlu0 %4798
      %4800 = vrot.lane.b32.xlu0 %v4638, 24
      %v4801 = vpop.permute.xlu0 %4800
      %4802 = vrot.lane.b32.xlu0 %v4641, 24
      %v4803 = vpop.permute.xlu0 %4802
      %v4820 = vadd.f32 %v4740, %v4773
      %v4821 = vadd.f32 %v4741, %v4775
      %v4822 = vadd.f32 %v4742, %v4777
      %v4823 = vadd.f32 %v4743, %v4779
      %v4824 = vadd.f32 %v4744, %v4781
      %v4825 = vadd.f32 %v4745, %v4783
      %v4826 = vadd.f32 %v4746, %v4785
      %v4827 = vadd.f32 %v4747, %v4787
      %v4828 = vadd.f32 %v4748, %v4789
      %v4829 = vadd.f32 %v4749, %v4791
      %v4830 = vadd.f32 %v4750, %v4793
      %v4831 = vadd.f32 %v4751, %v4795
      %v4832 = vadd.f32 %v4752, %v4797
      %v4833 = vadd.f32 %v4753, %v4799
      %v4834 = vadd.f32 %v4754, %v4801
      %v4835 = vadd.f32 %v4755, %v4803
      %vm4836 = vcmask 261312
      %4837 = vst.msk [vmem:[#allocation5] sm:$0xff] %vm4836, %v4820
      %4838 = vst.msk [vmem:[#allocation5 + $0x8] sm:$0xff] %vm4836, %v4821
      %4839 = vst.msk [vmem:[#allocation5 + $0x10] sm:$0xff] %vm4836, %v4822
      %4840 = vst.msk [vmem:[#allocation5 + $0x18] sm:$0xff] %vm4836, %v4823
      %4841 = vst.msk [vmem:[#allocation5 + $0x20] sm:$0xff] %vm4836, %v4824
      %4842 = vst.msk [vmem:[#allocation5 + $0x28] sm:$0xff] %vm4836, %v4825
      %4843 = vst.msk [vmem:[#allocation5 + $0x30] sm:$0xff] %vm4836, %v4826
      %4844 = vst.msk [vmem:[#allocation5 + $0x38] sm:$0xff] %vm4836, %v4827
      %4845 = vst.msk [vmem:[#allocation5 + $0x40] sm:$0xff] %vm4836, %v4828
      %4846 = vst.msk [vmem:[#allocation5 + $0x48] sm:$0xff] %vm4836, %v4829
      %4847 = vst.msk [vmem:[#allocation5 + $0x50] sm:$0xff] %vm4836, %v4830
      %4848 = vst.msk [vmem:[#allocation5 + $0x58] sm:$0xff] %vm4836, %v4831
      %4849 = vst.msk [vmem:[#allocation5 + $0x60] sm:$0xff] %vm4836, %v4832
      %4850 = vst.msk [vmem:[#allocation5 + $0x68] sm:$0xff] %vm4836, %v4833
      %4851 = vst.msk [vmem:[#allocation5 + $0x70] sm:$0xff] %vm4836, %v4834
      %4852 = vst.msk [vmem:[#allocation5 + $0x78] sm:$0xff] %vm4836, %v4835
      %4853 = vst.msk [vmem:[#allocation3] sm:$0xff] %vm4836, %v4326
      %4854 = vst.msk [vmem:[#allocation3 + $0x8] sm:$0xff] %vm4836, %v4331
      %4855 = vst.msk [vmem:[#allocation3 + $0x10] sm:$0xff] %vm4836, %v4336
      %4856 = vst.msk [vmem:[#allocation3 + $0x18] sm:$0xff] %vm4836, %v4341
      %4857 = vst.msk [vmem:[#allocation3 + $0x20] sm:$0xff] %vm4836, %v4346
      %4858 = vst.msk [vmem:[#allocation3 + $0x28] sm:$0xff] %vm4836, %v4351
      %4859 = vst.msk [vmem:[#allocation3 + $0x30] sm:$0xff] %vm4836, %v4356
      %4860 = vst.msk [vmem:[#allocation3 + $0x38] sm:$0xff] %vm4836, %v4361
      %4861 = vst.msk [vmem:[#allocation3 + $0x40] sm:$0xff] %vm4836, %v4366
      %4862 = vst.msk [vmem:[#allocation3 + $0x48] sm:$0xff] %vm4836, %v4371
      %4863 = vst.msk [vmem:[#allocation3 + $0x50] sm:$0xff] %vm4836, %v4376
      %4864 = vst.msk [vmem:[#allocation3 + $0x58] sm:$0xff] %vm4836, %v4381
      %4865 = vst.msk [vmem:[#allocation3 + $0x60] sm:$0xff] %vm4836, %v4386
      %4866 = vst.msk [vmem:[#allocation3 + $0x68] sm:$0xff] %vm4836, %v4391
      %4867 = vst.msk [vmem:[#allocation3 + $0x70] sm:$0xff] %vm4836, %v4396
      %4868 = vst.msk [vmem:[#allocation3 + $0x78] sm:$0xff] %vm4836, %v4401
      %4870 = vset.pattern.permute.xlu0 24
      %4871 = vperm.xlu0 %4870, %v4499
      %v4872 = vpop.permute.xlu0 %4871
      %4875 = vset.pattern.permute.xlu0 24
      %4876 = vperm.xlu0 %4875, %v4500
      %v4877 = vpop.permute.xlu0 %4876
      %4880 = vset.pattern.permute.xlu0 24
      %4881 = vperm.xlu0 %4880, %v4501
      %v4882 = vpop.permute.xlu0 %4881
      %4885 = vset.pattern.permute.xlu0 24
      %4886 = vperm.xlu0 %4885, %v4502
      %v4887 = vpop.permute.xlu0 %4886
      %4890 = vset.pattern.permute.xlu0 24
      %4891 = vperm.xlu0 %4890, %v4503
      %v4892 = vpop.permute.xlu0 %4891
      %4895 = vset.pattern.permute.xlu0 24
      %4896 = vperm.xlu0 %4895, %v4504
      %v4897 = vpop.permute.xlu0 %4896
      %4900 = vset.pattern.permute.xlu0 24
      %4901 = vperm.xlu0 %4900, %v4505
      %v4902 = vpop.permute.xlu0 %4901
      %4905 = vset.pattern.permute.xlu0 24
      %4906 = vperm.xlu0 %4905, %v4506
      %v4907 = vpop.permute.xlu0 %4906
      %4910 = vset.pattern.permute.xlu0 24
      %4911 = vperm.xlu0 %4910, %v4507
      %v4912 = vpop.permute.xlu0 %4911
      %4915 = vset.pattern.permute.xlu0 24
      %4916 = vperm.xlu0 %4915, %v4508
      %v4917 = vpop.permute.xlu0 %4916
      %4920 = vset.pattern.permute.xlu0 24
      %4921 = vperm.xlu0 %4920, %v4509
      %v4922 = vpop.permute.xlu0 %4921
      %4925 = vset.pattern.permute.xlu0 24
      %4926 = vperm.xlu0 %4925, %v4510
      %v4927 = vpop.permute.xlu0 %4926
      %4930 = vset.pattern.permute.xlu0 24
      %4931 = vperm.xlu0 %4930, %v4511
      %v4932 = vpop.permute.xlu0 %4931
      %4935 = vset.pattern.permute.xlu0 24
      %4936 = vperm.xlu0 %4935, %v4512
      %v4937 = vpop.permute.xlu0 %4936
      %4940 = vset.pattern.permute.xlu0 24
      %4941 = vperm.xlu0 %4940, %v4513
      %v4942 = vpop.permute.xlu0 %4941
      %4945 = vset.pattern.permute.xlu0 24
      %4946 = vperm.xlu0 %4945, %v4514
      %v4947 = vpop.permute.xlu0 %4946
      %4949 = vst.msk [vmem:[#allocation4] sm:$0xff] %vm4836, %v4872
      %4950 = vst.msk [vmem:[#allocation4 + $0x8] sm:$0xff] %vm4836, %v4877
      %4951 = vst.msk [vmem:[#allocation4 + $0x10] sm:$0xff] %vm4836, %v4882
      %4952 = vst.msk [vmem:[#allocation4 + $0x18] sm:$0xff] %vm4836, %v4887
      %4953 = vst.msk [vmem:[#allocation4 + $0x20] sm:$0xff] %vm4836, %v4892
      %4954 = vst.msk [vmem:[#allocation4 + $0x28] sm:$0xff] %vm4836, %v4897
      %4955 = vst.msk [vmem:[#allocation4 + $0x30] sm:$0xff] %vm4836, %v4902
      %4956 = vst.msk [vmem:[#allocation4 + $0x38] sm:$0xff] %vm4836, %v4907
      %4957 = vst.msk [vmem:[#allocation4 + $0x40] sm:$0xff] %vm4836, %v4912
      %4958 = vst.msk [vmem:[#allocation4 + $0x48] sm:$0xff] %vm4836, %v4917
      %4959 = vst.msk [vmem:[#allocation4 + $0x50] sm:$0xff] %vm4836, %v4922
      %4960 = vst.msk [vmem:[#allocation4 + $0x58] sm:$0xff] %vm4836, %v4927
      %4961 = vst.msk [vmem:[#allocation4 + $0x60] sm:$0xff] %vm4836, %v4932
      %4962 = vst.msk [vmem:[#allocation4 + $0x68] sm:$0xff] %vm4836, %v4937
      %4963 = vst.msk [vmem:[#allocation4 + $0x70] sm:$0xff] %vm4836, %v4942
      %4964 = vst.msk [vmem:[#allocation4 + $0x78] sm:$0xff] %vm4836, %v4947
      // Predicated region
      $region93: #{encoder_forward.2} parent=87 // pred_check
        %p4965 = pneg %p657
      $region94: #{encoder_forward.2} parent=87 // pred_check_branch
        %4967 = sbr.rel (%p4965) target = $region96
      $region95: #{encoder_forward.2} parent=87 // pred_region
        %v4968 = vld [vmem:[%s628] sm:$0xf]
        %v4969 = vld [vmem:[%s628 + $0x4] sm:$0xf]
        %v4970 = vld [vmem:[%s628 + $0x8] sm:$0xf]
        %v4971 = vld [vmem:[%s628 + $0xc] sm:$0xf]
        %v4972 = vld [vmem:[%s628 + $0x10] sm:$0xf]
        %v4973 = vld [vmem:[%s628 + $0x14] sm:$0xf]
        %v4974 = vld [vmem:[%s628 + $0x18] sm:$0xf]
        %v4975 = vld [vmem:[%s628 + $0x1c] sm:$0xf]
        %v4976 = vld [vmem:[%s628 + $0x20] sm:$0xf]
        %v4977 = vld [vmem:[%s628 + $0x24] sm:$0xf]
        %v4978 = vld [vmem:[%s628 + $0x28] sm:$0xf]
        %v4979 = vld [vmem:[%s628 + $0x2c] sm:$0xf]
        %v4980 = vld [vmem:[%s628 + $0x30] sm:$0xf]
        %v4981 = vld [vmem:[%s628 + $0x34] sm:$0xf]
        %v4982 = vld [vmem:[%s628 + $0x38] sm:$0xf]
        %v4983 = vld [vmem:[%s628 + $0x3c] sm:$0xf]
        %v4984 = vunpack.c.l.bf16 %v4968
        %v4985 = vunpack.c.l.bf16 %v4969
        %v4986 = vunpack.c.l.bf16 %v4970
        %v4987 = vunpack.c.l.bf16 %v4971
        %v4988 = vunpack.c.l.bf16 %v4972
        %v4989 = vunpack.c.l.bf16 %v4973
        %v4990 = vunpack.c.l.bf16 %v4974
        %v4991 = vunpack.c.l.bf16 %v4975
        %v4992 = vunpack.c.l.bf16 %v4976
        %v4993 = vunpack.c.l.bf16 %v4977
        %v4994 = vunpack.c.l.bf16 %v4978
        %v4995 = vunpack.c.l.bf16 %v4979
        %v4996 = vunpack.c.l.bf16 %v4980
        %v4997 = vunpack.c.l.bf16 %v4981
        %v4998 = vunpack.c.l.bf16 %v4982
        %v4999 = vunpack.c.l.bf16 %v4983
        %v5000 = vld [vmem:[#allocation5] sm:$0xff]
        %v5001 = vld [vmem:[#allocation5 + $0x8] sm:$0xff]
        %v5002 = vld [vmem:[#allocation5 + $0x10] sm:$0xff]
        %v5003 = vld [vmem:[#allocation5 + $0x18] sm:$0xff]
        %v5004 = vld [vmem:[#allocation5 + $0x20] sm:$0xff]
        %v5005 = vld [vmem:[#allocation5 + $0x28] sm:$0xff]
        %v5006 = vld [vmem:[#allocation5 + $0x30] sm:$0xff]
        %v5007 = vld [vmem:[#allocation5 + $0x38] sm:$0xff]
        %v5008 = vld [vmem:[#allocation5 + $0x40] sm:$0xff]
        %v5009 = vld [vmem:[#allocation5 + $0x48] sm:$0xff]
        %v5010 = vld [vmem:[#allocation5 + $0x50] sm:$0xff]
        %v5011 = vld [vmem:[#allocation5 + $0x58] sm:$0xff]
        %v5012 = vld [vmem:[#allocation5 + $0x60] sm:$0xff]
        %v5013 = vld [vmem:[#allocation5 + $0x68] sm:$0xff]
        %v5014 = vld [vmem:[#allocation5 + $0x70] sm:$0xff]
        %v5015 = vld [vmem:[#allocation5 + $0x78] sm:$0xff]
        %v5016 = vld [vmem:[#allocation4] sm:$0xff]
        %v5017 = vld [vmem:[#allocation4 + $0x8] sm:$0xff]
        %v5018 = vld [vmem:[#allocation4 + $0x10] sm:$0xff]
        %v5019 = vld [vmem:[#allocation4 + $0x18] sm:$0xff]
        %v5020 = vld [vmem:[#allocation4 + $0x20] sm:$0xff]
        %v5021 = vld [vmem:[#allocation4 + $0x28] sm:$0xff]
        %v5022 = vld [vmem:[#allocation4 + $0x30] sm:$0xff]
        %v5023 = vld [vmem:[#allocation4 + $0x38] sm:$0xff]
        %v5024 = vld [vmem:[#allocation4 + $0x40] sm:$0xff]
        %v5025 = vld [vmem:[#allocation4 + $0x48] sm:$0xff]
        %v5026 = vld [vmem:[#allocation4 + $0x50] sm:$0xff]
        %v5027 = vld [vmem:[#allocation4 + $0x58] sm:$0xff]
        %v5028 = vld [vmem:[#allocation4 + $0x60] sm:$0xff]
        %v5029 = vld [vmem:[#allocation4 + $0x68] sm:$0xff]
        %v5030 = vld [vmem:[#allocation4 + $0x70] sm:$0xff]
        %v5031 = vld [vmem:[#allocation4 + $0x78] sm:$0xff]
        %v5032 = vrcp.pop %v5016
        %v5033 = vrcp.pop %v5017
        %v5034 = vrcp.pop %v5018
        %v5035 = vrcp.pop %v5019
        %v5036 = vrcp.pop %v5020
        %v5037 = vrcp.pop %v5021
        %v5038 = vrcp.pop %v5022
        %v5039 = vrcp.pop %v5023
        %v5040 = vrcp.pop %v5024
        %v5041 = vrcp.pop %v5025
        %v5042 = vrcp.pop %v5026
        %v5043 = vrcp.pop %v5027
        %v5044 = vrcp.pop %v5028
        %v5045 = vrcp.pop %v5029
        %v5046 = vrcp.pop %v5030
        %v5047 = vrcp.pop %v5031
        %v5048 = vmul.f32 %v5000, %v5032
        %v5049 = vmul.f32 %v5001, %v5033
        %v5050 = vmul.f32 %v5002, %v5034
        %v5051 = vmul.f32 %v5003, %v5035
        %v5052 = vmul.f32 %v5004, %v5036
        %v5053 = vmul.f32 %v5005, %v5037
        %v5054 = vmul.f32 %v5006, %v5038
        %v5055 = vmul.f32 %v5007, %v5039
        %v5056 = vmul.f32 %v5008, %v5040
        %v5057 = vmul.f32 %v5009, %v5041
        %v5058 = vmul.f32 %v5010, %v5042
        %v5059 = vmul.f32 %v5011, %v5043
        %v5060 = vmul.f32 %v5012, %v5044
        %v5061 = vmul.f32 %v5013, %v5045
        %v5062 = vmul.f32 %v5014, %v5046
        %v5063 = vmul.f32 %v5015, %v5047
        %v5064 = vpack.c.bf16 %v5049, %v5048
        %v5065 = vpack.c.bf16 %v5051, %v5050
        %v5066 = vpack.c.bf16 %v5053, %v5052
        %v5067 = vpack.c.bf16 %v5055, %v5054
        %v5068 = vpack.c.bf16 %v5057, %v5056
        %v5069 = vpack.c.bf16 %v5059, %v5058
        %v5070 = vpack.c.bf16 %v5061, %v5060
        %v5071 = vpack.c.bf16 %v5063, %v5062
        %v5072 = vld [vmem:[%s7] sm:$0xf]
        %v5073 = vld [vmem:[%s7 + $0x4] sm:$0xf]
        %v5074 = vld [vmem:[%s7 + $0x8] sm:$0xf]
        %v5075 = vld [vmem:[%s7 + $0xc] sm:$0xf]
        %v5076 = vld [vmem:[%s7 + $0x10] sm:$0xf]
        %v5077 = vld [vmem:[%s7 + $0x14] sm:$0xf]
        %v5078 = vld [vmem:[%s7 + $0x18] sm:$0xf]
        %v5079 = vld [vmem:[%s7 + $0x1c] sm:$0xf]
        %v5080 = vld [vmem:[%s7 + $0x20] sm:$0xf]
        %v5081 = vld [vmem:[%s7 + $0x24] sm:$0xf]
        %v5082 = vld [vmem:[%s7 + $0x28] sm:$0xf]
        %v5083 = vld [vmem:[%s7 + $0x2c] sm:$0xf]
        %v5084 = vld [vmem:[%s7 + $0x30] sm:$0xf]
        %v5085 = vld [vmem:[%s7 + $0x34] sm:$0xf]
        %v5086 = vld [vmem:[%s7 + $0x38] sm:$0xf]
        %v5087 = vld [vmem:[%s7 + $0x3c] sm:$0xf]
        %v5088 = vld [vmem:[%s8] sm:$0x1]
        %v5090 = vlaneseq
        %v5091 = vshrl.u32 %v5090, 7
        %v5092 = vsub.s32 0, %v5091
        %v5093 = vrot.slane %v5088, %v5092
        %v5111 = vunpack.c.l.b16 %v5072
        %v5112 = vunpack.c.l.b16 %v5073
        %v5113 = vunpack.c.l.b16 %v5074
        %v5114 = vunpack.c.l.b16 %v5075
        %v5115 = vunpack.c.l.b16 %v5076
        %v5116 = vunpack.c.l.b16 %v5077
        %v5117 = vunpack.c.l.b16 %v5078
        %v5118 = vunpack.c.l.b16 %v5079
        %v5119 = vunpack.c.l.b16 %v5080
        %v5120 = vunpack.c.l.b16 %v5081
        %v5121 = vunpack.c.l.b16 %v5082
        %v5122 = vunpack.c.l.b16 %v5083
        %v5123 = vunpack.c.l.b16 %v5084
        %v5124 = vunpack.c.l.b16 %v5085
        %v5125 = vunpack.c.l.b16 %v5086
        %v5126 = vunpack.c.l.b16 %v5087
        %v5127 = vpack.c.b16 %v5112, %v5111
        %v5128 = vpack.c.b16 %v5114, %v5113
        %v5129 = vpack.c.b16 %v5116, %v5115
        %v5130 = vpack.c.b16 %v5118, %v5117
        %v5131 = vpack.c.b16 %v5120, %v5119
        %v5132 = vpack.c.b16 %v5122, %v5121
        %v5133 = vpack.c.b16 %v5124, %v5123
        %v5134 = vpack.c.b16 %v5126, %v5125
        %5143 = vmatprep.subr.bf16.mxu0 0
        %5144 = vmatpush1.bf16.msra.mxu0 %v5127
        %5145 = vmatprep.subr.bf16.mxu0 0
        %5146 = vmatpush1.bf16.msra.mxu0 %v5128
        %5147 = vmatprep.subr.bf16.mxu0 0
        %5148 = vmatpush1.bf16.msra.mxu0 %v5129
        %5149 = vmatprep.subr.bf16.mxu0 0
        %5150 = vmatpush1.bf16.msra.mxu0 %v5130
        %5151 = vmatprep.subr.bf16.mxu0 0
        %5152 = vmatpush1.bf16.msra.mxu0 %v5131
        %5153 = vmatprep.subr.bf16.mxu0 0
        %5154 = vmatpush1.bf16.msra.mxu0 %v5132
        %5155 = vmatprep.subr.bf16.mxu0 0
        %5156 = vmatpush1.bf16.msra.mxu0 %v5133
        %5157 = vmatprep.subr.bf16.mxu0 0
        %5158 = vmatpush1.bf16.msra.mxu0 %v5134
        %5159 = vmatprep.subr.bf16.mxu0 0
        %5160 = vmatpush1.bf16.msra.mxu0 0
        %5161 = vmatprep.subr.bf16.mxu0 0
        %5162 = vmatpush1.bf16.msra.mxu0 0
        %5163 = vmatprep.subr.bf16.mxu0 0
        %5164 = vmatpush1.bf16.msra.mxu0 0
        %5165 = vmatprep.subr.bf16.mxu0 0
        %5166 = vmatpush1.bf16.msra.mxu0 0
        %5167 = vmatprep.subr.bf16.mxu0 0
        %5168 = vmatpush1.bf16.msra.mxu0 0
        %5169 = vmatprep.subr.bf16.mxu0 0
        %5170 = vmatpush1.bf16.msra.mxu0 0
        %5171 = vmatprep.subr.bf16.mxu0 0
        %5172 = vmatpush1.bf16.msra.mxu0 0
        %5173 = vmatprep.subr.bf16.mxu0 0
        %5174 = vmatpush1.bf16.msra.mxu0 0
        %5175 = vmatprep.mubr.bf16.mxu0 0
        %5176 = vmatmul.mubr.bf16.gmra.mrb[0].mxu0 %v5064
        %v5177 = vpop.f32.mrb[0].mxu0
        %v5178 = vadd.f32 %v5093, %v5177
        %v5179 = vpop.f32.mrb[0].mxu0
        %v5180 = vpop.f32.mrb[0].mxu0
        %v5181 = vadd.f32 %v5093, %v5180
        %v5182 = vpop.f32.mrb[0].mxu0
        %5183 = vmatprep.mubr.bf16.mxu0 0
        %5184 = vmatmul.mubr.bf16.gmra.mrb[0].mxu0 %v5065
        %v5185 = vpop.f32.mrb[0].mxu0
        %v5186 = vadd.f32 %v5093, %v5185
        %v5187 = vpop.f32.mrb[0].mxu0
        %v5188 = vpop.f32.mrb[0].mxu0
        %v5189 = vadd.f32 %v5093, %v5188
        %v5190 = vpop.f32.mrb[0].mxu0
        %5191 = vmatprep.mubr.bf16.mxu0 0
        %5192 = vmatmul.mubr.bf16.gmra.mrb[0].mxu0 %v5066
        %v5193 = vpop.f32.mrb[0].mxu0
        %v5194 = vadd.f32 %v5093, %v5193
        %v5195 = vpop.f32.mrb[0].mxu0
        %v5196 = vpop.f32.mrb[0].mxu0
        %v5197 = vadd.f32 %v5093, %v5196
        %v5198 = vpop.f32.mrb[0].mxu0
        %5199 = vmatprep.mubr.bf16.mxu0 0
        %5200 = vmatmul.mubr.bf16.gmra.mrb[0].mxu0 %v5067
        %v5201 = vpop.f32.mrb[0].mxu0
        %v5202 = vadd.f32 %v5093, %v5201
        %v5203 = vpop.f32.mrb[0].mxu0
        %v5204 = vpop.f32.mrb[0].mxu0
        %v5205 = vadd.f32 %v5093, %v5204
        %v5206 = vpop.f32.mrb[0].mxu0
        %5207 = vmatprep.mubr.bf16.mxu0 0
        %5208 = vmatmul.mubr.bf16.gmra.mrb[0].mxu0 %v5068
        %v5209 = vpop.f32.mrb[0].mxu0
        %v5210 = vadd.f32 %v5093, %v5209
        %v5211 = vpop.f32.mrb[0].mxu0
        %v5212 = vpop.f32.mrb[0].mxu0
        %v5213 = vadd.f32 %v5093, %v5212
        %v5214 = vpop.f32.mrb[0].mxu0
        %5215 = vmatprep.mubr.bf16.mxu0 0
        %5216 = vmatmul.mubr.bf16.gmra.mrb[0].mxu0 %v5069
        %v5217 = vpop.f32.mrb[0].mxu0
        %v5218 = vadd.f32 %v5093, %v5217
        %v5219 = vpop.f32.mrb[0].mxu0
        %v5220 = vpop.f32.mrb[0].mxu0
        %v5221 = vadd.f32 %v5093, %v5220
        %v5222 = vpop.f32.mrb[0].mxu0
        %5223 = vmatprep.mubr.bf16.mxu0 0
        %5224 = vmatmul.mubr.bf16.gmra.mrb[0].mxu0 %v5070
        %v5225 = vpop.f32.mrb[0].mxu0
        %v5226 = vadd.f32 %v5093, %v5225
        %v5227 = vpop.f32.mrb[0].mxu0
        %v5228 = vpop.f32.mrb[0].mxu0
        %v5229 = vadd.f32 %v5093, %v5228
        %v5230 = vpop.f32.mrb[0].mxu0
        %5231 = vmatprep.mubr.bf16.mxu0 0
        %5232 = vmatmul.mubr.bf16.gmra.mrb[0].mxu0 %v5071
        %v5233 = vpop.f32.mrb[0].mxu0
        %v5234 = vadd.f32 %v5093, %v5233
        %v5235 = vpop.f32.mrb[0].mxu0
        %v5236 = vpop.f32.mrb[0].mxu0
        %v5237 = vadd.f32 %v5093, %v5236
        %v5238 = vpop.f32.mrb[0].mxu0
        %5239 = vdwg.mxu0
        %v5240 = vadd.f32 %v4984, %v5178
        %v5241 = vadd.f32 %v4985, %v5181
        %v5242 = vadd.f32 %v4986, %v5186
        %v5243 = vadd.f32 %v4987, %v5189
        %v5244 = vadd.f32 %v4988, %v5194
        %v5245 = vadd.f32 %v4989, %v5197
        %v5246 = vadd.f32 %v4990, %v5202
        %v5247 = vadd.f32 %v4991, %v5205
        %v5248 = vadd.f32 %v4992, %v5210
        %v5249 = vadd.f32 %v4993, %v5213
        %v5250 = vadd.f32 %v4994, %v5218
        %v5251 = vadd.f32 %v4995, %v5221
        %v5252 = vadd.f32 %v4996, %v5226
        %v5253 = vadd.f32 %v4997, %v5229
        %v5254 = vadd.f32 %v4998, %v5234
        %v5255 = vadd.f32 %v4999, %v5237
        %5256 = vadd.xlane.f32.xlu0 %v5240
        %v5257 = vpop.xlane.xlu0 %5256
        %5258 = vadd.xlane.f32.xlu0 %v5241
        %v5259 = vpop.xlane.xlu0 %5258
        %5260 = vadd.xlane.f32.xlu0 %v5242
        %v5261 = vpop.xlane.xlu0 %5260
        %5262 = vadd.xlane.f32.xlu0 %v5243
        %v5263 = vpop.xlane.xlu0 %5262
        %5264 = vadd.xlane.f32.xlu0 %v5244
        %v5265 = vpop.xlane.xlu0 %5264
        %5266 = vadd.xlane.f32.xlu0 %v5245
        %v5267 = vpop.xlane.xlu0 %5266
        %5268 = vadd.xlane.f32.xlu0 %v5246
        %v5269 = vpop.xlane.xlu0 %5268
        %5270 = vadd.xlane.f32.xlu0 %v5247
        %v5271 = vpop.xlane.xlu0 %5270
        %5272 = vadd.xlane.f32.xlu0 %v5248
        %v5273 = vpop.xlane.xlu0 %5272
        %5274 = vadd.xlane.f32.xlu0 %v5249
        %v5275 = vpop.xlane.xlu0 %5274
        %5276 = vadd.xlane.f32.xlu0 %v5250
        %v5277 = vpop.xlane.xlu0 %5276
        %5278 = vadd.xlane.f32.xlu0 %v5251
        %v5279 = vpop.xlane.xlu0 %5278
        %5280 = vadd.xlane.f32.xlu0 %v5252
        %v5281 = vpop.xlane.xlu0 %5280
        %5282 = vadd.xlane.f32.xlu0 %v5253
        %v5283 = vpop.xlane.xlu0 %5282
        %5284 = vadd.xlane.f32.xlu0 %v5254
        %v5285 = vpop.xlane.xlu0 %5284
        %5286 = vadd.xlane.f32.xlu0 %v5255
        %v5287 = vpop.xlane.xlu0 %5286
        %v5288 = vmul.f32 %v5257, 0.03125
        %v5289 = vmul.f32 %v5259, 0.03125
        %v5290 = vmul.f32 %v5261, 0.03125
        %v5291 = vmul.f32 %v5263, 0.03125
        %v5292 = vmul.f32 %v5265, 0.03125
        %v5293 = vmul.f32 %v5267, 0.03125
        %v5294 = vmul.f32 %v5269, 0.03125
        %v5295 = vmul.f32 %v5271, 0.03125
        %v5296 = vmul.f32 %v5273, 0.03125
        %v5297 = vmul.f32 %v5275, 0.03125
        %v5298 = vmul.f32 %v5277, 0.03125
        %v5299 = vmul.f32 %v5279, 0.03125
        %v5300 = vmul.f32 %v5281, 0.03125
        %v5301 = vmul.f32 %v5283, 0.03125
        %v5302 = vmul.f32 %v5285, 0.03125
        %v5303 = vmul.f32 %v5287, 0.03125
        %v5304 = vmul.f32 %v5240, %v5240
        %v5305 = vmul.f32 %v5241, %v5241
        %v5306 = vmul.f32 %v5242, %v5242
        %v5307 = vmul.f32 %v5243, %v5243
        %v5308 = vmul.f32 %v5244, %v5244
        %v5309 = vmul.f32 %v5245, %v5245
        %v5310 = vmul.f32 %v5246, %v5246
        %v5311 = vmul.f32 %v5247, %v5247
        %v5312 = vmul.f32 %v5248, %v5248
        %v5313 = vmul.f32 %v5249, %v5249
        %v5314 = vmul.f32 %v5250, %v5250
        %v5315 = vmul.f32 %v5251, %v5251
        %v5316 = vmul.f32 %v5252, %v5252
        %v5317 = vmul.f32 %v5253, %v5253
        %v5318 = vmul.f32 %v5254, %v5254
        %v5319 = vmul.f32 %v5255, %v5255
        %5320 = vadd.xlane.f32.xlu0 %v5304
        %v5321 = vpop.xlane.xlu0 %5320
        %5322 = vadd.xlane.f32.xlu0 %v5305
        %v5323 = vpop.xlane.xlu0 %5322
        %5324 = vadd.xlane.f32.xlu0 %v5306
        %v5325 = vpop.xlane.xlu0 %5324
        %5326 = vadd.xlane.f32.xlu0 %v5307
        %v5327 = vpop.xlane.xlu0 %5326
        %5328 = vadd.xlane.f32.xlu0 %v5308
        %v5329 = vpop.xlane.xlu0 %5328
        %5330 = vadd.xlane.f32.xlu0 %v5309
        %v5331 = vpop.xlane.xlu0 %5330
        %5332 = vadd.xlane.f32.xlu0 %v5310
        %v5333 = vpop.xlane.xlu0 %5332
        %5334 = vadd.xlane.f32.xlu0 %v5311
        %v5335 = vpop.xlane.xlu0 %5334
        %5336 = vadd.xlane.f32.xlu0 %v5312
        %v5337 = vpop.xlane.xlu0 %5336
        %5338 = vadd.xlane.f32.xlu0 %v5313
        %v5339 = vpop.xlane.xlu0 %5338
        %5340 = vadd.xlane.f32.xlu0 %v5314
        %v5341 = vpop.xlane.xlu0 %5340
        %5342 = vadd.xlane.f32.xlu0 %v5315
        %v5343 = vpop.xlane.xlu0 %5342
        %5344 = vadd.xlane.f32.xlu0 %v5316
        %v5345 = vpop.xlane.xlu0 %5344
        %5346 = vadd.xlane.f32.xlu0 %v5317
        %v5347 = vpop.xlane.xlu0 %5346
        %5348 = vadd.xlane.f32.xlu0 %v5318
        %v5349 = vpop.xlane.xlu0 %5348
        %5350 = vadd.xlane.f32.xlu0 %v5319
        %v5351 = vpop.xlane.xlu0 %5350
        %v5352 = vmul.f32 %v5321, 0.03125
        %v5353 = vmul.f32 %v5323, 0.03125
        %v5354 = vmul.f32 %v5325, 0.03125
        %v5355 = vmul.f32 %v5327, 0.03125
        %v5356 = vmul.f32 %v5329, 0.03125
        %v5357 = vmul.f32 %v5331, 0.03125
        %v5358 = vmul.f32 %v5333, 0.03125
        %v5359 = vmul.f32 %v5335, 0.03125
        %v5360 = vmul.f32 %v5337, 0.03125
        %v5361 = vmul.f32 %v5339, 0.03125
        %v5362 = vmul.f32 %v5341, 0.03125
        %v5363 = vmul.f32 %v5343, 0.03125
        %v5364 = vmul.f32 %v5345, 0.03125
        %v5365 = vmul.f32 %v5347, 0.03125
        %v5366 = vmul.f32 %v5349, 0.03125
        %v5367 = vmul.f32 %v5351, 0.03125
        %v5368 = vmul.f32 %v5288, %v5288
        %v5369 = vmul.f32 %v5289, %v5289
        %v5370 = vmul.f32 %v5290, %v5290
        %v5371 = vmul.f32 %v5291, %v5291
        %v5372 = vmul.f32 %v5292, %v5292
        %v5373 = vmul.f32 %v5293, %v5293
        %v5374 = vmul.f32 %v5294, %v5294
        %v5375 = vmul.f32 %v5295, %v5295
        %v5376 = vmul.f32 %v5296, %v5296
        %v5377 = vmul.f32 %v5297, %v5297
        %v5378 = vmul.f32 %v5298, %v5298
        %v5379 = vmul.f32 %v5299, %v5299
        %v5380 = vmul.f32 %v5300, %v5300
        %v5381 = vmul.f32 %v5301, %v5301
        %v5382 = vmul.f32 %v5302, %v5302
        %v5383 = vmul.f32 %v5303, %v5303
        %v5384 = vsub.f32 %v5352, %v5368
        %v5385 = vsub.f32 %v5353, %v5369
        %v5386 = vsub.f32 %v5354, %v5370
        %v5387 = vsub.f32 %v5355, %v5371
        %v5388 = vsub.f32 %v5356, %v5372
        %v5389 = vsub.f32 %v5357, %v5373
        %v5390 = vsub.f32 %v5358, %v5374
        %v5391 = vsub.f32 %v5359, %v5375
        %v5392 = vsub.f32 %v5360, %v5376
        %v5393 = vsub.f32 %v5361, %v5377
        %v5394 = vsub.f32 %v5362, %v5378
        %v5395 = vsub.f32 %v5363, %v5379
        %v5396 = vsub.f32 %v5364, %v5380
        %v5397 = vsub.f32 %v5365, %v5381
        %v5398 = vsub.f32 %v5366, %v5382
        %v5399 = vsub.f32 %v5367, %v5383
        %v5400 = vmax.f32 %v5384, 0.0
        %v5401 = vmax.f32 %v5385, 0.0
        %v5402 = vmax.f32 %v5386, 0.0
        %v5403 = vmax.f32 %v5387, 0.0
        %v5404 = vmax.f32 %v5388, 0.0
        %v5405 = vmax.f32 %v5389, 0.0
        %v5406 = vmax.f32 %v5390, 0.0
        %v5407 = vmax.f32 %v5391, 0.0
        %v5408 = vmax.f32 %v5392, 0.0
        %v5409 = vmax.f32 %v5393, 0.0
        %v5410 = vmax.f32 %v5394, 0.0
        %v5411 = vmax.f32 %v5395, 0.0
        %v5412 = vmax.f32 %v5396, 0.0
        %v5413 = vmax.f32 %v5397, 0.0
        %v5414 = vmax.f32 %v5398, 0.0
        %v5415 = vmax.f32 %v5399, 0.0
        %v5416 = vsub.f32 %v5240, %v5288
        %v5417 = vsub.f32 %v5241, %v5289
        %v5418 = vsub.f32 %v5242, %v5290
        %v5419 = vsub.f32 %v5243, %v5291
        %v5420 = vsub.f32 %v5244, %v5292
        %v5421 = vsub.f32 %v5245, %v5293
        %v5422 = vsub.f32 %v5246, %v5294
        %v5423 = vsub.f32 %v5247, %v5295
        %v5424 = vsub.f32 %v5248, %v5296
        %v5425 = vsub.f32 %v5249, %v5297
        %v5426 = vsub.f32 %v5250, %v5298
        %v5427 = vsub.f32 %v5251, %v5299
        %v5428 = vsub.f32 %v5252, %v5300
        %v5429 = vsub.f32 %v5253, %v5301
        %v5430 = vsub.f32 %v5254, %v5302
        %v5431 = vsub.f32 %v5255, %v5303
        %v5432 = vadd.f32 %v5400, 1e-05
        %v5433 = vadd.f32 %v5401, 1e-05
        %v5434 = vadd.f32 %v5402, 1e-05
        %v5435 = vadd.f32 %v5403, 1e-05
        %v5436 = vadd.f32 %v5404, 1e-05
        %v5437 = vadd.f32 %v5405, 1e-05
        %v5438 = vadd.f32 %v5406, 1e-05
        %v5439 = vadd.f32 %v5407, 1e-05
        %v5440 = vadd.f32 %v5408, 1e-05
        %v5441 = vadd.f32 %v5409, 1e-05
        %v5442 = vadd.f32 %v5410, 1e-05
        %v5443 = vadd.f32 %v5411, 1e-05
        %v5444 = vadd.f32 %v5412, 1e-05
        %v5445 = vadd.f32 %v5413, 1e-05
        %v5446 = vadd.f32 %v5414, 1e-05
        %v5447 = vadd.f32 %v5415, 1e-05
        %v5448 = vrsqrt.pop %v5432
        %v5449 = vrsqrt.pop %v5433
        %v5450 = vrsqrt.pop %v5434
        %v5451 = vrsqrt.pop %v5435
        %v5452 = vrsqrt.pop %v5436
        %v5453 = vrsqrt.pop %v5437
        %v5454 = vrsqrt.pop %v5438
        %v5455 = vrsqrt.pop %v5439
        %v5456 = vrsqrt.pop %v5440
        %v5457 = vrsqrt.pop %v5441
        %v5458 = vrsqrt.pop %v5442
        %v5459 = vrsqrt.pop %v5443
        %v5460 = vrsqrt.pop %v5444
        %v5461 = vrsqrt.pop %v5445
        %v5462 = vrsqrt.pop %v5446
        %v5463 = vrsqrt.pop %v5447
        %v5464 = vmul.f32 %v5416, %v5448
        %v5465 = vmul.f32 %v5417, %v5449
        %v5466 = vmul.f32 %v5418, %v5450
        %v5467 = vmul.f32 %v5419, %v5451
        %v5468 = vmul.f32 %v5420, %v5452
        %v5469 = vmul.f32 %v5421, %v5453
        %v5470 = vmul.f32 %v5422, %v5454
        %v5471 = vmul.f32 %v5423, %v5455
        %v5472 = vmul.f32 %v5424, %v5456
        %v5473 = vmul.f32 %v5425, %v5457
        %v5474 = vmul.f32 %v5426, %v5458
        %v5475 = vmul.f32 %v5427, %v5459
        %v5476 = vmul.f32 %v5428, %v5460
        %v5477 = vmul.f32 %v5429, %v5461
        %v5478 = vmul.f32 %v5430, %v5462
        %v5479 = vmul.f32 %v5431, %v5463
        %v5480 = vld [vmem:[%s9] sm:$0x1]
        %v5482 = vlaneseq
        %v5483 = vshrl.u32 %v5482, 7
        %v5484 = vsub.s32 0, %v5483
        %v5485 = vrot.slane %v5480, %v5484
        %v5487 = vmul.f32 %v5464, %v5485
        %v5488 = vmul.f32 %v5465, %v5485
        %v5489 = vmul.f32 %v5466, %v5485
        %v5490 = vmul.f32 %v5467, %v5485
        %v5491 = vmul.f32 %v5468, %v5485
        %v5492 = vmul.f32 %v5469, %v5485
        %v5493 = vmul.f32 %v5470, %v5485
        %v5494 = vmul.f32 %v5471, %v5485
        %v5495 = vmul.f32 %v5472, %v5485
        %v5496 = vmul.f32 %v5473, %v5485
        %v5497 = vmul.f32 %v5474, %v5485
        %v5498 = vmul.f32 %v5475, %v5485
        %v5499 = vmul.f32 %v5476, %v5485
        %v5500 = vmul.f32 %v5477, %v5485
        %v5501 = vmul.f32 %v5478, %v5485
        %v5502 = vmul.f32 %v5479, %v5485
        %v5503 = vld [vmem:[%s10] sm:$0x1]
        %v5505 = vlaneseq
        %v5506 = vshrl.u32 %v5505, 7
        %v5507 = vsub.s32 0, %v5506
        %v5508 = vrot.slane %v5503, %v5507
        %v5510 = vadd.f32 %v5487, %v5508
        %v5511 = vadd.f32 %v5488, %v5508
        %v5512 = vadd.f32 %v5489, %v5508
        %v5513 = vadd.f32 %v5490, %v5508
        %v5514 = vadd.f32 %v5491, %v5508
        %v5515 = vadd.f32 %v5492, %v5508
        %v5516 = vadd.f32 %v5493, %v5508
        %v5517 = vadd.f32 %v5494, %v5508
        %v5518 = vadd.f32 %v5495, %v5508
        %v5519 = vadd.f32 %v5496, %v5508
        %v5520 = vadd.f32 %v5497, %v5508
        %v5521 = vadd.f32 %v5498, %v5508
        %v5522 = vadd.f32 %v5499, %v5508
        %v5523 = vadd.f32 %v5500, %v5508
        %v5524 = vadd.f32 %v5501, %v5508
        %v5525 = vadd.f32 %v5502, %v5508
        %v5526 = vpack.c.bf16 %v5511, %v5510
        %v5527 = vpack.c.bf16 %v5513, %v5512
        %v5528 = vpack.c.bf16 %v5515, %v5514
        %v5529 = vpack.c.bf16 %v5517, %v5516
        %v5530 = vpack.c.bf16 %v5519, %v5518
        %v5531 = vpack.c.bf16 %v5521, %v5520
        %v5532 = vpack.c.bf16 %v5523, %v5522
        %v5533 = vpack.c.bf16 %v5525, %v5524
        %v5534 = vld [vmem:[%s11] sm:$0xf]
        %v5535 = vld [vmem:[%s11 + $0x4] sm:$0xf]
        %v5536 = vld [vmem:[%s11 + $0x8] sm:$0xf]
        %v5537 = vld [vmem:[%s11 + $0xc] sm:$0xf]
        %v5538 = vld [vmem:[%s11 + $0x10] sm:$0xf]
        %v5539 = vld [vmem:[%s11 + $0x14] sm:$0xf]
        %v5540 = vld [vmem:[%s11 + $0x18] sm:$0xf]
        %v5541 = vld [vmem:[%s11 + $0x1c] sm:$0xf]
        %v5542 = vld [vmem:[%s11 + $0x20] sm:$0xf]
        %v5543 = vld [vmem:[%s11 + $0x24] sm:$0xf]
        %v5544 = vld [vmem:[%s11 + $0x28] sm:$0xf]
        %v5545 = vld [vmem:[%s11 + $0x2c] sm:$0xf]
        %v5546 = vld [vmem:[%s11 + $0x30] sm:$0xf]
        %v5547 = vld [vmem:[%s11 + $0x34] sm:$0xf]
        %v5548 = vld [vmem:[%s11 + $0x38] sm:$0xf]
        %v5549 = vld [vmem:[%s11 + $0x3c] sm:$0xf]
        %v5550 = vld [vmem:[%s12] sm:$0x1]
        %v5552 = vlaneseq
        %v5553 = vshrl.u32 %v5552, 7
        %v5554 = vsub.s32 0, %v5553
        %v5555 = vrot.slane %v5550, %v5554
        %v5573 = vunpack.c.l.b16 %v5534
        %v5574 = vunpack.c.l.b16 %v5535
        %v5575 = vunpack.c.l.b16 %v5536
        %v5576 = vunpack.c.l.b16 %v5537
        %v5577 = vunpack.c.l.b16 %v5538
        %v5578 = vunpack.c.l.b16 %v5539
        %v5579 = vunpack.c.l.b16 %v5540
        %v5580 = vunpack.c.l.b16 %v5541
        %v5581 = vunpack.c.l.b16 %v5542
        %v5582 = vunpack.c.l.b16 %v5543
        %v5583 = vunpack.c.l.b16 %v5544
        %v5584 = vunpack.c.l.b16 %v5545
        %v5585 = vunpack.c.l.b16 %v5546
        %v5586 = vunpack.c.l.b16 %v5547
        %v5587 = vunpack.c.l.b16 %v5548
        %v5588 = vunpack.c.l.b16 %v5549
        %v5589 = vpack.c.b16 %v5574, %v5573
        %v5590 = vpack.c.b16 %v5576, %v5575
        %v5591 = vpack.c.b16 %v5578, %v5577
        %v5592 = vpack.c.b16 %v5580, %v5579
        %v5593 = vpack.c.b16 %v5582, %v5581
        %v5594 = vpack.c.b16 %v5584, %v5583
        %v5595 = vpack.c.b16 %v5586, %v5585
        %v5596 = vpack.c.b16 %v5588, %v5587
        %5605 = vmatprep.subr.bf16.mxu0 0
        %5606 = vmatpush1.bf16.msra.mxu0 %v5589
        %5607 = vmatprep.subr.bf16.mxu0 0
        %5608 = vmatpush1.bf16.msra.mxu0 %v5590
        %5609 = vmatprep.subr.bf16.mxu0 0
        %5610 = vmatpush1.bf16.msra.mxu0 %v5591
        %5611 = vmatprep.subr.bf16.mxu0 0
        %5612 = vmatpush1.bf16.msra.mxu0 %v5592
        %5613 = vmatprep.subr.bf16.mxu0 0
        %5614 = vmatpush1.bf16.msra.mxu0 %v5593
        %5615 = vmatprep.subr.bf16.mxu0 0
        %5616 = vmatpush1.bf16.msra.mxu0 %v5594
        %5617 = vmatprep.subr.bf16.mxu0 0
        %5618 = vmatpush1.bf16.msra.mxu0 %v5595
        %5619 = vmatprep.subr.bf16.mxu0 0
        %5620 = vmatpush1.bf16.msra.mxu0 %v5596
        %5621 = vmatprep.subr.bf16.mxu0 0
        %5622 = vmatpush1.bf16.msra.mxu0 0
        %5623 = vmatprep.subr.bf16.mxu0 0
        %5624 = vmatpush1.bf16.msra.mxu0 0
        %5625 = vmatprep.subr.bf16.mxu0 0
        %5626 = vmatpush1.bf16.msra.mxu0 0
        %5627 = vmatprep.subr.bf16.mxu0 0
        %5628 = vmatpush1.bf16.msra.mxu0 0
        %5629 = vmatprep.subr.bf16.mxu0 0
        %5630 = vmatpush1.bf16.msra.mxu0 0
        %5631 = vmatprep.subr.bf16.mxu0 0
        %5632 = vmatpush1.bf16.msra.mxu0 0
        %5633 = vmatprep.subr.bf16.mxu0 0
        %5634 = vmatpush1.bf16.msra.mxu0 0
        %5635 = vmatprep.subr.bf16.mxu0 0
        %5636 = vmatpush1.bf16.msra.mxu0 0
        %5637 = vmatprep.mubr.bf16.mxu0 0
        %5638 = vmatmul.mubr.bf16.gmra.mrb[0].mxu0 %v5526
        %v5639 = vpop.f32.mrb[0].mxu0
        %v5640 = vadd.f32 %v5555, %v5639
        %v5641 = vpop.f32.mrb[0].mxu0
        %v5642 = vpop.f32.mrb[0].mxu0
        %v5643 = vadd.f32 %v5555, %v5642
        %v5644 = vpop.f32.mrb[0].mxu0
        %5645 = vmatprep.mubr.bf16.mxu0 0
        %5646 = vmatmul.mubr.bf16.gmra.mrb[0].mxu0 %v5527
        %v5647 = vpop.f32.mrb[0].mxu0
        %v5648 = vadd.f32 %v5555, %v5647
        %v5649 = vpop.f32.mrb[0].mxu0
        %v5650 = vpop.f32.mrb[0].mxu0
        %v5651 = vadd.f32 %v5555, %v5650
        %v5652 = vpop.f32.mrb[0].mxu0
        %5653 = vmatprep.mubr.bf16.mxu0 0
        %5654 = vmatmul.mubr.bf16.gmra.mrb[0].mxu0 %v5528
        %v5655 = vpop.f32.mrb[0].mxu0
        %v5656 = vadd.f32 %v5555, %v5655
        %v5657 = vpop.f32.mrb[0].mxu0
        %v5658 = vpop.f32.mrb[0].mxu0
        %v5659 = vadd.f32 %v5555, %v5658
        %v5660 = vpop.f32.mrb[0].mxu0
        %5661 = vmatprep.mubr.bf16.mxu0 0
        %5662 = vmatmul.mubr.bf16.gmra.mrb[0].mxu0 %v5529
        %v5663 = vpop.f32.mrb[0].mxu0
        %v5664 = vadd.f32 %v5555, %v5663
        %v5665 = vpop.f32.mrb[0].mxu0
        %v5666 = vpop.f32.mrb[0].mxu0
        %v5667 = vadd.f32 %v5555, %v5666
        %v5668 = vpop.f32.mrb[0].mxu0
        %5669 = vmatprep.mubr.bf16.mxu0 0
        %5670 = vmatmul.mubr.bf16.gmra.mrb[0].mxu0 %v5530
        %v5671 = vpop.f32.mrb[0].mxu0
        %v5672 = vadd.f32 %v5555, %v5671
        %v5673 = vpop.f32.mrb[0].mxu0
        %v5674 = vpop.f32.mrb[0].mxu0
        %v5675 = vadd.f32 %v5555, %v5674
        %v5676 = vpop.f32.mrb[0].mxu0
        %5677 = vmatprep.mubr.bf16.mxu0 0
        %5678 = vmatmul.mubr.bf16.gmra.mrb[0].mxu0 %v5531
        %v5679 = vpop.f32.mrb[0].mxu0
        %v5680 = vadd.f32 %v5555, %v5679
        %v5681 = vpop.f32.mrb[0].mxu0
        %v5682 = vpop.f32.mrb[0].mxu0
        %v5683 = vadd.f32 %v5555, %v5682
        %v5684 = vpop.f32.mrb[0].mxu0
        %5685 = vmatprep.mubr.bf16.mxu0 0
        %5686 = vmatmul.mubr.bf16.gmra.mrb[0].mxu0 %v5532
        %v5687 = vpop.f32.mrb[0].mxu0
        %v5688 = vadd.f32 %v5555, %v5687
        %v5689 = vpop.f32.mrb[0].mxu0
        %v5690 = vpop.f32.mrb[0].mxu0
        %v5691 = vadd.f32 %v5555, %v5690
        %v5692 = vpop.f32.mrb[0].mxu0
        %5693 = vmatprep.mubr.bf16.mxu0 0
        %5694 = vmatmul.mubr.bf16.gmra.mrb[0].mxu0 %v5533
        %v5695 = vpop.f32.mrb[0].mxu0
        %v5696 = vadd.f32 %v5555, %v5695
        %v5697 = vpop.f32.mrb[0].mxu0
        %v5698 = vpop.f32.mrb[0].mxu0
        %v5699 = vadd.f32 %v5555, %v5698
        %v5700 = vpop.f32.mrb[0].mxu0
        %5701 = vdwg.mxu0
        %v5702 = vmax.f32 %v5640, 0.0
        %v5703 = vmax.f32 %v5643, 0.0
        %v5704 = vmax.f32 %v5648, 0.0
        %v5705 = vmax.f32 %v5651, 0.0
        %v5706 = vmax.f32 %v5656, 0.0
        %v5707 = vmax.f32 %v5659, 0.0
        %v5708 = vmax.f32 %v5664, 0.0
        %v5709 = vmax.f32 %v5667, 0.0
        %v5710 = vmax.f32 %v5672, 0.0
        %v5711 = vmax.f32 %v5675, 0.0
        %v5712 = vmax.f32 %v5680, 0.0
        %v5713 = vmax.f32 %v5683, 0.0
        %v5714 = vmax.f32 %v5688, 0.0
        %v5715 = vmax.f32 %v5691, 0.0
        %v5716 = vmax.f32 %v5696, 0.0
        %v5717 = vmax.f32 %v5699, 0.0
        %v5718 = vpack.c.bf16 %v5703, %v5702
        %v5719 = vpack.c.bf16 %v5705, %v5704
        %v5720 = vpack.c.bf16 %v5707, %v5706
        %v5721 = vpack.c.bf16 %v5709, %v5708
        %v5722 = vpack.c.bf16 %v5711, %v5710
        %v5723 = vpack.c.bf16 %v5713, %v5712
        %v5724 = vpack.c.bf16 %v5715, %v5714
        %v5725 = vpack.c.bf16 %v5717, %v5716
        %v5726 = vld [vmem:[%s13] sm:$0xf]
        %v5727 = vld [vmem:[%s13 + $0x4] sm:$0xf]
        %v5728 = vld [vmem:[%s13 + $0x8] sm:$0xf]
        %v5729 = vld [vmem:[%s13 + $0xc] sm:$0xf]
        %v5730 = vld [vmem:[%s13 + $0x10] sm:$0xf]
        %v5731 = vld [vmem:[%s13 + $0x14] sm:$0xf]
        %v5732 = vld [vmem:[%s13 + $0x18] sm:$0xf]
        %v5733 = vld [vmem:[%s13 + $0x1c] sm:$0xf]
        %v5734 = vld [vmem:[%s13 + $0x20] sm:$0xf]
        %v5735 = vld [vmem:[%s13 + $0x24] sm:$0xf]
        %v5736 = vld [vmem:[%s13 + $0x28] sm:$0xf]
        %v5737 = vld [vmem:[%s13 + $0x2c] sm:$0xf]
        %v5738 = vld [vmem:[%s13 + $0x30] sm:$0xf]
        %v5739 = vld [vmem:[%s13 + $0x34] sm:$0xf]
        %v5740 = vld [vmem:[%s13 + $0x38] sm:$0xf]
        %v5741 = vld [vmem:[%s13 + $0x3c] sm:$0xf]
        %v5742 = vld [vmem:[%s14] sm:$0x1]
        %v5744 = vlaneseq
        %v5745 = vshrl.u32 %v5744, 7
        %v5746 = vsub.s32 0, %v5745
        %v5747 = vrot.slane %v5742, %v5746
        %v5765 = vunpack.c.l.b16 %v5726
        %v5766 = vunpack.c.l.b16 %v5727
        %v5767 = vunpack.c.l.b16 %v5728
        %v5768 = vunpack.c.l.b16 %v5729
        %v5769 = vunpack.c.l.b16 %v5730
        %v5770 = vunpack.c.l.b16 %v5731
        %v5771 = vunpack.c.l.b16 %v5732
        %v5772 = vunpack.c.l.b16 %v5733
        %v5773 = vunpack.c.l.b16 %v5734
        %v5774 = vunpack.c.l.b16 %v5735
        %v5775 = vunpack.c.l.b16 %v5736
        %v5776 = vunpack.c.l.b16 %v5737
        %v5777 = vunpack.c.l.b16 %v5738
        %v5778 = vunpack.c.l.b16 %v5739
        %v5779 = vunpack.c.l.b16 %v5740
        %v5780 = vunpack.c.l.b16 %v5741
        %v5781 = vpack.c.b16 %v5766, %v5765
        %v5782 = vpack.c.b16 %v5768, %v5767
        %v5783 = vpack.c.b16 %v5770, %v5769
        %v5784 = vpack.c.b16 %v5772, %v5771
        %v5785 = vpack.c.b16 %v5774, %v5773
        %v5786 = vpack.c.b16 %v5776, %v5775
        %v5787 = vpack.c.b16 %v5778, %v5777
        %v5788 = vpack.c.b16 %v5780, %v5779
        %5797 = vmatprep.subr.bf16.mxu0 0
        %5798 = vmatpush1.bf16.msra.mxu0 %v5781
        %5799 = vmatprep.subr.bf16.mxu0 0
        %5800 = vmatpush1.bf16.msra.mxu0 %v5782
        %5801 = vmatprep.subr.bf16.mxu0 0
        %5802 = vmatpush1.bf16.msra.mxu0 %v5783
        %5803 = vmatprep.subr.bf16.mxu0 0
        %5804 = vmatpush1.bf16.msra.mxu0 %v5784
        %5805 = vmatprep.subr.bf16.mxu0 0
        %5806 = vmatpush1.bf16.msra.mxu0 %v5785
        %5807 = vmatprep.subr.bf16.mxu0 0
        %5808 = vmatpush1.bf16.msra.mxu0 %v5786
        %5809 = vmatprep.subr.bf16.mxu0 0
        %5810 = vmatpush1.bf16.msra.mxu0 %v5787
        %5811 = vmatprep.subr.bf16.mxu0 0
        %5812 = vmatpush1.bf16.msra.mxu0 %v5788
        %5813 = vmatprep.subr.bf16.mxu0 0
        %5814 = vmatpush1.bf16.msra.mxu0 0
        %5815 = vmatprep.subr.bf16.mxu0 0
        %5816 = vmatpush1.bf16.msra.mxu0 0
        %5817 = vmatprep.subr.bf16.mxu0 0
        %5818 = vmatpush1.bf16.msra.mxu0 0
        %5819 = vmatprep.subr.bf16.mxu0 0
        %5820 = vmatpush1.bf16.msra.mxu0 0
        %5821 = vmatprep.subr.bf16.mxu0 0
        %5822 = vmatpush1.bf16.msra.mxu0 0
        %5823 = vmatprep.subr.bf16.mxu0 0
        %5824 = vmatpush1.bf16.msra.mxu0 0
        %5825 = vmatprep.subr.bf16.mxu0 0
        %5826 = vmatpush1.bf16.msra.mxu0 0
        %5827 = vmatprep.subr.bf16.mxu0 0
        %5828 = vmatpush1.bf16.msra.mxu0 0
        %5829 = vmatprep.mubr.bf16.mxu0 0
        %5830 = vmatmul.mubr.bf16.gmra.mrb[0].mxu0 %v5718
        %v5831 = vpop.f32.mrb[0].mxu0
        %v5832 = vadd.f32 %v5747, %v5831
        %v5833 = vpop.f32.mrb[0].mxu0
        %v5834 = vpop.f32.mrb[0].mxu0
        %v5835 = vadd.f32 %v5747, %v5834
        %v5836 = vpop.f32.mrb[0].mxu0
        %5837 = vmatprep.mubr.bf16.mxu0 0
        %5838 = vmatmul.mubr.bf16.gmra.mrb[0].mxu0 %v5719
        %v5839 = vpop.f32.mrb[0].mxu0
        %v5840 = vadd.f32 %v5747, %v5839
        %v5841 = vpop.f32.mrb[0].mxu0
        %v5842 = vpop.f32.mrb[0].mxu0
        %v5843 = vadd.f32 %v5747, %v5842
        %v5844 = vpop.f32.mrb[0].mxu0
        %5845 = vmatprep.mubr.bf16.mxu0 0
        %5846 = vmatmul.mubr.bf16.gmra.mrb[0].mxu0 %v5720
        %v5847 = vpop.f32.mrb[0].mxu0
        %v5848 = vadd.f32 %v5747, %v5847
        %v5849 = vpop.f32.mrb[0].mxu0
        %v5850 = vpop.f32.mrb[0].mxu0
        %v5851 = vadd.f32 %v5747, %v5850
        %v5852 = vpop.f32.mrb[0].mxu0
        %5853 = vmatprep.mubr.bf16.mxu0 0
        %5854 = vmatmul.mubr.bf16.gmra.mrb[0].mxu0 %v5721
        %v5855 = vpop.f32.mrb[0].mxu0
        %v5856 = vadd.f32 %v5747, %v5855
        %v5857 = vpop.f32.mrb[0].mxu0
        %v5858 = vpop.f32.mrb[0].mxu0
        %v5859 = vadd.f32 %v5747, %v5858
        %v5860 = vpop.f32.mrb[0].mxu0
        %5861 = vmatprep.mubr.bf16.mxu0 0
        %5862 = vmatmul.mubr.bf16.gmra.mrb[0].mxu0 %v5722
        %v5863 = vpop.f32.mrb[0].mxu0
        %v5864 = vadd.f32 %v5747, %v5863
        %v5865 = vpop.f32.mrb[0].mxu0
        %v5866 = vpop.f32.mrb[0].mxu0
        %v5867 = vadd.f32 %v5747, %v5866
        %v5868 = vpop.f32.mrb[0].mxu0
        %5869 = vmatprep.mubr.bf16.mxu0 0
        %5870 = vmatmul.mubr.bf16.gmra.mrb[0].mxu0 %v5723
        %v5871 = vpop.f32.mrb[0].mxu0
        %v5872 = vadd.f32 %v5747, %v5871
        %v5873 = vpop.f32.mrb[0].mxu0
        %v5874 = vpop.f32.mrb[0].mxu0
        %v5875 = vadd.f32 %v5747, %v5874
        %v5876 = vpop.f32.mrb[0].mxu0
        %5877 = vmatprep.mubr.bf16.mxu0 0
        %5878 = vmatmul.mubr.bf16.gmra.mrb[0].mxu0 %v5724
        %v5879 = vpop.f32.mrb[0].mxu0
        %v5880 = vadd.f32 %v5747, %v5879
        %v5881 = vpop.f32.mrb[0].mxu0
        %v5882 = vpop.f32.mrb[0].mxu0
        %v5883 = vadd.f32 %v5747, %v5882
        %v5884 = vpop.f32.mrb[0].mxu0
        %5885 = vmatprep.mubr.bf16.mxu0 0
        %5886 = vmatmul.mubr.bf16.gmra.mrb[0].mxu0 %v5725
        %v5887 = vpop.f32.mrb[0].mxu0
        %v5888 = vadd.f32 %v5747, %v5887
        %v5889 = vpop.f32.mrb[0].mxu0
        %v5890 = vpop.f32.mrb[0].mxu0
        %v5891 = vadd.f32 %v5747, %v5890
        %v5892 = vpop.f32.mrb[0].mxu0
        %5893 = vdwg.mxu0
        %v5894 = vadd.f32 %v5510, %v5832
        %v5895 = vadd.f32 %v5511, %v5835
        %v5896 = vadd.f32 %v5512, %v5840
        %v5897 = vadd.f32 %v5513, %v5843
        %v5898 = vadd.f32 %v5514, %v5848
        %v5899 = vadd.f32 %v5515, %v5851
        %v5900 = vadd.f32 %v5516, %v5856
        %v5901 = vadd.f32 %v5517, %v5859
        %v5902 = vadd.f32 %v5518, %v5864
        %v5903 = vadd.f32 %v5519, %v5867
        %v5904 = vadd.f32 %v5520, %v5872
        %v5905 = vadd.f32 %v5521, %v5875
        %v5906 = vadd.f32 %v5522, %v5880
        %v5907 = vadd.f32 %v5523, %v5883
        %v5908 = vadd.f32 %v5524, %v5888
        %v5909 = vadd.f32 %v5525, %v5891
        %5910 = vadd.xlane.f32.xlu0 %v5894
        %v5911 = vpop.xlane.xlu0 %5910
        %5912 = vadd.xlane.f32.xlu0 %v5895
        %v5913 = vpop.xlane.xlu0 %5912
        %5914 = vadd.xlane.f32.xlu0 %v5896
        %v5915 = vpop.xlane.xlu0 %5914
        %5916 = vadd.xlane.f32.xlu0 %v5897
        %v5917 = vpop.xlane.xlu0 %5916
        %5918 = vadd.xlane.f32.xlu0 %v5898
        %v5919 = vpop.xlane.xlu0 %5918
        %5920 = vadd.xlane.f32.xlu0 %v5899
        %v5921 = vpop.xlane.xlu0 %5920
        %5922 = vadd.xlane.f32.xlu0 %v5900
        %v5923 = vpop.xlane.xlu0 %5922
        %5924 = vadd.xlane.f32.xlu0 %v5901
        %v5925 = vpop.xlane.xlu0 %5924
        %5926 = vadd.xlane.f32.xlu0 %v5902
        %v5927 = vpop.xlane.xlu0 %5926
        %5928 = vadd.xlane.f32.xlu0 %v5903
        %v5929 = vpop.xlane.xlu0 %5928
        %5930 = vadd.xlane.f32.xlu0 %v5904
        %v5931 = vpop.xlane.xlu0 %5930
        %5932 = vadd.xlane.f32.xlu0 %v5905
        %v5933 = vpop.xlane.xlu0 %5932
        %5934 = vadd.xlane.f32.xlu0 %v5906
        %v5935 = vpop.xlane.xlu0 %5934
        %5936 = vadd.xlane.f32.xlu0 %v5907
        %v5937 = vpop.xlane.xlu0 %5936
        %5938 = vadd.xlane.f32.xlu0 %v5908
        %v5939 = vpop.xlane.xlu0 %5938
        %5940 = vadd.xlane.f32.xlu0 %v5909
        %v5941 = vpop.xlane.xlu0 %5940
        %v5942 = vmul.f32 %v5911, 0.03125
        %v5943 = vmul.f32 %v5913, 0.03125
        %v5944 = vmul.f32 %v5915, 0.03125
        %v5945 = vmul.f32 %v5917, 0.03125
        %v5946 = vmul.f32 %v5919, 0.03125
        %v5947 = vmul.f32 %v5921, 0.03125
        %v5948 = vmul.f32 %v5923, 0.03125
        %v5949 = vmul.f32 %v5925, 0.03125
        %v5950 = vmul.f32 %v5927, 0.03125
        %v5951 = vmul.f32 %v5929, 0.03125
        %v5952 = vmul.f32 %v5931, 0.03125
        %v5953 = vmul.f32 %v5933, 0.03125
        %v5954 = vmul.f32 %v5935, 0.03125
        %v5955 = vmul.f32 %v5937, 0.03125
        %v5956 = vmul.f32 %v5939, 0.03125
        %v5957 = vmul.f32 %v5941, 0.03125
        %v5958 = vmul.f32 %v5894, %v5894
        %v5959 = vmul.f32 %v5895, %v5895
        %v5960 = vmul.f32 %v5896, %v5896
        %v5961 = vmul.f32 %v5897, %v5897
        %v5962 = vmul.f32 %v5898, %v5898
        %v5963 = vmul.f32 %v5899, %v5899
        %v5964 = vmul.f32 %v5900, %v5900
        %v5965 = vmul.f32 %v5901, %v5901
        %v5966 = vmul.f32 %v5902, %v5902
        %v5967 = vmul.f32 %v5903, %v5903
        %v5968 = vmul.f32 %v5904, %v5904
        %v5969 = vmul.f32 %v5905, %v5905
        %v5970 = vmul.f32 %v5906, %v5906
        %v5971 = vmul.f32 %v5907, %v5907
        %v5972 = vmul.f32 %v5908, %v5908
        %v5973 = vmul.f32 %v5909, %v5909
        %5974 = vadd.xlane.f32.xlu0 %v5958
        %v5975 = vpop.xlane.xlu0 %5974
        %5976 = vadd.xlane.f32.xlu0 %v5959
        %v5977 = vpop.xlane.xlu0 %5976
        %5978 = vadd.xlane.f32.xlu0 %v5960
        %v5979 = vpop.xlane.xlu0 %5978
        %5980 = vadd.xlane.f32.xlu0 %v5961
        %v5981 = vpop.xlane.xlu0 %5980
        %5982 = vadd.xlane.f32.xlu0 %v5962
        %v5983 = vpop.xlane.xlu0 %5982
        %5984 = vadd.xlane.f32.xlu0 %v5963
        %v5985 = vpop.xlane.xlu0 %5984
        %5986 = vadd.xlane.f32.xlu0 %v5964
        %v5987 = vpop.xlane.xlu0 %5986
        %5988 = vadd.xlane.f32.xlu0 %v5965
        %v5989 = vpop.xlane.xlu0 %5988
        %5990 = vadd.xlane.f32.xlu0 %v5966
        %v5991 = vpop.xlane.xlu0 %5990
        %5992 = vadd.xlane.f32.xlu0 %v5967
        %v5993 = vpop.xlane.xlu0 %5992
        %5994 = vadd.xlane.f32.xlu0 %v5968
        %v5995 = vpop.xlane.xlu0 %5994
        %5996 = vadd.xlane.f32.xlu0 %v5969
        %v5997 = vpop.xlane.xlu0 %5996
        %5998 = vadd.xlane.f32.xlu0 %v5970
        %v5999 = vpop.xlane.xlu0 %5998
        %6000 = vadd.xlane.f32.xlu0 %v5971
        %v6001 = vpop.xlane.xlu0 %6000
        %6002 = vadd.xlane.f32.xlu0 %v5972
        %v6003 = vpop.xlane.xlu0 %6002
        %6004 = vadd.xlane.f32.xlu0 %v5973
        %v6005 = vpop.xlane.xlu0 %6004
        %v6006 = vmul.f32 %v5975, 0.03125
        %v6007 = vmul.f32 %v5977, 0.03125
        %v6008 = vmul.f32 %v5979, 0.03125
        %v6009 = vmul.f32 %v5981, 0.03125
        %v6010 = vmul.f32 %v5983, 0.03125
        %v6011 = vmul.f32 %v5985, 0.03125
        %v6012 = vmul.f32 %v5987, 0.03125
        %v6013 = vmul.f32 %v5989, 0.03125
        %v6014 = vmul.f32 %v5991, 0.03125
        %v6015 = vmul.f32 %v5993, 0.03125
        %v6016 = vmul.f32 %v5995, 0.03125
        %v6017 = vmul.f32 %v5997, 0.03125
        %v6018 = vmul.f32 %v5999, 0.03125
        %v6019 = vmul.f32 %v6001, 0.03125
        %v6020 = vmul.f32 %v6003, 0.03125
        %v6021 = vmul.f32 %v6005, 0.03125
        %v6022 = vmul.f32 %v5942, %v5942
        %v6023 = vmul.f32 %v5943, %v5943
        %v6024 = vmul.f32 %v5944, %v5944
        %v6025 = vmul.f32 %v5945, %v5945
        %v6026 = vmul.f32 %v5946, %v5946
        %v6027 = vmul.f32 %v5947, %v5947
        %v6028 = vmul.f32 %v5948, %v5948
        %v6029 = vmul.f32 %v5949, %v5949
        %v6030 = vmul.f32 %v5950, %v5950
        %v6031 = vmul.f32 %v5951, %v5951
        %v6032 = vmul.f32 %v5952, %v5952
        %v6033 = vmul.f32 %v5953, %v5953
        %v6034 = vmul.f32 %v5954, %v5954
        %v6035 = vmul.f32 %v5955, %v5955
        %v6036 = vmul.f32 %v5956, %v5956
        %v6037 = vmul.f32 %v5957, %v5957
        %v6038 = vsub.f32 %v6006, %v6022
        %v6039 = vsub.f32 %v6007, %v6023
        %v6040 = vsub.f32 %v6008, %v6024
        %v6041 = vsub.f32 %v6009, %v6025
        %v6042 = vsub.f32 %v6010, %v6026
        %v6043 = vsub.f32 %v6011, %v6027
        %v6044 = vsub.f32 %v6012, %v6028
        %v6045 = vsub.f32 %v6013, %v6029
        %v6046 = vsub.f32 %v6014, %v6030
        %v6047 = vsub.f32 %v6015, %v6031
        %v6048 = vsub.f32 %v6016, %v6032
        %v6049 = vsub.f32 %v6017, %v6033
        %v6050 = vsub.f32 %v6018, %v6034
        %v6051 = vsub.f32 %v6019, %v6035
        %v6052 = vsub.f32 %v6020, %v6036
        %v6053 = vsub.f32 %v6021, %v6037
        %v6054 = vmax.f32 %v6038, 0.0
        %v6055 = vmax.f32 %v6039, 0.0
        %v6056 = vmax.f32 %v6040, 0.0
        %v6057 = vmax.f32 %v6041, 0.0
        %v6058 = vmax.f32 %v6042, 0.0
        %v6059 = vmax.f32 %v6043, 0.0
        %v6060 = vmax.f32 %v6044, 0.0
        %v6061 = vmax.f32 %v6045, 0.0
        %v6062 = vmax.f32 %v6046, 0.0
        %v6063 = vmax.f32 %v6047, 0.0
        %v6064 = vmax.f32 %v6048, 0.0
        %v6065 = vmax.f32 %v6049, 0.0
        %v6066 = vmax.f32 %v6050, 0.0
        %v6067 = vmax.f32 %v6051, 0.0
        %v6068 = vmax.f32 %v6052, 0.0
        %v6069 = vmax.f32 %v6053, 0.0
        %v6070 = vsub.f32 %v5894, %v5942
        %v6071 = vsub.f32 %v5895, %v5943
        %v6072 = vsub.f32 %v5896, %v5944
        %v6073 = vsub.f32 %v5897, %v5945
        %v6074 = vsub.f32 %v5898, %v5946
        %v6075 = vsub.f32 %v5899, %v5947
        %v6076 = vsub.f32 %v5900, %v5948
        %v6077 = vsub.f32 %v5901, %v5949
        %v6078 = vsub.f32 %v5902, %v5950
        %v6079 = vsub.f32 %v5903, %v5951
        %v6080 = vsub.f32 %v5904, %v5952
        %v6081 = vsub.f32 %v5905, %v5953
        %v6082 = vsub.f32 %v5906, %v5954
        %v6083 = vsub.f32 %v5907, %v5955
        %v6084 = vsub.f32 %v5908, %v5956
        %v6085 = vsub.f32 %v5909, %v5957
        %v6086 = vadd.f32 %v6054, 1e-05
        %v6087 = vadd.f32 %v6055, 1e-05
        %v6088 = vadd.f32 %v6056, 1e-05
        %v6089 = vadd.f32 %v6057, 1e-05
        %v6090 = vadd.f32 %v6058, 1e-05
        %v6091 = vadd.f32 %v6059, 1e-05
        %v6092 = vadd.f32 %v6060, 1e-05
        %v6093 = vadd.f32 %v6061, 1e-05
        %v6094 = vadd.f32 %v6062, 1e-05
        %v6095 = vadd.f32 %v6063, 1e-05
        %v6096 = vadd.f32 %v6064, 1e-05
        %v6097 = vadd.f32 %v6065, 1e-05
        %v6098 = vadd.f32 %v6066, 1e-05
        %v6099 = vadd.f32 %v6067, 1e-05
        %v6100 = vadd.f32 %v6068, 1e-05
        %v6101 = vadd.f32 %v6069, 1e-05
        %v6102 = vrsqrt.pop %v6086
        %v6103 = vrsqrt.pop %v6087
        %v6104 = vrsqrt.pop %v6088
        %v6105 = vrsqrt.pop %v6089
        %v6106 = vrsqrt.pop %v6090
        %v6107 = vrsqrt.pop %v6091
        %v6108 = vrsqrt.pop %v6092
        %v6109 = vrsqrt.pop %v6093
        %v6110 = vrsqrt.pop %v6094
        %v6111 = vrsqrt.pop %v6095
        %v6112 = vrsqrt.pop %v6096
        %v6113 = vrsqrt.pop %v6097
        %v6114 = vrsqrt.pop %v6098
        %v6115 = vrsqrt.pop %v6099
        %v6116 = vrsqrt.pop %v6100
        %v6117 = vrsqrt.pop %v6101
        %v6118 = vmul.f32 %v6070, %v6102
        %v6119 = vmul.f32 %v6071, %v6103
        %v6120 = vmul.f32 %v6072, %v6104
        %v6121 = vmul.f32 %v6073, %v6105
        %v6122 = vmul.f32 %v6074, %v6106
        %v6123 = vmul.f32 %v6075, %v6107
        %v6124 = vmul.f32 %v6076, %v6108
        %v6125 = vmul.f32 %v6077, %v6109
        %v6126 = vmul.f32 %v6078, %v6110
        %v6127 = vmul.f32 %v6079, %v6111
        %v6128 = vmul.f32 %v6080, %v6112
        %v6129 = vmul.f32 %v6081, %v6113
        %v6130 = vmul.f32 %v6082, %v6114
        %v6131 = vmul.f32 %v6083, %v6115
        %v6132 = vmul.f32 %v6084, %v6116
        %v6133 = vmul.f32 %v6085, %v6117
        %v6134 = vld [vmem:[%s15] sm:$0x1]
        %v6136 = vlaneseq
        %v6137 = vshrl.u32 %v6136, 7
        %v6138 = vsub.s32 0, %v6137
        %v6139 = vrot.slane %v6134, %v6138
        %v6141 = vmul.f32 %v6118, %v6139
        %v6142 = vmul.f32 %v6119, %v6139
        %v6143 = vmul.f32 %v6120, %v6139
        %v6144 = vmul.f32 %v6121, %v6139
        %v6145 = vmul.f32 %v6122, %v6139
        %v6146 = vmul.f32 %v6123, %v6139
        %v6147 = vmul.f32 %v6124, %v6139
        %v6148 = vmul.f32 %v6125, %v6139
        %v6149 = vmul.f32 %v6126, %v6139
        %v6150 = vmul.f32 %v6127, %v6139
        %v6151 = vmul.f32 %v6128, %v6139
        %v6152 = vmul.f32 %v6129, %v6139
        %v6153 = vmul.f32 %v6130, %v6139
        %v6154 = vmul.f32 %v6131, %v6139
        %v6155 = vmul.f32 %v6132, %v6139
        %v6156 = vmul.f32 %v6133, %v6139
        %v6157 = vld [vmem:[%s16] sm:$0x1]
        %v6159 = vlaneseq
        %v6160 = vshrl.u32 %v6159, 7
        %v6161 = vsub.s32 0, %v6160
        %v6162 = vrot.slane %v6157, %v6161
        %v6164 = vadd.f32 %v6141, %v6162
        %v6165 = vadd.f32 %v6142, %v6162
        %v6166 = vadd.f32 %v6143, %v6162
        %v6167 = vadd.f32 %v6144, %v6162
        %v6168 = vadd.f32 %v6145, %v6162
        %v6169 = vadd.f32 %v6146, %v6162
        %v6170 = vadd.f32 %v6147, %v6162
        %v6171 = vadd.f32 %v6148, %v6162
        %v6172 = vadd.f32 %v6149, %v6162
        %v6173 = vadd.f32 %v6150, %v6162
        %v6174 = vadd.f32 %v6151, %v6162
        %v6175 = vadd.f32 %v6152, %v6162
        %v6176 = vadd.f32 %v6153, %v6162
        %v6177 = vadd.f32 %v6154, %v6162
        %v6178 = vadd.f32 %v6155, %v6162
        %v6179 = vadd.f32 %v6156, %v6162
        %v6180 = vpack.c.bf16 %v6165, %v6164
        %v6181 = vpack.c.bf16 %v6167, %v6166
        %v6182 = vpack.c.bf16 %v6169, %v6168
        %v6183 = vpack.c.bf16 %v6171, %v6170
        %v6184 = vpack.c.bf16 %v6173, %v6172
        %v6185 = vpack.c.bf16 %v6175, %v6174
        %v6186 = vpack.c.bf16 %v6177, %v6176
        %v6187 = vpack.c.bf16 %v6179, %v6178
        %v6196 = vunpack.c.l.b16 %v6180
        %v6197 = vunpack.c.h.b16 %v6180
        %v6198 = vunpack.c.l.b16 %v6181
        %v6199 = vunpack.c.h.b16 %v6181
        %v6200 = vunpack.c.l.b16 %v6182
        %v6201 = vunpack.c.h.b16 %v6182
        %v6202 = vunpack.c.l.b16 %v6183
        %v6203 = vunpack.c.h.b16 %v6183
        %v6204 = vunpack.c.l.b16 %v6184
        %v6205 = vunpack.c.h.b16 %v6184
        %v6206 = vunpack.c.l.b16 %v6185
        %v6207 = vunpack.c.h.b16 %v6185
        %v6208 = vunpack.c.l.b16 %v6186
        %v6209 = vunpack.c.h.b16 %v6186
        %v6210 = vunpack.c.l.b16 %v6187
        %v6211 = vunpack.c.h.b16 %v6187
        %v6212 = vpack.c.b16 %v6196, %v6196
        %v6213 = vpack.c.b16 %v6197, %v6197
        %v6214 = vpack.c.b16 %v6198, %v6198
        %v6215 = vpack.c.b16 %v6199, %v6199
        %v6216 = vpack.c.b16 %v6200, %v6200
        %v6217 = vpack.c.b16 %v6201, %v6201
        %v6218 = vpack.c.b16 %v6202, %v6202
        %v6219 = vpack.c.b16 %v6203, %v6203
        %v6220 = vpack.c.b16 %v6204, %v6204
        %v6221 = vpack.c.b16 %v6205, %v6205
        %v6222 = vpack.c.b16 %v6206, %v6206
        %v6223 = vpack.c.b16 %v6207, %v6207
        %v6224 = vpack.c.b16 %v6208, %v6208
        %v6225 = vpack.c.b16 %v6209, %v6209
        %v6226 = vpack.c.b16 %v6210, %v6210
        %v6227 = vpack.c.b16 %v6211, %v6211
        %6244 = vst [vmem:[%s654] sm:$0xf] %v6212
        %6245 = vst [vmem:[%s654 + $0x4] sm:$0xf] %v6213
        %6246 = vst [vmem:[%s654 + $0x8] sm:$0xf] %v6214
        %6247 = vst [vmem:[%s654 + $0xc] sm:$0xf] %v6215
        %6248 = vst [vmem:[%s654 + $0x10] sm:$0xf] %v6216
        %6249 = vst [vmem:[%s654 + $0x14] sm:$0xf] %v6217
        %6250 = vst [vmem:[%s654 + $0x18] sm:$0xf] %v6218
        %6251 = vst [vmem:[%s654 + $0x1c] sm:$0xf] %v6219
        %6252 = vst [vmem:[%s654 + $0x20] sm:$0xf] %v6220
        %6253 = vst [vmem:[%s654 + $0x24] sm:$0xf] %v6221
        %6254 = vst [vmem:[%s654 + $0x28] sm:$0xf] %v6222
        %6255 = vst [vmem:[%s654 + $0x2c] sm:$0xf] %v6223
        %6256 = vst [vmem:[%s654 + $0x30] sm:$0xf] %v6224
        %6257 = vst [vmem:[%s654 + $0x34] sm:$0xf] %v6225
        %6258 = vst [vmem:[%s654 + $0x38] sm:$0xf] %v6226
        %6259 = vst [vmem:[%s654 + $0x3c] sm:$0xf] %v6227
      $region96: #{encoder_forward.2} parent=87 // pred_fallthru
        _
      %s6260 = smul.u32 16, %s34
      %p6261 = scmp.lt.s32.totalorder %s33, 1
      %s6262 = scalar_select %p6261, %s33, 1
      %p6263 = scmp.lt.s32.totalorder %s6260, 15
      %s6264 = scalar_select %p6263, %s6260, 15
      %s6265 = smul.addr %s6262, 16
      %s6266 = sadd.s32 %s6264, %s6265
      %s6267 = smul.addr %s6266, 4
      %s6268 = scalar_lea.vmem %s17, %s6267
      // Predicated region
      $region97: #{encoder_forward.2} parent=87 // pred_check
        %p6269 = pneg %p445
      $region98: #{encoder_forward.2} parent=87 // pred_check_branch
        %6271 = sbr.rel (%p6269) target = $region100
      $region99: #{encoder_forward.2} parent=87 // pred_region
        %s6272 = smul.u32 16, %s34
      $region100: #{encoder_forward.2} parent=87 // pred_fallthru
        _
    $region88: #{encoder_forward.2} parent=5 // pred_fallthru
      _
    %p6273 = scmp.le.s32.totalorder 2, %s23
    // Predicated region
    $region101: #{encoder_forward.2} parent=5 // pred_check
      %p6274 = pneg %p6273
    $region102: #{encoder_forward.2} parent=5 // pred_check_branch
      %6276 = sbr.rel (%p6274) target = $region104
    $region103: #{encoder_forward.2} parent=5 // pred_region
      %s6277 = ssub.s32 %s23, 2
      // Predicated region
      $region105: #{encoder_forward.2} parent=103 // pred_check
        %p6278 = pneg %p451
      $region106: #{encoder_forward.2} parent=103 // pred_check_branch
        %6280 = sbr.rel (%p6278) target = $region108
      $region107: #{encoder_forward.2} parent=103 // pred_region
        %s6281 = smul.u32 16, %s37
        %p6282 = scmp.lt.s32.totalorder %s36, 1
        %s6283 = scalar_select %p6282, %s36, 1
        %p6284 = scmp.lt.s32.totalorder %s6281, 15
        %s6285 = scalar_select %p6284, %s6281, 15
        %s6286 = smul.addr %s6283, 16
        %s6287 = sadd.s32 %s6285, %s6286
        %s6288 = smul.addr %s6287, 4
        %s6289 = scalar_lea.vmem %s17, %s6288
      $region108: #{encoder_forward.2} parent=103 // pred_fallthru
        _
    $region104: #{encoder_forward.2} parent=5 // pred_fallthru
      _
  $region6: #{encoder_forward.2} parent=0 // loop_footer
    %s27 = sadd.s32 1, %s23
  $region7: #{encoder_forward.2} parent=0 // loop_footer_branch
    %22 = sbr.rel target = $region3
  $region8: #{encoder_forward.2} parent=0 // loop_exit
    _

</llo_original>
